<compile_context>
chip_gen: v6e
topology: v6e:2x2x1
jax: 0.10.0
libtpu: 0.0.40
codegen_flags: <defaults>
</compile_context>

<pallas_src>
import functools

import jax
import jax.numpy as jnp
from jax.experimental import pallas as pl
from jax.experimental.pallas import tpu as pltpu

EPS = 1e-5  # nn.BatchNorm2d default eps


# ----------------------------------------------------------------------------
# Fused Pallas kernel: 3 x (conv3x3 -> BN(batch stats) -> ReLU)
# ----------------------------------------------------------------------------
def _fused_kernel(N, H, W, Cin, Cout,
                  x_ref, w1_ref, w2_ref, w3_ref,
                  g1_ref, b1_ref, g2_ref, b2_ref, g3_ref, b3_ref,
                  gat_ref, sct_ref,
                  o_ref, pbuf_ref):
    # x_ref   : [N*(H+2), (W+2)*Cin]   bf16  zero-padded layer-1 input
    # w*_ref  : [9, W*Cin_l, W*Cout]   bf16  block-diagonal tap weights
    # g*/b*   : [1, Cout]              f32   BN gamma / beta
    # gat_ref : [W*Cout, Cout]         f32   lane-group -> channel gather
    # sct_ref : [Cout, W*Cout]         f32   channel -> lane-group scatter
    # o_ref   : [N*H, W*Cout]          f32   lane-dense output slab
    # pbuf_ref: [N*(H+2), (W+2)*Cout]  f32   padded activation scratch (VMEM)
    Hp = H + 2
    gat = gat_ref[...]
    sct = sct_ref[...]
    inv_cnt = 1.0 / float(N * H * W)

    def conv_bn_relu(in_ref, cin, w_ref, g_ref, beta_ref):
        # ---- conv as 9 tap matmuls (MXU), f32 accumulation ----
        ys = []
        for n in range(N):
            acc = None
            for t in range(9):
                dh, dw = divmod(t, 3)
                xs = in_ref[pl.ds(n * Hp + dh, H), pl.ds(dw * cin, W * cin)]
                xs = xs.astype(jnp.bfloat16)
                d = jnp.dot(xs, w_ref[t], preferred_element_type=jnp.float32)
                acc = d if acc is None else acc + d
            ys.append(acc)
        y = jnp.concatenate(ys, axis=0)                 # [N*H, W*Cout] f32

        # ---- training-mode BN: one pass sum / sum-of-squares ----
        s1 = jnp.dot(jnp.sum(y, axis=0, keepdims=True), gat)      # [1, Cout]
        s2 = jnp.dot(jnp.sum(y * y, axis=0, keepdims=True), gat)  # [1, Cout]
        mean = s1 * inv_cnt
        var = s2 * inv_cnt - mean * mean
        a = g_ref[...] * jax.lax.rsqrt(var + EPS)       # folded scale
        c = beta_ref[...] - mean * a                    # folded shift
        a_l = jnp.dot(a, sct)                           # [1, W*Cout]
        c_l = jnp.dot(c, sct)
        return jnp.maximum(y * a_l + c_l, 0.0)          # ReLU, f32

    def stash(act):
        # Write the activation into the interior of the zero-padded buffer
        # that feeds the next layer (halo stays zero).
        for n in range(N):
            pbuf_ref[pl.ds(n * Hp + 1, H), pl.ds(Cout, W * Cout)] = (
                act[n * H:(n + 1) * H, :])

    # Zero the halo once; interiors are fully overwritten per layer.
    pbuf_ref[...] = jnp.zeros_like(pbuf_ref)

    a1 = conv_bn_relu(x_ref, Cin, w1_ref, g1_ref, b1_ref)
    stash(a1)
    a2 = conv_bn_relu(pbuf_ref, Cout, w2_ref, g2_ref, b2_ref)
    stash(a2)
    a3 = conv_bn_relu(pbuf_ref, Cout, w3_ref, g3_ref, b3_ref)
    o_ref[...] = a3


# ----------------------------------------------------------------------------
# Host-side wrapper (layout glue only -- no im2col)
# ----------------------------------------------------------------------------
@jax.jit
def block_mid_2_forward(x_nchw, params):
    """params = [(w OIHW, b [C], gamma [C], beta [C])] * 3 (PyTorch layouts).

    Hard-coded for kernel_size=3, stride=1, padding=1 (the block_mid_2 demo
    configuration, which keeps H/W constant across the three layers).
    """
    N, Cin, H, W = x_nchw.shape
    Cout = params[0][0].shape[0]

    # Layer-1 input: NCHW -> NHWC -> pad spatial halo -> 2-D lane-dense slab.
    x = jnp.transpose(x_nchw, (0, 2, 3, 1))
    xp = jnp.pad(x, ((0, 0), (1, 1), (1, 1), (0, 0)))
    x2 = xp.reshape(N * (H + 2), (W + 2) * Cin).astype(jnp.bfloat16)

    def expand(w_oihw, cin):
        # OIHW -> [9, cin, Cout] taps -> block-diagonal over W:
        # bd[t, wi*cin+ci, wj*Cout+co] = (wi==wj) * w[co, ci, dh, dw]
        taps = jnp.transpose(w_oihw, (2, 3, 1, 0)).reshape(9, cin, Cout)
        eye_w = jnp.eye(W, dtype=jnp.float32)
        bd = jnp.einsum('ij,tkl->tikjl', eye_w, taps)
        return bd.reshape(9, W * cin, W * Cout).astype(jnp.bfloat16)

    w1 = expand(params[0][0], Cin)
    w2 = expand(params[1][0], Cout)
    w3 = expand(params[2][0], Cout)

    # Channel gather / scatter matrices for the [.., W*Cout] lane layout.
    gat = jnp.tile(jnp.eye(Cout, dtype=jnp.float32), (W, 1))   # [W*Cout, Cout]
    sct = gat.T                                                # [Cout, W*Cout]

    def bn(p):  # (gamma, beta) as [1, Cout] f32; conv bias is dropped (cancels
        return (p[2].reshape(1, Cout).astype(jnp.float32),     # under BN mean)
                p[3].reshape(1, Cout).astype(jnp.float32))

    (g1, b1), (g2, b2), (g3, b3) = bn(params[0]), bn(params[1]), bn(params[2])

    kern = functools.partial(_fused_kernel, N, H, W, Cin, Cout)
    out = pl.pallas_call(
        kern,
        out_shape=jax.ShapeDtypeStruct((N * H, W * Cout), jnp.float32),
        in_specs=[
            pl.BlockSpec((N * (H + 2), (W + 2) * Cin), lambda: (0, 0)),
            pl.BlockSpec((9, W * Cin, W * Cout), lambda: (0, 0, 0)),
            pl.BlockSpec((9, W * Cout, W * Cout), lambda: (0, 0, 0)),
            pl.BlockSpec((9, W * Cout, W * Cout), lambda: (0, 0, 0)),
            pl.BlockSpec((1, Cout), lambda: (0, 0)),
            pl.BlockSpec((1, Cout), lambda: (0, 0)),
            pl.BlockSpec((1, Cout), lambda: (0, 0)),
            pl.BlockSpec((1, Cout), lambda: (0, 0)),
            pl.BlockSpec((1, Cout), lambda: (0, 0)),
            pl.BlockSpec((1, Cout), lambda: (0, 0)),
            pl.BlockSpec((W * Cout, Cout), lambda: (0, 0)),
            pl.BlockSpec((Cout, W * Cout), lambda: (0, 0)),
        ],
        out_specs=pl.BlockSpec((N * H, W * Cout), lambda: (0, 0)),
        scratch_shapes=[
            pltpu.VMEM((N * (H + 2), (W + 2) * Cout), jnp.float32),
        ],
    )(x2, w1, w2, w3, g1, b1, g2, b2, g3, b3, gat, sct)

    y = out.reshape(N, H, W, Cout)
    return jnp.transpose(y, (0, 3, 1, 2))  # NHWC -> NCHW


# ----------------------------------------------------------------------------
# Pure-JAX f32 reference (same math, via lax.conv, bias included) for checking
# ----------------------------------------------------------------------------
def reference_forward(x_nchw, params):
    x = x_nchw
    for (w, b, g, bt) in params:
        y = jax.lax.conv_general_dilated(
            x, w, window_strides=(1, 1), padding=((1, 1), (1, 1)),
            dimension_numbers=("NCHW", "OIHW", "NCHW"))
        y = y + b[None, :, None, None]
        mean = jnp.mean(y, axis=(0, 2, 3), keepdims=True)
        var = jnp.mean(jnp.square(y - mean), axis=(0, 2, 3), keepdims=True)
        y_hat = (y - mean) * jax.lax.rsqrt(var + EPS)
        x = jnp.maximum(
            y_hat * g[None, :, None, None] + bt[None, :, None, None], 0.0)
    return x


if __name__ == "__main__":
    # block_mid_2(in_channels=4, out_channels=8, kernel_size=3, stride=1,
    # padding=1) applied to x of shape [2, 4, 16, 16].
    N, Cin, Cout, H, W = 2, 4, 8, 16, 16
    K = 3

    key = jax.random.PRNGKey(0)
    keys = jax.random.split(key, 10)

    params = []
    ch_in = Cin
    for layer in range(3):
        kw, kb, kg, kbt = jax.random.split(keys[layer], 4)
        w = jax.random.normal(kw, (Cout, ch_in, K, K), jnp.float32) * 0.1
        b = jax.random.normal(kb, (Cout,), jnp.float32) * 0.05
        gamma = 1.0 + 0.1 * jax.random.normal(kg, (Cout,), jnp.float32)
        beta = 0.05 * jax.random.normal(kbt, (Cout,), jnp.float32)
        params.append((w, b, gamma, beta))
        ch_in = Cout

    x = jax.random.normal(keys[9], (N, Cin, H, W), jnp.float32)

    out = block_mid_2_forward(x, params)
    out = jax.block_until_ready(out)

    ref = reference_forward(x, params)
    assert out.shape == (N, Cout, H, W)
    # bf16 matmul operands (f32 accumulation) through 3 layers -> ~1e-2 level
    # deviation from the pure-f32 reference is expected.
    max_diff = float(jnp.max(jnp.abs(out - ref)))
    assert jnp.allclose(out, ref, rtol=5e-2, atol=5e-2), \
        f"max abs diff {max_diff}"

    print("KERNEL_OK")
</pallas_src>

<mosaic_0001>
module attributes {stable_mosaic.version = 11 : i64} {
  func.func @_fused_kernel(%arg0: memref<36x72xbf16, #tpu.memory_space<vmem>>, %arg1: memref<9x64x128xbf16, #tpu.memory_space<vmem>>, %arg2: memref<9x128x128xbf16, #tpu.memory_space<vmem>>, %arg3: memref<9x128x128xbf16, #tpu.memory_space<vmem>>, %arg4: memref<1x8xf32, #tpu.memory_space<vmem>>, %arg5: memref<1x8xf32, #tpu.memory_space<vmem>>, %arg6: memref<1x8xf32, #tpu.memory_space<vmem>>, %arg7: memref<1x8xf32, #tpu.memory_space<vmem>>, %arg8: memref<1x8xf32, #tpu.memory_space<vmem>>, %arg9: memref<1x8xf32, #tpu.memory_space<vmem>>, %arg10: memref<128x8xf32, #tpu.memory_space<vmem>>, %arg11: memref<8x128xf32, #tpu.memory_space<vmem>>, %arg12: memref<32x128xf32, #tpu.memory_space<vmem>>, %arg13: memref<36x144xf32, #tpu.memory_space<vmem>>) attributes {dimension_semantics = [], scalar_prefetch = 0 : i64, scratch_operands = 1 : i64, tpu.core_type = #tpu.core_type<tc>} {
    %c0 = arith.constant 0 : index
    %c0_0 = arith.constant 0 : index
    %0 = vector.load %arg10[%c0, %c0_0] : memref<128x8xf32, #tpu.memory_space<vmem>>, vector<128x8xf32>
    %c0_1 = arith.constant 0 : index
    %c0_2 = arith.constant 0 : index
    %1 = vector.load %arg11[%c0_1, %c0_2] : memref<8x128xf32, #tpu.memory_space<vmem>>, vector<8x128xf32>
    %cst = arith.constant 0.000000e+00 : f32
    %2 = vector.broadcast %cst : f32 to vector<36x144xf32>
    %c0_3 = arith.constant 0 : index
    %c0_4 = arith.constant 0 : index
    %3 = vector.load %arg13[%c0_3, %c0_4] : memref<36x144xf32, #tpu.memory_space<vmem>>, vector<36x144xf32>
    tpu.vector_store %arg13[%c0_3, %c0_4], %2 {strides = array<i32>} : memref<36x144xf32, #tpu.memory_space<vmem>>, vector<36x144xf32>,
    %c0_5 = arith.constant 0 : index
    %c0_6 = arith.constant 0 : index
    %4 = vector.load %arg0[%c0_5, %c0_6] : memref<36x72xbf16, #tpu.memory_space<vmem>>, vector<16x64xbf16>
    %c0_7 = arith.constant 0 : index
    %c0_8 = arith.constant 0 : index
    %c0_9 = arith.constant 0 : index
    %5 = vector.load %arg1[%c0_7, %c0_8, %c0_9] : memref<9x64x128xbf16, #tpu.memory_space<vmem>>, vector<1x64x128xbf16>
    %6 = vector.shape_cast %5 : vector<1x64x128xbf16> to vector<64x128xbf16>
    %cst_10 = arith.constant dense<0.000000e+00> : vector<16x128xf32>
    %7 = tpu.matmul %4, %6, %cst_10 {dimension_numbers = #tpu.dot_dimension_numbers<[1], [0], [0], [1], [0, 0, 1, 1], [], []>} : vector<16x64xbf16>, vector<64x128xbf16>, vector<16x128xf32> -> vector<16x128xf32>
    %c0_11 = arith.constant 0 : index
    %c4 = arith.constant 4 : index
    %8 = vector.load %arg0[%c0_11, %c4] : memref<36x72xbf16, #tpu.memory_space<vmem>>, vector<16x64xbf16>
    %c1 = arith.constant 1 : index
    %c0_12 = arith.constant 0 : index
    %c0_13 = arith.constant 0 : index
    %9 = vector.load %arg1[%c1, %c0_12, %c0_13] : memref<9x64x128xbf16, #tpu.memory_space<vmem>>, vector<1x64x128xbf16>
    %10 = vector.shape_cast %9 : vector<1x64x128xbf16> to vector<64x128xbf16>
    %cst_14 = arith.constant dense<0.000000e+00> : vector<16x128xf32>
    %11 = tpu.matmul %8, %10, %cst_14 {dimension_numbers = #tpu.dot_dimension_numbers<[1], [0], [0], [1], [0, 0, 1, 1], [], []>} : vector<16x64xbf16>, vector<64x128xbf16>, vector<16x128xf32> -> vector<16x128xf32>
    %12 = arith.addf %7, %11 : vector<16x128xf32>
    %c0_15 = arith.constant 0 : index
    %c8 = arith.constant 8 : index
    %13 = vector.load %arg0[%c0_15, %c8] : memref<36x72xbf16, #tpu.memory_space<vmem>>, vector<16x64xbf16>
    %c2 = arith.constant 2 : index
    %c0_16 = arith.constant 0 : index
    %c0_17 = arith.constant 0 : index
    %14 = vector.load %arg1[%c2, %c0_16, %c0_17] : memref<9x64x128xbf16, #tpu.memory_space<vmem>>, vector<1x64x128xbf16>
    %15 = vector.shape_cast %14 : vector<1x64x128xbf16> to vector<64x128xbf16>
    %cst_18 = arith.constant dense<0.000000e+00> : vector<16x128xf32>
    %16 = tpu.matmul %13, %15, %cst_18 {dimension_numbers = #tpu.dot_dimension_numbers<[1], [0], [0], [1], [0, 0, 1, 1], [], []>} : vector<16x64xbf16>, vector<64x128xbf16>, vector<16x128xf32> -> vector<16x128xf32>
    %17 = arith.addf %12, %16 : vector<16x128xf32>
    %c1_19 = arith.constant 1 : index
    %c0_20 = arith.constant 0 : index
    %18 = vector.load %arg0[%c1_19, %c0_20] : memref<36x72xbf16, #tpu.memory_space<vmem>>, vector<16x64xbf16>
    %c3 = arith.constant 3 : index
    %c0_21 = arith.constant 0 : index
    %c0_22 = arith.constant 0 : index
    %19 = vector.load %arg1[%c3, %c0_21, %c0_22] : memref<9x64x128xbf16, #tpu.memory_space<vmem>>, vector<1x64x128xbf16>
    %20 = vector.shape_cast %19 : vector<1x64x128xbf16> to vector<64x128xbf16>
    %cst_23 = arith.constant dense<0.000000e+00> : vector<16x128xf32>
    %21 = tpu.matmul %18, %20, %cst_23 {dimension_numbers = #tpu.dot_dimension_numbers<[1], [0], [0], [1], [0, 0, 1, 1], [], []>} : vector<16x64xbf16>, vector<64x128xbf16>, vector<16x128xf32> -> vector<16x128xf32>
    %22 = arith.addf %17, %21 : vector<16x128xf32>
    %c1_24 = arith.constant 1 : index
    %c4_25 = arith.constant 4 : index
    %23 = vector.load %arg0[%c1_24, %c4_25] : memref<36x72xbf16, #tpu.memory_space<vmem>>, vector<16x64xbf16>
    %c4_26 = arith.constant 4 : index
    %c0_27 = arith.constant 0 : index
    %c0_28 = arith.constant 0 : index
    %24 = vector.load %arg1[%c4_26, %c0_27, %c0_28] : memref<9x64x128xbf16, #tpu.memory_space<vmem>>, vector<1x64x128xbf16>
    %25 = vector.shape_cast %24 : vector<1x64x128xbf16> to vector<64x128xbf16>
    %cst_29 = arith.constant dense<0.000000e+00> : vector<16x128xf32>
    %26 = tpu.matmul %23, %25, %cst_29 {dimension_numbers = #tpu.dot_dimension_numbers<[1], [0], [0], [1], [0, 0, 1, 1], [], []>} : vector<16x64xbf16>, vector<64x128xbf16>, vector<16x128xf32> -> vector<16x128xf32>
    %27 = arith.addf %22, %26 : vector<16x128xf32>
    %c1_30 = arith.constant 1 : index
    %c8_31 = arith.constant 8 : index
    %28 = vector.load %arg0[%c1_30, %c8_31] : memref<36x72xbf16, #tpu.memory_space<vmem>>, vector<16x64xbf16>
    %c5 = arith.constant 5 : index
    %c0_32 = arith.constant 0 : index
    %c0_33 = arith.constant 0 : index
    %29 = vector.load %arg1[%c5, %c0_32, %c0_33] : memref<9x64x128xbf16, #tpu.memory_space<vmem>>, vector<1x64x128xbf16>
    %30 = vector.shape_cast %29 : vector<1x64x128xbf16> to vector<64x128xbf16>
    %cst_34 = arith.constant dense<0.000000e+00> : vector<16x128xf32>
    %31 = tpu.matmul %28, %30, %cst_34 {dimension_numbers = #tpu.dot_dimension_numbers<[1], [0], [0], [1], [0, 0, 1, 1], [], []>} : vector<16x64xbf16>, vector<64x128xbf16>, vector<16x128xf32> -> vector<16x128xf32>
    %32 = arith.addf %27, %31 : vector<16x128xf32>
    %c2_35 = arith.constant 2 : index
    %c0_36 = arith.constant 0 : index
    %33 = vector.load %arg0[%c2_35, %c0_36] : memref<36x72xbf16, #tpu.memory_space<vmem>>, vector<16x64xbf16>
    %c6 = arith.constant 6 : index
    %c0_37 = arith.constant 0 : index
    %c0_38 = arith.constant 0 : index
    %34 = vector.load %arg1[%c6, %c0_37, %c0_38] : memref<9x64x128xbf16, #tpu.memory_space<vmem>>, vector<1x64x128xbf16>
    %35 = vector.shape_cast %34 : vector<1x64x128xbf16> to vector<64x128xbf16>
    %cst_39 = arith.constant dense<0.000000e+00> : vector<16x128xf32>
    %36 = tpu.matmul %33, %35, %cst_39 {dimension_numbers = #tpu.dot_dimension_numbers<[1], [0], [0], [1], [0, 0, 1, 1], [], []>} : vector<16x64xbf16>, vector<64x128xbf16>, vector<16x128xf32> -> vector<16x128xf32>
    %37 = arith.addf %32, %36 : vector<16x128xf32>
    %c2_40 = arith.constant 2 : index
    %c4_41 = arith.constant 4 : index
    %38 = vector.load %arg0[%c2_40, %c4_41] : memref<36x72xbf16, #tpu.memory_space<vmem>>, vector<16x64xbf16>
    %c7 = arith.constant 7 : index
    %c0_42 = arith.constant 0 : index
    %c0_43 = arith.constant 0 : index
    %39 = vector.load %arg1[%c7, %c0_42, %c0_43] : memref<9x64x128xbf16, #tpu.memory_space<vmem>>, vector<1x64x128xbf16>
    %40 = vector.shape_cast %39 : vector<1x64x128xbf16> to vector<64x128xbf16>
    %cst_44 = arith.constant dense<0.000000e+00> : vector<16x128xf32>
    %41 = tpu.matmul %38, %40, %cst_44 {dimension_numbers = #tpu.dot_dimension_numbers<[1], [0], [0], [1], [0, 0, 1, 1], [], []>} : vector<16x64xbf16>, vector<64x128xbf16>, vector<16x128xf32> -> vector<16x128xf32>
    %42 = arith.addf %37, %41 : vector<16x128xf32>
    %c2_45 = arith.constant 2 : index
    %c8_46 = arith.constant 8 : index
    %43 = vector.load %arg0[%c2_45, %c8_46] : memref<36x72xbf16, #tpu.memory_space<vmem>>, vector<16x64xbf16>
    %c8_47 = arith.constant 8 : index
    %c0_48 = arith.constant 0 : index
    %c0_49 = arith.constant 0 : index
    %44 = vector.load %arg1[%c8_47, %c0_48, %c0_49] : memref<9x64x128xbf16, #tpu.memory_space<vmem>>, vector<1x64x128xbf16>
    %45 = vector.shape_cast %44 : vector<1x64x128xbf16> to vector<64x128xbf16>
    %cst_50 = arith.constant dense<0.000000e+00> : vector<16x128xf32>
    %46 = tpu.matmul %43, %45, %cst_50 {dimension_numbers = #tpu.dot_dimension_numbers<[1], [0], [0], [1], [0, 0, 1, 1], [], []>} : vector<16x64xbf16>, vector<64x128xbf16>, vector<16x128xf32> -> vector<16x128xf32>
    %47 = arith.addf %42, %46 : vector<16x128xf32>
    %c18 = arith.constant 18 : index
    %c0_51 = arith.constant 0 : index
    %48 = vector.load %arg0[%c18, %c0_51] : memref<36x72xbf16, #tpu.memory_space<vmem>>, vector<16x64xbf16>
    %c0_52 = arith.constant 0 : index
    %c0_53 = arith.constant 0 : index
    %c0_54 = arith.constant 0 : index
    %49 = vector.load %arg1[%c0_52, %c0_53, %c0_54] : memref<9x64x128xbf16, #tpu.memory_space<vmem>>, vector<1x64x128xbf16>
    %50 = vector.shape_cast %49 : vector<1x64x128xbf16> to vector<64x128xbf16>
    %cst_55 = arith.constant dense<0.000000e+00> : vector<16x128xf32>
    %51 = tpu.matmul %48, %50, %cst_55 {dimension_numbers = #tpu.dot_dimension_numbers<[1], [0], [0], [1], [0, 0, 1, 1], [], []>} : vector<16x64xbf16>, vector<64x128xbf16>, vector<16x128xf32> -> vector<16x128xf32>
    %c18_56 = arith.constant 18 : index
    %c4_57 = arith.constant 4 : index
    %52 = vector.load %arg0[%c18_56, %c4_57] : memref<36x72xbf16, #tpu.memory_space<vmem>>, vector<16x64xbf16>
    %c1_58 = arith.constant 1 : index
    %c0_59 = arith.constant 0 : index
    %c0_60 = arith.constant 0 : index
    %53 = vector.load %arg1[%c1_58, %c0_59, %c0_60] : memref<9x64x128xbf16, #tpu.memory_space<vmem>>, vector<1x64x128xbf16>
    %54 = vector.shape_cast %53 : vector<1x64x128xbf16> to vector<64x128xbf16>
    %cst_61 = arith.constant dense<0.000000e+00> : vector<16x128xf32>
    %55 = tpu.matmul %52, %54, %cst_61 {dimension_numbers = #tpu.dot_dimension_numbers<[1], [0], [0], [1], [0, 0, 1, 1], [], []>} : vector<16x64xbf16>, vector<64x128xbf16>, vector<16x128xf32> -> vector<16x128xf32>
    %56 = arith.addf %51, %55 : vector<16x128xf32>
    %c18_62 = arith.constant 18 : index
    %c8_63 = arith.constant 8 : index
    %57 = vector.load %arg0[%c18_62, %c8_63] : memref<36x72xbf16, #tpu.memory_space<vmem>>, vector<16x64xbf16>
    %c2_64 = arith.constant 2 : index
    %c0_65 = arith.constant 0 : index
    %c0_66 = arith.constant 0 : index
    %58 = vector.load %arg1[%c2_64, %c0_65, %c0_66] : memref<9x64x128xbf16, #tpu.memory_space<vmem>>, vector<1x64x128xbf16>
    %59 = vector.shape_cast %58 : vector<1x64x128xbf16> to vector<64x128xbf16>
    %cst_67 = arith.constant dense<0.000000e+00> : vector<16x128xf32>
    %60 = tpu.matmul %57, %59, %cst_67 {dimension_numbers = #tpu.dot_dimension_numbers<[1], [0], [0], [1], [0, 0, 1, 1], [], []>} : vector<16x64xbf16>, vector<64x128xbf16>, vector<16x128xf32> -> vector<16x128xf32>
    %61 = arith.addf %56, %60 : vector<16x128xf32>
    %c19 = arith.constant 19 : index
    %c0_68 = arith.constant 0 : index
    %62 = vector.load %arg0[%c19, %c0_68] : memref<36x72xbf16, #tpu.memory_space<vmem>>, vector<16x64xbf16>
    %c3_69 = arith.constant 3 : index
    %c0_70 = arith.constant 0 : index
    %c0_71 = arith.constant 0 : index
    %63 = vector.load %arg1[%c3_69, %c0_70, %c0_71] : memref<9x64x128xbf16, #tpu.memory_space<vmem>>, vector<1x64x128xbf16>
    %64 = vector.shape_cast %63 : vector<1x64x128xbf16> to vector<64x128xbf16>
    %cst_72 = arith.constant dense<0.000000e+00> : vector<16x128xf32>
    %65 = tpu.matmul %62, %64, %cst_72 {dimension_numbers = #tpu.dot_dimension_numbers<[1], [0], [0], [1], [0, 0, 1, 1], [], []>} : vector<16x64xbf16>, vector<64x128xbf16>, vector<16x128xf32> -> vector<16x128xf32>
    %66 = arith.addf %61, %65 : vector<16x128xf32>
    %c19_73 = arith.constant 19 : index
    %c4_74 = arith.constant 4 : index
    %67 = vector.load %arg0[%c19_73, %c4_74] : memref<36x72xbf16, #tpu.memory_space<vmem>>, vector<16x64xbf16>
    %c4_75 = arith.constant 4 : index
    %c0_76 = arith.constant 0 : index
    %c0_77 = arith.constant 0 : index
    %68 = vector.load %arg1[%c4_75, %c0_76, %c0_77] : memref<9x64x128xbf16, #tpu.memory_space<vmem>>, vector<1x64x128xbf16>
    %69 = vector.shape_cast %68 : vector<1x64x128xbf16> to vector<64x128xbf16>
    %cst_78 = arith.constant dense<0.000000e+00> : vector<16x128xf32>
    %70 = tpu.matmul %67, %69, %cst_78 {dimension_numbers = #tpu.dot_dimension_numbers<[1], [0], [0], [1], [0, 0, 1, 1], [], []>} : vector<16x64xbf16>, vector<64x128xbf16>, vector<16x128xf32> -> vector<16x128xf32>
    %71 = arith.addf %66, %70 : vector<16x128xf32>
    %c19_79 = arith.constant 19 : index
    %c8_80 = arith.constant 8 : index
    %72 = vector.load %arg0[%c19_79, %c8_80] : memref<36x72xbf16, #tpu.memory_space<vmem>>, vector<16x64xbf16>
    %c5_81 = arith.constant 5 : index
    %c0_82 = arith.constant 0 : index
    %c0_83 = arith.constant 0 : index
    %73 = vector.load %arg1[%c5_81, %c0_82, %c0_83] : memref<9x64x128xbf16, #tpu.memory_space<vmem>>, vector<1x64x128xbf16>
    %74 = vector.shape_cast %73 : vector<1x64x128xbf16> to vector<64x128xbf16>
    %cst_84 = arith.constant dense<0.000000e+00> : vector<16x128xf32>
    %75 = tpu.matmul %72, %74, %cst_84 {dimension_numbers = #tpu.dot_dimension_numbers<[1], [0], [0], [1], [0, 0, 1, 1], [], []>} : vector<16x64xbf16>, vector<64x128xbf16>, vector<16x128xf32> -> vector<16x128xf32>
    %76 = arith.addf %71, %75 : vector<16x128xf32>
    %c20 = arith.constant 20 : index
    %c0_85 = arith.constant 0 : index
    %77 = vector.load %arg0[%c20, %c0_85] : memref<36x72xbf16, #tpu.memory_space<vmem>>, vector<16x64xbf16>
    %c6_86 = arith.constant 6 : index
    %c0_87 = arith.constant 0 : index
    %c0_88 = arith.constant 0 : index
    %78 = vector.load %arg1[%c6_86, %c0_87, %c0_88] : memref<9x64x128xbf16, #tpu.memory_space<vmem>>, vector<1x64x128xbf16>
    %79 = vector.shape_cast %78 : vector<1x64x128xbf16> to vector<64x128xbf16>
    %cst_89 = arith.constant dense<0.000000e+00> : vector<16x128xf32>
    %80 = tpu.matmul %77, %79, %cst_89 {dimension_numbers = #tpu.dot_dimension_numbers<[1], [0], [0], [1], [0, 0, 1, 1], [], []>} : vector<16x64xbf16>, vector<64x128xbf16>, vector<16x128xf32> -> vector<16x128xf32>
    %81 = arith.addf %76, %80 : vector<16x128xf32>
    %c20_90 = arith.constant 20 : index
    %c4_91 = arith.constant 4 : index
    %82 = vector.load %arg0[%c20_90, %c4_91] : memref<36x72xbf16, #tpu.memory_space<vmem>>, vector<16x64xbf16>
    %c7_92 = arith.constant 7 : index
    %c0_93 = arith.constant 0 : index
    %c0_94 = arith.constant 0 : index
    %83 = vector.load %arg1[%c7_92, %c0_93, %c0_94] : memref<9x64x128xbf16, #tpu.memory_space<vmem>>, vector<1x64x128xbf16>
    %84 = vector.shape_cast %83 : vector<1x64x128xbf16> to vector<64x128xbf16>
    %cst_95 = arith.constant dense<0.000000e+00> : vector<16x128xf32>
    %85 = tpu.matmul %82, %84, %cst_95 {dimension_numbers = #tpu.dot_dimension_numbers<[1], [0], [0], [1], [0, 0, 1, 1], [], []>} : vector<16x64xbf16>, vector<64x128xbf16>, vector<16x128xf32> -> vector<16x128xf32>
    %86 = arith.addf %81, %85 : vector<16x128xf32>
    %c20_96 = arith.constant 20 : index
    %c8_97 = arith.constant 8 : index
    %87 = vector.load %arg0[%c20_96, %c8_97] : memref<36x72xbf16, #tpu.memory_space<vmem>>, vector<16x64xbf16>
    %c8_98 = arith.constant 8 : index
    %c0_99 = arith.constant 0 : index
    %c0_100 = arith.constant 0 : index
    %88 = vector.load %arg1[%c8_98, %c0_99, %c0_100] : memref<9x64x128xbf16, #tpu.memory_space<vmem>>, vector<1x64x128xbf16>
    %89 = vector.shape_cast %88 : vector<1x64x128xbf16> to vector<64x128xbf16>
    %cst_101 = arith.constant dense<0.000000e+00> : vector<16x128xf32>
    %90 = tpu.matmul %87, %89, %cst_101 {dimension_numbers = #tpu.dot_dimension_numbers<[1], [0], [0], [1], [0, 0, 1, 1], [], []>} : vector<16x64xbf16>, vector<64x128xbf16>, vector<16x128xf32> -> vector<16x128xf32>
    %91 = arith.addf %86, %90 : vector<16x128xf32>
    %92 = tpu.concatenate %47, %91 in 0 : vector<16x128xf32>, vector<16x128xf32> -> vector<32x128xf32>
    %cst_102 = arith.constant dense<0.000000e+00> : vector<128xf32>
    %93 = vector.multi_reduction <add>, %92, %cst_102 [0] : vector<32x128xf32> to vector<128xf32>
    %94 = vector.shape_cast %93 : vector<128xf32> to vector<1x128xf32>
    %cst_103 = arith.constant dense<0.000000e+00> : vector<1x8xf32>
    %95 = tpu.matmul %94, %0, %cst_103 {dimension_numbers = #tpu.dot_dimension_numbers<[1], [0], [0], [1], [0, 0, 1, 1], [], []>} : vector<1x128xf32>, vector<128x8xf32>, vector<1x8xf32> -> vector<1x8xf32>
    %96 = arith.mulf %92, %92 : vector<32x128xf32>
    %cst_104 = arith.constant dense<0.000000e+00> : vector<128xf32>
    %97 = vector.multi_reduction <add>, %96, %cst_104 [0] : vector<32x128xf32> to vector<128xf32>
    %98 = vector.shape_cast %97 : vector<128xf32> to vector<1x128xf32>
    %cst_105 = arith.constant dense<0.000000e+00> : vector<1x8xf32>
    %99 = tpu.matmul %98, %0, %cst_105 {dimension_numbers = #tpu.dot_dimension_numbers<[1], [0], [0], [1], [0, 0, 1, 1], [], []>} : vector<1x128xf32>, vector<128x8xf32>, vector<1x8xf32> -> vector<1x8xf32>
    %cst_106 = arith.constant 0.001953125 : f32
    %100 = vector.broadcast %cst_106 : f32 to vector<1x8xf32>
    %101 = arith.mulf %95, %100 : vector<1x8xf32>
    %cst_107 = arith.constant 0.001953125 : f32
    %102 = vector.broadcast %cst_107 : f32 to vector<1x8xf32>
    %103 = arith.mulf %99, %102 : vector<1x8xf32>
    %104 = arith.mulf %101, %101 : vector<1x8xf32>
    %105 = arith.subf %103, %104 : vector<1x8xf32>
    %c0_108 = arith.constant 0 : index
    %c0_109 = arith.constant 0 : index
    %106 = vector.load %arg4[%c0_108, %c0_109] : memref<1x8xf32, #tpu.memory_space<vmem>>, vector<1x8xf32>
    %cst_110 = arith.constant 9.99999974E-6 : f32
    %107 = vector.broadcast %cst_110 : f32 to vector<1x8xf32>
    %108 = arith.addf %105, %107 : vector<1x8xf32>
    %109 = math.rsqrt %108 : vector<1x8xf32>
    %110 = arith.mulf %106, %109 : vector<1x8xf32>
    %c0_111 = arith.constant 0 : index
    %c0_112 = arith.constant 0 : index
    %111 = vector.load %arg5[%c0_111, %c0_112] : memref<1x8xf32, #tpu.memory_space<vmem>>, vector<1x8xf32>
    %112 = arith.mulf %101, %110 : vector<1x8xf32>
    %113 = arith.subf %111, %112 : vector<1x8xf32>
    %cst_113 = arith.constant dense<0.000000e+00> : vector<1x128xf32>
    %114 = tpu.matmul %110, %1, %cst_113 {dimension_numbers = #tpu.dot_dimension_numbers<[1], [0], [0], [1], [0, 0, 1, 1], [], []>} : vector<1x8xf32>, vector<8x128xf32>, vector<1x128xf32> -> vector<1x128xf32>
    %cst_114 = arith.constant dense<0.000000e+00> : vector<1x128xf32>
    %115 = tpu.matmul %113, %1, %cst_114 {dimension_numbers = #tpu.dot_dimension_numbers<[1], [0], [0], [1], [0, 0, 1, 1], [], []>} : vector<1x8xf32>, vector<8x128xf32>, vector<1x128xf32> -> vector<1x128xf32>
    %116 = vector.broadcast %114 : vector<1x128xf32> to vector<32x128xf32>
    %117 = arith.mulf %92, %116 : vector<32x128xf32>
    %118 = vector.broadcast %115 : vector<1x128xf32> to vector<32x128xf32>
    %119 = arith.addf %117, %118 : vector<32x128xf32>
    %cst_115 = arith.constant 0.000000e+00 : f32
    %120 = vector.broadcast %cst_115 : f32 to vector<32x128xf32>
    %121 = arith.maximumf %119, %120 : vector<32x128xf32>
    %122 = vector.extract_strided_slice %121 {offsets = [0, 0], sizes = [16, 128], strides = [1, 1]} : vector<32x128xf32> to vector<16x128xf32>
    %c1_116 = arith.constant 1 : index
    %c8_117 = arith.constant 8 : index
    %123 = vector.load %arg13[%c1_116, %c8_117] : memref<36x144xf32, #tpu.memory_space<vmem>>, vector<16x128xf32>
    tpu.vector_store %arg13[%c1_116, %c8_117], %122 {strides = array<i32>} : memref<36x144xf32, #tpu.memory_space<vmem>>, vector<16x128xf32>,
    %124 = vector.extract_strided_slice %121 {offsets = [16, 0], sizes = [16, 128], strides = [1, 1]} : vector<32x128xf32> to vector<16x128xf32>
    %c19_118 = arith.constant 19 : index
    %c8_119 = arith.constant 8 : index
    %125 = vector.load %arg13[%c19_118, %c8_119] : memref<36x144xf32, #tpu.memory_space<vmem>>, vector<16x128xf32>
    tpu.vector_store %arg13[%c19_118, %c8_119], %124 {strides = array<i32>} : memref<36x144xf32, #tpu.memory_space<vmem>>, vector<16x128xf32>,
    %c0_120 = arith.constant 0 : index
    %c0_121 = arith.constant 0 : index
    %126 = vector.load %arg13[%c0_120, %c0_121] : memref<36x144xf32, #tpu.memory_space<vmem>>, vector<16x128xf32>
    %127 = arith.truncf %126 : vector<16x128xf32> to vector<16x128xbf16>
    %c0_122 = arith.constant 0 : index
    %c0_123 = arith.constant 0 : index
    %c0_124 = arith.constant 0 : index
    %128 = vector.load %arg2[%c0_122, %c0_123, %c0_124] : memref<9x128x128xbf16, #tpu.memory_space<vmem>>, vector<1x128x128xbf16>
    %129 = vector.shape_cast %128 : vector<1x128x128xbf16> to vector<128x128xbf16>
    %cst_125 = arith.constant dense<0.000000e+00> : vector<16x128xf32>
    %130 = tpu.matmul %127, %129, %cst_125 {dimension_numbers = #tpu.dot_dimension_numbers<[1], [0], [0], [1], [0, 0, 1, 1], [], []>} : vector<16x128xbf16>, vector<128x128xbf16>, vector<16x128xf32> -> vector<16x128xf32>
    %c0_126 = arith.constant 0 : index
    %c8_127 = arith.constant 8 : index
    %131 = vector.load %arg13[%c0_126, %c8_127] : memref<36x144xf32, #tpu.memory_space<vmem>>, vector<16x128xf32>
    %132 = arith.truncf %131 : vector<16x128xf32> to vector<16x128xbf16>
    %c1_128 = arith.constant 1 : index
    %c0_129 = arith.constant 0 : index
    %c0_130 = arith.constant 0 : index
    %133 = vector.load %arg2[%c1_128, %c0_129, %c0_130] : memref<9x128x128xbf16, #tpu.memory_space<vmem>>, vector<1x128x128xbf16>
    %134 = vector.shape_cast %133 : vector<1x128x128xbf16> to vector<128x128xbf16>
    %cst_131 = arith.constant dense<0.000000e+00> : vector<16x128xf32>
    %135 = tpu.matmul %132, %134, %cst_131 {dimension_numbers = #tpu.dot_dimension_numbers<[1], [0], [0], [1], [0, 0, 1, 1], [], []>} : vector<16x128xbf16>, vector<128x128xbf16>, vector<16x128xf32> -> vector<16x128xf32>
    %136 = arith.addf %130, %135 : vector<16x128xf32>
    %c0_132 = arith.constant 0 : index
    %c16 = arith.constant 16 : index
    %137 = vector.load %arg13[%c0_132, %c16] : memref<36x144xf32, #tpu.memory_space<vmem>>, vector<16x128xf32>
    %138 = arith.truncf %137 : vector<16x128xf32> to vector<16x128xbf16>
    %c2_133 = arith.constant 2 : index
    %c0_134 = arith.constant 0 : index
    %c0_135 = arith.constant 0 : index
    %139 = vector.load %arg2[%c2_133, %c0_134, %c0_135] : memref<9x128x128xbf16, #tpu.memory_space<vmem>>, vector<1x128x128xbf16>
    %140 = vector.shape_cast %139 : vector<1x128x128xbf16> to vector<128x128xbf16>
    %cst_136 = arith.constant dense<0.000000e+00> : vector<16x128xf32>
    %141 = tpu.matmul %138, %140, %cst_136 {dimension_numbers = #tpu.dot_dimension_numbers<[1], [0], [0], [1], [0, 0, 1, 1], [], []>} : vector<16x128xbf16>, vector<128x128xbf16>, vector<16x128xf32> -> vector<16x128xf32>
    %142 = arith.addf %136, %141 : vector<16x128xf32>
    %c1_137 = arith.constant 1 : index
    %c0_138 = arith.constant 0 : index
    %143 = vector.load %arg13[%c1_137, %c0_138] : memref<36x144xf32, #tpu.memory_space<vmem>>, vector<16x128xf32>
    %144 = arith.truncf %143 : vector<16x128xf32> to vector<16x128xbf16>
    %c3_139 = arith.constant 3 : index
    %c0_140 = arith.constant 0 : index
    %c0_141 = arith.constant 0 : index
    %145 = vector.load %arg2[%c3_139, %c0_140, %c0_141] : memref<9x128x128xbf16, #tpu.memory_space<vmem>>, vector<1x128x128xbf16>
    %146 = vector.shape_cast %145 : vector<1x128x128xbf16> to vector<128x128xbf16>
    %cst_142 = arith.constant dense<0.000000e+00> : vector<16x128xf32>
    %147 = tpu.matmul %144, %146, %cst_142 {dimension_numbers = #tpu.dot_dimension_numbers<[1], [0], [0], [1], [0, 0, 1, 1], [], []>} : vector<16x128xbf16>, vector<128x128xbf16>, vector<16x128xf32> -> vector<16x128xf32>
    %148 = arith.addf %142, %147 : vector<16x128xf32>
    %c1_143 = arith.constant 1 : index
    %c8_144 = arith.constant 8 : index
    %149 = vector.load %arg13[%c1_143, %c8_144] : memref<36x144xf32, #tpu.memory_space<vmem>>, vector<16x128xf32>
    %150 = arith.truncf %149 : vector<16x128xf32> to vector<16x128xbf16>
    %c4_145 = arith.constant 4 : index
    %c0_146 = arith.constant 0 : index
    %c0_147 = arith.constant 0 : index
    %151 = vector.load %arg2[%c4_145, %c0_146, %c0_147] : memref<9x128x128xbf16, #tpu.memory_space<vmem>>, vector<1x128x128xbf16>
    %152 = vector.shape_cast %151 : vector<1x128x128xbf16> to vector<128x128xbf16>
    %cst_148 = arith.constant dense<0.000000e+00> : vector<16x128xf32>
    %153 = tpu.matmul %150, %152, %cst_148 {dimension_numbers = #tpu.dot_dimension_numbers<[1], [0], [0], [1], [0, 0, 1, 1], [], []>} : vector<16x128xbf16>, vector<128x128xbf16>, vector<16x128xf32> -> vector<16x128xf32>
    %154 = arith.addf %148, %153 : vector<16x128xf32>
    %c1_149 = arith.constant 1 : index
    %c16_150 = arith.constant 16 : index
    %155 = vector.load %arg13[%c1_149, %c16_150] : memref<36x144xf32, #tpu.memory_space<vmem>>, vector<16x128xf32>
    %156 = arith.truncf %155 : vector<16x128xf32> to vector<16x128xbf16>
    %c5_151 = arith.constant 5 : index
    %c0_152 = arith.constant 0 : index
    %c0_153 = arith.constant 0 : index
    %157 = vector.load %arg2[%c5_151, %c0_152, %c0_153] : memref<9x128x128xbf16, #tpu.memory_space<vmem>>, vector<1x128x128xbf16>
    %158 = vector.shape_cast %157 : vector<1x128x128xbf16> to vector<128x128xbf16>
    %cst_154 = arith.constant dense<0.000000e+00> : vector<16x128xf32>
    %159 = tpu.matmul %156, %158, %cst_154 {dimension_numbers = #tpu.dot_dimension_numbers<[1], [0], [0], [1], [0, 0, 1, 1], [], []>} : vector<16x128xbf16>, vector<128x128xbf16>, vector<16x128xf32> -> vector<16x128xf32>
    %160 = arith.addf %154, %159 : vector<16x128xf32>
    %c2_155 = arith.constant 2 : index
    %c0_156 = arith.constant 0 : index
    %161 = vector.load %arg13[%c2_155, %c0_156] : memref<36x144xf32, #tpu.memory_space<vmem>>, vector<16x128xf32>
    %162 = arith.truncf %161 : vector<16x128xf32> to vector<16x128xbf16>
    %c6_157 = arith.constant 6 : index
    %c0_158 = arith.constant 0 : index
    %c0_159 = arith.constant 0 : index
    %163 = vector.load %arg2[%c6_157, %c0_158, %c0_159] : memref<9x128x128xbf16, #tpu.memory_space<vmem>>, vector<1x128x128xbf16>
    %164 = vector.shape_cast %163 : vector<1x128x128xbf16> to vector<128x128xbf16>
    %cst_160 = arith.constant dense<0.000000e+00> : vector<16x128xf32>
    %165 = tpu.matmul %162, %164, %cst_160 {dimension_numbers = #tpu.dot_dimension_numbers<[1], [0], [0], [1], [0, 0, 1, 1], [], []>} : vector<16x128xbf16>, vector<128x128xbf16>, vector<16x128xf32> -> vector<16x128xf32>
    %166 = arith.addf %160, %165 : vector<16x128xf32>
    %c2_161 = arith.constant 2 : index
    %c8_162 = arith.constant 8 : index
    %167 = vector.load %arg13[%c2_161, %c8_162] : memref<36x144xf32, #tpu.memory_space<vmem>>, vector<16x128xf32>
    %168 = arith.truncf %167 : vector<16x128xf32> to vector<16x128xbf16>
    %c7_163 = arith.constant 7 : index
    %c0_164 = arith.constant 0 : index
    %c0_165 = arith.constant 0 : index
    %169 = vector.load %arg2[%c7_163, %c0_164, %c0_165] : memref<9x128x128xbf16, #tpu.memory_space<vmem>>, vector<1x128x128xbf16>
    %170 = vector.shape_cast %169 : vector<1x128x128xbf16> to vector<128x128xbf16>
    %cst_166 = arith.constant dense<0.000000e+00> : vector<16x128xf32>
    %171 = tpu.matmul %168, %170, %cst_166 {dimension_numbers = #tpu.dot_dimension_numbers<[1], [0], [0], [1], [0, 0, 1, 1], [], []>} : vector<16x128xbf16>, vector<128x128xbf16>, vector<16x128xf32> -> vector<16x128xf32>
    %172 = arith.addf %166, %171 : vector<16x128xf32>
    %c2_167 = arith.constant 2 : index
    %c16_168 = arith.constant 16 : index
    %173 = vector.load %arg13[%c2_167, %c16_168] : memref<36x144xf32, #tpu.memory_space<vmem>>, vector<16x128xf32>
    %174 = arith.truncf %173 : vector<16x128xf32> to vector<16x128xbf16>
    %c8_169 = arith.constant 8 : index
    %c0_170 = arith.constant 0 : index
    %c0_171 = arith.constant 0 : index
    %175 = vector.load %arg2[%c8_169, %c0_170, %c0_171] : memref<9x128x128xbf16, #tpu.memory_space<vmem>>, vector<1x128x128xbf16>
    %176 = vector.shape_cast %175 : vector<1x128x128xbf16> to vector<128x128xbf16>
    %cst_172 = arith.constant dense<0.000000e+00> : vector<16x128xf32>
    %177 = tpu.matmul %174, %176, %cst_172 {dimension_numbers = #tpu.dot_dimension_numbers<[1], [0], [0], [1], [0, 0, 1, 1], [], []>} : vector<16x128xbf16>, vector<128x128xbf16>, vector<16x128xf32> -> vector<16x128xf32>
    %178 = arith.addf %172, %177 : vector<16x128xf32>
    %c18_173 = arith.constant 18 : index
    %c0_174 = arith.constant 0 : index
    %179 = vector.load %arg13[%c18_173, %c0_174] : memref<36x144xf32, #tpu.memory_space<vmem>>, vector<16x128xf32>
    %180 = arith.truncf %179 : vector<16x128xf32> to vector<16x128xbf16>
    %c0_175 = arith.constant 0 : index
    %c0_176 = arith.constant 0 : index
    %c0_177 = arith.constant 0 : index
    %181 = vector.load %arg2[%c0_175, %c0_176, %c0_177] : memref<9x128x128xbf16, #tpu.memory_space<vmem>>, vector<1x128x128xbf16>
    %182 = vector.shape_cast %181 : vector<1x128x128xbf16> to vector<128x128xbf16>
    %cst_178 = arith.constant dense<0.000000e+00> : vector<16x128xf32>
    %183 = tpu.matmul %180, %182, %cst_178 {dimension_numbers = #tpu.dot_dimension_numbers<[1], [0], [0], [1], [0, 0, 1, 1], [], []>} : vector<16x128xbf16>, vector<128x128xbf16>, vector<16x128xf32> -> vector<16x128xf32>
    %c18_179 = arith.constant 18 : index
    %c8_180 = arith.constant 8 : index
    %184 = vector.load %arg13[%c18_179, %c8_180] : memref<36x144xf32, #tpu.memory_space<vmem>>, vector<16x128xf32>
    %185 = arith.truncf %184 : vector<16x128xf32> to vector<16x128xbf16>
    %c1_181 = arith.constant 1 : index
    %c0_182 = arith.constant 0 : index
    %c0_183 = arith.constant 0 : index
    %186 = vector.load %arg2[%c1_181, %c0_182, %c0_183] : memref<9x128x128xbf16, #tpu.memory_space<vmem>>, vector<1x128x128xbf16>
    %187 = vector.shape_cast %186 : vector<1x128x128xbf16> to vector<128x128xbf16>
    %cst_184 = arith.constant dense<0.000000e+00> : vector<16x128xf32>
    %188 = tpu.matmul %185, %187, %cst_184 {dimension_numbers = #tpu.dot_dimension_numbers<[1], [0], [0], [1], [0, 0, 1, 1], [], []>} : vector<16x128xbf16>, vector<128x128xbf16>, vector<16x128xf32> -> vector<16x128xf32>
    %189 = arith.addf %183, %188 : vector<16x128xf32>
    %c18_185 = arith.constant 18 : index
    %c16_186 = arith.constant 16 : index
    %190 = vector.load %arg13[%c18_185, %c16_186] : memref<36x144xf32, #tpu.memory_space<vmem>>, vector<16x128xf32>
    %191 = arith.truncf %190 : vector<16x128xf32> to vector<16x128xbf16>
    %c2_187 = arith.constant 2 : index
    %c0_188 = arith.constant 0 : index
    %c0_189 = arith.constant 0 : index
    %192 = vector.load %arg2[%c2_187, %c0_188, %c0_189] : memref<9x128x128xbf16, #tpu.memory_space<vmem>>, vector<1x128x128xbf16>
    %193 = vector.shape_cast %192 : vector<1x128x128xbf16> to vector<128x128xbf16>
    %cst_190 = arith.constant dense<0.000000e+00> : vector<16x128xf32>
    %194 = tpu.matmul %191, %193, %cst_190 {dimension_numbers = #tpu.dot_dimension_numbers<[1], [0], [0], [1], [0, 0, 1, 1], [], []>} : vector<16x128xbf16>, vector<128x128xbf16>, vector<16x128xf32> -> vector<16x128xf32>
    %195 = arith.addf %189, %194 : vector<16x128xf32>
    %c19_191 = arith.constant 19 : index
    %c0_192 = arith.constant 0 : index
    %196 = vector.load %arg13[%c19_191, %c0_192] : memref<36x144xf32, #tpu.memory_space<vmem>>, vector<16x128xf32>
    %197 = arith.truncf %196 : vector<16x128xf32> to vector<16x128xbf16>
    %c3_193 = arith.constant 3 : index
    %c0_194 = arith.constant 0 : index
    %c0_195 = arith.constant 0 : index
    %198 = vector.load %arg2[%c3_193, %c0_194, %c0_195] : memref<9x128x128xbf16, #tpu.memory_space<vmem>>, vector<1x128x128xbf16>
    %199 = vector.shape_cast %198 : vector<1x128x128xbf16> to vector<128x128xbf16>
    %cst_196 = arith.constant dense<0.000000e+00> : vector<16x128xf32>
    %200 = tpu.matmul %197, %199, %cst_196 {dimension_numbers = #tpu.dot_dimension_numbers<[1], [0], [0], [1], [0, 0, 1, 1], [], []>} : vector<16x128xbf16>, vector<128x128xbf16>, vector<16x128xf32> -> vector<16x128xf32>
    %201 = arith.addf %195, %200 : vector<16x128xf32>
    %c19_197 = arith.constant 19 : index
    %c8_198 = arith.constant 8 : index
    %202 = vector.load %arg13[%c19_197, %c8_198] : memref<36x144xf32, #tpu.memory_space<vmem>>, vector<16x128xf32>
    %203 = arith.truncf %202 : vector<16x128xf32> to vector<16x128xbf16>
    %c4_199 = arith.constant 4 : index
    %c0_200 = arith.constant 0 : index
    %c0_201 = arith.constant 0 : index
    %204 = vector.load %arg2[%c4_199, %c0_200, %c0_201] : memref<9x128x128xbf16, #tpu.memory_space<vmem>>, vector<1x128x128xbf16>
    %205 = vector.shape_cast %204 : vector<1x128x128xbf16> to vector<128x128xbf16>
    %cst_202 = arith.constant dense<0.000000e+00> : vector<16x128xf32>
    %206 = tpu.matmul %203, %205, %cst_202 {dimension_numbers = #tpu.dot_dimension_numbers<[1], [0], [0], [1], [0, 0, 1, 1], [], []>} : vector<16x128xbf16>, vector<128x128xbf16>, vector<16x128xf32> -> vector<16x128xf32>
    %207 = arith.addf %201, %206 : vector<16x128xf32>
    %c19_203 = arith.constant 19 : index
    %c16_204 = arith.constant 16 : index
    %208 = vector.load %arg13[%c19_203, %c16_204] : memref<36x144xf32, #tpu.memory_space<vmem>>, vector<16x128xf32>
    %209 = arith.truncf %208 : vector<16x128xf32> to vector<16x128xbf16>
    %c5_205 = arith.constant 5 : index
    %c0_206 = arith.constant 0 : index
    %c0_207 = arith.constant 0 : index
    %210 = vector.load %arg2[%c5_205, %c0_206, %c0_207] : memref<9x128x128xbf16, #tpu.memory_space<vmem>>, vector<1x128x128xbf16>
    %211 = vector.shape_cast %210 : vector<1x128x128xbf16> to vector<128x128xbf16>
    %cst_208 = arith.constant dense<0.000000e+00> : vector<16x128xf32>
    %212 = tpu.matmul %209, %211, %cst_208 {dimension_numbers = #tpu.dot_dimension_numbers<[1], [0], [0], [1], [0, 0, 1, 1], [], []>} : vector<16x128xbf16>, vector<128x128xbf16>, vector<16x128xf32> -> vector<16x128xf32>
    %213 = arith.addf %207, %212 : vector<16x128xf32>
    %c20_209 = arith.constant 20 : index
    %c0_210 = arith.constant 0 : index
    %214 = vector.load %arg13[%c20_209, %c0_210] : memref<36x144xf32, #tpu.memory_space<vmem>>, vector<16x128xf32>
    %215 = arith.truncf %214 : vector<16x128xf32> to vector<16x128xbf16>
    %c6_211 = arith.constant 6 : index
    %c0_212 = arith.constant 0 : index
    %c0_213 = arith.constant 0 : index
    %216 = vector.load %arg2[%c6_211, %c0_212, %c0_213] : memref<9x128x128xbf16, #tpu.memory_space<vmem>>, vector<1x128x128xbf16>
    %217 = vector.shape_cast %216 : vector<1x128x128xbf16> to vector<128x128xbf16>
    %cst_214 = arith.constant dense<0.000000e+00> : vector<16x128xf32>
    %218 = tpu.matmul %215, %217, %cst_214 {dimension_numbers = #tpu.dot_dimension_numbers<[1], [0], [0], [1], [0, 0, 1, 1], [], []>} : vector<16x128xbf16>, vector<128x128xbf16>, vector<16x128xf32> -> vector<16x128xf32>
    %219 = arith.addf %213, %218 : vector<16x128xf32>
    %c20_215 = arith.constant 20 : index
    %c8_216 = arith.constant 8 : index
    %220 = vector.load %arg13[%c20_215, %c8_216] : memref<36x144xf32, #tpu.memory_space<vmem>>, vector<16x128xf32>
    %221 = arith.truncf %220 : vector<16x128xf32> to vector<16x128xbf16>
    %c7_217 = arith.constant 7 : index
    %c0_218 = arith.constant 0 : index
    %c0_219 = arith.constant 0 : index
    %222 = vector.load %arg2[%c7_217, %c0_218, %c0_219] : memref<9x128x128xbf16, #tpu.memory_space<vmem>>, vector<1x128x128xbf16>
    %223 = vector.shape_cast %222 : vector<1x128x128xbf16> to vector<128x128xbf16>
    %cst_220 = arith.constant dense<0.000000e+00> : vector<16x128xf32>
    %224 = tpu.matmul %221, %223, %cst_220 {dimension_numbers = #tpu.dot_dimension_numbers<[1], [0], [0], [1], [0, 0, 1, 1], [], []>} : vector<16x128xbf16>, vector<128x128xbf16>, vector<16x128xf32> -> vector<16x128xf32>
    %225 = arith.addf %219, %224 : vector<16x128xf32>
    %c20_221 = arith.constant 20 : index
    %c16_222 = arith.constant 16 : index
    %226 = vector.load %arg13[%c20_221, %c16_222] : memref<36x144xf32, #tpu.memory_space<vmem>>, vector<16x128xf32>
    %227 = arith.truncf %226 : vector<16x128xf32> to vector<16x128xbf16>
    %c8_223 = arith.constant 8 : index
    %c0_224 = arith.constant 0 : index
    %c0_225 = arith.constant 0 : index
    %228 = vector.load %arg2[%c8_223, %c0_224, %c0_225] : memref<9x128x128xbf16, #tpu.memory_space<vmem>>, vector<1x128x128xbf16>
    %229 = vector.shape_cast %228 : vector<1x128x128xbf16> to vector<128x128xbf16>
    %cst_226 = arith.constant dense<0.000000e+00> : vector<16x128xf32>
    %230 = tpu.matmul %227, %229, %cst_226 {dimension_numbers = #tpu.dot_dimension_numbers<[1], [0], [0], [1], [0, 0, 1, 1], [], []>} : vector<16x128xbf16>, vector<128x128xbf16>, vector<16x128xf32> -> vector<16x128xf32>
    %231 = arith.addf %225, %230 : vector<16x128xf32>
    %232 = tpu.concatenate %178, %231 in 0 : vector<16x128xf32>, vector<16x128xf32> -> vector<32x128xf32>
    %cst_227 = arith.constant dense<0.000000e+00> : vector<128xf32>
    %233 = vector.multi_reduction <add>, %232, %cst_227 [0] : vector<32x128xf32> to vector<128xf32>
    %234 = vector.shape_cast %233 : vector<128xf32> to vector<1x128xf32>
    %cst_228 = arith.constant dense<0.000000e+00> : vector<1x8xf32>
    %235 = tpu.matmul %234, %0, %cst_228 {dimension_numbers = #tpu.dot_dimension_numbers<[1], [0], [0], [1], [0, 0, 1, 1], [], []>} : vector<1x128xf32>, vector<128x8xf32>, vector<1x8xf32> -> vector<1x8xf32>
    %236 = arith.mulf %232, %232 : vector<32x128xf32>
    %cst_229 = arith.constant dense<0.000000e+00> : vector<128xf32>
    %237 = vector.multi_reduction <add>, %236, %cst_229 [0] : vector<32x128xf32> to vector<128xf32>
    %238 = vector.shape_cast %237 : vector<128xf32> to vector<1x128xf32>
    %cst_230 = arith.constant dense<0.000000e+00> : vector<1x8xf32>
    %239 = tpu.matmul %238, %0, %cst_230 {dimension_numbers = #tpu.dot_dimension_numbers<[1], [0], [0], [1], [0, 0, 1, 1], [], []>} : vector<1x128xf32>, vector<128x8xf32>, vector<1x8xf32> -> vector<1x8xf32>
    %cst_231 = arith.constant 0.001953125 : f32
    %240 = vector.broadcast %cst_231 : f32 to vector<1x8xf32>
    %241 = arith.mulf %235, %240 : vector<1x8xf32>
    %cst_232 = arith.constant 0.001953125 : f32
    %242 = vector.broadcast %cst_232 : f32 to vector<1x8xf32>
    %243 = arith.mulf %239, %242 : vector<1x8xf32>
    %244 = arith.mulf %241, %241 : vector<1x8xf32>
    %245 = arith.subf %243, %244 : vector<1x8xf32>
    %c0_233 = arith.constant 0 : index
    %c0_234 = arith.constant 0 : index
    %246 = vector.load %arg6[%c0_233, %c0_234] : memref<1x8xf32, #tpu.memory_space<vmem>>, vector<1x8xf32>
    %cst_235 = arith.constant 9.99999974E-6 : f32
    %247 = vector.broadcast %cst_235 : f32 to vector<1x8xf32>
    %248 = arith.addf %245, %247 : vector<1x8xf32>
    %249 = math.rsqrt %248 : vector<1x8xf32>
    %250 = arith.mulf %246, %249 : vector<1x8xf32>
    %c0_236 = arith.constant 0 : index
    %c0_237 = arith.constant 0 : index
    %251 = vector.load %arg7[%c0_236, %c0_237] : memref<1x8xf32, #tpu.memory_space<vmem>>, vector<1x8xf32>
    %252 = arith.mulf %241, %250 : vector<1x8xf32>
    %253 = arith.subf %251, %252 : vector<1x8xf32>
    %cst_238 = arith.constant dense<0.000000e+00> : vector<1x128xf32>
    %254 = tpu.matmul %250, %1, %cst_238 {dimension_numbers = #tpu.dot_dimension_numbers<[1], [0], [0], [1], [0, 0, 1, 1], [], []>} : vector<1x8xf32>, vector<8x128xf32>, vector<1x128xf32> -> vector<1x128xf32>
    %cst_239 = arith.constant dense<0.000000e+00> : vector<1x128xf32>
    %255 = tpu.matmul %253, %1, %cst_239 {dimension_numbers = #tpu.dot_dimension_numbers<[1], [0], [0], [1], [0, 0, 1, 1], [], []>} : vector<1x8xf32>, vector<8x128xf32>, vector<1x128xf32> -> vector<1x128xf32>
    %256 = vector.broadcast %254 : vector<1x128xf32> to vector<32x128xf32>
    %257 = arith.mulf %232, %256 : vector<32x128xf32>
    %258 = vector.broadcast %255 : vector<1x128xf32> to vector<32x128xf32>
    %259 = arith.addf %257, %258 : vector<32x128xf32>
    %cst_240 = arith.constant 0.000000e+00 : f32
    %260 = vector.broadcast %cst_240 : f32 to vector<32x128xf32>
    %261 = arith.maximumf %259, %260 : vector<32x128xf32>
    %262 = vector.extract_strided_slice %261 {offsets = [0, 0], sizes = [16, 128], strides = [1, 1]} : vector<32x128xf32> to vector<16x128xf32>
    %c1_241 = arith.constant 1 : index
    %c8_242 = arith.constant 8 : index
    %263 = vector.load %arg13[%c1_241, %c8_242] : memref<36x144xf32, #tpu.memory_space<vmem>>, vector<16x128xf32>
    tpu.vector_store %arg13[%c1_241, %c8_242], %262 {strides = array<i32>} : memref<36x144xf32, #tpu.memory_space<vmem>>, vector<16x128xf32>,
    %264 = vector.extract_strided_slice %261 {offsets = [16, 0], sizes = [16, 128], strides = [1, 1]} : vector<32x128xf32> to vector<16x128xf32>
    %c19_243 = arith.constant 19 : index
    %c8_244 = arith.constant 8 : index
    %265 = vector.load %arg13[%c19_243, %c8_244] : memref<36x144xf32, #tpu.memory_space<vmem>>, vector<16x128xf32>
    tpu.vector_store %arg13[%c19_243, %c8_244], %264 {strides = array<i32>} : memref<36x144xf32, #tpu.memory_space<vmem>>, vector<16x128xf32>,
    %c0_245 = arith.constant 0 : index
    %c0_246 = arith.constant 0 : index
    %266 = vector.load %arg13[%c0_245, %c0_246] : memref<36x144xf32, #tpu.memory_space<vmem>>, vector<16x128xf32>
    %267 = arith.truncf %266 : vector<16x128xf32> to vector<16x128xbf16>
    %c0_247 = arith.constant 0 : index
    %c0_248 = arith.constant 0 : index
    %c0_249 = arith.constant 0 : index
    %268 = vector.load %arg3[%c0_247, %c0_248, %c0_249] : memref<9x128x128xbf16, #tpu.memory_space<vmem>>, vector<1x128x128xbf16>
    %269 = vector.shape_cast %268 : vector<1x128x128xbf16> to vector<128x128xbf16>
    %cst_250 = arith.constant dense<0.000000e+00> : vector<16x128xf32>
    %270 = tpu.matmul %267, %269, %cst_250 {dimension_numbers = #tpu.dot_dimension_numbers<[1], [0], [0], [1], [0, 0, 1, 1], [], []>} : vector<16x128xbf16>, vector<128x128xbf16>, vector<16x128xf32> -> vector<16x128xf32>
    %c0_251 = arith.constant 0 : index
    %c8_252 = arith.constant 8 : index
    %271 = vector.load %arg13[%c0_251, %c8_252] : memref<36x144xf32, #tpu.memory_space<vmem>>, vector<16x128xf32>
    %272 = arith.truncf %271 : vector<16x128xf32> to vector<16x128xbf16>
    %c1_253 = arith.constant 1 : index
    %c0_254 = arith.constant 0 : index
    %c0_255 = arith.constant 0 : index
    %273 = vector.load %arg3[%c1_253, %c0_254, %c0_255] : memref<9x128x128xbf16, #tpu.memory_space<vmem>>, vector<1x128x128xbf16>
    %274 = vector.shape_cast %273 : vector<1x128x128xbf16> to vector<128x128xbf16>
    %cst_256 = arith.constant dense<0.000000e+00> : vector<16x128xf32>
    %275 = tpu.matmul %272, %274, %cst_256 {dimension_numbers = #tpu.dot_dimension_numbers<[1], [0], [0], [1], [0, 0, 1, 1], [], []>} : vector<16x128xbf16>, vector<128x128xbf16>, vector<16x128xf32> -> vector<16x128xf32>
    %276 = arith.addf %270, %275 : vector<16x128xf32>
    %c0_257 = arith.constant 0 : index
    %c16_258 = arith.constant 16 : index
    %277 = vector.load %arg13[%c0_257, %c16_258] : memref<36x144xf32, #tpu.memory_space<vmem>>, vector<16x128xf32>
    %278 = arith.truncf %277 : vector<16x128xf32> to vector<16x128xbf16>
    %c2_259 = arith.constant 2 : index
    %c0_260 = arith.constant 0 : index
    %c0_261 = arith.constant 0 : index
    %279 = vector.load %arg3[%c2_259, %c0_260, %c0_261] : memref<9x128x128xbf16, #tpu.memory_space<vmem>>, vector<1x128x128xbf16>
    %280 = vector.shape_cast %279 : vector<1x128x128xbf16> to vector<128x128xbf16>
    %cst_262 = arith.constant dense<0.000000e+00> : vector<16x128xf32>
    %281 = tpu.matmul %278, %280, %cst_262 {dimension_numbers = #tpu.dot_dimension_numbers<[1], [0], [0], [1], [0, 0, 1, 1], [], []>} : vector<16x128xbf16>, vector<128x128xbf16>, vector<16x128xf32> -> vector<16x128xf32>
    %282 = arith.addf %276, %281 : vector<16x128xf32>
    %c1_263 = arith.constant 1 : index
    %c0_264 = arith.constant 0 : index
    %283 = vector.load %arg13[%c1_263, %c0_264] : memref<36x144xf32, #tpu.memory_space<vmem>>, vector<16x128xf32>
    %284 = arith.truncf %283 : vector<16x128xf32> to vector<16x128xbf16>
    %c3_265 = arith.constant 3 : index
    %c0_266 = arith.constant 0 : index
    %c0_267 = arith.constant 0 : index
    %285 = vector.load %arg3[%c3_265, %c0_266, %c0_267] : memref<9x128x128xbf16, #tpu.memory_space<vmem>>, vector<1x128x128xbf16>
    %286 = vector.shape_cast %285 : vector<1x128x128xbf16> to vector<128x128xbf16>
    %cst_268 = arith.constant dense<0.000000e+00> : vector<16x128xf32>
    %287 = tpu.matmul %284, %286, %cst_268 {dimension_numbers = #tpu.dot_dimension_numbers<[1], [0], [0], [1], [0, 0, 1, 1], [], []>} : vector<16x128xbf16>, vector<128x128xbf16>, vector<16x128xf32> -> vector<16x128xf32>
    %288 = arith.addf %282, %287 : vector<16x128xf32>
    %c1_269 = arith.constant 1 : index
    %c8_270 = arith.constant 8 : index
    %289 = vector.load %arg13[%c1_269, %c8_270] : memref<36x144xf32, #tpu.memory_space<vmem>>, vector<16x128xf32>
    %290 = arith.truncf %289 : vector<16x128xf32> to vector<16x128xbf16>
    %c4_271 = arith.constant 4 : index
    %c0_272 = arith.constant 0 : index
    %c0_273 = arith.constant 0 : index
    %291 = vector.load %arg3[%c4_271, %c0_272, %c0_273] : memref<9x128x128xbf16, #tpu.memory_space<vmem>>, vector<1x128x128xbf16>
    %292 = vector.shape_cast %291 : vector<1x128x128xbf16> to vector<128x128xbf16>
    %cst_274 = arith.constant dense<0.000000e+00> : vector<16x128xf32>
    %293 = tpu.matmul %290, %292, %cst_274 {dimension_numbers = #tpu.dot_dimension_numbers<[1], [0], [0], [1], [0, 0, 1, 1], [], []>} : vector<16x128xbf16>, vector<128x128xbf16>, vector<16x128xf32> -> vector<16x128xf32>
    %294 = arith.addf %288, %293 : vector<16x128xf32>
    %c1_275 = arith.constant 1 : index
    %c16_276 = arith.constant 16 : index
    %295 = vector.load %arg13[%c1_275, %c16_276] : memref<36x144xf32, #tpu.memory_space<vmem>>, vector<16x128xf32>
    %296 = arith.truncf %295 : vector<16x128xf32> to vector<16x128xbf16>
    %c5_277 = arith.constant 5 : index
    %c0_278 = arith.constant 0 : index
    %c0_279 = arith.constant 0 : index
    %297 = vector.load %arg3[%c5_277, %c0_278, %c0_279] : memref<9x128x128xbf16, #tpu.memory_space<vmem>>, vector<1x128x128xbf16>
    %298 = vector.shape_cast %297 : vector<1x128x128xbf16> to vector<128x128xbf16>
    %cst_280 = arith.constant dense<0.000000e+00> : vector<16x128xf32>
    %299 = tpu.matmul %296, %298, %cst_280 {dimension_numbers = #tpu.dot_dimension_numbers<[1], [0], [0], [1], [0, 0, 1, 1], [], []>} : vector<16x128xbf16>, vector<128x128xbf16>, vector<16x128xf32> -> vector<16x128xf32>
    %300 = arith.addf %294, %299 : vector<16x128xf32>
    %c2_281 = arith.constant 2 : index
    %c0_282 = arith.constant 0 : index
    %301 = vector.load %arg13[%c2_281, %c0_282] : memref<36x144xf32, #tpu.memory_space<vmem>>, vector<16x128xf32>
    %302 = arith.truncf %301 : vector<16x128xf32> to vector<16x128xbf16>
    %c6_283 = arith.constant 6 : index
    %c0_284 = arith.constant 0 : index
    %c0_285 = arith.constant 0 : index
    %303 = vector.load %arg3[%c6_283, %c0_284, %c0_285] : memref<9x128x128xbf16, #tpu.memory_space<vmem>>, vector<1x128x128xbf16>
    %304 = vector.shape_cast %303 : vector<1x128x128xbf16> to vector<128x128xbf16>
    %cst_286 = arith.constant dense<0.000000e+00> : vector<16x128xf32>
    %305 = tpu.matmul %302, %304, %cst_286 {dimension_numbers = #tpu.dot_dimension_numbers<[1], [0], [0], [1], [0, 0, 1, 1], [], []>} : vector<16x128xbf16>, vector<128x128xbf16>, vector<16x128xf32> -> vector<16x128xf32>
    %306 = arith.addf %300, %305 : vector<16x128xf32>
    %c2_287 = arith.constant 2 : index
    %c8_288 = arith.constant 8 : index
    %307 = vector.load %arg13[%c2_287, %c8_288] : memref<36x144xf32, #tpu.memory_space<vmem>>, vector<16x128xf32>
    %308 = arith.truncf %307 : vector<16x128xf32> to vector<16x128xbf16>
    %c7_289 = arith.constant 7 : index
    %c0_290 = arith.constant 0 : index
    %c0_291 = arith.constant 0 : index
    %309 = vector.load %arg3[%c7_289, %c0_290, %c0_291] : memref<9x128x128xbf16, #tpu.memory_space<vmem>>, vector<1x128x128xbf16>
    %310 = vector.shape_cast %309 : vector<1x128x128xbf16> to vector<128x128xbf16>
    %cst_292 = arith.constant dense<0.000000e+00> : vector<16x128xf32>
    %311 = tpu.matmul %308, %310, %cst_292 {dimension_numbers = #tpu.dot_dimension_numbers<[1], [0], [0], [1], [0, 0, 1, 1], [], []>} : vector<16x128xbf16>, vector<128x128xbf16>, vector<16x128xf32> -> vector<16x128xf32>
    %312 = arith.addf %306, %311 : vector<16x128xf32>
    %c2_293 = arith.constant 2 : index
    %c16_294 = arith.constant 16 : index
    %313 = vector.load %arg13[%c2_293, %c16_294] : memref<36x144xf32, #tpu.memory_space<vmem>>, vector<16x128xf32>
    %314 = arith.truncf %313 : vector<16x128xf32> to vector<16x128xbf16>
    %c8_295 = arith.constant 8 : index
    %c0_296 = arith.constant 0 : index
    %c0_297 = arith.constant 0 : index
    %315 = vector.load %arg3[%c8_295, %c0_296, %c0_297] : memref<9x128x128xbf16, #tpu.memory_space<vmem>>, vector<1x128x128xbf16>
    %316 = vector.shape_cast %315 : vector<1x128x128xbf16> to vector<128x128xbf16>
    %cst_298 = arith.constant dense<0.000000e+00> : vector<16x128xf32>
    %317 = tpu.matmul %314, %316, %cst_298 {dimension_numbers = #tpu.dot_dimension_numbers<[1], [0], [0], [1], [0, 0, 1, 1], [], []>} : vector<16x128xbf16>, vector<128x128xbf16>, vector<16x128xf32> -> vector<16x128xf32>
    %318 = arith.addf %312, %317 : vector<16x128xf32>
    %c18_299 = arith.constant 18 : index
    %c0_300 = arith.constant 0 : index
    %319 = vector.load %arg13[%c18_299, %c0_300] : memref<36x144xf32, #tpu.memory_space<vmem>>, vector<16x128xf32>
    %320 = arith.truncf %319 : vector<16x128xf32> to vector<16x128xbf16>
    %c0_301 = arith.constant 0 : index
    %c0_302 = arith.constant 0 : index
    %c0_303 = arith.constant 0 : index
    %321 = vector.load %arg3[%c0_301, %c0_302, %c0_303] : memref<9x128x128xbf16, #tpu.memory_space<vmem>>, vector<1x128x128xbf16>
    %322 = vector.shape_cast %321 : vector<1x128x128xbf16> to vector<128x128xbf16>
    %cst_304 = arith.constant dense<0.000000e+00> : vector<16x128xf32>
    %323 = tpu.matmul %320, %322, %cst_304 {dimension_numbers = #tpu.dot_dimension_numbers<[1], [0], [0], [1], [0, 0, 1, 1], [], []>} : vector<16x128xbf16>, vector<128x128xbf16>, vector<16x128xf32> -> vector<16x128xf32>
    %c18_305 = arith.constant 18 : index
    %c8_306 = arith.constant 8 : index
    %324 = vector.load %arg13[%c18_305, %c8_306] : memref<36x144xf32, #tpu.memory_space<vmem>>, vector<16x128xf32>
    %325 = arith.truncf %324 : vector<16x128xf32> to vector<16x128xbf16>
    %c1_307 = arith.constant 1 : index
    %c0_308 = arith.constant 0 : index
    %c0_309 = arith.constant 0 : index
    %326 = vector.load %arg3[%c1_307, %c0_308, %c0_309] : memref<9x128x128xbf16, #tpu.memory_space<vmem>>, vector<1x128x128xbf16>
    %327 = vector.shape_cast %326 : vector<1x128x128xbf16> to vector<128x128xbf16>
    %cst_310 = arith.constant dense<0.000000e+00> : vector<16x128xf32>
    %328 = tpu.matmul %325, %327, %cst_310 {dimension_numbers = #tpu.dot_dimension_numbers<[1], [0], [0], [1], [0, 0, 1, 1], [], []>} : vector<16x128xbf16>, vector<128x128xbf16>, vector<16x128xf32> -> vector<16x128xf32>
    %329 = arith.addf %323, %328 : vector<16x128xf32>
    %c18_311 = arith.constant 18 : index
    %c16_312 = arith.constant 16 : index
    %330 = vector.load %arg13[%c18_311, %c16_312] : memref<36x144xf32, #tpu.memory_space<vmem>>, vector<16x128xf32>
    %331 = arith.truncf %330 : vector<16x128xf32> to vector<16x128xbf16>
    %c2_313 = arith.constant 2 : index
    %c0_314 = arith.constant 0 : index
    %c0_315 = arith.constant 0 : index
    %332 = vector.load %arg3[%c2_313, %c0_314, %c0_315] : memref<9x128x128xbf16, #tpu.memory_space<vmem>>, vector<1x128x128xbf16>
    %333 = vector.shape_cast %332 : vector<1x128x128xbf16> to vector<128x128xbf16>
    %cst_316 = arith.constant dense<0.000000e+00> : vector<16x128xf32>
    %334 = tpu.matmul %331, %333, %cst_316 {dimension_numbers = #tpu.dot_dimension_numbers<[1], [0], [0], [1], [0, 0, 1, 1], [], []>} : vector<16x128xbf16>, vector<128x128xbf16>, vector<16x128xf32> -> vector<16x128xf32>
    %335 = arith.addf %329, %334 : vector<16x128xf32>
    %c19_317 = arith.constant 19 : index
    %c0_318 = arith.constant 0 : index
    %336 = vector.load %arg13[%c19_317, %c0_318] : memref<36x144xf32, #tpu.memory_space<vmem>>, vector<16x128xf32>
    %337 = arith.truncf %336 : vector<16x128xf32> to vector<16x128xbf16>
    %c3_319 = arith.constant 3 : index
    %c0_320 = arith.constant 0 : index
    %c0_321 = arith.constant 0 : index
    %338 = vector.load %arg3[%c3_319, %c0_320, %c0_321] : memref<9x128x128xbf16, #tpu.memory_space<vmem>>, vector<1x128x128xbf16>
    %339 = vector.shape_cast %338 : vector<1x128x128xbf16> to vector<128x128xbf16>
    %cst_322 = arith.constant dense<0.000000e+00> : vector<16x128xf32>
    %340 = tpu.matmul %337, %339, %cst_322 {dimension_numbers = #tpu.dot_dimension_numbers<[1], [0], [0], [1], [0, 0, 1, 1], [], []>} : vector<16x128xbf16>, vector<128x128xbf16>, vector<16x128xf32> -> vector<16x128xf32>
    %341 = arith.addf %335, %340 : vector<16x128xf32>
    %c19_323 = arith.constant 19 : index
    %c8_324 = arith.constant 8 : index
    %342 = vector.load %arg13[%c19_323, %c8_324] : memref<36x144xf32, #tpu.memory_space<vmem>>, vector<16x128xf32>
    %343 = arith.truncf %342 : vector<16x128xf32> to vector<16x128xbf16>
    %c4_325 = arith.constant 4 : index
    %c0_326 = arith.constant 0 : index
    %c0_327 = arith.constant 0 : index
    %344 = vector.load %arg3[%c4_325, %c0_326, %c0_327] : memref<9x128x128xbf16, #tpu.memory_space<vmem>>, vector<1x128x128xbf16>
    %345 = vector.shape_cast %344 : vector<1x128x128xbf16> to vector<128x128xbf16>
    %cst_328 = arith.constant dense<0.000000e+00> : vector<16x128xf32>
    %346 = tpu.matmul %343, %345, %cst_328 {dimension_numbers = #tpu.dot_dimension_numbers<[1], [0], [0], [1], [0, 0, 1, 1], [], []>} : vector<16x128xbf16>, vector<128x128xbf16>, vector<16x128xf32> -> vector<16x128xf32>
    %347 = arith.addf %341, %346 : vector<16x128xf32>
    %c19_329 = arith.constant 19 : index
    %c16_330 = arith.constant 16 : index
    %348 = vector.load %arg13[%c19_329, %c16_330] : memref<36x144xf32, #tpu.memory_space<vmem>>, vector<16x128xf32>
    %349 = arith.truncf %348 : vector<16x128xf32> to vector<16x128xbf16>
    %c5_331 = arith.constant 5 : index
    %c0_332 = arith.constant 0 : index
    %c0_333 = arith.constant 0 : index
    %350 = vector.load %arg3[%c5_331, %c0_332, %c0_333] : memref<9x128x128xbf16, #tpu.memory_space<vmem>>, vector<1x128x128xbf16>
    %351 = vector.shape_cast %350 : vector<1x128x128xbf16> to vector<128x128xbf16>
    %cst_334 = arith.constant dense<0.000000e+00> : vector<16x128xf32>
    %352 = tpu.matmul %349, %351, %cst_334 {dimension_numbers = #tpu.dot_dimension_numbers<[1], [0], [0], [1], [0, 0, 1, 1], [], []>} : vector<16x128xbf16>, vector<128x128xbf16>, vector<16x128xf32> -> vector<16x128xf32>
    %353 = arith.addf %347, %352 : vector<16x128xf32>
    %c20_335 = arith.constant 20 : index
    %c0_336 = arith.constant 0 : index
    %354 = vector.load %arg13[%c20_335, %c0_336] : memref<36x144xf32, #tpu.memory_space<vmem>>, vector<16x128xf32>
    %355 = arith.truncf %354 : vector<16x128xf32> to vector<16x128xbf16>
    %c6_337 = arith.constant 6 : index
    %c0_338 = arith.constant 0 : index
    %c0_339 = arith.constant 0 : index
    %356 = vector.load %arg3[%c6_337, %c0_338, %c0_339] : memref<9x128x128xbf16, #tpu.memory_space<vmem>>, vector<1x128x128xbf16>
    %357 = vector.shape_cast %356 : vector<1x128x128xbf16> to vector<128x128xbf16>
    %cst_340 = arith.constant dense<0.000000e+00> : vector<16x128xf32>
    %358 = tpu.matmul %355, %357, %cst_340 {dimension_numbers = #tpu.dot_dimension_numbers<[1], [0], [0], [1], [0, 0, 1, 1], [], []>} : vector<16x128xbf16>, vector<128x128xbf16>, vector<16x128xf32> -> vector<16x128xf32>
    %359 = arith.addf %353, %358 : vector<16x128xf32>
    %c20_341 = arith.constant 20 : index
    %c8_342 = arith.constant 8 : index
    %360 = vector.load %arg13[%c20_341, %c8_342] : memref<36x144xf32, #tpu.memory_space<vmem>>, vector<16x128xf32>
    %361 = arith.truncf %360 : vector<16x128xf32> to vector<16x128xbf16>
    %c7_343 = arith.constant 7 : index
    %c0_344 = arith.constant 0 : index
    %c0_345 = arith.constant 0 : index
    %362 = vector.load %arg3[%c7_343, %c0_344, %c0_345] : memref<9x128x128xbf16, #tpu.memory_space<vmem>>, vector<1x128x128xbf16>
    %363 = vector.shape_cast %362 : vector<1x128x128xbf16> to vector<128x128xbf16>
    %cst_346 = arith.constant dense<0.000000e+00> : vector<16x128xf32>
    %364 = tpu.matmul %361, %363, %cst_346 {dimension_numbers = #tpu.dot_dimension_numbers<[1], [0], [0], [1], [0, 0, 1, 1], [], []>} : vector<16x128xbf16>, vector<128x128xbf16>, vector<16x128xf32> -> vector<16x128xf32>
    %365 = arith.addf %359, %364 : vector<16x128xf32>
    %c20_347 = arith.constant 20 : index
    %c16_348 = arith.constant 16 : index
    %366 = vector.load %arg13[%c20_347, %c16_348] : memref<36x144xf32, #tpu.memory_space<vmem>>, vector<16x128xf32>
    %367 = arith.truncf %366 : vector<16x128xf32> to vector<16x128xbf16>
    %c8_349 = arith.constant 8 : index
    %c0_350 = arith.constant 0 : index
    %c0_351 = arith.constant 0 : index
    %368 = vector.load %arg3[%c8_349, %c0_350, %c0_351] : memref<9x128x128xbf16, #tpu.memory_space<vmem>>, vector<1x128x128xbf16>
    %369 = vector.shape_cast %368 : vector<1x128x128xbf16> to vector<128x128xbf16>
    %cst_352 = arith.constant dense<0.000000e+00> : vector<16x128xf32>
    %370 = tpu.matmul %367, %369, %cst_352 {dimension_numbers = #tpu.dot_dimension_numbers<[1], [0], [0], [1], [0, 0, 1, 1], [], []>} : vector<16x128xbf16>, vector<128x128xbf16>, vector<16x128xf32> -> vector<16x128xf32>
    %371 = arith.addf %365, %370 : vector<16x128xf32>
    %372 = tpu.concatenate %318, %371 in 0 : vector<16x128xf32>, vector<16x128xf32> -> vector<32x128xf32>
    %cst_353 = arith.constant dense<0.000000e+00> : vector<128xf32>
    %373 = vector.multi_reduction <add>, %372, %cst_353 [0] : vector<32x128xf32> to vector<128xf32>
    %374 = vector.shape_cast %373 : vector<128xf32> to vector<1x128xf32>
    %cst_354 = arith.constant dense<0.000000e+00> : vector<1x8xf32>
    %375 = tpu.matmul %374, %0, %cst_354 {dimension_numbers = #tpu.dot_dimension_numbers<[1], [0], [0], [1], [0, 0, 1, 1], [], []>} : vector<1x128xf32>, vector<128x8xf32>, vector<1x8xf32> -> vector<1x8xf32>
    %376 = arith.mulf %372, %372 : vector<32x128xf32>
    %cst_355 = arith.constant dense<0.000000e+00> : vector<128xf32>
    %377 = vector.multi_reduction <add>, %376, %cst_355 [0] : vector<32x128xf32> to vector<128xf32>
    %378 = vector.shape_cast %377 : vector<128xf32> to vector<1x128xf32>
    %cst_356 = arith.constant dense<0.000000e+00> : vector<1x8xf32>
    %379 = tpu.matmul %378, %0, %cst_356 {dimension_numbers = #tpu.dot_dimension_numbers<[1], [0], [0], [1], [0, 0, 1, 1], [], []>} : vector<1x128xf32>, vector<128x8xf32>, vector<1x8xf32> -> vector<1x8xf32>
    %cst_357 = arith.constant 0.001953125 : f32
    %380 = vector.broadcast %cst_357 : f32 to vector<1x8xf32>
    %381 = arith.mulf %375, %380 : vector<1x8xf32>
    %cst_358 = arith.constant 0.001953125 : f32
    %382 = vector.broadcast %cst_358 : f32 to vector<1x8xf32>
    %383 = arith.mulf %379, %382 : vector<1x8xf32>
    %384 = arith.mulf %381, %381 : vector<1x8xf32>
    %385 = arith.subf %383, %384 : vector<1x8xf32>
    %c0_359 = arith.constant 0 : index
    %c0_360 = arith.constant 0 : index
    %386 = vector.load %arg8[%c0_359, %c0_360] : memref<1x8xf32, #tpu.memory_space<vmem>>, vector<1x8xf32>
    %cst_361 = arith.constant 9.99999974E-6 : f32
    %387 = vector.broadcast %cst_361 : f32 to vector<1x8xf32>
    %388 = arith.addf %385, %387 : vector<1x8xf32>
    %389 = math.rsqrt %388 : vector<1x8xf32>
    %390 = arith.mulf %386, %389 : vector<1x8xf32>
    %c0_362 = arith.constant 0 : index
    %c0_363 = arith.constant 0 : index
    %391 = vector.load %arg9[%c0_362, %c0_363] : memref<1x8xf32, #tpu.memory_space<vmem>>, vector<1x8xf32>
    %392 = arith.mulf %381, %390 : vector<1x8xf32>
    %393 = arith.subf %391, %392 : vector<1x8xf32>
    %cst_364 = arith.constant dense<0.000000e+00> : vector<1x128xf32>
    %394 = tpu.matmul %390, %1, %cst_364 {dimension_numbers = #tpu.dot_dimension_numbers<[1], [0], [0], [1], [0, 0, 1, 1], [], []>} : vector<1x8xf32>, vector<8x128xf32>, vector<1x128xf32> -> vector<1x128xf32>
    %cst_365 = arith.constant dense<0.000000e+00> : vector<1x128xf32>
    %395 = tpu.matmul %393, %1, %cst_365 {dimension_numbers = #tpu.dot_dimension_numbers<[1], [0], [0], [1], [0, 0, 1, 1], [], []>} : vector<1x8xf32>, vector<8x128xf32>, vector<1x128xf32> -> vector<1x128xf32>
    %396 = vector.broadcast %394 : vector<1x128xf32> to vector<32x128xf32>
    %397 = arith.mulf %372, %396 : vector<32x128xf32>
    %398 = vector.broadcast %395 : vector<1x128xf32> to vector<32x128xf32>
    %399 = arith.addf %397, %398 : vector<32x128xf32>
    %cst_366 = arith.constant 0.000000e+00 : f32
    %400 = vector.broadcast %cst_366 : f32 to vector<32x128xf32>
    %401 = arith.maximumf %399, %400 : vector<32x128xf32>
    %c0_367 = arith.constant 0 : index
    %c0_368 = arith.constant 0 : index
    %402 = vector.load %arg12[%c0_367, %c0_368] : memref<32x128xf32, #tpu.memory_space<vmem>>, vector<32x128xf32>
    tpu.vector_store %arg12[%c0_367, %c0_368], %401 {strides = array<i32>} : memref<32x128xf32, #tpu.memory_space<vmem>>, vector<32x128xf32>,
    return
  }
}

</mosaic_0001>

<llo_original>
// kernel: tile.9
$region0: #{tile.9}
  %s0 = inlined_call_operand.vmem [shape: f32[16,8,8], index: 0, kind: input, shape index: {}]
  %s1 = inlined_call_operand.vmem [shape: f32[128,8], index: 1, kind: output, shape index: {}]
  %s2 = smov 3
  %v3 = vld [vmem:[%s0] ss:$16 sm:%s2]
  %s4 = smov 12
  %v5 = vld [vmem:[%s0] ss:$16 sm:%s4]
  %vm6 = vcmask 1043458
  %v7 = vsel %vm6, %v5, %v3
  %s8 = smov 48
  %v9 = vld [vmem:[%s0] ss:$16 sm:%s8]
  %vm10 = vcmask 1045508
  %v11 = vsel %vm10, %v9, %v7
  %s12 = smov 192
  %v13 = vld [vmem:[%s0] ss:$16 sm:%s12]
  %vm14 = vcmask 1047558
  %v15 = vsel %vm14, %v13, %v11
  %vm16 = vcmask 64512
  %17 = vst.msk [vmem:[%s1] sm:$0xff] %vm16, %v15
  %s18 = scalar_lea.vmem %s0, 15
  %s19 = smov 3
  %v20 = vld [vmem:[%s18] ss:$16 sm:%s19]
  %s21 = scalar_lea.vmem %s0, 15
  %s22 = smov 12
  %v23 = vld [vmem:[%s21] ss:$16 sm:%s22]
  %vm24 = vcmask 1043458
  %v25 = vsel %vm24, %v23, %v20
  %s26 = scalar_lea.vmem %s0, 15
  %s27 = smov 48
  %v28 = vld [vmem:[%s26] ss:$16 sm:%s27]
  %vm29 = vcmask 1045508
  %v30 = vsel %vm29, %v28, %v25
  %s31 = scalar_lea.vmem %s0, 15
  %s32 = smov 192
  %v33 = vld [vmem:[%s31] ss:$16 sm:%s32]
  %vm34 = vcmask 1047558
  %v35 = vsel %vm34, %v33, %v30
  %36 = vrot.lane.b32.xlu0 %v35, 120
  %v37 = vpop.permute.xlu0 %36
  %vm38 = vcmask 1048512
  %39 = vst.msk [vmem:[%s1] sm:$0xff] %vm38, %v37
  %s40 = scalar_lea.vmem %s0, 14
  %s41 = smov 3
  %v42 = vld [vmem:[%s40] ss:$16 sm:%s41]
  %s43 = scalar_lea.vmem %s0, 14
  %s44 = smov 12
  %v45 = vld [vmem:[%s43] ss:$16 sm:%s44]
  %vm46 = vcmask 1043458
  %v47 = vsel %vm46, %v45, %v42
  %s48 = scalar_lea.vmem %s0, 14
  %s49 = smov 48
  %v50 = vld [vmem:[%s48] ss:$16 sm:%s49]
  %vm51 = vcmask 1045508
  %v52 = vsel %vm51, %v50, %v47
  %s53 = scalar_lea.vmem %s0, 14
  %s54 = smov 192
  %v55 = vld [vmem:[%s53] ss:$16 sm:%s54]
  %vm56 = vcmask 1047558
  %v57 = vsel %vm56, %v55, %v52
  %58 = vrot.lane.b32.xlu0 %v57, 112
  %v59 = vpop.permute.xlu0 %58
  %vm60 = vcmask 982912
  %61 = vst.msk [vmem:[%s1] sm:$0xff] %vm60, %v59
  %s62 = scalar_lea.vmem %s0, 13
  %s63 = smov 3
  %v64 = vld [vmem:[%s62] ss:$16 sm:%s63]
  %s65 = scalar_lea.vmem %s0, 13
  %s66 = smov 12
  %v67 = vld [vmem:[%s65] ss:$16 sm:%s66]
  %vm68 = vcmask 1043458
  %v69 = vsel %vm68, %v67, %v64
  %s70 = scalar_lea.vmem %s0, 13
  %s71 = smov 48
  %v72 = vld [vmem:[%s70] ss:$16 sm:%s71]
  %vm73 = vcmask 1045508
  %v74 = vsel %vm73, %v72, %v69
  %s75 = scalar_lea.vmem %s0, 13
  %s76 = smov 192
  %v77 = vld [vmem:[%s75] ss:$16 sm:%s76]
  %vm78 = vcmask 1047558
  %v79 = vsel %vm78, %v77, %v74
  %80 = vrot.lane.b32.xlu0 %v79, 104
  %v81 = vpop.permute.xlu0 %80
  %vm82 = vcmask 917312
  %83 = vst.msk [vmem:[%s1] sm:$0xff] %vm82, %v81
  %s84 = scalar_lea.vmem %s0, 12
  %s85 = smov 3
  %v86 = vld [vmem:[%s84] ss:$16 sm:%s85]
  %s87 = scalar_lea.vmem %s0, 12
  %s88 = smov 12
  %v89 = vld [vmem:[%s87] ss:$16 sm:%s88]
  %vm90 = vcmask 1043458
  %v91 = vsel %vm90, %v89, %v86
  %s92 = scalar_lea.vmem %s0, 12
  %s93 = smov 48
  %v94 = vld [vmem:[%s92] ss:$16 sm:%s93]
  %vm95 = vcmask 1045508
  %v96 = vsel %vm95, %v94, %v91
  %s97 = scalar_lea.vmem %s0, 12
  %s98 = smov 192
  %v99 = vld [vmem:[%s97] ss:$16 sm:%s98]
  %vm100 = vcmask 1047558
  %v101 = vsel %vm100, %v99, %v96
  %102 = vrot.lane.b32.xlu0 %v101, 96
  %v103 = vpop.permute.xlu0 %102
  %vm104 = vcmask 851712
  %105 = vst.msk [vmem:[%s1] sm:$0xff] %vm104, %v103
  %s106 = scalar_lea.vmem %s0, 11
  %s107 = smov 3
  %v108 = vld [vmem:[%s106] ss:$16 sm:%s107]
  %s109 = scalar_lea.vmem %s0, 11
  %s110 = smov 12
  %v111 = vld [vmem:[%s109] ss:$16 sm:%s110]
  %vm112 = vcmask 1043458
  %v113 = vsel %vm112, %v111, %v108
  %s114 = scalar_lea.vmem %s0, 11
  %s115 = smov 48
  %v116 = vld [vmem:[%s114] ss:$16 sm:%s115]
  %vm117 = vcmask 1045508
  %v118 = vsel %vm117, %v116, %v113
  %s119 = scalar_lea.vmem %s0, 11
  %s120 = smov 192
  %v121 = vld [vmem:[%s119] ss:$16 sm:%s120]
  %vm122 = vcmask 1047558
  %v123 = vsel %vm122, %v121, %v118
  %124 = vrot.lane.b32.xlu0 %v123, 88
  %v125 = vpop.permute.xlu0 %124
  %vm126 = vcmask 786112
  %127 = vst.msk [vmem:[%s1] sm:$0xff] %vm126, %v125
  %s128 = scalar_lea.vmem %s0, 10
  %s129 = smov 3
  %v130 = vld [vmem:[%s128] ss:$16 sm:%s129]
  %s131 = scalar_lea.vmem %s0, 10
  %s132 = smov 12
  %v133 = vld [vmem:[%s131] ss:$16 sm:%s132]
  %vm134 = vcmask 1043458
  %v135 = vsel %vm134, %v133, %v130
  %s136 = scalar_lea.vmem %s0, 10
  %s137 = smov 48
  %v138 = vld [vmem:[%s136] ss:$16 sm:%s137]
  %vm139 = vcmask 1045508
  %v140 = vsel %vm139, %v138, %v135
  %s141 = scalar_lea.vmem %s0, 10
  %s142 = smov 192
  %v143 = vld [vmem:[%s141] ss:$16 sm:%s142]
  %vm144 = vcmask 1047558
  %v145 = vsel %vm144, %v143, %v140
  %146 = vrot.lane.b32.xlu0 %v145, 80
  %v147 = vpop.permute.xlu0 %146
  %vm148 = vcmask 720512
  %149 = vst.msk [vmem:[%s1] sm:$0xff] %vm148, %v147
  %s150 = scalar_lea.vmem %s0, 9
  %s151 = smov 3
  %v152 = vld [vmem:[%s150] ss:$16 sm:%s151]
  %s153 = scalar_lea.vmem %s0, 9
  %s154 = smov 12
  %v155 = vld [vmem:[%s153] ss:$16 sm:%s154]
  %vm156 = vcmask 1043458
  %v157 = vsel %vm156, %v155, %v152
  %s158 = scalar_lea.vmem %s0, 9
  %s159 = smov 48
  %v160 = vld [vmem:[%s158] ss:$16 sm:%s159]
  %vm161 = vcmask 1045508
  %v162 = vsel %vm161, %v160, %v157
  %s163 = scalar_lea.vmem %s0, 9
  %s164 = smov 192
  %v165 = vld [vmem:[%s163] ss:$16 sm:%s164]
  %vm166 = vcmask 1047558
  %v167 = vsel %vm166, %v165, %v162
  %168 = vrot.lane.b32.xlu0 %v167, 72
  %v169 = vpop.permute.xlu0 %168
  %vm170 = vcmask 654912
  %171 = vst.msk [vmem:[%s1] sm:$0xff] %vm170, %v169
  %s172 = scalar_lea.vmem %s0, 8
  %s173 = smov 3
  %v174 = vld [vmem:[%s172] ss:$16 sm:%s173]
  %s175 = scalar_lea.vmem %s0, 8
  %s176 = smov 12
  %v177 = vld [vmem:[%s175] ss:$16 sm:%s176]
  %vm178 = vcmask 1043458
  %v179 = vsel %vm178, %v177, %v174
  %s180 = scalar_lea.vmem %s0, 8
  %s181 = smov 48
  %v182 = vld [vmem:[%s180] ss:$16 sm:%s181]
  %vm183 = vcmask 1045508
  %v184 = vsel %vm183, %v182, %v179
  %s185 = scalar_lea.vmem %s0, 8
  %s186 = smov 192
  %v187 = vld [vmem:[%s185] ss:$16 sm:%s186]
  %vm188 = vcmask 1047558
  %v189 = vsel %vm188, %v187, %v184
  %190 = vrot.lane.b32.xlu0 %v189, 64
  %v191 = vpop.permute.xlu0 %190
  %vm192 = vcmask 589312
  %193 = vst.msk [vmem:[%s1] sm:$0xff] %vm192, %v191
  %s194 = scalar_lea.vmem %s0, 7
  %s195 = smov 3
  %v196 = vld [vmem:[%s194] ss:$16 sm:%s195]
  %s197 = scalar_lea.vmem %s0, 7
  %s198 = smov 12
  %v199 = vld [vmem:[%s197] ss:$16 sm:%s198]
  %vm200 = vcmask 1043458
  %v201 = vsel %vm200, %v199, %v196
  %s202 = scalar_lea.vmem %s0, 7
  %s203 = smov 48
  %v204 = vld [vmem:[%s202] ss:$16 sm:%s203]
  %vm205 = vcmask 1045508
  %v206 = vsel %vm205, %v204, %v201
  %s207 = scalar_lea.vmem %s0, 7
  %s208 = smov 192
  %v209 = vld [vmem:[%s207] ss:$16 sm:%s208]
  %vm210 = vcmask 1047558
  %v211 = vsel %vm210, %v209, %v206
  %212 = vrot.lane.b32.xlu0 %v211, 56
  %v213 = vpop.permute.xlu0 %212
  %vm214 = vcmask 523712
  %215 = vst.msk [vmem:[%s1] sm:$0xff] %vm214, %v213
  %s216 = scalar_lea.vmem %s0, 6
  %s217 = smov 3
  %v218 = vld [vmem:[%s216] ss:$16 sm:%s217]
  %s219 = scalar_lea.vmem %s0, 6
  %s220 = smov 12
  %v221 = vld [vmem:[%s219] ss:$16 sm:%s220]
  %vm222 = vcmask 1043458
  %v223 = vsel %vm222, %v221, %v218
  %s224 = scalar_lea.vmem %s0, 6
  %s225 = smov 48
  %v226 = vld [vmem:[%s224] ss:$16 sm:%s225]
  %vm227 = vcmask 1045508
  %v228 = vsel %vm227, %v226, %v223
  %s229 = scalar_lea.vmem %s0, 6
  %s230 = smov 192
  %v231 = vld [vmem:[%s229] ss:$16 sm:%s230]
  %vm232 = vcmask 1047558
  %v233 = vsel %vm232, %v231, %v228
  %234 = vrot.lane.b32.xlu0 %v233, 48
  %v235 = vpop.permute.xlu0 %234
  %vm236 = vcmask 458112
  %237 = vst.msk [vmem:[%s1] sm:$0xff] %vm236, %v235
  %s238 = scalar_lea.vmem %s0, 5
  %s239 = smov 3
  %v240 = vld [vmem:[%s238] ss:$16 sm:%s239]
  %s241 = scalar_lea.vmem %s0, 5
  %s242 = smov 12
  %v243 = vld [vmem:[%s241] ss:$16 sm:%s242]
  %vm244 = vcmask 1043458
  %v245 = vsel %vm244, %v243, %v240
  %s246 = scalar_lea.vmem %s0, 5
  %s247 = smov 48
  %v248 = vld [vmem:[%s246] ss:$16 sm:%s247]
  %vm249 = vcmask 1045508
  %v250 = vsel %vm249, %v248, %v245
  %s251 = scalar_lea.vmem %s0, 5
  %s252 = smov 192
  %v253 = vld [vmem:[%s251] ss:$16 sm:%s252]
  %vm254 = vcmask 1047558
  %v255 = vsel %vm254, %v253, %v250
  %256 = vrot.lane.b32.xlu0 %v255, 40
  %v257 = vpop.permute.xlu0 %256
  %vm258 = vcmask 392512
  %259 = vst.msk [vmem:[%s1] sm:$0xff] %vm258, %v257
  %s260 = scalar_lea.vmem %s0, 4
  %s261 = smov 3
  %v262 = vld [vmem:[%s260] ss:$16 sm:%s261]
  %s263 = scalar_lea.vmem %s0, 4
  %s264 = smov 12
  %v265 = vld [vmem:[%s263] ss:$16 sm:%s264]
  %vm266 = vcmask 1043458
  %v267 = vsel %vm266, %v265, %v262
  %s268 = scalar_lea.vmem %s0, 4
  %s269 = smov 48
  %v270 = vld [vmem:[%s268] ss:$16 sm:%s269]
  %vm271 = vcmask 1045508
  %v272 = vsel %vm271, %v270, %v267
  %s273 = scalar_lea.vmem %s0, 4
  %s274 = smov 192
  %v275 = vld [vmem:[%s273] ss:$16 sm:%s274]
  %vm276 = vcmask 1047558
  %v277 = vsel %vm276, %v275, %v272
  %278 = vrot.lane.b32.xlu0 %v277, 32
  %v279 = vpop.permute.xlu0 %278
  %vm280 = vcmask 326912
  %281 = vst.msk [vmem:[%s1] sm:$0xff] %vm280, %v279
  %s282 = scalar_lea.vmem %s0, 3
  %s283 = smov 3
  %v284 = vld [vmem:[%s282] ss:$16 sm:%s283]
  %s285 = scalar_lea.vmem %s0, 3
  %s286 = smov 12
  %v287 = vld [vmem:[%s285] ss:$16 sm:%s286]
  %vm288 = vcmask 1043458
  %v289 = vsel %vm288, %v287, %v284
  %s290 = scalar_lea.vmem %s0, 3
  %s291 = smov 48
  %v292 = vld [vmem:[%s290] ss:$16 sm:%s291]
  %vm293 = vcmask 1045508
  %v294 = vsel %vm293, %v292, %v289
  %s295 = scalar_lea.vmem %s0, 3
  %s296 = smov 192
  %v297 = vld [vmem:[%s295] ss:$16 sm:%s296]
  %vm298 = vcmask 1047558
  %v299 = vsel %vm298, %v297, %v294
  %300 = vrot.lane.b32.xlu0 %v299, 24
  %v301 = vpop.permute.xlu0 %300
  %vm302 = vcmask 261312
  %303 = vst.msk [vmem:[%s1] sm:$0xff] %vm302, %v301
  %s304 = scalar_lea.vmem %s0, 2
  %s305 = smov 3
  %v306 = vld [vmem:[%s304] ss:$16 sm:%s305]
  %s307 = scalar_lea.vmem %s0, 2
  %s308 = smov 12
  %v309 = vld [vmem:[%s307] ss:$16 sm:%s308]
  %vm310 = vcmask 1043458
  %v311 = vsel %vm310, %v309, %v306
  %s312 = scalar_lea.vmem %s0, 2
  %s313 = smov 48
  %v314 = vld [vmem:[%s312] ss:$16 sm:%s313]
  %vm315 = vcmask 1045508
  %v316 = vsel %vm315, %v314, %v311
  %s317 = scalar_lea.vmem %s0, 2
  %s318 = smov 192
  %v319 = vld [vmem:[%s317] ss:$16 sm:%s318]
  %vm320 = vcmask 1047558
  %v321 = vsel %vm320, %v319, %v316
  %322 = vrot.lane.b32.xlu0 %v321, 16
  %v323 = vpop.permute.xlu0 %322
  %vm324 = vcmask 195712
  %325 = vst.msk [vmem:[%s1] sm:$0xff] %vm324, %v323
  %s326 = scalar_lea.vmem %s0, 1
  %s327 = smov 3
  %v328 = vld [vmem:[%s326] ss:$16 sm:%s327]
  %s329 = scalar_lea.vmem %s0, 1
  %s330 = smov 12
  %v331 = vld [vmem:[%s329] ss:$16 sm:%s330]
  %vm332 = vcmask 1043458
  %v333 = vsel %vm332, %v331, %v328
  %s334 = scalar_lea.vmem %s0, 1
  %s335 = smov 48
  %v336 = vld [vmem:[%s334] ss:$16 sm:%s335]
  %vm337 = vcmask 1045508
  %v338 = vsel %vm337, %v336, %v333
  %s339 = scalar_lea.vmem %s0, 1
  %s340 = smov 192
  %v341 = vld [vmem:[%s339] ss:$16 sm:%s340]
  %vm342 = vcmask 1047558
  %v343 = vsel %vm342, %v341, %v338
  %344 = vrot.lane.b32.xlu0 %v343, 8
  %v345 = vpop.permute.xlu0 %344
  %vm346 = vcmask 130112
  %347 = vst.msk [vmem:[%s1] sm:$0xff] %vm346, %v345

// kernel: block_mid_2_forward.1
$region0: #{block_mid_2_forward.1}
  #allocation0 [shape = 'u32[]', space=smem, size = 0x4, offset = 0x4, fixed_abs, tag = 'smem constant byte address 0x4 - core index']
  #allocation1 [shape = 'u32[144,128]{1,0:T(1,128)}', space=vmem, size = 0x12000, scoped, tag = 'internal scratch']
  #allocation2 [shape = 'f32[36,144]{1,0:T(8,128)}', space=vmem, size = 0xa000, scoped, tag = 'scratch operand']
  %s0 = inlined_call_operand.vmem [shape: bf16[36,72], index: 0, kind: input, shape index: {}]
  %s1 = inlined_call_operand.vmem [shape: bf16[9,64,128], index: 1, kind: input, shape index: {}]
  %s2 = inlined_call_operand.vmem [shape: bf16[9,128,128], index: 2, kind: input, shape index: {}]
  %s3 = inlined_call_operand.vmem [shape: bf16[9,128,128], index: 3, kind: input, shape index: {}]
  %s4 = inlined_call_operand.vmem [shape: f32[1,8], index: 4, kind: input, shape index: {}]
  %s5 = inlined_call_operand.vmem [shape: f32[1,8], index: 5, kind: input, shape index: {}]
  %s6 = inlined_call_operand.vmem [shape: f32[1,8], index: 6, kind: input, shape index: {}]
  %s7 = inlined_call_operand.vmem [shape: f32[1,8], index: 7, kind: input, shape index: {}]
  %s8 = inlined_call_operand.vmem [shape: f32[1,8], index: 8, kind: input, shape index: {}]
  %s9 = inlined_call_operand.vmem [shape: f32[1,8], index: 9, kind: input, shape index: {}]
  %s10 = inlined_call_operand.vmem [shape: f32[128,8], index: 10, kind: input, shape index: {}]
  %s11 = inlined_call_operand.vmem [shape: f32[8,128], index: 11, kind: input, shape index: {}]
  %s12 = inlined_call_operand.vmem [shape: f32[32,128], index: 12, kind: output, shape index: {}]
  %s13 = sld [smem:[#allocation0]]
  $region58: #{block_mid_2_forward.1} parent=0
    _
  %s15 = ssub.s32 1, %s13
  %s16 = scalar_select 0, %s15, %s13
  // Predicated region
  $region2: #{block_mid_2_forward.1} parent=0 // pred_check
    _
  $region3: #{block_mid_2_forward.1} parent=0 // pred_check_branch
    %18 = sbr.rel (0) target = $region5
  $region4: #{block_mid_2_forward.1} parent=0 // pred_region
    _
  $region5: #{block_mid_2_forward.1} parent=0 // pred_fallthru
    _
  // Predicated region
  $region6: #{block_mid_2_forward.1} parent=0 // pred_check
    _
  $region7: #{block_mid_2_forward.1} parent=0 // pred_check_branch
    %20 = sbr.rel (0) target = $region9
  $region8: #{block_mid_2_forward.1} parent=0 // pred_region
    _
  $region9: #{block_mid_2_forward.1} parent=0 // pred_fallthru
    _
  // Predicated region
  $region10: #{block_mid_2_forward.1} parent=0 // pred_check
    _
  $region11: #{block_mid_2_forward.1} parent=0 // pred_check_branch
    %22 = sbr.rel (0) target = $region13
  $region12: #{block_mid_2_forward.1} parent=0 // pred_region
    _
  $region13: #{block_mid_2_forward.1} parent=0 // pred_fallthru
    _
  // Predicated region
  $region14: #{block_mid_2_forward.1} parent=0 // pred_check
    _
  $region15: #{block_mid_2_forward.1} parent=0 // pred_check_branch
    %24 = sbr.rel (0) target = $region17
  $region16: #{block_mid_2_forward.1} parent=0 // pred_region
    _
  $region17: #{block_mid_2_forward.1} parent=0 // pred_fallthru
    _
  // Predicated region
  $region18: #{block_mid_2_forward.1} parent=0 // pred_check
    _
  $region19: #{block_mid_2_forward.1} parent=0 // pred_check_branch
    %26 = sbr.rel (0) target = $region21
  $region20: #{block_mid_2_forward.1} parent=0 // pred_region
    _
  $region21: #{block_mid_2_forward.1} parent=0 // pred_fallthru
    _
  // Predicated region
  $region22: #{block_mid_2_forward.1} parent=0 // pred_check
    _
  $region23: #{block_mid_2_forward.1} parent=0 // pred_check_branch
    %28 = sbr.rel (0) target = $region25
  $region24: #{block_mid_2_forward.1} parent=0 // pred_region
    _
  $region25: #{block_mid_2_forward.1} parent=0 // pred_fallthru
    _
  // Predicated region
  $region26: #{block_mid_2_forward.1} parent=0 // pred_check
    _
  $region27: #{block_mid_2_forward.1} parent=0 // pred_check_branch
    %30 = sbr.rel (0) target = $region29
  $region28: #{block_mid_2_forward.1} parent=0 // pred_region
    _
  $region29: #{block_mid_2_forward.1} parent=0 // pred_fallthru
    _
  // Predicated region
  $region30: #{block_mid_2_forward.1} parent=0 // pred_check
    _
  $region31: #{block_mid_2_forward.1} parent=0 // pred_check_branch
    %32 = sbr.rel (0) target = $region33
  $region32: #{block_mid_2_forward.1} parent=0 // pred_region
    _
  $region33: #{block_mid_2_forward.1} parent=0 // pred_fallthru
    _
  // Predicated region
  $region34: #{block_mid_2_forward.1} parent=0 // pred_check
    _
  $region35: #{block_mid_2_forward.1} parent=0 // pred_check_branch
    %34 = sbr.rel (0) target = $region37
  $region36: #{block_mid_2_forward.1} parent=0 // pred_region
    _
  $region37: #{block_mid_2_forward.1} parent=0 // pred_fallthru
    _
  // Predicated region
  $region38: #{block_mid_2_forward.1} parent=0 // pred_check
    _
  $region39: #{block_mid_2_forward.1} parent=0 // pred_check_branch
    %36 = sbr.rel (0) target = $region41
  $region40: #{block_mid_2_forward.1} parent=0 // pred_region
    _
  $region41: #{block_mid_2_forward.1} parent=0 // pred_fallthru
    _
  // Predicated region
  $region42: #{block_mid_2_forward.1} parent=0 // pred_check
    _
  $region43: #{block_mid_2_forward.1} parent=0 // pred_check_branch
    %38 = sbr.rel (0) target = $region45
  $region44: #{block_mid_2_forward.1} parent=0 // pred_region
    _
  $region45: #{block_mid_2_forward.1} parent=0 // pred_fallthru
    _
  // Predicated region
  $region46: #{block_mid_2_forward.1} parent=0 // pred_check
    _
  $region47: #{block_mid_2_forward.1} parent=0 // pred_check_branch
    %40 = sbr.rel (0) target = $region49
  $region48: #{block_mid_2_forward.1} parent=0 // pred_region
    _
  $region49: #{block_mid_2_forward.1} parent=0 // pred_fallthru
    _
  %v42 = vld [vmem:[%s10] sm:$0xff]
  %v43 = vld [vmem:[%s10 + $0x8] sm:$0xff]
  %v44 = vld [vmem:[%s10 + $0x10] sm:$0xff]
  %v45 = vld [vmem:[%s10 + $0x18] sm:$0xff]
  %v46 = vld [vmem:[%s10 + $0x20] sm:$0xff]
  %v47 = vld [vmem:[%s10 + $0x28] sm:$0xff]
  %v48 = vld [vmem:[%s10 + $0x30] sm:$0xff]
  %v49 = vld [vmem:[%s10 + $0x38] sm:$0xff]
  %v50 = vld [vmem:[%s10 + $0x40] sm:$0xff]
  %v51 = vld [vmem:[%s10 + $0x48] sm:$0xff]
  %v52 = vld [vmem:[%s10 + $0x50] sm:$0xff]
  %v53 = vld [vmem:[%s10 + $0x58] sm:$0xff]
  %v54 = vld [vmem:[%s10 + $0x60] sm:$0xff]
  %v55 = vld [vmem:[%s10 + $0x68] sm:$0xff]
  %v56 = vld [vmem:[%s10 + $0x70] sm:$0xff]
  %v57 = vld [vmem:[%s10 + $0x78] sm:$0xff]
  %v58 = vld [vmem:[%s11] sm:$0xff]
  %59 = vst [vmem:[#allocation2] sm:$0xff] 0.0
  %vm60 = vcmask 130048
  %61 = vst.msk [vmem:[#allocation2 + $0x8] sm:$0xff] %vm60, 0.0
  %62 = vst [vmem:[#allocation2 + $0x10] sm:$0xff] 0.0
  %63 = vst.msk [vmem:[#allocation2 + $0x18] sm:$0xff] %vm60, 0.0
  %64 = vst [vmem:[#allocation2 + $0x20] sm:$0xff] 0.0
  %65 = vst.msk [vmem:[#allocation2 + $0x28] sm:$0xff] %vm60, 0.0
  %66 = vst [vmem:[#allocation2 + $0x30] sm:$0xff] 0.0
  %67 = vst.msk [vmem:[#allocation2 + $0x38] sm:$0xff] %vm60, 0.0
  %68 = vst [vmem:[#allocation2 + $0x40] sm:$0xf] 0.0
  %vm69 = vcmask 125952
  %70 = vst.msk [vmem:[#allocation2 + $0x48] sm:$0xf] %vm69, 0.0
  %v71 = vld [vmem:[%s0] sm:$0xf]
  %v72 = vld [vmem:[%s0 + $0x4] sm:$0xf]
  %v73 = vld [vmem:[%s1] sm:$0xf]
  %v74 = vld [vmem:[%s1 + $0x4] sm:$0xf]
  %v75 = vld [vmem:[%s1 + $0x8] sm:$0xf]
  %v76 = vld [vmem:[%s1 + $0xc] sm:$0xf]
  %v77 = vld [vmem:[%s1 + $0x10] sm:$0xf]
  %v78 = vld [vmem:[%s1 + $0x14] sm:$0xf]
  %v79 = vld [vmem:[%s1 + $0x18] sm:$0xf]
  %v80 = vld [vmem:[%s1 + $0x1c] sm:$0xf]
  %s81 = scalar_lea.vmem %s1, 32
  %v82 = vld [vmem:[%s81] sm:$0xf]
  %v83 = vld [vmem:[%s81 + $0x4] sm:$0xf]
  %v84 = vld [vmem:[%s81 + $0x8] sm:$0xf]
  %v85 = vld [vmem:[%s81 + $0xc] sm:$0xf]
  %v86 = vld [vmem:[%s81 + $0x10] sm:$0xf]
  %v87 = vld [vmem:[%s81 + $0x14] sm:$0xf]
  %v88 = vld [vmem:[%s81 + $0x18] sm:$0xf]
  %v89 = vld [vmem:[%s81 + $0x1c] sm:$0xf]
  %v92 = vunpack.c.l.b16 %v71
  %v93 = vunpack.c.l.b16 %v72
  %v94 = vpack.c.b16 %v93, %v92
  %95 = vrot.lane.b32.xlu0 %v94, 124
  %v96 = vpop.permute.xlu0 %95
  %v105 = vunpack.c.l.b16 %v82
  %v106 = vunpack.c.l.b16 %v83
  %v107 = vunpack.c.l.b16 %v84
  %v108 = vunpack.c.l.b16 %v85
  %v109 = vunpack.c.l.b16 %v86
  %v110 = vunpack.c.l.b16 %v87
  %v111 = vunpack.c.l.b16 %v88
  %v112 = vunpack.c.l.b16 %v89
  %v113 = vpack.c.b16 %v106, %v105
  %v114 = vpack.c.b16 %v108, %v107
  %v115 = vpack.c.b16 %v110, %v109
  %v116 = vpack.c.b16 %v112, %v111
  %vm121 = vcmask 523264
  %v123 = vsel %vm121, %v96, 0
  %125 = vmatprep.subr.bf16.mxu0 0
  %126 = vmatpush1.bf16.msra.mxu0 0
  %127 = vmatprep.subr.bf16.mxu0 0
  %128 = vmatpush1.bf16.msra.mxu0 0
  %129 = vmatprep.subr.bf16.mxu0 0
  %130 = vmatpush1.bf16.msra.mxu0 0
  %131 = vmatprep.subr.bf16.mxu0 0
  %132 = vmatpush1.bf16.msra.mxu0 0
  %133 = vmatprep.subr.bf16.mxu0 0
  %134 = vmatpush1.bf16.msra.mxu0 %v116
  %135 = vmatprep.subr.bf16.mxu0 0
  %136 = vmatpush1.bf16.msra.mxu0 %v115
  %137 = vmatprep.subr.bf16.mxu0 0
  %138 = vmatpush1.bf16.msra.mxu0 %v114
  %139 = vmatprep.subr.bf16.mxu0 0
  %140 = vmatpush1.bf16.msra.mxu0 %v113
  %141 = vmatprep.subr.bf16.mxu0 0
  %142 = vmatpush2.bf16.msra.mxu0 0
  %143 = vmatprep.subr.bf16.mxu0 0
  %144 = vmatpush2.bf16.msra.mxu0 0
  %145 = vmatprep.subr.bf16.mxu0 0
  %146 = vmatpush2.bf16.msra.mxu0 0
  %147 = vmatprep.subr.bf16.mxu0 0
  %148 = vmatpush2.bf16.msra.mxu0 0
  %149 = vmatprep.subr.bf16.mxu0 0
  %150 = vmatpush2.bf16.msra.mxu0 0
  %151 = vmatprep.subr.bf16.mxu0 0
  %152 = vmatpush2.bf16.msra.mxu0 0
  %153 = vmatprep.subr.bf16.mxu0 0
  %154 = vmatpush2.bf16.msra.mxu0 0
  %155 = vmatprep.subr.bf16.mxu0 0
  %156 = vmatpush2.bf16.msra.mxu0 0
  %157 = vmatprep.mubr.bf16.mxu0 0
  %158 = vmatmul.mubr.bf16.gmra.mxu0 %v123
  %v159 = vpop.f32.mrf.mxu0
  %v160 = vadd.f32 0.0, %v159
  %v161 = vpop.f32.mrf.mxu0
  %v162 = vpop.f32.mrf.mxu0
  %v163 = vadd.f32 0.0, %v162
  %v164 = vpop.f32.mrf.mxu0
  %165 = vdwg.mxu0
  %v174 = vunpack.c.l.b16 %v73
  %v175 = vunpack.c.l.b16 %v74
  %v176 = vunpack.c.l.b16 %v75
  %v177 = vunpack.c.l.b16 %v76
  %v178 = vunpack.c.l.b16 %v77
  %v179 = vunpack.c.l.b16 %v78
  %v180 = vunpack.c.l.b16 %v79
  %v181 = vunpack.c.l.b16 %v80
  %v182 = vpack.c.b16 %v175, %v174
  %v183 = vpack.c.b16 %v177, %v176
  %v184 = vpack.c.b16 %v179, %v178
  %v185 = vpack.c.b16 %v181, %v180
  %v191 = vsel %vm121, %v94, 0
  %193 = vmatprep.subr.bf16.mxu0 0
  %194 = vmatpush1.bf16.msra.mxu0 0
  %195 = vmatprep.subr.bf16.mxu0 0
  %196 = vmatpush1.bf16.msra.mxu0 0
  %197 = vmatprep.subr.bf16.mxu0 0
  %198 = vmatpush1.bf16.msra.mxu0 0
  %199 = vmatprep.subr.bf16.mxu0 0
  %200 = vmatpush1.bf16.msra.mxu0 0
  %201 = vmatprep.subr.bf16.mxu0 0
  %202 = vmatpush1.bf16.msra.mxu0 %v185
  %203 = vmatprep.subr.bf16.mxu0 0
  %204 = vmatpush1.bf16.msra.mxu0 %v184
  %205 = vmatprep.subr.bf16.mxu0 0
  %206 = vmatpush1.bf16.msra.mxu0 %v183
  %207 = vmatprep.subr.bf16.mxu0 0
  %208 = vmatpush1.bf16.msra.mxu0 %v182
  %209 = vmatprep.subr.bf16.mxu0 0
  %210 = vmatpush2.bf16.msra.mxu0 0
  %211 = vmatprep.subr.bf16.mxu0 0
  %212 = vmatpush2.bf16.msra.mxu0 0
  %213 = vmatprep.subr.bf16.mxu0 0
  %214 = vmatpush2.bf16.msra.mxu0 0
  %215 = vmatprep.subr.bf16.mxu0 0
  %216 = vmatpush2.bf16.msra.mxu0 0
  %217 = vmatprep.subr.bf16.mxu0 0
  %218 = vmatpush2.bf16.msra.mxu0 0
  %219 = vmatprep.subr.bf16.mxu0 0
  %220 = vmatpush2.bf16.msra.mxu0 0
  %221 = vmatprep.subr.bf16.mxu0 0
  %222 = vmatpush2.bf16.msra.mxu0 0
  %223 = vmatprep.subr.bf16.mxu0 0
  %224 = vmatpush2.bf16.msra.mxu0 0
  %225 = vmatprep.mubr.bf16.mxu0 0
  %226 = vmatmul.mubr.bf16.gmra.mxu0 %v191
  %v227 = vpop.f32.mrf.mxu0
  %v228 = vadd.f32 %v160, %v227
  %v229 = vpop.f32.mrf.mxu0
  %v230 = vpop.f32.mrf.mxu0
  %v231 = vadd.f32 %v163, %v230
  %v232 = vpop.f32.mrf.mxu0
  %233 = vdwg.mxu0
  %s234 = scalar_lea.vmem %s1, 64
  %v235 = vld [vmem:[%s234] sm:$0xf]
  %v236 = vld [vmem:[%s234 + $0x4] sm:$0xf]
  %v237 = vld [vmem:[%s234 + $0x8] sm:$0xf]
  %v238 = vld [vmem:[%s234 + $0xc] sm:$0xf]
  %v239 = vld [vmem:[%s234 + $0x10] sm:$0xf]
  %v240 = vld [vmem:[%s234 + $0x14] sm:$0xf]
  %v241 = vld [vmem:[%s234 + $0x18] sm:$0xf]
  %v242 = vld [vmem:[%s234 + $0x1c] sm:$0xf]
  %243 = vrot.lane.b32.xlu0 %v94, 120
  %v244 = vpop.permute.xlu0 %243
  %v253 = vunpack.c.l.b16 %v235
  %v254 = vunpack.c.l.b16 %v236
  %v255 = vunpack.c.l.b16 %v237
  %v256 = vunpack.c.l.b16 %v238
  %v257 = vunpack.c.l.b16 %v239
  %v258 = vunpack.c.l.b16 %v240
  %v259 = vunpack.c.l.b16 %v241
  %v260 = vunpack.c.l.b16 %v242
  %v261 = vpack.c.b16 %v254, %v253
  %v262 = vpack.c.b16 %v256, %v255
  %v263 = vpack.c.b16 %v258, %v257
  %v264 = vpack.c.b16 %v260, %v259
  %v270 = vsel %vm121, %v244, 0
  %272 = vmatprep.subr.bf16.mxu0 0
  %273 = vmatpush1.bf16.msra.mxu0 0
  %274 = vmatprep.subr.bf16.mxu0 0
  %275 = vmatpush1.bf16.msra.mxu0 0
  %276 = vmatprep.subr.bf16.mxu0 0
  %277 = vmatpush1.bf16.msra.mxu0 0
  %278 = vmatprep.subr.bf16.mxu0 0
  %279 = vmatpush1.bf16.msra.mxu0 0
  %280 = vmatprep.subr.bf16.mxu0 0
  %281 = vmatpush1.bf16.msra.mxu0 %v264
  %282 = vmatprep.subr.bf16.mxu0 0
  %283 = vmatpush1.bf16.msra.mxu0 %v263
  %284 = vmatprep.subr.bf16.mxu0 0
  %285 = vmatpush1.bf16.msra.mxu0 %v262
  %286 = vmatprep.subr.bf16.mxu0 0
  %287 = vmatpush1.bf16.msra.mxu0 %v261
  %288 = vmatprep.subr.bf16.mxu0 0
  %289 = vmatpush2.bf16.msra.mxu0 0
  %290 = vmatprep.subr.bf16.mxu0 0
  %291 = vmatpush2.bf16.msra.mxu0 0
  %292 = vmatprep.subr.bf16.mxu0 0
  %293 = vmatpush2.bf16.msra.mxu0 0
  %294 = vmatprep.subr.bf16.mxu0 0
  %295 = vmatpush2.bf16.msra.mxu0 0
  %296 = vmatprep.subr.bf16.mxu0 0
  %297 = vmatpush2.bf16.msra.mxu0 0
  %298 = vmatprep.subr.bf16.mxu0 0
  %299 = vmatpush2.bf16.msra.mxu0 0
  %300 = vmatprep.subr.bf16.mxu0 0
  %301 = vmatpush2.bf16.msra.mxu0 0
  %302 = vmatprep.subr.bf16.mxu0 0
  %303 = vmatpush2.bf16.msra.mxu0 0
  %304 = vmatprep.mubr.bf16.mxu0 0
  %305 = vmatmul.mubr.bf16.gmra.mxu0 %v270
  %v306 = vpop.f32.mrf.mxu0
  %v307 = vadd.f32 0.0, %v306
  %v308 = vpop.f32.mrf.mxu0
  %v309 = vpop.f32.mrf.mxu0
  %v310 = vadd.f32 0.0, %v309
  %v311 = vpop.f32.mrf.mxu0
  %312 = vdwg.mxu0
  %v313 = vadd.f32 %v228, %v307
  %v314 = vadd.f32 %v231, %v310
  %v315 = vld [vmem:[%s0] sm:$0xf]
  %v316 = vld [vmem:[%s0 + $0x4] sm:$0xf]
  %v317 = vld [vmem:[%s0 + $0x8] sm:$0x1]
  %s318 = scalar_lea.vmem %s1, 96
  %v319 = vld [vmem:[%s318] sm:$0xf]
  %v320 = vld [vmem:[%s318 + $0x4] sm:$0xf]
  %v321 = vld [vmem:[%s318 + $0x8] sm:$0xf]
  %v322 = vld [vmem:[%s318 + $0xc] sm:$0xf]
  %v323 = vld [vmem:[%s318 + $0x10] sm:$0xf]
  %v324 = vld [vmem:[%s318 + $0x14] sm:$0xf]
  %v325 = vld [vmem:[%s318 + $0x18] sm:$0xf]
  %v326 = vld [vmem:[%s318 + $0x1c] sm:$0xf]
  %v330 = vunpack.c.l.b16 %v315
  %v331 = vunpack.c.l.b16 %v316
  %v332 = vunpack.c.l.b16 %v317
  %v333 = vpack.c.b16 %v331, %v330
  %v334 = vpack.c.b16 %v332, %v332
  %vm335 = vsmask.f32 7424
  %v337 = vshrl.u32 %v333, 16
  %v339 = vshll.u32 %v333, 16
  %v341 = vrot.slane %v339, 1
  %v342 = vor.u32 %v337, %v341
  %v344 = vshll.u32 %v334, 16
  %v346 = vrot.slane %v344, 1
  %v347 = vsel %vm335, %v342, %v346
  %v356 = vunpack.c.l.b16 %v319
  %v357 = vunpack.c.l.b16 %v320
  %v358 = vunpack.c.l.b16 %v321
  %v359 = vunpack.c.l.b16 %v322
  %v360 = vunpack.c.l.b16 %v323
  %v361 = vunpack.c.l.b16 %v324
  %v362 = vunpack.c.l.b16 %v325
  %v363 = vunpack.c.l.b16 %v326
  %v364 = vpack.c.b16 %v357, %v356
  %v365 = vpack.c.b16 %v359, %v358
  %v366 = vpack.c.b16 %v361, %v360
  %v367 = vpack.c.b16 %v363, %v362
  %v373 = vsel %vm121, %v347, 0
  %375 = vmatprep.subr.bf16.mxu0 0
  %376 = vmatpush1.bf16.msra.mxu0 0
  %377 = vmatprep.subr.bf16.mxu0 0
  %378 = vmatpush1.bf16.msra.mxu0 0
  %379 = vmatprep.subr.bf16.mxu0 0
  %380 = vmatpush1.bf16.msra.mxu0 0
  %381 = vmatprep.subr.bf16.mxu0 0
  %382 = vmatpush1.bf16.msra.mxu0 0
  %383 = vmatprep.subr.bf16.mxu0 0
  %384 = vmatpush1.bf16.msra.mxu0 %v367
  %385 = vmatprep.subr.bf16.mxu0 0
  %386 = vmatpush1.bf16.msra.mxu0 %v366
  %387 = vmatprep.subr.bf16.mxu0 0
  %388 = vmatpush1.bf16.msra.mxu0 %v365
  %389 = vmatprep.subr.bf16.mxu0 0
  %390 = vmatpush1.bf16.msra.mxu0 %v364
  %391 = vmatprep.subr.bf16.mxu0 0
  %392 = vmatpush2.bf16.msra.mxu0 0
  %393 = vmatprep.subr.bf16.mxu0 0
  %394 = vmatpush2.bf16.msra.mxu0 0
  %395 = vmatprep.subr.bf16.mxu0 0
  %396 = vmatpush2.bf16.msra.mxu0 0
  %397 = vmatprep.subr.bf16.mxu0 0
  %398 = vmatpush2.bf16.msra.mxu0 0
  %399 = vmatprep.subr.bf16.mxu0 0
  %400 = vmatpush2.bf16.msra.mxu0 0
  %401 = vmatprep.subr.bf16.mxu0 0
  %402 = vmatpush2.bf16.msra.mxu0 0
  %403 = vmatprep.subr.bf16.mxu0 0
  %404 = vmatpush2.bf16.msra.mxu0 0
  %405 = vmatprep.subr.bf16.mxu0 0
  %406 = vmatpush2.bf16.msra.mxu0 0
  %407 = vmatprep.mubr.bf16.mxu0 0
  %408 = vmatmul.mubr.bf16.gmra.mxu0 %v373
  %v409 = vpop.f32.mrf.mxu0
  %v410 = vadd.f32 0.0, %v409
  %v411 = vpop.f32.mrf.mxu0
  %v412 = vpop.f32.mrf.mxu0
  %v413 = vadd.f32 0.0, %v412
  %v414 = vpop.f32.mrf.mxu0
  %415 = vdwg.mxu0
  %v416 = vadd.f32 %v313, %v410
  %v417 = vadd.f32 %v314, %v413
  %s418 = scalar_lea.vmem %s1, 128
  %v419 = vld [vmem:[%s418] sm:$0xf]
  %v420 = vld [vmem:[%s418 + $0x4] sm:$0xf]
  %v421 = vld [vmem:[%s418 + $0x8] sm:$0xf]
  %v422 = vld [vmem:[%s418 + $0xc] sm:$0xf]
  %v423 = vld [vmem:[%s418 + $0x10] sm:$0xf]
  %v424 = vld [vmem:[%s418 + $0x14] sm:$0xf]
  %v425 = vld [vmem:[%s418 + $0x18] sm:$0xf]
  %v426 = vld [vmem:[%s418 + $0x1c] sm:$0xf]
  %427 = vrot.lane.b32.xlu0 %v347, 124
  %v428 = vpop.permute.xlu0 %427
  %v437 = vunpack.c.l.b16 %v419
  %v438 = vunpack.c.l.b16 %v420
  %v439 = vunpack.c.l.b16 %v421
  %v440 = vunpack.c.l.b16 %v422
  %v441 = vunpack.c.l.b16 %v423
  %v442 = vunpack.c.l.b16 %v424
  %v443 = vunpack.c.l.b16 %v425
  %v444 = vunpack.c.l.b16 %v426
  %v445 = vpack.c.b16 %v438, %v437
  %v446 = vpack.c.b16 %v440, %v439
  %v447 = vpack.c.b16 %v442, %v441
  %v448 = vpack.c.b16 %v444, %v443
  %v454 = vsel %vm121, %v428, 0
  %456 = vmatprep.subr.bf16.mxu0 0
  %457 = vmatpush1.bf16.msra.mxu0 0
  %458 = vmatprep.subr.bf16.mxu0 0
  %459 = vmatpush1.bf16.msra.mxu0 0
  %460 = vmatprep.subr.bf16.mxu0 0
  %461 = vmatpush1.bf16.msra.mxu0 0
  %462 = vmatprep.subr.bf16.mxu0 0
  %463 = vmatpush1.bf16.msra.mxu0 0
  %464 = vmatprep.subr.bf16.mxu0 0
  %465 = vmatpush1.bf16.msra.mxu0 %v448
  %466 = vmatprep.subr.bf16.mxu0 0
  %467 = vmatpush1.bf16.msra.mxu0 %v447
  %468 = vmatprep.subr.bf16.mxu0 0
  %469 = vmatpush1.bf16.msra.mxu0 %v446
  %470 = vmatprep.subr.bf16.mxu0 0
  %471 = vmatpush1.bf16.msra.mxu0 %v445
  %472 = vmatprep.subr.bf16.mxu0 0
  %473 = vmatpush2.bf16.msra.mxu0 0
  %474 = vmatprep.subr.bf16.mxu0 0
  %475 = vmatpush2.bf16.msra.mxu0 0
  %476 = vmatprep.subr.bf16.mxu0 0
  %477 = vmatpush2.bf16.msra.mxu0 0
  %478 = vmatprep.subr.bf16.mxu0 0
  %479 = vmatpush2.bf16.msra.mxu0 0
  %480 = vmatprep.subr.bf16.mxu0 0
  %481 = vmatpush2.bf16.msra.mxu0 0
  %482 = vmatprep.subr.bf16.mxu0 0
  %483 = vmatpush2.bf16.msra.mxu0 0
  %484 = vmatprep.subr.bf16.mxu0 0
  %485 = vmatpush2.bf16.msra.mxu0 0
  %486 = vmatprep.subr.bf16.mxu0 0
  %487 = vmatpush2.bf16.msra.mxu0 0
  %488 = vmatprep.mubr.bf16.mxu0 0
  %489 = vmatmul.mubr.bf16.gmra.mxu0 %v454
  %v490 = vpop.f32.mrf.mxu0
  %v491 = vadd.f32 0.0, %v490
  %v492 = vpop.f32.mrf.mxu0
  %v493 = vpop.f32.mrf.mxu0
  %v494 = vadd.f32 0.0, %v493
  %v495 = vpop.f32.mrf.mxu0
  %496 = vdwg.mxu0
  %v497 = vadd.f32 %v416, %v491
  %v498 = vadd.f32 %v417, %v494
  %s499 = scalar_lea.vmem %s1, 160
  %v500 = vld [vmem:[%s499] sm:$0xf]
  %v501 = vld [vmem:[%s499 + $0x4] sm:$0xf]
  %v502 = vld [vmem:[%s499 + $0x8] sm:$0xf]
  %v503 = vld [vmem:[%s499 + $0xc] sm:$0xf]
  %v504 = vld [vmem:[%s499 + $0x10] sm:$0xf]
  %v505 = vld [vmem:[%s499 + $0x14] sm:$0xf]
  %v506 = vld [vmem:[%s499 + $0x18] sm:$0xf]
  %v507 = vld [vmem:[%s499 + $0x1c] sm:$0xf]
  %508 = vrot.lane.b32.xlu0 %v347, 120
  %v509 = vpop.permute.xlu0 %508
  %v518 = vunpack.c.l.b16 %v500
  %v519 = vunpack.c.l.b16 %v501
  %v520 = vunpack.c.l.b16 %v502
  %v521 = vunpack.c.l.b16 %v503
  %v522 = vunpack.c.l.b16 %v504
  %v523 = vunpack.c.l.b16 %v505
  %v524 = vunpack.c.l.b16 %v506
  %v525 = vunpack.c.l.b16 %v507
  %v526 = vpack.c.b16 %v519, %v518
  %v527 = vpack.c.b16 %v521, %v520
  %v528 = vpack.c.b16 %v523, %v522
  %v529 = vpack.c.b16 %v525, %v524
  %v535 = vsel %vm121, %v509, 0
  %537 = vmatprep.subr.bf16.mxu0 0
  %538 = vmatpush1.bf16.msra.mxu0 0
  %539 = vmatprep.subr.bf16.mxu0 0
  %540 = vmatpush1.bf16.msra.mxu0 0
  %541 = vmatprep.subr.bf16.mxu0 0
  %542 = vmatpush1.bf16.msra.mxu0 0
  %543 = vmatprep.subr.bf16.mxu0 0
  %544 = vmatpush1.bf16.msra.mxu0 0
  %545 = vmatprep.subr.bf16.mxu0 0
  %546 = vmatpush1.bf16.msra.mxu0 %v529
  %547 = vmatprep.subr.bf16.mxu0 0
  %548 = vmatpush1.bf16.msra.mxu0 %v528
  %549 = vmatprep.subr.bf16.mxu0 0
  %550 = vmatpush1.bf16.msra.mxu0 %v527
  %551 = vmatprep.subr.bf16.mxu0 0
  %552 = vmatpush1.bf16.msra.mxu0 %v526
  %553 = vmatprep.subr.bf16.mxu0 0
  %554 = vmatpush2.bf16.msra.mxu0 0
  %555 = vmatprep.subr.bf16.mxu0 0
  %556 = vmatpush2.bf16.msra.mxu0 0
  %557 = vmatprep.subr.bf16.mxu0 0
  %558 = vmatpush2.bf16.msra.mxu0 0
  %559 = vmatprep.subr.bf16.mxu0 0
  %560 = vmatpush2.bf16.msra.mxu0 0
  %561 = vmatprep.subr.bf16.mxu0 0
  %562 = vmatpush2.bf16.msra.mxu0 0
  %563 = vmatprep.subr.bf16.mxu0 0
  %564 = vmatpush2.bf16.msra.mxu0 0
  %565 = vmatprep.subr.bf16.mxu0 0
  %566 = vmatpush2.bf16.msra.mxu0 0
  %567 = vmatprep.subr.bf16.mxu0 0
  %568 = vmatpush2.bf16.msra.mxu0 0
  %569 = vmatprep.mubr.bf16.mxu0 0
  %570 = vmatmul.mubr.bf16.gmra.mxu0 %v535
  %v571 = vpop.f32.mrf.mxu0
  %v572 = vadd.f32 0.0, %v571
  %v573 = vpop.f32.mrf.mxu0
  %v574 = vpop.f32.mrf.mxu0
  %v575 = vadd.f32 0.0, %v574
  %v576 = vpop.f32.mrf.mxu0
  %577 = vdwg.mxu0
  %v578 = vadd.f32 %v497, %v572
  %v579 = vadd.f32 %v498, %v575
  %v580 = vld [vmem:[%s0] sm:$0xe]
  %s581 = scalar_lea.vmem %s1, 192
  %v582 = vld [vmem:[%s581] sm:$0xf]
  %v583 = vld [vmem:[%s581 + $0x4] sm:$0xf]
  %v584 = vld [vmem:[%s581 + $0x8] sm:$0xf]
  %v585 = vld [vmem:[%s581 + $0xc] sm:$0xf]
  %v586 = vld [vmem:[%s581 + $0x10] sm:$0xf]
  %v587 = vld [vmem:[%s581 + $0x14] sm:$0xf]
  %v588 = vld [vmem:[%s581 + $0x18] sm:$0xf]
  %v589 = vld [vmem:[%s581 + $0x1c] sm:$0xf]
  %v591 = vunpack.c.l.b16 %v580
  %v592 = vpack.c.b16 %v331, %v591
  %vm593 = vcmask 1046528
  %v594 = vrot.slane %v592, 1
  %v595 = vrot.slane %v334, 1
  %v596 = vsel %vm593, %v594, %v595
  %v605 = vunpack.c.l.b16 %v582
  %v606 = vunpack.c.l.b16 %v583
  %v607 = vunpack.c.l.b16 %v584
  %v608 = vunpack.c.l.b16 %v585
  %v609 = vunpack.c.l.b16 %v586
  %v610 = vunpack.c.l.b16 %v587
  %v611 = vunpack.c.l.b16 %v588
  %v612 = vunpack.c.l.b16 %v589
  %v613 = vpack.c.b16 %v606, %v605
  %v614 = vpack.c.b16 %v608, %v607
  %v615 = vpack.c.b16 %v610, %v609
  %v616 = vpack.c.b16 %v612, %v611
  %v622 = vsel %vm121, %v596, 0
  %624 = vmatprep.subr.bf16.mxu0 0
  %625 = vmatpush1.bf16.msra.mxu0 0
  %626 = vmatprep.subr.bf16.mxu0 0
  %627 = vmatpush1.bf16.msra.mxu0 0
  %628 = vmatprep.subr.bf16.mxu0 0
  %629 = vmatpush1.bf16.msra.mxu0 0
  %630 = vmatprep.subr.bf16.mxu0 0
  %631 = vmatpush1.bf16.msra.mxu0 0
  %632 = vmatprep.subr.bf16.mxu0 0
  %633 = vmatpush1.bf16.msra.mxu0 %v616
  %634 = vmatprep.subr.bf16.mxu0 0
  %635 = vmatpush1.bf16.msra.mxu0 %v615
  %636 = vmatprep.subr.bf16.mxu0 0
  %637 = vmatpush1.bf16.msra.mxu0 %v614
  %638 = vmatprep.subr.bf16.mxu0 0
  %639 = vmatpush1.bf16.msra.mxu0 %v613
  %640 = vmatprep.subr.bf16.mxu0 0
  %641 = vmatpush2.bf16.msra.mxu0 0
  %642 = vmatprep.subr.bf16.mxu0 0
  %643 = vmatpush2.bf16.msra.mxu0 0
  %644 = vmatprep.subr.bf16.mxu0 0
  %645 = vmatpush2.bf16.msra.mxu0 0
  %646 = vmatprep.subr.bf16.mxu0 0
  %647 = vmatpush2.bf16.msra.mxu0 0
  %648 = vmatprep.subr.bf16.mxu0 0
  %649 = vmatpush2.bf16.msra.mxu0 0
  %650 = vmatprep.subr.bf16.mxu0 0
  %651 = vmatpush2.bf16.msra.mxu0 0
  %652 = vmatprep.subr.bf16.mxu0 0
  %653 = vmatpush2.bf16.msra.mxu0 0
  %654 = vmatprep.subr.bf16.mxu0 0
  %655 = vmatpush2.bf16.msra.mxu0 0
  %656 = vmatprep.mubr.bf16.mxu0 0
  %657 = vmatmul.mubr.bf16.gmra.mxu0 %v622
  %v658 = vpop.f32.mrf.mxu0
  %v659 = vadd.f32 0.0, %v658
  %v660 = vpop.f32.mrf.mxu0
  %v661 = vpop.f32.mrf.mxu0
  %v662 = vadd.f32 0.0, %v661
  %v663 = vpop.f32.mrf.mxu0
  %664 = vdwg.mxu0
  %v665 = vadd.f32 %v578, %v659
  %v666 = vadd.f32 %v579, %v662
  %s667 = scalar_lea.vmem %s1, 224
  %v668 = vld [vmem:[%s667] sm:$0xf]
  %v669 = vld [vmem:[%s667 + $0x4] sm:$0xf]
  %v670 = vld [vmem:[%s667 + $0x8] sm:$0xf]
  %v671 = vld [vmem:[%s667 + $0xc] sm:$0xf]
  %v672 = vld [vmem:[%s667 + $0x10] sm:$0xf]
  %v673 = vld [vmem:[%s667 + $0x14] sm:$0xf]
  %v674 = vld [vmem:[%s667 + $0x18] sm:$0xf]
  %v675 = vld [vmem:[%s667 + $0x1c] sm:$0xf]
  %676 = vrot.lane.b32.xlu0 %v596, 124
  %v677 = vpop.permute.xlu0 %676
  %v686 = vunpack.c.l.b16 %v668
  %v687 = vunpack.c.l.b16 %v669
  %v688 = vunpack.c.l.b16 %v670
  %v689 = vunpack.c.l.b16 %v671
  %v690 = vunpack.c.l.b16 %v672
  %v691 = vunpack.c.l.b16 %v673
  %v692 = vunpack.c.l.b16 %v674
  %v693 = vunpack.c.l.b16 %v675
  %v694 = vpack.c.b16 %v687, %v686
  %v695 = vpack.c.b16 %v689, %v688
  %v696 = vpack.c.b16 %v691, %v690
  %v697 = vpack.c.b16 %v693, %v692
  %v703 = vsel %vm121, %v677, 0
  %705 = vmatprep.subr.bf16.mxu0 0
  %706 = vmatpush1.bf16.msra.mxu0 0
  %707 = vmatprep.subr.bf16.mxu0 0
  %708 = vmatpush1.bf16.msra.mxu0 0
  %709 = vmatprep.subr.bf16.mxu0 0
  %710 = vmatpush1.bf16.msra.mxu0 0
  %711 = vmatprep.subr.bf16.mxu0 0
  %712 = vmatpush1.bf16.msra.mxu0 0
  %713 = vmatprep.subr.bf16.mxu0 0
  %714 = vmatpush1.bf16.msra.mxu0 %v697
  %715 = vmatprep.subr.bf16.mxu0 0
  %716 = vmatpush1.bf16.msra.mxu0 %v696
  %717 = vmatprep.subr.bf16.mxu0 0
  %718 = vmatpush1.bf16.msra.mxu0 %v695
  %719 = vmatprep.subr.bf16.mxu0 0
  %720 = vmatpush1.bf16.msra.mxu0 %v694
  %721 = vmatprep.subr.bf16.mxu0 0
  %722 = vmatpush2.bf16.msra.mxu0 0
  %723 = vmatprep.subr.bf16.mxu0 0
  %724 = vmatpush2.bf16.msra.mxu0 0
  %725 = vmatprep.subr.bf16.mxu0 0
  %726 = vmatpush2.bf16.msra.mxu0 0
  %727 = vmatprep.subr.bf16.mxu0 0
  %728 = vmatpush2.bf16.msra.mxu0 0
  %729 = vmatprep.subr.bf16.mxu0 0
  %730 = vmatpush2.bf16.msra.mxu0 0
  %731 = vmatprep.subr.bf16.mxu0 0
  %732 = vmatpush2.bf16.msra.mxu0 0
  %733 = vmatprep.subr.bf16.mxu0 0
  %734 = vmatpush2.bf16.msra.mxu0 0
  %735 = vmatprep.subr.bf16.mxu0 0
  %736 = vmatpush2.bf16.msra.mxu0 0
  %737 = vmatprep.mubr.bf16.mxu0 0
  %738 = vmatmul.mubr.bf16.gmra.mxu0 %v703
  %v739 = vpop.f32.mrf.mxu0
  %v740 = vadd.f32 0.0, %v739
  %v741 = vpop.f32.mrf.mxu0
  %v742 = vpop.f32.mrf.mxu0
  %v743 = vadd.f32 0.0, %v742
  %v744 = vpop.f32.mrf.mxu0
  %745 = vdwg.mxu0
  %v746 = vadd.f32 %v665, %v740
  %v747 = vadd.f32 %v666, %v743
  %s748 = scalar_lea.vmem %s1, 256
  %v749 = vld [vmem:[%s748] sm:$0xf]
  %v750 = vld [vmem:[%s748 + $0x4] sm:$0xf]
  %v751 = vld [vmem:[%s748 + $0x8] sm:$0xf]
  %v752 = vld [vmem:[%s748 + $0xc] sm:$0xf]
  %v753 = vld [vmem:[%s748 + $0x10] sm:$0xf]
  %v754 = vld [vmem:[%s748 + $0x14] sm:$0xf]
  %v755 = vld [vmem:[%s748 + $0x18] sm:$0xf]
  %v756 = vld [vmem:[%s748 + $0x1c] sm:$0xf]
  %757 = vrot.lane.b32.xlu0 %v596, 120
  %v758 = vpop.permute.xlu0 %757
  %v767 = vunpack.c.l.b16 %v749
  %v768 = vunpack.c.l.b16 %v750
  %v769 = vunpack.c.l.b16 %v751
  %v770 = vunpack.c.l.b16 %v752
  %v771 = vunpack.c.l.b16 %v753
  %v772 = vunpack.c.l.b16 %v754
  %v773 = vunpack.c.l.b16 %v755
  %v774 = vunpack.c.l.b16 %v756
  %v775 = vpack.c.b16 %v768, %v767
  %v776 = vpack.c.b16 %v770, %v769
  %v777 = vpack.c.b16 %v772, %v771
  %v778 = vpack.c.b16 %v774, %v773
  %v784 = vsel %vm121, %v758, 0
  %786 = vmatprep.subr.bf16.mxu0 0
  %787 = vmatpush1.bf16.msra.mxu0 0
  %788 = vmatprep.subr.bf16.mxu0 0
  %789 = vmatpush1.bf16.msra.mxu0 0
  %790 = vmatprep.subr.bf16.mxu0 0
  %791 = vmatpush1.bf16.msra.mxu0 0
  %792 = vmatprep.subr.bf16.mxu0 0
  %793 = vmatpush1.bf16.msra.mxu0 0
  %794 = vmatprep.subr.bf16.mxu0 0
  %795 = vmatpush1.bf16.msra.mxu0 %v778
  %796 = vmatprep.subr.bf16.mxu0 0
  %797 = vmatpush1.bf16.msra.mxu0 %v777
  %798 = vmatprep.subr.bf16.mxu0 0
  %799 = vmatpush1.bf16.msra.mxu0 %v776
  %800 = vmatprep.subr.bf16.mxu0 0
  %801 = vmatpush1.bf16.msra.mxu0 %v775
  %802 = vmatprep.subr.bf16.mxu0 0
  %803 = vmatpush2.bf16.msra.mxu0 0
  %804 = vmatprep.subr.bf16.mxu0 0
  %805 = vmatpush2.bf16.msra.mxu0 0
  %806 = vmatprep.subr.bf16.mxu0 0
  %807 = vmatpush2.bf16.msra.mxu0 0
  %808 = vmatprep.subr.bf16.mxu0 0
  %809 = vmatpush2.bf16.msra.mxu0 0
  %810 = vmatprep.subr.bf16.mxu0 0
  %811 = vmatpush2.bf16.msra.mxu0 0
  %812 = vmatprep.subr.bf16.mxu0 0
  %813 = vmatpush2.bf16.msra.mxu0 0
  %814 = vmatprep.subr.bf16.mxu0 0
  %815 = vmatpush2.bf16.msra.mxu0 0
  %816 = vmatprep.subr.bf16.mxu0 0
  %817 = vmatpush2.bf16.msra.mxu0 0
  %818 = vmatprep.mubr.bf16.mxu0 0
  %819 = vmatmul.mubr.bf16.gmra.mxu0 %v784
  %v820 = vpop.f32.mrf.mxu0
  %v821 = vadd.f32 0.0, %v820
  %v822 = vpop.f32.mrf.mxu0
  %v823 = vpop.f32.mrf.mxu0
  %v824 = vadd.f32 0.0, %v823
  %v825 = vpop.f32.mrf.mxu0
  %826 = vdwg.mxu0
  %v827 = vadd.f32 %v746, %v821
  %v828 = vadd.f32 %v747, %v824
  %v829 = vld [vmem:[%s0 + $0x8] sm:$0xe]
  %v830 = vld [vmem:[%s0 + $0xc] sm:$0xf]
  %v831 = vld [vmem:[%s0 + $0x10] sm:$0x1]
  %v835 = vunpack.c.l.b16 %v829
  %v836 = vunpack.c.l.b16 %v830
  %v837 = vunpack.c.l.b16 %v831
  %v838 = vpack.c.b16 %v836, %v835
  %v839 = vpack.c.b16 %v837, %v837
  %v840 = vrot.slane %v838, 1
  %v841 = vrot.slane %v839, 1
  %v842 = vsel %vm593, %v840, %v841
  %843 = vrot.lane.b32.xlu0 %v842, 124
  %v844 = vpop.permute.xlu0 %843
  %v846 = vsel %vm121, %v844, 0
  %848 = vmatprep.subr.bf16.mxu0 0
  %849 = vmatpush1.bf16.msra.mxu0 0
  %850 = vmatprep.subr.bf16.mxu0 0
  %851 = vmatpush1.bf16.msra.mxu0 0
  %852 = vmatprep.subr.bf16.mxu0 0
  %853 = vmatpush1.bf16.msra.mxu0 0
  %854 = vmatprep.subr.bf16.mxu0 0
  %855 = vmatpush1.bf16.msra.mxu0 0
  %856 = vmatprep.subr.bf16.mxu0 0
  %857 = vmatpush1.bf16.msra.mxu0 %v116
  %858 = vmatprep.subr.bf16.mxu0 0
  %859 = vmatpush1.bf16.msra.mxu0 %v115
  %860 = vmatprep.subr.bf16.mxu0 0
  %861 = vmatpush1.bf16.msra.mxu0 %v114
  %862 = vmatprep.subr.bf16.mxu0 0
  %863 = vmatpush1.bf16.msra.mxu0 %v113
  %864 = vmatprep.subr.bf16.mxu0 0
  %865 = vmatpush2.bf16.msra.mxu0 0
  %866 = vmatprep.subr.bf16.mxu0 0
  %867 = vmatpush2.bf16.msra.mxu0 0
  %868 = vmatprep.subr.bf16.mxu0 0
  %869 = vmatpush2.bf16.msra.mxu0 0
  %870 = vmatprep.subr.bf16.mxu0 0
  %871 = vmatpush2.bf16.msra.mxu0 0
  %872 = vmatprep.subr.bf16.mxu0 0
  %873 = vmatpush2.bf16.msra.mxu0 0
  %874 = vmatprep.subr.bf16.mxu0 0
  %875 = vmatpush2.bf16.msra.mxu0 0
  %876 = vmatprep.subr.bf16.mxu0 0
  %877 = vmatpush2.bf16.msra.mxu0 0
  %878 = vmatprep.subr.bf16.mxu0 0
  %879 = vmatpush2.bf16.msra.mxu0 0
  %880 = vmatprep.mubr.bf16.mxu0 0
  %881 = vmatmul.mubr.bf16.gmra.mxu0 %v846
  %v882 = vpop.f32.mrf.mxu0
  %v883 = vadd.f32 0.0, %v882
  %v884 = vpop.f32.mrf.mxu0
  %v885 = vpop.f32.mrf.mxu0
  %v886 = vadd.f32 0.0, %v885
  %v887 = vpop.f32.mrf.mxu0
  %888 = vdwg.mxu0
  %v890 = vsel %vm121, %v842, 0
  %892 = vmatprep.subr.bf16.mxu0 0
  %893 = vmatpush1.bf16.msra.mxu0 0
  %894 = vmatprep.subr.bf16.mxu0 0
  %895 = vmatpush1.bf16.msra.mxu0 0
  %896 = vmatprep.subr.bf16.mxu0 0
  %897 = vmatpush1.bf16.msra.mxu0 0
  %898 = vmatprep.subr.bf16.mxu0 0
  %899 = vmatpush1.bf16.msra.mxu0 0
  %900 = vmatprep.subr.bf16.mxu0 0
  %901 = vmatpush1.bf16.msra.mxu0 %v185
  %902 = vmatprep.subr.bf16.mxu0 0
  %903 = vmatpush1.bf16.msra.mxu0 %v184
  %904 = vmatprep.subr.bf16.mxu0 0
  %905 = vmatpush1.bf16.msra.mxu0 %v183
  %906 = vmatprep.subr.bf16.mxu0 0
  %907 = vmatpush1.bf16.msra.mxu0 %v182
  %908 = vmatprep.subr.bf16.mxu0 0
  %909 = vmatpush2.bf16.msra.mxu0 0
  %910 = vmatprep.subr.bf16.mxu0 0
  %911 = vmatpush2.bf16.msra.mxu0 0
  %912 = vmatprep.subr.bf16.mxu0 0
  %913 = vmatpush2.bf16.msra.mxu0 0
  %914 = vmatprep.subr.bf16.mxu0 0
  %915 = vmatpush2.bf16.msra.mxu0 0
  %916 = vmatprep.subr.bf16.mxu0 0
  %917 = vmatpush2.bf16.msra.mxu0 0
  %918 = vmatprep.subr.bf16.mxu0 0
  %919 = vmatpush2.bf16.msra.mxu0 0
  %920 = vmatprep.subr.bf16.mxu0 0
  %921 = vmatpush2.bf16.msra.mxu0 0
  %922 = vmatprep.subr.bf16.mxu0 0
  %923 = vmatpush2.bf16.msra.mxu0 0
  %924 = vmatprep.mubr.bf16.mxu0 0
  %925 = vmatmul.mubr.bf16.gmra.mxu0 %v890
  %v926 = vpop.f32.mrf.mxu0
  %v927 = vadd.f32 %v883, %v926
  %v928 = vpop.f32.mrf.mxu0
  %v929 = vpop.f32.mrf.mxu0
  %v930 = vadd.f32 %v886, %v929
  %v931 = vpop.f32.mrf.mxu0
  %932 = vdwg.mxu0
  %933 = vrot.lane.b32.xlu0 %v842, 120
  %v934 = vpop.permute.xlu0 %933
  %v936 = vsel %vm121, %v934, 0
  %938 = vmatprep.subr.bf16.mxu0 0
  %939 = vmatpush1.bf16.msra.mxu0 0
  %940 = vmatprep.subr.bf16.mxu0 0
  %941 = vmatpush1.bf16.msra.mxu0 0
  %942 = vmatprep.subr.bf16.mxu0 0
  %943 = vmatpush1.bf16.msra.mxu0 0
  %944 = vmatprep.subr.bf16.mxu0 0
  %945 = vmatpush1.bf16.msra.mxu0 0
  %946 = vmatprep.subr.bf16.mxu0 0
  %947 = vmatpush1.bf16.msra.mxu0 %v264
  %948 = vmatprep.subr.bf16.mxu0 0
  %949 = vmatpush1.bf16.msra.mxu0 %v263
  %950 = vmatprep.subr.bf16.mxu0 0
  %951 = vmatpush1.bf16.msra.mxu0 %v262
  %952 = vmatprep.subr.bf16.mxu0 0
  %953 = vmatpush1.bf16.msra.mxu0 %v261
  %954 = vmatprep.subr.bf16.mxu0 0
  %955 = vmatpush2.bf16.msra.mxu0 0
  %956 = vmatprep.subr.bf16.mxu0 0
  %957 = vmatpush2.bf16.msra.mxu0 0
  %958 = vmatprep.subr.bf16.mxu0 0
  %959 = vmatpush2.bf16.msra.mxu0 0
  %960 = vmatprep.subr.bf16.mxu0 0
  %961 = vmatpush2.bf16.msra.mxu0 0
  %962 = vmatprep.subr.bf16.mxu0 0
  %963 = vmatpush2.bf16.msra.mxu0 0
  %964 = vmatprep.subr.bf16.mxu0 0
  %965 = vmatpush2.bf16.msra.mxu0 0
  %966 = vmatprep.subr.bf16.mxu0 0
  %967 = vmatpush2.bf16.msra.mxu0 0
  %968 = vmatprep.subr.bf16.mxu0 0
  %969 = vmatpush2.bf16.msra.mxu0 0
  %970 = vmatprep.mubr.bf16.mxu0 0
  %971 = vmatmul.mubr.bf16.gmra.mxu0 %v936
  %v972 = vpop.f32.mrf.mxu0
  %v973 = vadd.f32 0.0, %v972
  %v974 = vpop.f32.mrf.mxu0
  %v975 = vpop.f32.mrf.mxu0
  %v976 = vadd.f32 0.0, %v975
  %v977 = vpop.f32.mrf.mxu0
  %978 = vdwg.mxu0
  %v979 = vadd.f32 %v927, %v973
  %v980 = vadd.f32 %v930, %v976
  %v981 = vld [vmem:[%s0 + $0x10] sm:$0x3]
  %v983 = vunpack.c.l.b16 %v981
  %v984 = vpack.c.b16 %v983, %v983
  %vm985 = vsmask.f32 6400
  %v987 = vshrl.u32 %v838, 16
  %v989 = vrot.slane %v987, 1
  %v990 = vshll.u32 %v838, 16
  %v992 = vrot.slane %v990, 2
  %v993 = vor.u32 %v989, %v992
  %v995 = vshrl.u32 %v984, 16
  %v997 = vrot.slane %v995, 1
  %v998 = vshll.u32 %v984, 16
  %v1000 = vrot.slane %v998, 2
  %v1001 = vor.u32 %v997, %v1000
  %v1002 = vsel %vm985, %v993, %v1001
  %v1004 = vsel %vm121, %v1002, 0
  %1006 = vmatprep.subr.bf16.mxu0 0
  %1007 = vmatpush1.bf16.msra.mxu0 0
  %1008 = vmatprep.subr.bf16.mxu0 0
  %1009 = vmatpush1.bf16.msra.mxu0 0
  %1010 = vmatprep.subr.bf16.mxu0 0
  %1011 = vmatpush1.bf16.msra.mxu0 0
  %1012 = vmatprep.subr.bf16.mxu0 0
  %1013 = vmatpush1.bf16.msra.mxu0 0
  %1014 = vmatprep.subr.bf16.mxu0 0
  %1015 = vmatpush1.bf16.msra.mxu0 %v367
  %1016 = vmatprep.subr.bf16.mxu0 0
  %1017 = vmatpush1.bf16.msra.mxu0 %v366
  %1018 = vmatprep.subr.bf16.mxu0 0
  %1019 = vmatpush1.bf16.msra.mxu0 %v365
  %1020 = vmatprep.subr.bf16.mxu0 0
  %1021 = vmatpush1.bf16.msra.mxu0 %v364
  %1022 = vmatprep.subr.bf16.mxu0 0
  %1023 = vmatpush2.bf16.msra.mxu0 0
  %1024 = vmatprep.subr.bf16.mxu0 0
  %1025 = vmatpush2.bf16.msra.mxu0 0
  %1026 = vmatprep.subr.bf16.mxu0 0
  %1027 = vmatpush2.bf16.msra.mxu0 0
  %1028 = vmatprep.subr.bf16.mxu0 0
  %1029 = vmatpush2.bf16.msra.mxu0 0
  %1030 = vmatprep.subr.bf16.mxu0 0
  %1031 = vmatpush2.bf16.msra.mxu0 0
  %1032 = vmatprep.subr.bf16.mxu0 0
  %1033 = vmatpush2.bf16.msra.mxu0 0
  %1034 = vmatprep.subr.bf16.mxu0 0
  %1035 = vmatpush2.bf16.msra.mxu0 0
  %1036 = vmatprep.subr.bf16.mxu0 0
  %1037 = vmatpush2.bf16.msra.mxu0 0
  %1038 = vmatprep.mubr.bf16.mxu0 0
  %1039 = vmatmul.mubr.bf16.gmra.mxu0 %v1004
  %v1040 = vpop.f32.mrf.mxu0
  %v1041 = vadd.f32 0.0, %v1040
  %v1042 = vpop.f32.mrf.mxu0
  %v1043 = vpop.f32.mrf.mxu0
  %v1044 = vadd.f32 0.0, %v1043
  %v1045 = vpop.f32.mrf.mxu0
  %1046 = vdwg.mxu0
  %v1047 = vadd.f32 %v979, %v1041
  %v1048 = vadd.f32 %v980, %v1044
  %1049 = vrot.lane.b32.xlu0 %v1002, 124
  %v1050 = vpop.permute.xlu0 %1049
  %v1052 = vsel %vm121, %v1050, 0
  %1054 = vmatprep.subr.bf16.mxu0 0
  %1055 = vmatpush1.bf16.msra.mxu0 0
  %1056 = vmatprep.subr.bf16.mxu0 0
  %1057 = vmatpush1.bf16.msra.mxu0 0
  %1058 = vmatprep.subr.bf16.mxu0 0
  %1059 = vmatpush1.bf16.msra.mxu0 0
  %1060 = vmatprep.subr.bf16.mxu0 0
  %1061 = vmatpush1.bf16.msra.mxu0 0
  %1062 = vmatprep.subr.bf16.mxu0 0
  %1063 = vmatpush1.bf16.msra.mxu0 %v448
  %1064 = vmatprep.subr.bf16.mxu0 0
  %1065 = vmatpush1.bf16.msra.mxu0 %v447
  %1066 = vmatprep.subr.bf16.mxu0 0
  %1067 = vmatpush1.bf16.msra.mxu0 %v446
  %1068 = vmatprep.subr.bf16.mxu0 0
  %1069 = vmatpush1.bf16.msra.mxu0 %v445
  %1070 = vmatprep.subr.bf16.mxu0 0
  %1071 = vmatpush2.bf16.msra.mxu0 0
  %1072 = vmatprep.subr.bf16.mxu0 0
  %1073 = vmatpush2.bf16.msra.mxu0 0
  %1074 = vmatprep.subr.bf16.mxu0 0
  %1075 = vmatpush2.bf16.msra.mxu0 0
  %1076 = vmatprep.subr.bf16.mxu0 0
  %1077 = vmatpush2.bf16.msra.mxu0 0
  %1078 = vmatprep.subr.bf16.mxu0 0
  %1079 = vmatpush2.bf16.msra.mxu0 0
  %1080 = vmatprep.subr.bf16.mxu0 0
  %1081 = vmatpush2.bf16.msra.mxu0 0
  %1082 = vmatprep.subr.bf16.mxu0 0
  %1083 = vmatpush2.bf16.msra.mxu0 0
  %1084 = vmatprep.subr.bf16.mxu0 0
  %1085 = vmatpush2.bf16.msra.mxu0 0
  %1086 = vmatprep.mubr.bf16.mxu0 0
  %1087 = vmatmul.mubr.bf16.gmra.mxu0 %v1052
  %v1088 = vpop.f32.mrf.mxu0
  %v1089 = vadd.f32 0.0, %v1088
  %v1090 = vpop.f32.mrf.mxu0
  %v1091 = vpop.f32.mrf.mxu0
  %v1092 = vadd.f32 0.0, %v1091
  %v1093 = vpop.f32.mrf.mxu0
  %1094 = vdwg.mxu0
  %v1095 = vadd.f32 %v1047, %v1089
  %v1096 = vadd.f32 %v1048, %v1092
  %1097 = vrot.lane.b32.xlu0 %v1002, 120
  %v1098 = vpop.permute.xlu0 %1097
  %v1100 = vsel %vm121, %v1098, 0
  %1102 = vmatprep.subr.bf16.mxu0 0
  %1103 = vmatpush1.bf16.msra.mxu0 0
  %1104 = vmatprep.subr.bf16.mxu0 0
  %1105 = vmatpush1.bf16.msra.mxu0 0
  %1106 = vmatprep.subr.bf16.mxu0 0
  %1107 = vmatpush1.bf16.msra.mxu0 0
  %1108 = vmatprep.subr.bf16.mxu0 0
  %1109 = vmatpush1.bf16.msra.mxu0 0
  %1110 = vmatprep.subr.bf16.mxu0 0
  %1111 = vmatpush1.bf16.msra.mxu0 %v529
  %1112 = vmatprep.subr.bf16.mxu0 0
  %1113 = vmatpush1.bf16.msra.mxu0 %v528
  %1114 = vmatprep.subr.bf16.mxu0 0
  %1115 = vmatpush1.bf16.msra.mxu0 %v527
  %1116 = vmatprep.subr.bf16.mxu0 0
  %1117 = vmatpush1.bf16.msra.mxu0 %v526
  %1118 = vmatprep.subr.bf16.mxu0 0
  %1119 = vmatpush2.bf16.msra.mxu0 0
  %1120 = vmatprep.subr.bf16.mxu0 0
  %1121 = vmatpush2.bf16.msra.mxu0 0
  %1122 = vmatprep.subr.bf16.mxu0 0
  %1123 = vmatpush2.bf16.msra.mxu0 0
  %1124 = vmatprep.subr.bf16.mxu0 0
  %1125 = vmatpush2.bf16.msra.mxu0 0
  %1126 = vmatprep.subr.bf16.mxu0 0
  %1127 = vmatpush2.bf16.msra.mxu0 0
  %1128 = vmatprep.subr.bf16.mxu0 0
  %1129 = vmatpush2.bf16.msra.mxu0 0
  %1130 = vmatprep.subr.bf16.mxu0 0
  %1131 = vmatpush2.bf16.msra.mxu0 0
  %1132 = vmatprep.subr.bf16.mxu0 0
  %1133 = vmatpush2.bf16.msra.mxu0 0
  %1134 = vmatprep.mubr.bf16.mxu0 0
  %1135 = vmatmul.mubr.bf16.gmra.mxu0 %v1100
  %v1136 = vpop.f32.mrf.mxu0
  %v1137 = vadd.f32 0.0, %v1136
  %v1138 = vpop.f32.mrf.mxu0
  %v1139 = vpop.f32.mrf.mxu0
  %v1140 = vadd.f32 0.0, %v1139
  %v1141 = vpop.f32.mrf.mxu0
  %1142 = vdwg.mxu0
  %v1143 = vadd.f32 %v1095, %v1137
  %v1144 = vadd.f32 %v1096, %v1140
  %v1145 = vld [vmem:[%s0 + $0x8] sm:$0xc]
  %v1147 = vunpack.c.l.b16 %v1145
  %v1148 = vpack.c.b16 %v836, %v1147
  %vm1149 = vcmask 1045504
  %v1150 = vrot.slane %v1148, 2
  %v1151 = vrot.slane %v984, 2
  %v1152 = vsel %vm1149, %v1150, %v1151
  %v1154 = vsel %vm121, %v1152, 0
  %1156 = vmatprep.subr.bf16.mxu0 0
  %1157 = vmatpush1.bf16.msra.mxu0 0
  %1158 = vmatprep.subr.bf16.mxu0 0
  %1159 = vmatpush1.bf16.msra.mxu0 0
  %1160 = vmatprep.subr.bf16.mxu0 0
  %1161 = vmatpush1.bf16.msra.mxu0 0
  %1162 = vmatprep.subr.bf16.mxu0 0
  %1163 = vmatpush1.bf16.msra.mxu0 0
  %1164 = vmatprep.subr.bf16.mxu0 0
  %1165 = vmatpush1.bf16.msra.mxu0 %v616
  %1166 = vmatprep.subr.bf16.mxu0 0
  %1167 = vmatpush1.bf16.msra.mxu0 %v615
  %1168 = vmatprep.subr.bf16.mxu0 0
  %1169 = vmatpush1.bf16.msra.mxu0 %v614
  %1170 = vmatprep.subr.bf16.mxu0 0
  %1171 = vmatpush1.bf16.msra.mxu0 %v613
  %1172 = vmatprep.subr.bf16.mxu0 0
  %1173 = vmatpush2.bf16.msra.mxu0 0
  %1174 = vmatprep.subr.bf16.mxu0 0
  %1175 = vmatpush2.bf16.msra.mxu0 0
  %1176 = vmatprep.subr.bf16.mxu0 0
  %1177 = vmatpush2.bf16.msra.mxu0 0
  %1178 = vmatprep.subr.bf16.mxu0 0
  %1179 = vmatpush2.bf16.msra.mxu0 0
  %1180 = vmatprep.subr.bf16.mxu0 0
  %1181 = vmatpush2.bf16.msra.mxu0 0
  %1182 = vmatprep.subr.bf16.mxu0 0
  %1183 = vmatpush2.bf16.msra.mxu0 0
  %1184 = vmatprep.subr.bf16.mxu0 0
  %1185 = vmatpush2.bf16.msra.mxu0 0
  %1186 = vmatprep.subr.bf16.mxu0 0
  %1187 = vmatpush2.bf16.msra.mxu0 0
  %1188 = vmatprep.mubr.bf16.mxu0 0
  %1189 = vmatmul.mubr.bf16.gmra.mxu0 %v1154
  %v1190 = vpop.f32.mrf.mxu0
  %v1191 = vadd.f32 0.0, %v1190
  %v1192 = vpop.f32.mrf.mxu0
  %v1193 = vpop.f32.mrf.mxu0
  %v1194 = vadd.f32 0.0, %v1193
  %v1195 = vpop.f32.mrf.mxu0
  %1196 = vdwg.mxu0
  %v1197 = vadd.f32 %v1143, %v1191
  %v1198 = vadd.f32 %v1144, %v1194
  %1199 = vrot.lane.b32.xlu0 %v1152, 124
  %v1200 = vpop.permute.xlu0 %1199
  %v1202 = vsel %vm121, %v1200, 0
  %1204 = vmatprep.subr.bf16.mxu0 0
  %1205 = vmatpush1.bf16.msra.mxu0 0
  %1206 = vmatprep.subr.bf16.mxu0 0
  %1207 = vmatpush1.bf16.msra.mxu0 0
  %1208 = vmatprep.subr.bf16.mxu0 0
  %1209 = vmatpush1.bf16.msra.mxu0 0
  %1210 = vmatprep.subr.bf16.mxu0 0
  %1211 = vmatpush1.bf16.msra.mxu0 0
  %1212 = vmatprep.subr.bf16.mxu0 0
  %1213 = vmatpush1.bf16.msra.mxu0 %v697
  %1214 = vmatprep.subr.bf16.mxu0 0
  %1215 = vmatpush1.bf16.msra.mxu0 %v696
  %1216 = vmatprep.subr.bf16.mxu0 0
  %1217 = vmatpush1.bf16.msra.mxu0 %v695
  %1218 = vmatprep.subr.bf16.mxu0 0
  %1219 = vmatpush1.bf16.msra.mxu0 %v694
  %1220 = vmatprep.subr.bf16.mxu0 0
  %1221 = vmatpush2.bf16.msra.mxu0 0
  %1222 = vmatprep.subr.bf16.mxu0 0
  %1223 = vmatpush2.bf16.msra.mxu0 0
  %1224 = vmatprep.subr.bf16.mxu0 0
  %1225 = vmatpush2.bf16.msra.mxu0 0
  %1226 = vmatprep.subr.bf16.mxu0 0
  %1227 = vmatpush2.bf16.msra.mxu0 0
  %1228 = vmatprep.subr.bf16.mxu0 0
  %1229 = vmatpush2.bf16.msra.mxu0 0
  %1230 = vmatprep.subr.bf16.mxu0 0
  %1231 = vmatpush2.bf16.msra.mxu0 0
  %1232 = vmatprep.subr.bf16.mxu0 0
  %1233 = vmatpush2.bf16.msra.mxu0 0
  %1234 = vmatprep.subr.bf16.mxu0 0
  %1235 = vmatpush2.bf16.msra.mxu0 0
  %1236 = vmatprep.mubr.bf16.mxu0 0
  %1237 = vmatmul.mubr.bf16.gmra.mxu0 %v1202
  %v1238 = vpop.f32.mrf.mxu0
  %v1239 = vadd.f32 0.0, %v1238
  %v1240 = vpop.f32.mrf.mxu0
  %v1241 = vpop.f32.mrf.mxu0
  %v1242 = vadd.f32 0.0, %v1241
  %v1243 = vpop.f32.mrf.mxu0
  %1244 = vdwg.mxu0
  %v1245 = vadd.f32 %v1197, %v1239
  %v1246 = vadd.f32 %v1198, %v1242
  %1247 = vrot.lane.b32.xlu0 %v1152, 120
  %v1248 = vpop.permute.xlu0 %1247
  %v1250 = vsel %vm121, %v1248, 0
  %1252 = vmatprep.subr.bf16.mxu0 0
  %1253 = vmatpush1.bf16.msra.mxu0 0
  %1254 = vmatprep.subr.bf16.mxu0 0
  %1255 = vmatpush1.bf16.msra.mxu0 0
  %1256 = vmatprep.subr.bf16.mxu0 0
  %1257 = vmatpush1.bf16.msra.mxu0 0
  %1258 = vmatprep.subr.bf16.mxu0 0
  %1259 = vmatpush1.bf16.msra.mxu0 0
  %1260 = vmatprep.subr.bf16.mxu0 0
  %1261 = vmatpush1.bf16.msra.mxu0 %v778
  %1262 = vmatprep.subr.bf16.mxu0 0
  %1263 = vmatpush1.bf16.msra.mxu0 %v777
  %1264 = vmatprep.subr.bf16.mxu0 0
  %1265 = vmatpush1.bf16.msra.mxu0 %v776
  %1266 = vmatprep.subr.bf16.mxu0 0
  %1267 = vmatpush1.bf16.msra.mxu0 %v775
  %1268 = vmatprep.subr.bf16.mxu0 0
  %1269 = vmatpush2.bf16.msra.mxu0 0
  %1270 = vmatprep.subr.bf16.mxu0 0
  %1271 = vmatpush2.bf16.msra.mxu0 0
  %1272 = vmatprep.subr.bf16.mxu0 0
  %1273 = vmatpush2.bf16.msra.mxu0 0
  %1274 = vmatprep.subr.bf16.mxu0 0
  %1275 = vmatpush2.bf16.msra.mxu0 0
  %1276 = vmatprep.subr.bf16.mxu0 0
  %1277 = vmatpush2.bf16.msra.mxu0 0
  %1278 = vmatprep.subr.bf16.mxu0 0
  %1279 = vmatpush2.bf16.msra.mxu0 0
  %1280 = vmatprep.subr.bf16.mxu0 0
  %1281 = vmatpush2.bf16.msra.mxu0 0
  %1282 = vmatprep.subr.bf16.mxu0 0
  %1283 = vmatpush2.bf16.msra.mxu0 0
  %1284 = vmatprep.mubr.bf16.mxu0 0
  %1285 = vmatmul.mubr.bf16.gmra.mxu0 %v1250
  %v1286 = vpop.f32.mrf.mxu0
  %v1287 = vadd.f32 0.0, %v1286
  %v1288 = vpop.f32.mrf.mxu0
  %v1289 = vpop.f32.mrf.mxu0
  %v1290 = vadd.f32 0.0, %v1289
  %v1291 = vpop.f32.mrf.mxu0
  %1292 = vdwg.mxu0
  %v1293 = vadd.f32 %v1245, %v1287
  %v1294 = vadd.f32 %v1246, %v1290
  %v1295 = vadd.f32 %v827, %v828
  %v1296 = vadd.f32 %v1295, %v1293
  %v1297 = vadd.f32 %v1296, %v1294
  %v1298 = vrot.slane %v1297, 4
  %v1299 = vadd.f32 %v1297, %v1298
  %v1300 = vrot.slane %v1299, 2
  %v1301 = vadd.f32 %v1299, %v1300
  %v1302 = vrot.slane %v1301, 1
  %v1303 = vadd.f32 %v1301, %v1302
  %1304 = vmatprep.subr.mxu0 0.0
  %1305 = vmatpush1.msra.mxu0 %v57
  %1306 = vmatprep.subr.mxu0 0.0
  %1307 = vmatpush1.msra.mxu0 %v56
  %1308 = vmatprep.subr.mxu0 0.0
  %1309 = vmatpush1.msra.mxu0 %v55
  %1310 = vmatprep.subr.mxu0 0.0
  %1311 = vmatpush1.msra.mxu0 %v54
  %1312 = vmatprep.subr.mxu0 0.0
  %1313 = vmatpush1.msra.mxu0 %v53
  %1314 = vmatprep.subr.mxu0 0.0
  %1315 = vmatpush1.msra.mxu0 %v52
  %1316 = vmatprep.subr.mxu0 0.0
  %1317 = vmatpush1.msra.mxu0 %v51
  %1318 = vmatprep.subr.mxu0 0.0
  %1319 = vmatpush1.msra.mxu0 %v50
  %1320 = vmatprep.subr.mxu0 0.0
  %1321 = vmatpush1.msra.mxu0 %v49
  %1322 = vmatprep.subr.mxu0 0.0
  %1323 = vmatpush1.msra.mxu0 %v48
  %1324 = vmatprep.subr.mxu0 0.0
  %1325 = vmatpush1.msra.mxu0 %v47
  %1326 = vmatprep.subr.mxu0 0.0
  %1327 = vmatpush1.msra.mxu0 %v46
  %1328 = vmatprep.subr.mxu0 0.0
  %1329 = vmatpush1.msra.mxu0 %v45
  %1330 = vmatprep.subr.mxu0 0.0
  %1331 = vmatpush1.msra.mxu0 %v44
  %1332 = vmatprep.subr.mxu0 0.0
  %1333 = vmatpush1.msra.mxu0 %v43
  %1334 = vmatprep.subr.mxu0 0.0
  %1335 = vmatpush1.msra.mxu0 %v42
  %1336 = vmatprep.subr.mxu0 0.0
  %1337 = vmatpush2.msra.mxu0 0.0
  %1338 = vmatprep.subr.mxu0 0.0
  %1339 = vmatpush2.msra.mxu0 0.0
  %1340 = vmatprep.subr.mxu0 0.0
  %1341 = vmatpush2.msra.mxu0 0.0
  %1342 = vmatprep.subr.mxu0 0.0
  %1343 = vmatpush2.msra.mxu0 0.0
  %1344 = vmatprep.subr.mxu0 0.0
  %1345 = vmatpush2.msra.mxu0 0.0
  %1346 = vmatprep.subr.mxu0 0.0
  %1347 = vmatpush2.msra.mxu0 0.0
  %1348 = vmatprep.subr.mxu0 0.0
  %1349 = vmatpush2.msra.mxu0 0.0
  %1350 = vmatprep.subr.mxu0 0.0
  %1351 = vmatpush2.msra.mxu0 0.0
  %1352 = vmatprep.subr.mxu0 0.0
  %1353 = vmatpush2.msra.mxu0 0.0
  %1354 = vmatprep.subr.mxu0 0.0
  %1355 = vmatpush2.msra.mxu0 0.0
  %1356 = vmatprep.subr.mxu0 0.0
  %1357 = vmatpush2.msra.mxu0 0.0
  %1358 = vmatprep.subr.mxu0 0.0
  %1359 = vmatpush2.msra.mxu0 0.0
  %1360 = vmatprep.subr.mxu0 0.0
  %1361 = vmatpush2.msra.mxu0 0.0
  %1362 = vmatprep.subr.mxu0 0.0
  %1363 = vmatpush2.msra.mxu0 0.0
  %1364 = vmatprep.subr.mxu0 0.0
  %1365 = vmatpush2.msra.mxu0 0.0
  %1366 = vmatprep.subr.mxu0 0.0
  %1367 = vmatpush2.msra.mxu0 0.0
  %1368 = vmatprep.mubr.f32.mxu0 0.0
  %1369 = vmatmul.mubr.f32.gmra.mxu0 %v1303
  %v1370 = vpop.f32.mrf.mxu0
  %v1371 = vadd.f32 0.0, %v1370
  %v1372 = vpop.f32.mrf.mxu0
  %1373 = vdwg.mxu0
  %v1374 = vmul.f32 %v827, %v827
  %v1375 = vmul.f32 %v828, %v828
  %v1376 = vmul.f32 %v1293, %v1293
  %v1377 = vmul.f32 %v1294, %v1294
  %v1378 = vadd.f32 %v1374, %v1375
  %v1379 = vadd.f32 %v1378, %v1376
  %v1380 = vadd.f32 %v1379, %v1377
  %v1381 = vrot.slane %v1380, 4
  %v1382 = vadd.f32 %v1380, %v1381
  %v1383 = vrot.slane %v1382, 2
  %v1384 = vadd.f32 %v1382, %v1383
  %v1385 = vrot.slane %v1384, 1
  %v1386 = vadd.f32 %v1384, %v1385
  %1387 = vmatprep.subr.mxu0 0.0
  %1388 = vmatpush1.msra.mxu0 %v57
  %1389 = vmatprep.subr.mxu0 0.0
  %1390 = vmatpush1.msra.mxu0 %v56
  %1391 = vmatprep.subr.mxu0 0.0
  %1392 = vmatpush1.msra.mxu0 %v55
  %1393 = vmatprep.subr.mxu0 0.0
  %1394 = vmatpush1.msra.mxu0 %v54
  %1395 = vmatprep.subr.mxu0 0.0
  %1396 = vmatpush1.msra.mxu0 %v53
  %1397 = vmatprep.subr.mxu0 0.0
  %1398 = vmatpush1.msra.mxu0 %v52
  %1399 = vmatprep.subr.mxu0 0.0
  %1400 = vmatpush1.msra.mxu0 %v51
  %1401 = vmatprep.subr.mxu0 0.0
  %1402 = vmatpush1.msra.mxu0 %v50
  %1403 = vmatprep.subr.mxu0 0.0
  %1404 = vmatpush1.msra.mxu0 %v49
  %1405 = vmatprep.subr.mxu0 0.0
  %1406 = vmatpush1.msra.mxu0 %v48
  %1407 = vmatprep.subr.mxu0 0.0
  %1408 = vmatpush1.msra.mxu0 %v47
  %1409 = vmatprep.subr.mxu0 0.0
  %1410 = vmatpush1.msra.mxu0 %v46
  %1411 = vmatprep.subr.mxu0 0.0
  %1412 = vmatpush1.msra.mxu0 %v45
  %1413 = vmatprep.subr.mxu0 0.0
  %1414 = vmatpush1.msra.mxu0 %v44
  %1415 = vmatprep.subr.mxu0 0.0
  %1416 = vmatpush1.msra.mxu0 %v43
  %1417 = vmatprep.subr.mxu0 0.0
  %1418 = vmatpush1.msra.mxu0 %v42
  %1419 = vmatprep.subr.mxu0 0.0
  %1420 = vmatpush2.msra.mxu0 0.0
  %1421 = vmatprep.subr.mxu0 0.0
  %1422 = vmatpush2.msra.mxu0 0.0
  %1423 = vmatprep.subr.mxu0 0.0
  %1424 = vmatpush2.msra.mxu0 0.0
  %1425 = vmatprep.subr.mxu0 0.0
  %1426 = vmatpush2.msra.mxu0 0.0
  %1427 = vmatprep.subr.mxu0 0.0
  %1428 = vmatpush2.msra.mxu0 0.0
  %1429 = vmatprep.subr.mxu0 0.0
  %1430 = vmatpush2.msra.mxu0 0.0
  %1431 = vmatprep.subr.mxu0 0.0
  %1432 = vmatpush2.msra.mxu0 0.0
  %1433 = vmatprep.subr.mxu0 0.0
  %1434 = vmatpush2.msra.mxu0 0.0
  %1435 = vmatprep.subr.mxu0 0.0
  %1436 = vmatpush2.msra.mxu0 0.0
  %1437 = vmatprep.subr.mxu0 0.0
  %1438 = vmatpush2.msra.mxu0 0.0
  %1439 = vmatprep.subr.mxu0 0.0
  %1440 = vmatpush2.msra.mxu0 0.0
  %1441 = vmatprep.subr.mxu0 0.0
  %1442 = vmatpush2.msra.mxu0 0.0
  %1443 = vmatprep.subr.mxu0 0.0
  %1444 = vmatpush2.msra.mxu0 0.0
  %1445 = vmatprep.subr.mxu0 0.0
  %1446 = vmatpush2.msra.mxu0 0.0
  %1447 = vmatprep.subr.mxu0 0.0
  %1448 = vmatpush2.msra.mxu0 0.0
  %1449 = vmatprep.subr.mxu0 0.0
  %1450 = vmatpush2.msra.mxu0 0.0
  %1451 = vmatprep.mubr.f32.mxu0 0.0
  %1452 = vmatmul.mubr.f32.gmra.mxu0 %v1386
  %v1453 = vpop.f32.mrf.mxu0
  %v1454 = vadd.f32 0.0, %v1453
  %v1455 = vpop.f32.mrf.mxu0
  %1456 = vdwg.mxu0
  %v1457 = vmul.f32 %v1371, 0.001953125
  %v1458 = vmul.f32 %v1454, 0.001953125
  %v1459 = vmul.f32 %v1457, %v1457
  %v1460 = vsub.f32 %v1458, %v1459
  %v1461 = vld [vmem:[%s4] sm:$0x1]
  %v1462 = vadd.f32 %v1460, 1e-05
  %v1463 = vrsqrt.pop %v1462
  %v1464 = vmul.f32 %v1461, %v1463
  %v1465 = vld [vmem:[%s5] sm:$0x1]
  %v1466 = vmul.f32 %v1457, %v1464
  %v1467 = vsub.f32 %v1465, %v1466
  %vm1468 = vcmask 64512
  %v1470 = vsel %vm1468, %v1464, 0
  %1472 = vmatprep.subr.mxu0 0.0
  %1473 = vmatpush1.msra.mxu0 0.0
  %1474 = vmatprep.subr.mxu0 0.0
  %1475 = vmatpush1.msra.mxu0 0.0
  %1476 = vmatprep.subr.mxu0 0.0
  %1477 = vmatpush1.msra.mxu0 0.0
  %1478 = vmatprep.subr.mxu0 0.0
  %1479 = vmatpush1.msra.mxu0 0.0
  %1480 = vmatprep.subr.mxu0 0.0
  %1481 = vmatpush1.msra.mxu0 0.0
  %1482 = vmatprep.subr.mxu0 0.0
  %1483 = vmatpush1.msra.mxu0 0.0
  %1484 = vmatprep.subr.mxu0 0.0
  %1485 = vmatpush1.msra.mxu0 0.0
  %1486 = vmatprep.subr.mxu0 0.0
  %1487 = vmatpush1.msra.mxu0 0.0
  %1488 = vmatprep.subr.mxu0 0.0
  %1489 = vmatpush1.msra.mxu0 0.0
  %1490 = vmatprep.subr.mxu0 0.0
  %1491 = vmatpush1.msra.mxu0 0.0
  %1492 = vmatprep.subr.mxu0 0.0
  %1493 = vmatpush1.msra.mxu0 0.0
  %1494 = vmatprep.subr.mxu0 0.0
  %1495 = vmatpush1.msra.mxu0 0.0
  %1496 = vmatprep.subr.mxu0 0.0
  %1497 = vmatpush1.msra.mxu0 0.0
  %1498 = vmatprep.subr.mxu0 0.0
  %1499 = vmatpush1.msra.mxu0 0.0
  %1500 = vmatprep.subr.mxu0 0.0
  %1501 = vmatpush1.msra.mxu0 0.0
  %1502 = vmatprep.subr.mxu0 0.0
  %1503 = vmatpush1.msra.mxu0 %v58
  %1504 = vmatprep.subr.mxu0 0.0
  %1505 = vmatpush2.msra.mxu0 0.0
  %1506 = vmatprep.subr.mxu0 0.0
  %1507 = vmatpush2.msra.mxu0 0.0
  %1508 = vmatprep.subr.mxu0 0.0
  %1509 = vmatpush2.msra.mxu0 0.0
  %1510 = vmatprep.subr.mxu0 0.0
  %1511 = vmatpush2.msra.mxu0 0.0
  %1512 = vmatprep.subr.mxu0 0.0
  %1513 = vmatpush2.msra.mxu0 0.0
  %1514 = vmatprep.subr.mxu0 0.0
  %1515 = vmatpush2.msra.mxu0 0.0
  %1516 = vmatprep.subr.mxu0 0.0
  %1517 = vmatpush2.msra.mxu0 0.0
  %1518 = vmatprep.subr.mxu0 0.0
  %1519 = vmatpush2.msra.mxu0 0.0
  %1520 = vmatprep.subr.mxu0 0.0
  %1521 = vmatpush2.msra.mxu0 0.0
  %1522 = vmatprep.subr.mxu0 0.0
  %1523 = vmatpush2.msra.mxu0 0.0
  %1524 = vmatprep.subr.mxu0 0.0
  %1525 = vmatpush2.msra.mxu0 0.0
  %1526 = vmatprep.subr.mxu0 0.0
  %1527 = vmatpush2.msra.mxu0 0.0
  %1528 = vmatprep.subr.mxu0 0.0
  %1529 = vmatpush2.msra.mxu0 0.0
  %1530 = vmatprep.subr.mxu0 0.0
  %1531 = vmatpush2.msra.mxu0 0.0
  %1532 = vmatprep.subr.mxu0 0.0
  %1533 = vmatpush2.msra.mxu0 0.0
  %1534 = vmatprep.subr.mxu0 0.0
  %1535 = vmatpush2.msra.mxu0 0.0
  %1536 = vmatprep.mubr.f32.mxu0 0.0
  %1537 = vmatmul.mubr.f32.gmra.mxu0 %v1470
  %v1538 = vpop.f32.mrf.mxu0
  %v1539 = vadd.f32 0.0, %v1538
  %v1540 = vpop.f32.mrf.mxu0
  %1541 = vdwg.mxu0
  %v1543 = vsel %vm1468, %v1467, 0
  %1545 = vmatprep.subr.mxu0 0.0
  %1546 = vmatpush1.msra.mxu0 0.0
  %1547 = vmatprep.subr.mxu0 0.0
  %1548 = vmatpush1.msra.mxu0 0.0
  %1549 = vmatprep.subr.mxu0 0.0
  %1550 = vmatpush1.msra.mxu0 0.0
  %1551 = vmatprep.subr.mxu0 0.0
  %1552 = vmatpush1.msra.mxu0 0.0
  %1553 = vmatprep.subr.mxu0 0.0
  %1554 = vmatpush1.msra.mxu0 0.0
  %1555 = vmatprep.subr.mxu0 0.0
  %1556 = vmatpush1.msra.mxu0 0.0
  %1557 = vmatprep.subr.mxu0 0.0
  %1558 = vmatpush1.msra.mxu0 0.0
  %1559 = vmatprep.subr.mxu0 0.0
  %1560 = vmatpush1.msra.mxu0 0.0
  %1561 = vmatprep.subr.mxu0 0.0
  %1562 = vmatpush1.msra.mxu0 0.0
  %1563 = vmatprep.subr.mxu0 0.0
  %1564 = vmatpush1.msra.mxu0 0.0
  %1565 = vmatprep.subr.mxu0 0.0
  %1566 = vmatpush1.msra.mxu0 0.0
  %1567 = vmatprep.subr.mxu0 0.0
  %1568 = vmatpush1.msra.mxu0 0.0
  %1569 = vmatprep.subr.mxu0 0.0
  %1570 = vmatpush1.msra.mxu0 0.0
  %1571 = vmatprep.subr.mxu0 0.0
  %1572 = vmatpush1.msra.mxu0 0.0
  %1573 = vmatprep.subr.mxu0 0.0
  %1574 = vmatpush1.msra.mxu0 0.0
  %1575 = vmatprep.subr.mxu0 0.0
  %1576 = vmatpush1.msra.mxu0 %v58
  %1577 = vmatprep.subr.mxu0 0.0
  %1578 = vmatpush2.msra.mxu0 0.0
  %1579 = vmatprep.subr.mxu0 0.0
  %1580 = vmatpush2.msra.mxu0 0.0
  %1581 = vmatprep.subr.mxu0 0.0
  %1582 = vmatpush2.msra.mxu0 0.0
  %1583 = vmatprep.subr.mxu0 0.0
  %1584 = vmatpush2.msra.mxu0 0.0
  %1585 = vmatprep.subr.mxu0 0.0
  %1586 = vmatpush2.msra.mxu0 0.0
  %1587 = vmatprep.subr.mxu0 0.0
  %1588 = vmatpush2.msra.mxu0 0.0
  %1589 = vmatprep.subr.mxu0 0.0
  %1590 = vmatpush2.msra.mxu0 0.0
  %1591 = vmatprep.subr.mxu0 0.0
  %1592 = vmatpush2.msra.mxu0 0.0
  %1593 = vmatprep.subr.mxu0 0.0
  %1594 = vmatpush2.msra.mxu0 0.0
  %1595 = vmatprep.subr.mxu0 0.0
  %1596 = vmatpush2.msra.mxu0 0.0
  %1597 = vmatprep.subr.mxu0 0.0
  %1598 = vmatpush2.msra.mxu0 0.0
  %1599 = vmatprep.subr.mxu0 0.0
  %1600 = vmatpush2.msra.mxu0 0.0
  %1601 = vmatprep.subr.mxu0 0.0
  %1602 = vmatpush2.msra.mxu0 0.0
  %1603 = vmatprep.subr.mxu0 0.0
  %1604 = vmatpush2.msra.mxu0 0.0
  %1605 = vmatprep.subr.mxu0 0.0
  %1606 = vmatpush2.msra.mxu0 0.0
  %1607 = vmatprep.subr.mxu0 0.0
  %1608 = vmatpush2.msra.mxu0 0.0
  %1609 = vmatprep.mubr.f32.mxu0 0.0
  %1610 = vmatmul.mubr.f32.gmra.mxu0 %v1543
  %v1611 = vpop.f32.mrf.mxu0
  %v1612 = vadd.f32 0.0, %v1611
  %v1613 = vpop.f32.mrf.mxu0
  %1614 = vdwg.mxu0
  %v1615 = vlaneseq
  %v1616 = vshrl.u32 %v1615, 7
  %v1617 = vsub.s32 0, %v1616
  %v1618 = vrot.slane %v1539, %v1617
  %v1619 = vmul.f32 %v827, %v1618
  %v1620 = vmul.f32 %v828, %v1618
  %v1621 = vmul.f32 %v1293, %v1618
  %v1622 = vmul.f32 %v1294, %v1618
  %v1623 = vlaneseq
  %v1624 = vshrl.u32 %v1623, 7
  %v1625 = vsub.s32 0, %v1624
  %v1626 = vrot.slane %v1612, %v1625
  %v1627 = vadd.f32 %v1619, %v1626
  %v1628 = vadd.f32 %v1620, %v1626
  %v1629 = vadd.f32 %v1621, %v1626
  %v1630 = vadd.f32 %v1622, %v1626
  %v1631 = vmax.f32 %v1627, 0.0
  %v1632 = vmax.f32 %v1628, 0.0
  %v1633 = vmax.f32 %v1629, 0.0
  %v1634 = vmax.f32 %v1630, 0.0
  %vm1637 = vcmask 1040384
  %v1638 = vrot.slane %v1631, 7
  %v1639 = vrot.slane %v1632, 7
  %v1640 = vsel %vm1637, %v1638, %v1639
  %1641 = vrot.lane.b32.xlu0 %v1638, 8
  %v1642 = vpop.permute.xlu0 %1641
  %1643 = vrot.lane.b32.xlu0 %v1640, 8
  %v1644 = vpop.permute.xlu0 %1643
  %1645 = vrot.lane.b32.xlu0 %v1639, 8
  %v1646 = vpop.permute.xlu0 %1645
  %vm1650 = vcmask 1047617
  %1651 = vst.msk [vmem:[#allocation2] sm:$0xfe] %vm1650, %v1642
  %vm1652 = vcmask 64513
  %1653 = vst.msk [vmem:[#allocation2 + $0x8] sm:$0xfe] %vm1652, %v1642
  %vm1654 = vcmask 1047616
  %1655 = vst.msk [vmem:[#allocation2 + $0x10] sm:$0xff] %vm1654, %v1644
  %1656 = vst.msk [vmem:[#allocation2 + $0x18] sm:$0xff] %vm1468, %v1644
  %vm1657 = vcmask 1040448
  %1658 = vst.msk [vmem:[#allocation2 + $0x20] sm:$0x1] %vm1657, %v1646
  %vm1659 = vcmask 57344
  %1660 = vst.msk [vmem:[#allocation2 + $0x28] sm:$0x1] %vm1659, %v1646
  %vm1663 = vcmask 1042432
  %v1664 = vrot.slane %v1633, 5
  %v1665 = vrot.slane %v1634, 5
  %v1666 = vsel %vm1663, %v1664, %v1665
  %1667 = vrot.lane.b32.xlu0 %v1664, 8
  %v1668 = vpop.permute.xlu0 %1667
  %1669 = vrot.lane.b32.xlu0 %v1666, 8
  %v1670 = vpop.permute.xlu0 %1669
  %1671 = vrot.lane.b32.xlu0 %v1665, 8
  %v1672 = vpop.permute.xlu0 %1671
  %vm1676 = vcmask 1047619
  %1677 = vst.msk [vmem:[#allocation2 + $0x20] sm:$0xf8] %vm1676, %v1668
  %vm1678 = vcmask 64515
  %1679 = vst.msk [vmem:[#allocation2 + $0x28] sm:$0xf8] %vm1678, %v1668
  %1680 = vst.msk [vmem:[#allocation2 + $0x30] sm:$0xff] %vm1654, %v1670
  %1681 = vst.msk [vmem:[#allocation2 + $0x38] sm:$0xff] %vm1468, %v1670
  %vm1682 = vcmask 1042496
  %1683 = vst.msk [vmem:[#allocation2 + $0x40] sm:$0x7] %vm1682, %v1672
  %vm1684 = vcmask 59392
  %1685 = vst.msk [vmem:[#allocation2 + $0x48] sm:$0x7] %vm1684, %v1672
  %v1686 = vld [vmem:[#allocation2] sm:$0xff]
  %v1687 = vld [vmem:[#allocation2 + $0x10] sm:$0xff]
  %v1688 = vpack.c.bf16 %v1687, %v1686
  %v1689 = vld [vmem:[%s2] sm:$0xf]
  %v1690 = vld [vmem:[%s2 + $0x4] sm:$0xf]
  %v1691 = vld [vmem:[%s2 + $0x8] sm:$0xf]
  %v1692 = vld [vmem:[%s2 + $0xc] sm:$0xf]
  %v1693 = vld [vmem:[%s2 + $0x10] sm:$0xf]
  %v1694 = vld [vmem:[%s2 + $0x14] sm:$0xf]
  %v1695 = vld [vmem:[%s2 + $0x18] sm:$0xf]
  %v1696 = vld [vmem:[%s2 + $0x1c] sm:$0xf]
  %v1697 = vld [vmem:[%s2 + $0x20] sm:$0xf]
  %v1698 = vld [vmem:[%s2 + $0x24] sm:$0xf]
  %v1699 = vld [vmem:[%s2 + $0x28] sm:$0xf]
  %v1700 = vld [vmem:[%s2 + $0x2c] sm:$0xf]
  %v1701 = vld [vmem:[%s2 + $0x30] sm:$0xf]
  %v1702 = vld [vmem:[%s2 + $0x34] sm:$0xf]
  %v1703 = vld [vmem:[%s2 + $0x38] sm:$0xf]
  %v1704 = vld [vmem:[%s2 + $0x3c] sm:$0xf]
  %v1705 = vld [vmem:[#allocation2 + $0x8] sm:$0xff]
  %v1706 = vld [vmem:[#allocation2 + $0x18] sm:$0xff]
  %v1707 = vpack.c.bf16 %v1706, %v1705
  %s1708 = scalar_lea.vmem %s2, 64
  %v1709 = vld [vmem:[%s1708] sm:$0xf]
  %v1710 = vld [vmem:[%s1708 + $0x4] sm:$0xf]
  %v1711 = vld [vmem:[%s1708 + $0x8] sm:$0xf]
  %v1712 = vld [vmem:[%s1708 + $0xc] sm:$0xf]
  %v1713 = vld [vmem:[%s1708 + $0x10] sm:$0xf]
  %v1714 = vld [vmem:[%s1708 + $0x14] sm:$0xf]
  %v1715 = vld [vmem:[%s1708 + $0x18] sm:$0xf]
  %v1716 = vld [vmem:[%s1708 + $0x1c] sm:$0xf]
  %v1717 = vld [vmem:[%s1708 + $0x20] sm:$0xf]
  %v1718 = vld [vmem:[%s1708 + $0x24] sm:$0xf]
  %v1719 = vld [vmem:[%s1708 + $0x28] sm:$0xf]
  %v1720 = vld [vmem:[%s1708 + $0x2c] sm:$0xf]
  %v1721 = vld [vmem:[%s1708 + $0x30] sm:$0xf]
  %v1722 = vld [vmem:[%s1708 + $0x34] sm:$0xf]
  %v1723 = vld [vmem:[%s1708 + $0x38] sm:$0xf]
  %v1724 = vld [vmem:[%s1708 + $0x3c] sm:$0xf]
  %1727 = vrot.lane.b32.xlu0 %v1688, 120
  %v1728 = vpop.permute.xlu0 %1727
  %1729 = vrot.lane.b32.xlu0 %v1707, 120
  %v1730 = vpop.permute.xlu0 %1729
  %vm1731 = vcmask 982016
  %v1732 = vsel %vm1731, %v1728, %v1730
  %v1750 = vunpack.c.l.b16 %v1709
  %v1751 = vunpack.c.l.b16 %v1710
  %v1752 = vunpack.c.l.b16 %v1711
  %v1753 = vunpack.c.l.b16 %v1712
  %v1754 = vunpack.c.l.b16 %v1713
  %v1755 = vunpack.c.l.b16 %v1714
  %v1756 = vunpack.c.l.b16 %v1715
  %v1757 = vunpack.c.l.b16 %v1716
  %v1758 = vunpack.c.l.b16 %v1717
  %v1759 = vunpack.c.l.b16 %v1718
  %v1760 = vunpack.c.l.b16 %v1719
  %v1761 = vunpack.c.l.b16 %v1720
  %v1762 = vunpack.c.l.b16 %v1721
  %v1763 = vunpack.c.l.b16 %v1722
  %v1764 = vunpack.c.l.b16 %v1723
  %v1765 = vunpack.c.l.b16 %v1724
  %v1766 = vpack.c.b16 %v1751, %v1750
  %v1767 = vpack.c.b16 %v1753, %v1752
  %v1768 = vpack.c.b16 %v1755, %v1754
  %v1769 = vpack.c.b16 %v1757, %v1756
  %v1770 = vpack.c.b16 %v1759, %v1758
  %v1771 = vpack.c.b16 %v1761, %v1760
  %v1772 = vpack.c.b16 %v1763, %v1762
  %v1773 = vpack.c.b16 %v1765, %v1764
  %1782 = vmatprep.subr.bf16.mxu0 0
  %1783 = vmatpush1.bf16.msra.mxu0 %v1773
  %1784 = vmatprep.subr.bf16.mxu0 0
  %1785 = vmatpush1.bf16.msra.mxu0 %v1772
  %1786 = vmatprep.subr.bf16.mxu0 0
  %1787 = vmatpush1.bf16.msra.mxu0 %v1771
  %1788 = vmatprep.subr.bf16.mxu0 0
  %1789 = vmatpush1.bf16.msra.mxu0 %v1770
  %1790 = vmatprep.subr.bf16.mxu0 0
  %1791 = vmatpush1.bf16.msra.mxu0 %v1769
  %1792 = vmatprep.subr.bf16.mxu0 0
  %1793 = vmatpush1.bf16.msra.mxu0 %v1768
  %1794 = vmatprep.subr.bf16.mxu0 0
  %1795 = vmatpush1.bf16.msra.mxu0 %v1767
  %1796 = vmatprep.subr.bf16.mxu0 0
  %1797 = vmatpush1.bf16.msra.mxu0 %v1766
  %1798 = vmatprep.subr.bf16.mxu0 0
  %1799 = vmatpush2.bf16.msra.mxu0 0
  %1800 = vmatprep.subr.bf16.mxu0 0
  %1801 = vmatpush2.bf16.msra.mxu0 0
  %1802 = vmatprep.subr.bf16.mxu0 0
  %1803 = vmatpush2.bf16.msra.mxu0 0
  %1804 = vmatprep.subr.bf16.mxu0 0
  %1805 = vmatpush2.bf16.msra.mxu0 0
  %1806 = vmatprep.subr.bf16.mxu0 0
  %1807 = vmatpush2.bf16.msra.mxu0 0
  %1808 = vmatprep.subr.bf16.mxu0 0
  %1809 = vmatpush2.bf16.msra.mxu0 0
  %1810 = vmatprep.subr.bf16.mxu0 0
  %1811 = vmatpush2.bf16.msra.mxu0 0
  %1812 = vmatprep.subr.bf16.mxu0 0
  %1813 = vmatpush2.bf16.msra.mxu0 0
  %1814 = vmatprep.mubr.bf16.mxu0 0
  %1815 = vmatmul.mubr.bf16.gmra.mxu0 %v1732
  %v1816 = vpop.f32.mrf.mxu0
  %v1817 = vadd.f32 0.0, %v1816
  %v1818 = vpop.f32.mrf.mxu0
  %v1819 = vpop.f32.mrf.mxu0
  %v1820 = vadd.f32 0.0, %v1819
  %v1821 = vpop.f32.mrf.mxu0
  %1822 = vdwg.mxu0
  %v1839 = vunpack.c.l.b16 %v1689
  %v1840 = vunpack.c.l.b16 %v1690
  %v1841 = vunpack.c.l.b16 %v1691
  %v1842 = vunpack.c.l.b16 %v1692
  %v1843 = vunpack.c.l.b16 %v1693
  %v1844 = vunpack.c.l.b16 %v1694
  %v1845 = vunpack.c.l.b16 %v1695
  %v1846 = vunpack.c.l.b16 %v1696
  %v1847 = vunpack.c.l.b16 %v1697
  %v1848 = vunpack.c.l.b16 %v1698
  %v1849 = vunpack.c.l.b16 %v1699
  %v1850 = vunpack.c.l.b16 %v1700
  %v1851 = vunpack.c.l.b16 %v1701
  %v1852 = vunpack.c.l.b16 %v1702
  %v1853 = vunpack.c.l.b16 %v1703
  %v1854 = vunpack.c.l.b16 %v1704
  %v1855 = vpack.c.b16 %v1840, %v1839
  %v1856 = vpack.c.b16 %v1842, %v1841
  %v1857 = vpack.c.b16 %v1844, %v1843
  %v1858 = vpack.c.b16 %v1846, %v1845
  %v1859 = vpack.c.b16 %v1848, %v1847
  %v1860 = vpack.c.b16 %v1850, %v1849
  %v1861 = vpack.c.b16 %v1852, %v1851
  %v1862 = vpack.c.b16 %v1854, %v1853
  %1871 = vmatprep.subr.bf16.mxu0 0
  %1872 = vmatpush1.bf16.msra.mxu0 %v1862
  %1873 = vmatprep.subr.bf16.mxu0 0
  %1874 = vmatpush1.bf16.msra.mxu0 %v1861
  %1875 = vmatprep.subr.bf16.mxu0 0
  %1876 = vmatpush1.bf16.msra.mxu0 %v1860
  %1877 = vmatprep.subr.bf16.mxu0 0
  %1878 = vmatpush1.bf16.msra.mxu0 %v1859
  %1879 = vmatprep.subr.bf16.mxu0 0
  %1880 = vmatpush1.bf16.msra.mxu0 %v1858
  %1881 = vmatprep.subr.bf16.mxu0 0
  %1882 = vmatpush1.bf16.msra.mxu0 %v1857
  %1883 = vmatprep.subr.bf16.mxu0 0
  %1884 = vmatpush1.bf16.msra.mxu0 %v1856
  %1885 = vmatprep.subr.bf16.mxu0 0
  %1886 = vmatpush1.bf16.msra.mxu0 %v1855
  %1887 = vmatprep.subr.bf16.mxu0 0
  %1888 = vmatpush2.bf16.msra.mxu0 0
  %1889 = vmatprep.subr.bf16.mxu0 0
  %1890 = vmatpush2.bf16.msra.mxu0 0
  %1891 = vmatprep.subr.bf16.mxu0 0
  %1892 = vmatpush2.bf16.msra.mxu0 0
  %1893 = vmatprep.subr.bf16.mxu0 0
  %1894 = vmatpush2.bf16.msra.mxu0 0
  %1895 = vmatprep.subr.bf16.mxu0 0
  %1896 = vmatpush2.bf16.msra.mxu0 0
  %1897 = vmatprep.subr.bf16.mxu0 0
  %1898 = vmatpush2.bf16.msra.mxu0 0
  %1899 = vmatprep.subr.bf16.mxu0 0
  %1900 = vmatpush2.bf16.msra.mxu0 0
  %1901 = vmatprep.subr.bf16.mxu0 0
  %1902 = vmatpush2.bf16.msra.mxu0 0
  %1903 = vmatprep.mubr.bf16.mxu0 0
  %1904 = vmatmul.mubr.bf16.gmra.mxu0 %v1688
  %v1905 = vpop.f32.mrf.mxu0
  %v1906 = vadd.f32 %v1817, %v1905
  %v1907 = vpop.f32.mrf.mxu0
  %v1908 = vpop.f32.mrf.mxu0
  %v1909 = vadd.f32 %v1820, %v1908
  %v1910 = vpop.f32.mrf.mxu0
  %1911 = vdwg.mxu0
  %s1912 = scalar_lea.vmem %s2, 128
  %v1913 = vld [vmem:[%s1912] sm:$0xf]
  %v1914 = vld [vmem:[%s1912 + $0x4] sm:$0xf]
  %v1915 = vld [vmem:[%s1912 + $0x8] sm:$0xf]
  %v1916 = vld [vmem:[%s1912 + $0xc] sm:$0xf]
  %v1917 = vld [vmem:[%s1912 + $0x10] sm:$0xf]
  %v1918 = vld [vmem:[%s1912 + $0x14] sm:$0xf]
  %v1919 = vld [vmem:[%s1912 + $0x18] sm:$0xf]
  %v1920 = vld [vmem:[%s1912 + $0x1c] sm:$0xf]
  %v1921 = vld [vmem:[%s1912 + $0x20] sm:$0xf]
  %v1922 = vld [vmem:[%s1912 + $0x24] sm:$0xf]
  %v1923 = vld [vmem:[%s1912 + $0x28] sm:$0xf]
  %v1924 = vld [vmem:[%s1912 + $0x2c] sm:$0xf]
  %v1925 = vld [vmem:[%s1912 + $0x30] sm:$0xf]
  %v1926 = vld [vmem:[%s1912 + $0x34] sm:$0xf]
  %v1927 = vld [vmem:[%s1912 + $0x38] sm:$0xf]
  %v1928 = vld [vmem:[%s1912 + $0x3c] sm:$0xf]
  %1929 = vrot.lane.b32.xlu0 %v1688, 112
  %v1930 = vpop.permute.xlu0 %1929
  %1931 = vrot.lane.b32.xlu0 %v1707, 112
  %v1932 = vpop.permute.xlu0 %1931
  %vm1933 = vcmask 916480
  %v1934 = vsel %vm1933, %v1930, %v1932
  %v1952 = vunpack.c.l.b16 %v1913
  %v1953 = vunpack.c.l.b16 %v1914
  %v1954 = vunpack.c.l.b16 %v1915
  %v1955 = vunpack.c.l.b16 %v1916
  %v1956 = vunpack.c.l.b16 %v1917
  %v1957 = vunpack.c.l.b16 %v1918
  %v1958 = vunpack.c.l.b16 %v1919
  %v1959 = vunpack.c.l.b16 %v1920
  %v1960 = vunpack.c.l.b16 %v1921
  %v1961 = vunpack.c.l.b16 %v1922
  %v1962 = vunpack.c.l.b16 %v1923
  %v1963 = vunpack.c.l.b16 %v1924
  %v1964 = vunpack.c.l.b16 %v1925
  %v1965 = vunpack.c.l.b16 %v1926
  %v1966 = vunpack.c.l.b16 %v1927
  %v1967 = vunpack.c.l.b16 %v1928
  %v1968 = vpack.c.b16 %v1953, %v1952
  %v1969 = vpack.c.b16 %v1955, %v1954
  %v1970 = vpack.c.b16 %v1957, %v1956
  %v1971 = vpack.c.b16 %v1959, %v1958
  %v1972 = vpack.c.b16 %v1961, %v1960
  %v1973 = vpack.c.b16 %v1963, %v1962
  %v1974 = vpack.c.b16 %v1965, %v1964
  %v1975 = vpack.c.b16 %v1967, %v1966
  %1984 = vmatprep.subr.bf16.mxu0 0
  %1985 = vmatpush1.bf16.msra.mxu0 %v1975
  %1986 = vmatprep.subr.bf16.mxu0 0
  %1987 = vmatpush1.bf16.msra.mxu0 %v1974
  %1988 = vmatprep.subr.bf16.mxu0 0
  %1989 = vmatpush1.bf16.msra.mxu0 %v1973
  %1990 = vmatprep.subr.bf16.mxu0 0
  %1991 = vmatpush1.bf16.msra.mxu0 %v1972
  %1992 = vmatprep.subr.bf16.mxu0 0
  %1993 = vmatpush1.bf16.msra.mxu0 %v1971
  %1994 = vmatprep.subr.bf16.mxu0 0
  %1995 = vmatpush1.bf16.msra.mxu0 %v1970
  %1996 = vmatprep.subr.bf16.mxu0 0
  %1997 = vmatpush1.bf16.msra.mxu0 %v1969
  %1998 = vmatprep.subr.bf16.mxu0 0
  %1999 = vmatpush1.bf16.msra.mxu0 %v1968
  %2000 = vmatprep.subr.bf16.mxu0 0
  %2001 = vmatpush2.bf16.msra.mxu0 0
  %2002 = vmatprep.subr.bf16.mxu0 0
  %2003 = vmatpush2.bf16.msra.mxu0 0
  %2004 = vmatprep.subr.bf16.mxu0 0
  %2005 = vmatpush2.bf16.msra.mxu0 0
  %2006 = vmatprep.subr.bf16.mxu0 0
  %2007 = vmatpush2.bf16.msra.mxu0 0
  %2008 = vmatprep.subr.bf16.mxu0 0
  %2009 = vmatpush2.bf16.msra.mxu0 0
  %2010 = vmatprep.subr.bf16.mxu0 0
  %2011 = vmatpush2.bf16.msra.mxu0 0
  %2012 = vmatprep.subr.bf16.mxu0 0
  %2013 = vmatpush2.bf16.msra.mxu0 0
  %2014 = vmatprep.subr.bf16.mxu0 0
  %2015 = vmatpush2.bf16.msra.mxu0 0
  %2016 = vmatprep.mubr.bf16.mxu0 0
  %2017 = vmatmul.mubr.bf16.gmra.mxu0 %v1934
  %v2018 = vpop.f32.mrf.mxu0
  %v2019 = vadd.f32 0.0, %v2018
  %v2020 = vpop.f32.mrf.mxu0
  %v2021 = vpop.f32.mrf.mxu0
  %v2022 = vadd.f32 0.0, %v2021
  %v2023 = vpop.f32.mrf.mxu0
  %2024 = vdwg.mxu0
  %v2025 = vadd.f32 %v1906, %v2019
  %v2026 = vadd.f32 %v1909, %v2022
  %v2027 = vld [vmem:[#allocation2] sm:$0xfe]
  %v2028 = vld [vmem:[#allocation2 + $0x10] sm:$0xff]
  %v2029 = vld [vmem:[#allocation2 + $0x20] sm:$0x1]
  %v2030 = vpack.c.bf16 %v2028, %v2027
  %v2031 = vpack.c.bf16 %v2029, %v2029
  %s2032 = scalar_lea.vmem %s2, 192
  %v2033 = vld [vmem:[%s2032] sm:$0xf]
  %v2034 = vld [vmem:[%s2032 + $0x4] sm:$0xf]
  %v2035 = vld [vmem:[%s2032 + $0x8] sm:$0xf]
  %v2036 = vld [vmem:[%s2032 + $0xc] sm:$0xf]
  %v2037 = vld [vmem:[%s2032 + $0x10] sm:$0xf]
  %v2038 = vld [vmem:[%s2032 + $0x14] sm:$0xf]
  %v2039 = vld [vmem:[%s2032 + $0x18] sm:$0xf]
  %v2040 = vld [vmem:[%s2032 + $0x1c] sm:$0xf]
  %v2041 = vld [vmem:[%s2032 + $0x20] sm:$0xf]
  %v2042 = vld [vmem:[%s2032 + $0x24] sm:$0xf]
  %v2043 = vld [vmem:[%s2032 + $0x28] sm:$0xf]
  %v2044 = vld [vmem:[%s2032 + $0x2c] sm:$0xf]
  %v2045 = vld [vmem:[%s2032 + $0x30] sm:$0xf]
  %v2046 = vld [vmem:[%s2032 + $0x34] sm:$0xf]
  %v2047 = vld [vmem:[%s2032 + $0x38] sm:$0xf]
  %v2048 = vld [vmem:[%s2032 + $0x3c] sm:$0xf]
  %v2050 = vshrl.u32 %v2030, 16
  %v2052 = vshll.u32 %v2030, 16
  %v2054 = vrot.slane %v2052, 1
  %v2055 = vor.u32 %v2050, %v2054
  %v2057 = vshll.u32 %v2031, 16
  %v2059 = vrot.slane %v2057, 1
  %v2060 = vsel %vm335, %v2055, %v2059
  %v2078 = vunpack.c.l.b16 %v2033
  %v2079 = vunpack.c.l.b16 %v2034
  %v2080 = vunpack.c.l.b16 %v2035
  %v2081 = vunpack.c.l.b16 %v2036
  %v2082 = vunpack.c.l.b16 %v2037
  %v2083 = vunpack.c.l.b16 %v2038
  %v2084 = vunpack.c.l.b16 %v2039
  %v2085 = vunpack.c.l.b16 %v2040
  %v2086 = vunpack.c.l.b16 %v2041
  %v2087 = vunpack.c.l.b16 %v2042
  %v2088 = vunpack.c.l.b16 %v2043
  %v2089 = vunpack.c.l.b16 %v2044
  %v2090 = vunpack.c.l.b16 %v2045
  %v2091 = vunpack.c.l.b16 %v2046
  %v2092 = vunpack.c.l.b16 %v2047
  %v2093 = vunpack.c.l.b16 %v2048
  %v2094 = vpack.c.b16 %v2079, %v2078
  %v2095 = vpack.c.b16 %v2081, %v2080
  %v2096 = vpack.c.b16 %v2083, %v2082
  %v2097 = vpack.c.b16 %v2085, %v2084
  %v2098 = vpack.c.b16 %v2087, %v2086
  %v2099 = vpack.c.b16 %v2089, %v2088
  %v2100 = vpack.c.b16 %v2091, %v2090
  %v2101 = vpack.c.b16 %v2093, %v2092
  %2110 = vmatprep.subr.bf16.mxu0 0
  %2111 = vmatpush1.bf16.msra.mxu0 %v2101
  %2112 = vmatprep.subr.bf16.mxu0 0
  %2113 = vmatpush1.bf16.msra.mxu0 %v2100
  %2114 = vmatprep.subr.bf16.mxu0 0
  %2115 = vmatpush1.bf16.msra.mxu0 %v2099
  %2116 = vmatprep.subr.bf16.mxu0 0
  %2117 = vmatpush1.bf16.msra.mxu0 %v2098
  %2118 = vmatprep.subr.bf16.mxu0 0
  %2119 = vmatpush1.bf16.msra.mxu0 %v2097
  %2120 = vmatprep.subr.bf16.mxu0 0
  %2121 = vmatpush1.bf16.msra.mxu0 %v2096
  %2122 = vmatprep.subr.bf16.mxu0 0
  %2123 = vmatpush1.bf16.msra.mxu0 %v2095
  %2124 = vmatprep.subr.bf16.mxu0 0
  %2125 = vmatpush1.bf16.msra.mxu0 %v2094
  %2126 = vmatprep.subr.bf16.mxu0 0
  %2127 = vmatpush2.bf16.msra.mxu0 0
  %2128 = vmatprep.subr.bf16.mxu0 0
  %2129 = vmatpush2.bf16.msra.mxu0 0
  %2130 = vmatprep.subr.bf16.mxu0 0
  %2131 = vmatpush2.bf16.msra.mxu0 0
  %2132 = vmatprep.subr.bf16.mxu0 0
  %2133 = vmatpush2.bf16.msra.mxu0 0
  %2134 = vmatprep.subr.bf16.mxu0 0
  %2135 = vmatpush2.bf16.msra.mxu0 0
  %2136 = vmatprep.subr.bf16.mxu0 0
  %2137 = vmatpush2.bf16.msra.mxu0 0
  %2138 = vmatprep.subr.bf16.mxu0 0
  %2139 = vmatpush2.bf16.msra.mxu0 0
  %2140 = vmatprep.subr.bf16.mxu0 0
  %2141 = vmatpush2.bf16.msra.mxu0 0
  %2142 = vmatprep.mubr.bf16.mxu0 0
  %2143 = vmatmul.mubr.bf16.gmra.mxu0 %v2060
  %v2144 = vpop.f32.mrf.mxu0
  %v2145 = vadd.f32 0.0, %v2144
  %v2146 = vpop.f32.mrf.mxu0
  %v2147 = vpop.f32.mrf.mxu0
  %v2148 = vadd.f32 0.0, %v2147
  %v2149 = vpop.f32.mrf.mxu0
  %2150 = vdwg.mxu0
  %v2151 = vadd.f32 %v2025, %v2145
  %v2152 = vadd.f32 %v2026, %v2148
  %v2153 = vld [vmem:[#allocation2] sm:$0xfe]
  %v2154 = vld [vmem:[#allocation2 + $0x8] sm:$0xfe]
  %v2155 = vld [vmem:[#allocation2 + $0x10] sm:$0xff]
  %v2156 = vld [vmem:[#allocation2 + $0x18] sm:$0xff]
  %v2157 = vld [vmem:[#allocation2 + $0x20] sm:$0x1]
  %v2158 = vld [vmem:[#allocation2 + $0x28] sm:$0x1]
  %v2159 = vpack.c.bf16 %v2155, %v2153
  %v2160 = vpack.c.bf16 %v2156, %v2154
  %v2161 = vpack.c.bf16 %v2157, %v2157
  %v2162 = vpack.c.bf16 %v2158, %v2158
  %s2163 = scalar_lea.vmem %s2, 256
  %v2164 = vld [vmem:[%s2163] sm:$0xf]
  %v2165 = vld [vmem:[%s2163 + $0x4] sm:$0xf]
  %v2166 = vld [vmem:[%s2163 + $0x8] sm:$0xf]
  %v2167 = vld [vmem:[%s2163 + $0xc] sm:$0xf]
  %v2168 = vld [vmem:[%s2163 + $0x10] sm:$0xf]
  %v2169 = vld [vmem:[%s2163 + $0x14] sm:$0xf]
  %v2170 = vld [vmem:[%s2163 + $0x18] sm:$0xf]
  %v2171 = vld [vmem:[%s2163 + $0x1c] sm:$0xf]
  %v2172 = vld [vmem:[%s2163 + $0x20] sm:$0xf]
  %v2173 = vld [vmem:[%s2163 + $0x24] sm:$0xf]
  %v2174 = vld [vmem:[%s2163 + $0x28] sm:$0xf]
  %v2175 = vld [vmem:[%s2163 + $0x2c] sm:$0xf]
  %v2176 = vld [vmem:[%s2163 + $0x30] sm:$0xf]
  %v2177 = vld [vmem:[%s2163 + $0x34] sm:$0xf]
  %v2178 = vld [vmem:[%s2163 + $0x38] sm:$0xf]
  %v2179 = vld [vmem:[%s2163 + $0x3c] sm:$0xf]
  %v2181 = vshrl.u32 %v2159, 16
  %v2183 = vshll.u32 %v2159, 16
  %v2185 = vrot.slane %v2183, 1
  %v2186 = vor.u32 %v2181, %v2185
  %v2188 = vshll.u32 %v2161, 16
  %v2190 = vrot.slane %v2188, 1
  %v2191 = vsel %vm335, %v2186, %v2190
  %v2193 = vshrl.u32 %v2160, 16
  %v2195 = vshll.u32 %v2160, 16
  %v2197 = vrot.slane %v2195, 1
  %v2198 = vor.u32 %v2193, %v2197
  %v2200 = vshll.u32 %v2162, 16
  %v2202 = vrot.slane %v2200, 1
  %v2203 = vsel %vm335, %v2198, %v2202
  %2204 = vrot.lane.b32.xlu0 %v2191, 120
  %v2205 = vpop.permute.xlu0 %2204
  %2206 = vrot.lane.b32.xlu0 %v2203, 120
  %v2207 = vpop.permute.xlu0 %2206
  %v2208 = vsel %vm1731, %v2205, %v2207
  %v2226 = vunpack.c.l.b16 %v2164
  %v2227 = vunpack.c.l.b16 %v2165
  %v2228 = vunpack.c.l.b16 %v2166
  %v2229 = vunpack.c.l.b16 %v2167
  %v2230 = vunpack.c.l.b16 %v2168
  %v2231 = vunpack.c.l.b16 %v2169
  %v2232 = vunpack.c.l.b16 %v2170
  %v2233 = vunpack.c.l.b16 %v2171
  %v2234 = vunpack.c.l.b16 %v2172
  %v2235 = vunpack.c.l.b16 %v2173
  %v2236 = vunpack.c.l.b16 %v2174
  %v2237 = vunpack.c.l.b16 %v2175
  %v2238 = vunpack.c.l.b16 %v2176
  %v2239 = vunpack.c.l.b16 %v2177
  %v2240 = vunpack.c.l.b16 %v2178
  %v2241 = vunpack.c.l.b16 %v2179
  %v2242 = vpack.c.b16 %v2227, %v2226
  %v2243 = vpack.c.b16 %v2229, %v2228
  %v2244 = vpack.c.b16 %v2231, %v2230
  %v2245 = vpack.c.b16 %v2233, %v2232
  %v2246 = vpack.c.b16 %v2235, %v2234
  %v2247 = vpack.c.b16 %v2237, %v2236
  %v2248 = vpack.c.b16 %v2239, %v2238
  %v2249 = vpack.c.b16 %v2241, %v2240
  %2258 = vmatprep.subr.bf16.mxu0 0
  %2259 = vmatpush1.bf16.msra.mxu0 %v2249
  %2260 = vmatprep.subr.bf16.mxu0 0
  %2261 = vmatpush1.bf16.msra.mxu0 %v2248
  %2262 = vmatprep.subr.bf16.mxu0 0
  %2263 = vmatpush1.bf16.msra.mxu0 %v2247
  %2264 = vmatprep.subr.bf16.mxu0 0
  %2265 = vmatpush1.bf16.msra.mxu0 %v2246
  %2266 = vmatprep.subr.bf16.mxu0 0
  %2267 = vmatpush1.bf16.msra.mxu0 %v2245
  %2268 = vmatprep.subr.bf16.mxu0 0
  %2269 = vmatpush1.bf16.msra.mxu0 %v2244
  %2270 = vmatprep.subr.bf16.mxu0 0
  %2271 = vmatpush1.bf16.msra.mxu0 %v2243
  %2272 = vmatprep.subr.bf16.mxu0 0
  %2273 = vmatpush1.bf16.msra.mxu0 %v2242
  %2274 = vmatprep.subr.bf16.mxu0 0
  %2275 = vmatpush2.bf16.msra.mxu0 0
  %2276 = vmatprep.subr.bf16.mxu0 0
  %2277 = vmatpush2.bf16.msra.mxu0 0
  %2278 = vmatprep.subr.bf16.mxu0 0
  %2279 = vmatpush2.bf16.msra.mxu0 0
  %2280 = vmatprep.subr.bf16.mxu0 0
  %2281 = vmatpush2.bf16.msra.mxu0 0
  %2282 = vmatprep.subr.bf16.mxu0 0
  %2283 = vmatpush2.bf16.msra.mxu0 0
  %2284 = vmatprep.subr.bf16.mxu0 0
  %2285 = vmatpush2.bf16.msra.mxu0 0
  %2286 = vmatprep.subr.bf16.mxu0 0
  %2287 = vmatpush2.bf16.msra.mxu0 0
  %2288 = vmatprep.subr.bf16.mxu0 0
  %2289 = vmatpush2.bf16.msra.mxu0 0
  %2290 = vmatprep.mubr.bf16.mxu0 0
  %2291 = vmatmul.mubr.bf16.gmra.mxu0 %v2208
  %v2292 = vpop.f32.mrf.mxu0
  %v2293 = vadd.f32 0.0, %v2292
  %v2294 = vpop.f32.mrf.mxu0
  %v2295 = vpop.f32.mrf.mxu0
  %v2296 = vadd.f32 0.0, %v2295
  %v2297 = vpop.f32.mrf.mxu0
  %2298 = vdwg.mxu0
  %v2299 = vadd.f32 %v2151, %v2293
  %v2300 = vadd.f32 %v2152, %v2296
  %s2301 = scalar_lea.vmem %s2, 320
  %v2302 = vld [vmem:[%s2301] sm:$0xf]
  %v2303 = vld [vmem:[%s2301 + $0x4] sm:$0xf]
  %v2304 = vld [vmem:[%s2301 + $0x8] sm:$0xf]
  %v2305 = vld [vmem:[%s2301 + $0xc] sm:$0xf]
  %v2306 = vld [vmem:[%s2301 + $0x10] sm:$0xf]
  %v2307 = vld [vmem:[%s2301 + $0x14] sm:$0xf]
  %v2308 = vld [vmem:[%s2301 + $0x18] sm:$0xf]
  %v2309 = vld [vmem:[%s2301 + $0x1c] sm:$0xf]
  %v2310 = vld [vmem:[%s2301 + $0x20] sm:$0xf]
  %v2311 = vld [vmem:[%s2301 + $0x24] sm:$0xf]
  %v2312 = vld [vmem:[%s2301 + $0x28] sm:$0xf]
  %v2313 = vld [vmem:[%s2301 + $0x2c] sm:$0xf]
  %v2314 = vld [vmem:[%s2301 + $0x30] sm:$0xf]
  %v2315 = vld [vmem:[%s2301 + $0x34] sm:$0xf]
  %v2316 = vld [vmem:[%s2301 + $0x38] sm:$0xf]
  %v2317 = vld [vmem:[%s2301 + $0x3c] sm:$0xf]
  %2318 = vrot.lane.b32.xlu0 %v2191, 112
  %v2319 = vpop.permute.xlu0 %2318
  %2320 = vrot.lane.b32.xlu0 %v2203, 112
  %v2321 = vpop.permute.xlu0 %2320
  %v2322 = vsel %vm1933, %v2319, %v2321
  %v2340 = vunpack.c.l.b16 %v2302
  %v2341 = vunpack.c.l.b16 %v2303
  %v2342 = vunpack.c.l.b16 %v2304
  %v2343 = vunpack.c.l.b16 %v2305
  %v2344 = vunpack.c.l.b16 %v2306
  %v2345 = vunpack.c.l.b16 %v2307
  %v2346 = vunpack.c.l.b16 %v2308
  %v2347 = vunpack.c.l.b16 %v2309
  %v2348 = vunpack.c.l.b16 %v2310
  %v2349 = vunpack.c.l.b16 %v2311
  %v2350 = vunpack.c.l.b16 %v2312
  %v2351 = vunpack.c.l.b16 %v2313
  %v2352 = vunpack.c.l.b16 %v2314
  %v2353 = vunpack.c.l.b16 %v2315
  %v2354 = vunpack.c.l.b16 %v2316
  %v2355 = vunpack.c.l.b16 %v2317
  %v2356 = vpack.c.b16 %v2341, %v2340
  %v2357 = vpack.c.b16 %v2343, %v2342
  %v2358 = vpack.c.b16 %v2345, %v2344
  %v2359 = vpack.c.b16 %v2347, %v2346
  %v2360 = vpack.c.b16 %v2349, %v2348
  %v2361 = vpack.c.b16 %v2351, %v2350
  %v2362 = vpack.c.b16 %v2353, %v2352
  %v2363 = vpack.c.b16 %v2355, %v2354
  %2372 = vmatprep.subr.bf16.mxu0 0
  %2373 = vmatpush1.bf16.msra.mxu0 %v2363
  %2374 = vmatprep.subr.bf16.mxu0 0
  %2375 = vmatpush1.bf16.msra.mxu0 %v2362
  %2376 = vmatprep.subr.bf16.mxu0 0
  %2377 = vmatpush1.bf16.msra.mxu0 %v2361
  %2378 = vmatprep.subr.bf16.mxu0 0
  %2379 = vmatpush1.bf16.msra.mxu0 %v2360
  %2380 = vmatprep.subr.bf16.mxu0 0
  %2381 = vmatpush1.bf16.msra.mxu0 %v2359
  %2382 = vmatprep.subr.bf16.mxu0 0
  %2383 = vmatpush1.bf16.msra.mxu0 %v2358
  %2384 = vmatprep.subr.bf16.mxu0 0
  %2385 = vmatpush1.bf16.msra.mxu0 %v2357
  %2386 = vmatprep.subr.bf16.mxu0 0
  %2387 = vmatpush1.bf16.msra.mxu0 %v2356
  %2388 = vmatprep.subr.bf16.mxu0 0
  %2389 = vmatpush2.bf16.msra.mxu0 0
  %2390 = vmatprep.subr.bf16.mxu0 0
  %2391 = vmatpush2.bf16.msra.mxu0 0
  %2392 = vmatprep.subr.bf16.mxu0 0
  %2393 = vmatpush2.bf16.msra.mxu0 0
  %2394 = vmatprep.subr.bf16.mxu0 0
  %2395 = vmatpush2.bf16.msra.mxu0 0
  %2396 = vmatprep.subr.bf16.mxu0 0
  %2397 = vmatpush2.bf16.msra.mxu0 0
  %2398 = vmatprep.subr.bf16.mxu0 0
  %2399 = vmatpush2.bf16.msra.mxu0 0
  %2400 = vmatprep.subr.bf16.mxu0 0
  %2401 = vmatpush2.bf16.msra.mxu0 0
  %2402 = vmatprep.subr.bf16.mxu0 0
  %2403 = vmatpush2.bf16.msra.mxu0 0
  %2404 = vmatprep.mubr.bf16.mxu0 0
  %2405 = vmatmul.mubr.bf16.gmra.mxu0 %v2322
  %v2406 = vpop.f32.mrf.mxu0
  %v2407 = vadd.f32 0.0, %v2406
  %v2408 = vpop.f32.mrf.mxu0
  %v2409 = vpop.f32.mrf.mxu0
  %v2410 = vadd.f32 0.0, %v2409
  %v2411 = vpop.f32.mrf.mxu0
  %2412 = vdwg.mxu0
  %v2413 = vadd.f32 %v2299, %v2407
  %v2414 = vadd.f32 %v2300, %v2410
  %v2415 = vld [vmem:[#allocation2] sm:$0xfc]
  %v2416 = vld [vmem:[#allocation2 + $0x20] sm:$0x3]
  %v2417 = vpack.c.bf16 %v2028, %v2415
  %v2418 = vpack.c.bf16 %v2416, %v2416
  %s2419 = scalar_lea.vmem %s2, 384
  %v2420 = vld [vmem:[%s2419] sm:$0xf]
  %v2421 = vld [vmem:[%s2419 + $0x4] sm:$0xf]
  %v2422 = vld [vmem:[%s2419 + $0x8] sm:$0xf]
  %v2423 = vld [vmem:[%s2419 + $0xc] sm:$0xf]
  %v2424 = vld [vmem:[%s2419 + $0x10] sm:$0xf]
  %v2425 = vld [vmem:[%s2419 + $0x14] sm:$0xf]
  %v2426 = vld [vmem:[%s2419 + $0x18] sm:$0xf]
  %v2427 = vld [vmem:[%s2419 + $0x1c] sm:$0xf]
  %v2428 = vld [vmem:[%s2419 + $0x20] sm:$0xf]
  %v2429 = vld [vmem:[%s2419 + $0x24] sm:$0xf]
  %v2430 = vld [vmem:[%s2419 + $0x28] sm:$0xf]
  %v2431 = vld [vmem:[%s2419 + $0x2c] sm:$0xf]
  %v2432 = vld [vmem:[%s2419 + $0x30] sm:$0xf]
  %v2433 = vld [vmem:[%s2419 + $0x34] sm:$0xf]
  %v2434 = vld [vmem:[%s2419 + $0x38] sm:$0xf]
  %v2435 = vld [vmem:[%s2419 + $0x3c] sm:$0xf]
  %v2438 = vrot.slane %v2417, 1
  %v2439 = vrot.slane %v2418, 1
  %v2440 = vsel %vm593, %v2438, %v2439
  %v2458 = vunpack.c.l.b16 %v2420
  %v2459 = vunpack.c.l.b16 %v2421
  %v2460 = vunpack.c.l.b16 %v2422
  %v2461 = vunpack.c.l.b16 %v2423
  %v2462 = vunpack.c.l.b16 %v2424
  %v2463 = vunpack.c.l.b16 %v2425
  %v2464 = vunpack.c.l.b16 %v2426
  %v2465 = vunpack.c.l.b16 %v2427
  %v2466 = vunpack.c.l.b16 %v2428
  %v2467 = vunpack.c.l.b16 %v2429
  %v2468 = vunpack.c.l.b16 %v2430
  %v2469 = vunpack.c.l.b16 %v2431
  %v2470 = vunpack.c.l.b16 %v2432
  %v2471 = vunpack.c.l.b16 %v2433
  %v2472 = vunpack.c.l.b16 %v2434
  %v2473 = vunpack.c.l.b16 %v2435
  %v2474 = vpack.c.b16 %v2459, %v2458
  %v2475 = vpack.c.b16 %v2461, %v2460
  %v2476 = vpack.c.b16 %v2463, %v2462
  %v2477 = vpack.c.b16 %v2465, %v2464
  %v2478 = vpack.c.b16 %v2467, %v2466
  %v2479 = vpack.c.b16 %v2469, %v2468
  %v2480 = vpack.c.b16 %v2471, %v2470
  %v2481 = vpack.c.b16 %v2473, %v2472
  %2490 = vmatprep.subr.bf16.mxu0 0
  %2491 = vmatpush1.bf16.msra.mxu0 %v2481
  %2492 = vmatprep.subr.bf16.mxu0 0
  %2493 = vmatpush1.bf16.msra.mxu0 %v2480
  %2494 = vmatprep.subr.bf16.mxu0 0
  %2495 = vmatpush1.bf16.msra.mxu0 %v2479
  %2496 = vmatprep.subr.bf16.mxu0 0
  %2497 = vmatpush1.bf16.msra.mxu0 %v2478
  %2498 = vmatprep.subr.bf16.mxu0 0
  %2499 = vmatpush1.bf16.msra.mxu0 %v2477
  %2500 = vmatprep.subr.bf16.mxu0 0
  %2501 = vmatpush1.bf16.msra.mxu0 %v2476
  %2502 = vmatprep.subr.bf16.mxu0 0
  %2503 = vmatpush1.bf16.msra.mxu0 %v2475
  %2504 = vmatprep.subr.bf16.mxu0 0
  %2505 = vmatpush1.bf16.msra.mxu0 %v2474
  %2506 = vmatprep.subr.bf16.mxu0 0
  %2507 = vmatpush2.bf16.msra.mxu0 0
  %2508 = vmatprep.subr.bf16.mxu0 0
  %2509 = vmatpush2.bf16.msra.mxu0 0
  %2510 = vmatprep.subr.bf16.mxu0 0
  %2511 = vmatpush2.bf16.msra.mxu0 0
  %2512 = vmatprep.subr.bf16.mxu0 0
  %2513 = vmatpush2.bf16.msra.mxu0 0
  %2514 = vmatprep.subr.bf16.mxu0 0
  %2515 = vmatpush2.bf16.msra.mxu0 0
  %2516 = vmatprep.subr.bf16.mxu0 0
  %2517 = vmatpush2.bf16.msra.mxu0 0
  %2518 = vmatprep.subr.bf16.mxu0 0
  %2519 = vmatpush2.bf16.msra.mxu0 0
  %2520 = vmatprep.subr.bf16.mxu0 0
  %2521 = vmatpush2.bf16.msra.mxu0 0
  %2522 = vmatprep.mubr.bf16.mxu0 0
  %2523 = vmatmul.mubr.bf16.gmra.mxu0 %v2440
  %v2524 = vpop.f32.mrf.mxu0
  %v2525 = vadd.f32 0.0, %v2524
  %v2526 = vpop.f32.mrf.mxu0
  %v2527 = vpop.f32.mrf.mxu0
  %v2528 = vadd.f32 0.0, %v2527
  %v2529 = vpop.f32.mrf.mxu0
  %2530 = vdwg.mxu0
  %v2531 = vadd.f32 %v2413, %v2525
  %v2532 = vadd.f32 %v2414, %v2528
  %v2533 = vld [vmem:[#allocation2] sm:$0xfc]
  %v2534 = vld [vmem:[#allocation2 + $0x8] sm:$0xfc]
  %v2535 = vld [vmem:[#allocation2 + $0x20] sm:$0x3]
  %v2536 = vld [vmem:[#allocation2 + $0x28] sm:$0x3]
  %v2537 = vpack.c.bf16 %v2155, %v2533
  %v2538 = vpack.c.bf16 %v2156, %v2534
  %v2539 = vpack.c.bf16 %v2535, %v2535
  %v2540 = vpack.c.bf16 %v2536, %v2536
  %s2541 = scalar_lea.vmem %s2, 448
  %v2542 = vld [vmem:[%s2541] sm:$0xf]
  %v2543 = vld [vmem:[%s2541 + $0x4] sm:$0xf]
  %v2544 = vld [vmem:[%s2541 + $0x8] sm:$0xf]
  %v2545 = vld [vmem:[%s2541 + $0xc] sm:$0xf]
  %v2546 = vld [vmem:[%s2541 + $0x10] sm:$0xf]
  %v2547 = vld [vmem:[%s2541 + $0x14] sm:$0xf]
  %v2548 = vld [vmem:[%s2541 + $0x18] sm:$0xf]
  %v2549 = vld [vmem:[%s2541 + $0x1c] sm:$0xf]
  %v2550 = vld [vmem:[%s2541 + $0x20] sm:$0xf]
  %v2551 = vld [vmem:[%s2541 + $0x24] sm:$0xf]
  %v2552 = vld [vmem:[%s2541 + $0x28] sm:$0xf]
  %v2553 = vld [vmem:[%s2541 + $0x2c] sm:$0xf]
  %v2554 = vld [vmem:[%s2541 + $0x30] sm:$0xf]
  %v2555 = vld [vmem:[%s2541 + $0x34] sm:$0xf]
  %v2556 = vld [vmem:[%s2541 + $0x38] sm:$0xf]
  %v2557 = vld [vmem:[%s2541 + $0x3c] sm:$0xf]
  %v2562 = vrot.slane %v2537, 1
  %v2563 = vrot.slane %v2539, 1
  %v2564 = vsel %vm593, %v2562, %v2563
  %v2565 = vrot.slane %v2538, 1
  %v2566 = vrot.slane %v2540, 1
  %v2567 = vsel %vm593, %v2565, %v2566
  %2568 = vrot.lane.b32.xlu0 %v2564, 120
  %v2569 = vpop.permute.xlu0 %2568
  %2570 = vrot.lane.b32.xlu0 %v2567, 120
  %v2571 = vpop.permute.xlu0 %2570
  %v2572 = vsel %vm1731, %v2569, %v2571
  %v2590 = vunpack.c.l.b16 %v2542
  %v2591 = vunpack.c.l.b16 %v2543
  %v2592 = vunpack.c.l.b16 %v2544
  %v2593 = vunpack.c.l.b16 %v2545
  %v2594 = vunpack.c.l.b16 %v2546
  %v2595 = vunpack.c.l.b16 %v2547
  %v2596 = vunpack.c.l.b16 %v2548
  %v2597 = vunpack.c.l.b16 %v2549
  %v2598 = vunpack.c.l.b16 %v2550
  %v2599 = vunpack.c.l.b16 %v2551
  %v2600 = vunpack.c.l.b16 %v2552
  %v2601 = vunpack.c.l.b16 %v2553
  %v2602 = vunpack.c.l.b16 %v2554
  %v2603 = vunpack.c.l.b16 %v2555
  %v2604 = vunpack.c.l.b16 %v2556
  %v2605 = vunpack.c.l.b16 %v2557
  %v2606 = vpack.c.b16 %v2591, %v2590
  %v2607 = vpack.c.b16 %v2593, %v2592
  %v2608 = vpack.c.b16 %v2595, %v2594
  %v2609 = vpack.c.b16 %v2597, %v2596
  %v2610 = vpack.c.b16 %v2599, %v2598
  %v2611 = vpack.c.b16 %v2601, %v2600
  %v2612 = vpack.c.b16 %v2603, %v2602
  %v2613 = vpack.c.b16 %v2605, %v2604
  %2622 = vmatprep.subr.bf16.mxu0 0
  %2623 = vmatpush1.bf16.msra.mxu0 %v2613
  %2624 = vmatprep.subr.bf16.mxu0 0
  %2625 = vmatpush1.bf16.msra.mxu0 %v2612
  %2626 = vmatprep.subr.bf16.mxu0 0
  %2627 = vmatpush1.bf16.msra.mxu0 %v2611
  %2628 = vmatprep.subr.bf16.mxu0 0
  %2629 = vmatpush1.bf16.msra.mxu0 %v2610
  %2630 = vmatprep.subr.bf16.mxu0 0
  %2631 = vmatpush1.bf16.msra.mxu0 %v2609
  %2632 = vmatprep.subr.bf16.mxu0 0
  %2633 = vmatpush1.bf16.msra.mxu0 %v2608
  %2634 = vmatprep.subr.bf16.mxu0 0
  %2635 = vmatpush1.bf16.msra.mxu0 %v2607
  %2636 = vmatprep.subr.bf16.mxu0 0
  %2637 = vmatpush1.bf16.msra.mxu0 %v2606
  %2638 = vmatprep.subr.bf16.mxu0 0
  %2639 = vmatpush2.bf16.msra.mxu0 0
  %2640 = vmatprep.subr.bf16.mxu0 0
  %2641 = vmatpush2.bf16.msra.mxu0 0
  %2642 = vmatprep.subr.bf16.mxu0 0
  %2643 = vmatpush2.bf16.msra.mxu0 0
  %2644 = vmatprep.subr.bf16.mxu0 0
  %2645 = vmatpush2.bf16.msra.mxu0 0
  %2646 = vmatprep.subr.bf16.mxu0 0
  %2647 = vmatpush2.bf16.msra.mxu0 0
  %2648 = vmatprep.subr.bf16.mxu0 0
  %2649 = vmatpush2.bf16.msra.mxu0 0
  %2650 = vmatprep.subr.bf16.mxu0 0
  %2651 = vmatpush2.bf16.msra.mxu0 0
  %2652 = vmatprep.subr.bf16.mxu0 0
  %2653 = vmatpush2.bf16.msra.mxu0 0
  %2654 = vmatprep.mubr.bf16.mxu0 0
  %2655 = vmatmul.mubr.bf16.gmra.mxu0 %v2572
  %v2656 = vpop.f32.mrf.mxu0
  %v2657 = vadd.f32 0.0, %v2656
  %v2658 = vpop.f32.mrf.mxu0
  %v2659 = vpop.f32.mrf.mxu0
  %v2660 = vadd.f32 0.0, %v2659
  %v2661 = vpop.f32.mrf.mxu0
  %2662 = vdwg.mxu0
  %v2663 = vadd.f32 %v2531, %v2657
  %v2664 = vadd.f32 %v2532, %v2660
  %s2665 = scalar_lea.vmem %s2, 512
  %v2666 = vld [vmem:[%s2665] sm:$0xf]
  %v2667 = vld [vmem:[%s2665 + $0x4] sm:$0xf]
  %v2668 = vld [vmem:[%s2665 + $0x8] sm:$0xf]
  %v2669 = vld [vmem:[%s2665 + $0xc] sm:$0xf]
  %v2670 = vld [vmem:[%s2665 + $0x10] sm:$0xf]
  %v2671 = vld [vmem:[%s2665 + $0x14] sm:$0xf]
  %v2672 = vld [vmem:[%s2665 + $0x18] sm:$0xf]
  %v2673 = vld [vmem:[%s2665 + $0x1c] sm:$0xf]
  %v2674 = vld [vmem:[%s2665 + $0x20] sm:$0xf]
  %v2675 = vld [vmem:[%s2665 + $0x24] sm:$0xf]
  %v2676 = vld [vmem:[%s2665 + $0x28] sm:$0xf]
  %v2677 = vld [vmem:[%s2665 + $0x2c] sm:$0xf]
  %v2678 = vld [vmem:[%s2665 + $0x30] sm:$0xf]
  %v2679 = vld [vmem:[%s2665 + $0x34] sm:$0xf]
  %v2680 = vld [vmem:[%s2665 + $0x38] sm:$0xf]
  %v2681 = vld [vmem:[%s2665 + $0x3c] sm:$0xf]
  %2682 = vrot.lane.b32.xlu0 %v2564, 112
  %v2683 = vpop.permute.xlu0 %2682
  %2684 = vrot.lane.b32.xlu0 %v2567, 112
  %v2685 = vpop.permute.xlu0 %2684
  %v2686 = vsel %vm1933, %v2683, %v2685
  %v2704 = vunpack.c.l.b16 %v2666
  %v2705 = vunpack.c.l.b16 %v2667
  %v2706 = vunpack.c.l.b16 %v2668
  %v2707 = vunpack.c.l.b16 %v2669
  %v2708 = vunpack.c.l.b16 %v2670
  %v2709 = vunpack.c.l.b16 %v2671
  %v2710 = vunpack.c.l.b16 %v2672
  %v2711 = vunpack.c.l.b16 %v2673
  %v2712 = vunpack.c.l.b16 %v2674
  %v2713 = vunpack.c.l.b16 %v2675
  %v2714 = vunpack.c.l.b16 %v2676
  %v2715 = vunpack.c.l.b16 %v2677
  %v2716 = vunpack.c.l.b16 %v2678
  %v2717 = vunpack.c.l.b16 %v2679
  %v2718 = vunpack.c.l.b16 %v2680
  %v2719 = vunpack.c.l.b16 %v2681
  %v2720 = vpack.c.b16 %v2705, %v2704
  %v2721 = vpack.c.b16 %v2707, %v2706
  %v2722 = vpack.c.b16 %v2709, %v2708
  %v2723 = vpack.c.b16 %v2711, %v2710
  %v2724 = vpack.c.b16 %v2713, %v2712
  %v2725 = vpack.c.b16 %v2715, %v2714
  %v2726 = vpack.c.b16 %v2717, %v2716
  %v2727 = vpack.c.b16 %v2719, %v2718
  %2736 = vmatprep.subr.bf16.mxu0 0
  %2737 = vmatpush1.bf16.msra.mxu0 %v2727
  %2738 = vmatprep.subr.bf16.mxu0 0
  %2739 = vmatpush1.bf16.msra.mxu0 %v2726
  %2740 = vmatprep.subr.bf16.mxu0 0
  %2741 = vmatpush1.bf16.msra.mxu0 %v2725
  %2742 = vmatprep.subr.bf16.mxu0 0
  %2743 = vmatpush1.bf16.msra.mxu0 %v2724
  %2744 = vmatprep.subr.bf16.mxu0 0
  %2745 = vmatpush1.bf16.msra.mxu0 %v2723
  %2746 = vmatprep.subr.bf16.mxu0 0
  %2747 = vmatpush1.bf16.msra.mxu0 %v2722
  %2748 = vmatprep.subr.bf16.mxu0 0
  %2749 = vmatpush1.bf16.msra.mxu0 %v2721
  %2750 = vmatprep.subr.bf16.mxu0 0
  %2751 = vmatpush1.bf16.msra.mxu0 %v2720
  %2752 = vmatprep.subr.bf16.mxu0 0
  %2753 = vmatpush2.bf16.msra.mxu0 0
  %2754 = vmatprep.subr.bf16.mxu0 0
  %2755 = vmatpush2.bf16.msra.mxu0 0
  %2756 = vmatprep.subr.bf16.mxu0 0
  %2757 = vmatpush2.bf16.msra.mxu0 0
  %2758 = vmatprep.subr.bf16.mxu0 0
  %2759 = vmatpush2.bf16.msra.mxu0 0
  %2760 = vmatprep.subr.bf16.mxu0 0
  %2761 = vmatpush2.bf16.msra.mxu0 0
  %2762 = vmatprep.subr.bf16.mxu0 0
  %2763 = vmatpush2.bf16.msra.mxu0 0
  %2764 = vmatprep.subr.bf16.mxu0 0
  %2765 = vmatpush2.bf16.msra.mxu0 0
  %2766 = vmatprep.subr.bf16.mxu0 0
  %2767 = vmatpush2.bf16.msra.mxu0 0
  %2768 = vmatprep.mubr.bf16.mxu0 0
  %2769 = vmatmul.mubr.bf16.gmra.mxu0 %v2686
  %v2770 = vpop.f32.mrf.mxu0
  %v2771 = vadd.f32 0.0, %v2770
  %v2772 = vpop.f32.mrf.mxu0
  %v2773 = vpop.f32.mrf.mxu0
  %v2774 = vadd.f32 0.0, %v2773
  %v2775 = vpop.f32.mrf.mxu0
  %2776 = vdwg.mxu0
  %v2777 = vadd.f32 %v2663, %v2771
  %v2778 = vadd.f32 %v2664, %v2774
  %v2779 = vld [vmem:[#allocation2 + $0x20] sm:$0xfc]
  %v2780 = vld [vmem:[#allocation2 + $0x30] sm:$0xff]
  %v2781 = vld [vmem:[#allocation2 + $0x40] sm:$0x3]
  %v2782 = vpack.c.bf16 %v2780, %v2779
  %v2783 = vpack.c.bf16 %v2781, %v2781
  %v2784 = vld [vmem:[#allocation2 + $0x28] sm:$0xfc]
  %v2785 = vld [vmem:[#allocation2 + $0x38] sm:$0xff]
  %v2786 = vld [vmem:[#allocation2 + $0x48] sm:$0x3]
  %v2787 = vpack.c.bf16 %v2785, %v2784
  %v2788 = vpack.c.bf16 %v2786, %v2786
  %v2793 = vrot.slane %v2782, 1
  %v2794 = vrot.slane %v2783, 1
  %v2795 = vsel %vm593, %v2793, %v2794
  %v2796 = vrot.slane %v2787, 1
  %v2797 = vrot.slane %v2788, 1
  %v2798 = vsel %vm593, %v2796, %v2797
  %2799 = vrot.lane.b32.xlu0 %v2795, 120
  %v2800 = vpop.permute.xlu0 %2799
  %2801 = vrot.lane.b32.xlu0 %v2798, 120
  %v2802 = vpop.permute.xlu0 %2801
  %v2803 = vsel %vm1731, %v2800, %v2802
  %2805 = vmatprep.subr.bf16.mxu0 0
  %2806 = vmatpush1.bf16.msra.mxu0 %v1773
  %2807 = vmatprep.subr.bf16.mxu0 0
  %2808 = vmatpush1.bf16.msra.mxu0 %v1772
  %2809 = vmatprep.subr.bf16.mxu0 0
  %2810 = vmatpush1.bf16.msra.mxu0 %v1771
  %2811 = vmatprep.subr.bf16.mxu0 0
  %2812 = vmatpush1.bf16.msra.mxu0 %v1770
  %2813 = vmatprep.subr.bf16.mxu0 0
  %2814 = vmatpush1.bf16.msra.mxu0 %v1769
  %2815 = vmatprep.subr.bf16.mxu0 0
  %2816 = vmatpush1.bf16.msra.mxu0 %v1768
  %2817 = vmatprep.subr.bf16.mxu0 0
  %2818 = vmatpush1.bf16.msra.mxu0 %v1767
  %2819 = vmatprep.subr.bf16.mxu0 0
  %2820 = vmatpush1.bf16.msra.mxu0 %v1766
  %2821 = vmatprep.subr.bf16.mxu0 0
  %2822 = vmatpush2.bf16.msra.mxu0 0
  %2823 = vmatprep.subr.bf16.mxu0 0
  %2824 = vmatpush2.bf16.msra.mxu0 0
  %2825 = vmatprep.subr.bf16.mxu0 0
  %2826 = vmatpush2.bf16.msra.mxu0 0
  %2827 = vmatprep.subr.bf16.mxu0 0
  %2828 = vmatpush2.bf16.msra.mxu0 0
  %2829 = vmatprep.subr.bf16.mxu0 0
  %2830 = vmatpush2.bf16.msra.mxu0 0
  %2831 = vmatprep.subr.bf16.mxu0 0
  %2832 = vmatpush2.bf16.msra.mxu0 0
  %2833 = vmatprep.subr.bf16.mxu0 0
  %2834 = vmatpush2.bf16.msra.mxu0 0
  %2835 = vmatprep.subr.bf16.mxu0 0
  %2836 = vmatpush2.bf16.msra.mxu0 0
  %2837 = vmatprep.mubr.bf16.mxu0 0
  %2838 = vmatmul.mubr.bf16.gmra.mxu0 %v2803
  %v2839 = vpop.f32.mrf.mxu0
  %v2840 = vadd.f32 0.0, %v2839
  %v2841 = vpop.f32.mrf.mxu0
  %v2842 = vpop.f32.mrf.mxu0
  %v2843 = vadd.f32 0.0, %v2842
  %v2844 = vpop.f32.mrf.mxu0
  %2845 = vdwg.mxu0
  %2847 = vmatprep.subr.bf16.mxu0 0
  %2848 = vmatpush1.bf16.msra.mxu0 %v1862
  %2849 = vmatprep.subr.bf16.mxu0 0
  %2850 = vmatpush1.bf16.msra.mxu0 %v1861
  %2851 = vmatprep.subr.bf16.mxu0 0
  %2852 = vmatpush1.bf16.msra.mxu0 %v1860
  %2853 = vmatprep.subr.bf16.mxu0 0
  %2854 = vmatpush1.bf16.msra.mxu0 %v1859
  %2855 = vmatprep.subr.bf16.mxu0 0
  %2856 = vmatpush1.bf16.msra.mxu0 %v1858
  %2857 = vmatprep.subr.bf16.mxu0 0
  %2858 = vmatpush1.bf16.msra.mxu0 %v1857
  %2859 = vmatprep.subr.bf16.mxu0 0
  %2860 = vmatpush1.bf16.msra.mxu0 %v1856
  %2861 = vmatprep.subr.bf16.mxu0 0
  %2862 = vmatpush1.bf16.msra.mxu0 %v1855
  %2863 = vmatprep.subr.bf16.mxu0 0
  %2864 = vmatpush2.bf16.msra.mxu0 0
  %2865 = vmatprep.subr.bf16.mxu0 0
  %2866 = vmatpush2.bf16.msra.mxu0 0
  %2867 = vmatprep.subr.bf16.mxu0 0
  %2868 = vmatpush2.bf16.msra.mxu0 0
  %2869 = vmatprep.subr.bf16.mxu0 0
  %2870 = vmatpush2.bf16.msra.mxu0 0
  %2871 = vmatprep.subr.bf16.mxu0 0
  %2872 = vmatpush2.bf16.msra.mxu0 0
  %2873 = vmatprep.subr.bf16.mxu0 0
  %2874 = vmatpush2.bf16.msra.mxu0 0
  %2875 = vmatprep.subr.bf16.mxu0 0
  %2876 = vmatpush2.bf16.msra.mxu0 0
  %2877 = vmatprep.subr.bf16.mxu0 0
  %2878 = vmatpush2.bf16.msra.mxu0 0
  %2879 = vmatprep.mubr.bf16.mxu0 0
  %2880 = vmatmul.mubr.bf16.gmra.mxu0 %v2795
  %v2881 = vpop.f32.mrf.mxu0
  %v2882 = vadd.f32 %v2840, %v2881
  %v2883 = vpop.f32.mrf.mxu0
  %v2884 = vpop.f32.mrf.mxu0
  %v2885 = vadd.f32 %v2843, %v2884
  %v2886 = vpop.f32.mrf.mxu0
  %2887 = vdwg.mxu0
  %2888 = vrot.lane.b32.xlu0 %v2795, 112
  %v2889 = vpop.permute.xlu0 %2888
  %2890 = vrot.lane.b32.xlu0 %v2798, 112
  %v2891 = vpop.permute.xlu0 %2890
  %v2892 = vsel %vm1933, %v2889, %v2891
  %2894 = vmatprep.subr.bf16.mxu0 0
  %2895 = vmatpush1.bf16.msra.mxu0 %v1975
  %2896 = vmatprep.subr.bf16.mxu0 0
  %2897 = vmatpush1.bf16.msra.mxu0 %v1974
  %2898 = vmatprep.subr.bf16.mxu0 0
  %2899 = vmatpush1.bf16.msra.mxu0 %v1973
  %2900 = vmatprep.subr.bf16.mxu0 0
  %2901 = vmatpush1.bf16.msra.mxu0 %v1972
  %2902 = vmatprep.subr.bf16.mxu0 0
  %2903 = vmatpush1.bf16.msra.mxu0 %v1971
  %2904 = vmatprep.subr.bf16.mxu0 0
  %2905 = vmatpush1.bf16.msra.mxu0 %v1970
  %2906 = vmatprep.subr.bf16.mxu0 0
  %2907 = vmatpush1.bf16.msra.mxu0 %v1969
  %2908 = vmatprep.subr.bf16.mxu0 0
  %2909 = vmatpush1.bf16.msra.mxu0 %v1968
  %2910 = vmatprep.subr.bf16.mxu0 0
  %2911 = vmatpush2.bf16.msra.mxu0 0
  %2912 = vmatprep.subr.bf16.mxu0 0
  %2913 = vmatpush2.bf16.msra.mxu0 0
  %2914 = vmatprep.subr.bf16.mxu0 0
  %2915 = vmatpush2.bf16.msra.mxu0 0
  %2916 = vmatprep.subr.bf16.mxu0 0
  %2917 = vmatpush2.bf16.msra.mxu0 0
  %2918 = vmatprep.subr.bf16.mxu0 0
  %2919 = vmatpush2.bf16.msra.mxu0 0
  %2920 = vmatprep.subr.bf16.mxu0 0
  %2921 = vmatpush2.bf16.msra.mxu0 0
  %2922 = vmatprep.subr.bf16.mxu0 0
  %2923 = vmatpush2.bf16.msra.mxu0 0
  %2924 = vmatprep.subr.bf16.mxu0 0
  %2925 = vmatpush2.bf16.msra.mxu0 0
  %2926 = vmatprep.mubr.bf16.mxu0 0
  %2927 = vmatmul.mubr.bf16.gmra.mxu0 %v2892
  %v2928 = vpop.f32.mrf.mxu0
  %v2929 = vadd.f32 0.0, %v2928
  %v2930 = vpop.f32.mrf.mxu0
  %v2931 = vpop.f32.mrf.mxu0
  %v2932 = vadd.f32 0.0, %v2931
  %v2933 = vpop.f32.mrf.mxu0
  %2934 = vdwg.mxu0
  %v2935 = vadd.f32 %v2882, %v2929
  %v2936 = vadd.f32 %v2885, %v2932
  %v2937 = vld [vmem:[#allocation2 + $0x20] sm:$0xf8]
  %v2938 = vld [vmem:[#allocation2 + $0x40] sm:$0x7]
  %v2939 = vpack.c.bf16 %v2780, %v2937
  %v2940 = vpack.c.bf16 %v2938, %v2938
  %v2942 = vshrl.u32 %v2939, 16
  %v2944 = vrot.slane %v2942, 1
  %v2945 = vshll.u32 %v2939, 16
  %v2947 = vrot.slane %v2945, 2
  %v2948 = vor.u32 %v2944, %v2947
  %v2950 = vshrl.u32 %v2940, 16
  %v2952 = vrot.slane %v2950, 1
  %v2953 = vshll.u32 %v2940, 16
  %v2955 = vrot.slane %v2953, 2
  %v2956 = vor.u32 %v2952, %v2955
  %v2957 = vsel %vm985, %v2948, %v2956
  %2959 = vmatprep.subr.bf16.mxu0 0
  %2960 = vmatpush1.bf16.msra.mxu0 %v2101
  %2961 = vmatprep.subr.bf16.mxu0 0
  %2962 = vmatpush1.bf16.msra.mxu0 %v2100
  %2963 = vmatprep.subr.bf16.mxu0 0
  %2964 = vmatpush1.bf16.msra.mxu0 %v2099
  %2965 = vmatprep.subr.bf16.mxu0 0
  %2966 = vmatpush1.bf16.msra.mxu0 %v2098
  %2967 = vmatprep.subr.bf16.mxu0 0
  %2968 = vmatpush1.bf16.msra.mxu0 %v2097
  %2969 = vmatprep.subr.bf16.mxu0 0
  %2970 = vmatpush1.bf16.msra.mxu0 %v2096
  %2971 = vmatprep.subr.bf16.mxu0 0
  %2972 = vmatpush1.bf16.msra.mxu0 %v2095
  %2973 = vmatprep.subr.bf16.mxu0 0
  %2974 = vmatpush1.bf16.msra.mxu0 %v2094
  %2975 = vmatprep.subr.bf16.mxu0 0
  %2976 = vmatpush2.bf16.msra.mxu0 0
  %2977 = vmatprep.subr.bf16.mxu0 0
  %2978 = vmatpush2.bf16.msra.mxu0 0
  %2979 = vmatprep.subr.bf16.mxu0 0
  %2980 = vmatpush2.bf16.msra.mxu0 0
  %2981 = vmatprep.subr.bf16.mxu0 0
  %2982 = vmatpush2.bf16.msra.mxu0 0
  %2983 = vmatprep.subr.bf16.mxu0 0
  %2984 = vmatpush2.bf16.msra.mxu0 0
  %2985 = vmatprep.subr.bf16.mxu0 0
  %2986 = vmatpush2.bf16.msra.mxu0 0
  %2987 = vmatprep.subr.bf16.mxu0 0
  %2988 = vmatpush2.bf16.msra.mxu0 0
  %2989 = vmatprep.subr.bf16.mxu0 0
  %2990 = vmatpush2.bf16.msra.mxu0 0
  %2991 = vmatprep.mubr.bf16.mxu0 0
  %2992 = vmatmul.mubr.bf16.gmra.mxu0 %v2957
  %v2993 = vpop.f32.mrf.mxu0
  %v2994 = vadd.f32 0.0, %v2993
  %v2995 = vpop.f32.mrf.mxu0
  %v2996 = vpop.f32.mrf.mxu0
  %v2997 = vadd.f32 0.0, %v2996
  %v2998 = vpop.f32.mrf.mxu0
  %2999 = vdwg.mxu0
  %v3000 = vadd.f32 %v2935, %v2994
  %v3001 = vadd.f32 %v2936, %v2997
  %v3002 = vld [vmem:[#allocation2 + $0x20] sm:$0xf8]
  %v3003 = vld [vmem:[#allocation2 + $0x28] sm:$0xf8]
  %v3004 = vld [vmem:[#allocation2 + $0x40] sm:$0x7]
  %v3005 = vld [vmem:[#allocation2 + $0x48] sm:$0x7]
  %v3006 = vpack.c.bf16 %v2780, %v3002
  %v3007 = vpack.c.bf16 %v2785, %v3003
  %v3008 = vpack.c.bf16 %v3004, %v3004
  %v3009 = vpack.c.bf16 %v3005, %v3005
  %v3011 = vshrl.u32 %v3006, 16
  %v3013 = vrot.slane %v3011, 1
  %v3014 = vshll.u32 %v3006, 16
  %v3016 = vrot.slane %v3014, 2
  %v3017 = vor.u32 %v3013, %v3016
  %v3019 = vshrl.u32 %v3008, 16
  %v3021 = vrot.slane %v3019, 1
  %v3022 = vshll.u32 %v3008, 16
  %v3024 = vrot.slane %v3022, 2
  %v3025 = vor.u32 %v3021, %v3024
  %v3026 = vsel %vm985, %v3017, %v3025
  %v3028 = vshrl.u32 %v3007, 16
  %v3030 = vrot.slane %v3028, 1
  %v3031 = vshll.u32 %v3007, 16
  %v3033 = vrot.slane %v3031, 2
  %v3034 = vor.u32 %v3030, %v3033
  %v3036 = vshrl.u32 %v3009, 16
  %v3038 = vrot.slane %v3036, 1
  %v3039 = vshll.u32 %v3009, 16
  %v3041 = vrot.slane %v3039, 2
  %v3042 = vor.u32 %v3038, %v3041
  %v3043 = vsel %vm985, %v3034, %v3042
  %3044 = vrot.lane.b32.xlu0 %v3026, 120
  %v3045 = vpop.permute.xlu0 %3044
  %3046 = vrot.lane.b32.xlu0 %v3043, 120
  %v3047 = vpop.permute.xlu0 %3046
  %v3048 = vsel %vm1731, %v3045, %v3047
  %3050 = vmatprep.subr.bf16.mxu0 0
  %3051 = vmatpush1.bf16.msra.mxu0 %v2249
  %3052 = vmatprep.subr.bf16.mxu0 0
  %3053 = vmatpush1.bf16.msra.mxu0 %v2248
  %3054 = vmatprep.subr.bf16.mxu0 0
  %3055 = vmatpush1.bf16.msra.mxu0 %v2247
  %3056 = vmatprep.subr.bf16.mxu0 0
  %3057 = vmatpush1.bf16.msra.mxu0 %v2246
  %3058 = vmatprep.subr.bf16.mxu0 0
  %3059 = vmatpush1.bf16.msra.mxu0 %v2245
  %3060 = vmatprep.subr.bf16.mxu0 0
  %3061 = vmatpush1.bf16.msra.mxu0 %v2244
  %3062 = vmatprep.subr.bf16.mxu0 0
  %3063 = vmatpush1.bf16.msra.mxu0 %v2243
  %3064 = vmatprep.subr.bf16.mxu0 0
  %3065 = vmatpush1.bf16.msra.mxu0 %v2242
  %3066 = vmatprep.subr.bf16.mxu0 0
  %3067 = vmatpush2.bf16.msra.mxu0 0
  %3068 = vmatprep.subr.bf16.mxu0 0
  %3069 = vmatpush2.bf16.msra.mxu0 0
  %3070 = vmatprep.subr.bf16.mxu0 0
  %3071 = vmatpush2.bf16.msra.mxu0 0
  %3072 = vmatprep.subr.bf16.mxu0 0
  %3073 = vmatpush2.bf16.msra.mxu0 0
  %3074 = vmatprep.subr.bf16.mxu0 0
  %3075 = vmatpush2.bf16.msra.mxu0 0
  %3076 = vmatprep.subr.bf16.mxu0 0
  %3077 = vmatpush2.bf16.msra.mxu0 0
  %3078 = vmatprep.subr.bf16.mxu0 0
  %3079 = vmatpush2.bf16.msra.mxu0 0
  %3080 = vmatprep.subr.bf16.mxu0 0
  %3081 = vmatpush2.bf16.msra.mxu0 0
  %3082 = vmatprep.mubr.bf16.mxu0 0
  %3083 = vmatmul.mubr.bf16.gmra.mxu0 %v3048
  %v3084 = vpop.f32.mrf.mxu0
  %v3085 = vadd.f32 0.0, %v3084
  %v3086 = vpop.f32.mrf.mxu0
  %v3087 = vpop.f32.mrf.mxu0
  %v3088 = vadd.f32 0.0, %v3087
  %v3089 = vpop.f32.mrf.mxu0
  %3090 = vdwg.mxu0
  %v3091 = vadd.f32 %v3000, %v3085
  %v3092 = vadd.f32 %v3001, %v3088
  %3093 = vrot.lane.b32.xlu0 %v3026, 112
  %v3094 = vpop.permute.xlu0 %3093
  %3095 = vrot.lane.b32.xlu0 %v3043, 112
  %v3096 = vpop.permute.xlu0 %3095
  %v3097 = vsel %vm1933, %v3094, %v3096
  %3099 = vmatprep.subr.bf16.mxu0 0
  %3100 = vmatpush1.bf16.msra.mxu0 %v2363
  %3101 = vmatprep.subr.bf16.mxu0 0
  %3102 = vmatpush1.bf16.msra.mxu0 %v2362
  %3103 = vmatprep.subr.bf16.mxu0 0
  %3104 = vmatpush1.bf16.msra.mxu0 %v2361
  %3105 = vmatprep.subr.bf16.mxu0 0
  %3106 = vmatpush1.bf16.msra.mxu0 %v2360
  %3107 = vmatprep.subr.bf16.mxu0 0
  %3108 = vmatpush1.bf16.msra.mxu0 %v2359
  %3109 = vmatprep.subr.bf16.mxu0 0
  %3110 = vmatpush1.bf16.msra.mxu0 %v2358
  %3111 = vmatprep.subr.bf16.mxu0 0
  %3112 = vmatpush1.bf16.msra.mxu0 %v2357
  %3113 = vmatprep.subr.bf16.mxu0 0
  %3114 = vmatpush1.bf16.msra.mxu0 %v2356
  %3115 = vmatprep.subr.bf16.mxu0 0
  %3116 = vmatpush2.bf16.msra.mxu0 0
  %3117 = vmatprep.subr.bf16.mxu0 0
  %3118 = vmatpush2.bf16.msra.mxu0 0
  %3119 = vmatprep.subr.bf16.mxu0 0
  %3120 = vmatpush2.bf16.msra.mxu0 0
  %3121 = vmatprep.subr.bf16.mxu0 0
  %3122 = vmatpush2.bf16.msra.mxu0 0
  %3123 = vmatprep.subr.bf16.mxu0 0
  %3124 = vmatpush2.bf16.msra.mxu0 0
  %3125 = vmatprep.subr.bf16.mxu0 0
  %3126 = vmatpush2.bf16.msra.mxu0 0
  %3127 = vmatprep.subr.bf16.mxu0 0
  %3128 = vmatpush2.bf16.msra.mxu0 0
  %3129 = vmatprep.subr.bf16.mxu0 0
  %3130 = vmatpush2.bf16.msra.mxu0 0
  %3131 = vmatprep.mubr.bf16.mxu0 0
  %3132 = vmatmul.mubr.bf16.gmra.mxu0 %v3097
  %v3133 = vpop.f32.mrf.mxu0
  %v3134 = vadd.f32 0.0, %v3133
  %v3135 = vpop.f32.mrf.mxu0
  %v3136 = vpop.f32.mrf.mxu0
  %v3137 = vadd.f32 0.0, %v3136
  %v3138 = vpop.f32.mrf.mxu0
  %3139 = vdwg.mxu0
  %v3140 = vadd.f32 %v3091, %v3134
  %v3141 = vadd.f32 %v3092, %v3137
  %v3142 = vld [vmem:[#allocation2 + $0x20] sm:$0xf0]
  %v3143 = vld [vmem:[#allocation2 + $0x40] sm:$0xf]
  %v3144 = vpack.c.bf16 %v2780, %v3142
  %v3145 = vpack.c.bf16 %v3143, %v3143
  %v3148 = vrot.slane %v3144, 2
  %v3149 = vrot.slane %v3145, 2
  %v3150 = vsel %vm1149, %v3148, %v3149
  %3152 = vmatprep.subr.bf16.mxu0 0
  %3153 = vmatpush1.bf16.msra.mxu0 %v2481
  %3154 = vmatprep.subr.bf16.mxu0 0
  %3155 = vmatpush1.bf16.msra.mxu0 %v2480
  %3156 = vmatprep.subr.bf16.mxu0 0
  %3157 = vmatpush1.bf16.msra.mxu0 %v2479
  %3158 = vmatprep.subr.bf16.mxu0 0
  %3159 = vmatpush1.bf16.msra.mxu0 %v2478
  %3160 = vmatprep.subr.bf16.mxu0 0
  %3161 = vmatpush1.bf16.msra.mxu0 %v2477
  %3162 = vmatprep.subr.bf16.mxu0 0
  %3163 = vmatpush1.bf16.msra.mxu0 %v2476
  %3164 = vmatprep.subr.bf16.mxu0 0
  %3165 = vmatpush1.bf16.msra.mxu0 %v2475
  %3166 = vmatprep.subr.bf16.mxu0 0
  %3167 = vmatpush1.bf16.msra.mxu0 %v2474
  %3168 = vmatprep.subr.bf16.mxu0 0
  %3169 = vmatpush2.bf16.msra.mxu0 0
  %3170 = vmatprep.subr.bf16.mxu0 0
  %3171 = vmatpush2.bf16.msra.mxu0 0
  %3172 = vmatprep.subr.bf16.mxu0 0
  %3173 = vmatpush2.bf16.msra.mxu0 0
  %3174 = vmatprep.subr.bf16.mxu0 0
  %3175 = vmatpush2.bf16.msra.mxu0 0
  %3176 = vmatprep.subr.bf16.mxu0 0
  %3177 = vmatpush2.bf16.msra.mxu0 0
  %3178 = vmatprep.subr.bf16.mxu0 0
  %3179 = vmatpush2.bf16.msra.mxu0 0
  %3180 = vmatprep.subr.bf16.mxu0 0
  %3181 = vmatpush2.bf16.msra.mxu0 0
  %3182 = vmatprep.subr.bf16.mxu0 0
  %3183 = vmatpush2.bf16.msra.mxu0 0
  %3184 = vmatprep.mubr.bf16.mxu0 0
  %3185 = vmatmul.mubr.bf16.gmra.mxu0 %v3150
  %v3186 = vpop.f32.mrf.mxu0
  %v3187 = vadd.f32 0.0, %v3186
  %v3188 = vpop.f32.mrf.mxu0
  %v3189 = vpop.f32.mrf.mxu0
  %v3190 = vadd.f32 0.0, %v3189
  %v3191 = vpop.f32.mrf.mxu0
  %3192 = vdwg.mxu0
  %v3193 = vadd.f32 %v3140, %v3187
  %v3194 = vadd.f32 %v3141, %v3190
  %v3195 = vld [vmem:[#allocation2 + $0x20] sm:$0xf0]
  %v3196 = vld [vmem:[#allocation2 + $0x28] sm:$0xf0]
  %v3197 = vld [vmem:[#allocation2 + $0x40] sm:$0xf]
  %v3198 = vld [vmem:[#allocation2 + $0x48] sm:$0xf]
  %v3199 = vpack.c.bf16 %v2780, %v3195
  %v3200 = vpack.c.bf16 %v2785, %v3196
  %v3201 = vpack.c.bf16 %v3197, %v3197
  %v3202 = vpack.c.bf16 %v3198, %v3198
  %v3207 = vrot.slane %v3199, 2
  %v3208 = vrot.slane %v3201, 2
  %v3209 = vsel %vm1149, %v3207, %v3208
  %v3210 = vrot.slane %v3200, 2
  %v3211 = vrot.slane %v3202, 2
  %v3212 = vsel %vm1149, %v3210, %v3211
  %3213 = vrot.lane.b32.xlu0 %v3209, 120
  %v3214 = vpop.permute.xlu0 %3213
  %3215 = vrot.lane.b32.xlu0 %v3212, 120
  %v3216 = vpop.permute.xlu0 %3215
  %v3217 = vsel %vm1731, %v3214, %v3216
  %3219 = vmatprep.subr.bf16.mxu0 0
  %3220 = vmatpush1.bf16.msra.mxu0 %v2613
  %3221 = vmatprep.subr.bf16.mxu0 0
  %3222 = vmatpush1.bf16.msra.mxu0 %v2612
  %3223 = vmatprep.subr.bf16.mxu0 0
  %3224 = vmatpush1.bf16.msra.mxu0 %v2611
  %3225 = vmatprep.subr.bf16.mxu0 0
  %3226 = vmatpush1.bf16.msra.mxu0 %v2610
  %3227 = vmatprep.subr.bf16.mxu0 0
  %3228 = vmatpush1.bf16.msra.mxu0 %v2609
  %3229 = vmatprep.subr.bf16.mxu0 0
  %3230 = vmatpush1.bf16.msra.mxu0 %v2608
  %3231 = vmatprep.subr.bf16.mxu0 0
  %3232 = vmatpush1.bf16.msra.mxu0 %v2607
  %3233 = vmatprep.subr.bf16.mxu0 0
  %3234 = vmatpush1.bf16.msra.mxu0 %v2606
  %3235 = vmatprep.subr.bf16.mxu0 0
  %3236 = vmatpush2.bf16.msra.mxu0 0
  %3237 = vmatprep.subr.bf16.mxu0 0
  %3238 = vmatpush2.bf16.msra.mxu0 0
  %3239 = vmatprep.subr.bf16.mxu0 0
  %3240 = vmatpush2.bf16.msra.mxu0 0
  %3241 = vmatprep.subr.bf16.mxu0 0
  %3242 = vmatpush2.bf16.msra.mxu0 0
  %3243 = vmatprep.subr.bf16.mxu0 0
  %3244 = vmatpush2.bf16.msra.mxu0 0
  %3245 = vmatprep.subr.bf16.mxu0 0
  %3246 = vmatpush2.bf16.msra.mxu0 0
  %3247 = vmatprep.subr.bf16.mxu0 0
  %3248 = vmatpush2.bf16.msra.mxu0 0
  %3249 = vmatprep.subr.bf16.mxu0 0
  %3250 = vmatpush2.bf16.msra.mxu0 0
  %3251 = vmatprep.mubr.bf16.mxu0 0
  %3252 = vmatmul.mubr.bf16.gmra.mxu0 %v3217
  %v3253 = vpop.f32.mrf.mxu0
  %v3254 = vadd.f32 0.0, %v3253
  %v3255 = vpop.f32.mrf.mxu0
  %v3256 = vpop.f32.mrf.mxu0
  %v3257 = vadd.f32 0.0, %v3256
  %v3258 = vpop.f32.mrf.mxu0
  %3259 = vdwg.mxu0
  %v3260 = vadd.f32 %v3193, %v3254
  %v3261 = vadd.f32 %v3194, %v3257
  %3262 = vrot.lane.b32.xlu0 %v3209, 112
  %v3263 = vpop.permute.xlu0 %3262
  %3264 = vrot.lane.b32.xlu0 %v3212, 112
  %v3265 = vpop.permute.xlu0 %3264
  %v3266 = vsel %vm1933, %v3263, %v3265
  %3268 = vmatprep.subr.bf16.mxu0 0
  %3269 = vmatpush1.bf16.msra.mxu0 %v2727
  %3270 = vmatprep.subr.bf16.mxu0 0
  %3271 = vmatpush1.bf16.msra.mxu0 %v2726
  %3272 = vmatprep.subr.bf16.mxu0 0
  %3273 = vmatpush1.bf16.msra.mxu0 %v2725
  %3274 = vmatprep.subr.bf16.mxu0 0
  %3275 = vmatpush1.bf16.msra.mxu0 %v2724
  %3276 = vmatprep.subr.bf16.mxu0 0
  %3277 = vmatpush1.bf16.msra.mxu0 %v2723
  %3278 = vmatprep.subr.bf16.mxu0 0
  %3279 = vmatpush1.bf16.msra.mxu0 %v2722
  %3280 = vmatprep.subr.bf16.mxu0 0
  %3281 = vmatpush1.bf16.msra.mxu0 %v2721
  %3282 = vmatprep.subr.bf16.mxu0 0
  %3283 = vmatpush1.bf16.msra.mxu0 %v2720
  %3284 = vmatprep.subr.bf16.mxu0 0
  %3285 = vmatpush2.bf16.msra.mxu0 0
  %3286 = vmatprep.subr.bf16.mxu0 0
  %3287 = vmatpush2.bf16.msra.mxu0 0
  %3288 = vmatprep.subr.bf16.mxu0 0
  %3289 = vmatpush2.bf16.msra.mxu0 0
  %3290 = vmatprep.subr.bf16.mxu0 0
  %3291 = vmatpush2.bf16.msra.mxu0 0
  %3292 = vmatprep.subr.bf16.mxu0 0
  %3293 = vmatpush2.bf16.msra.mxu0 0
  %3294 = vmatprep.subr.bf16.mxu0 0
  %3295 = vmatpush2.bf16.msra.mxu0 0
  %3296 = vmatprep.subr.bf16.mxu0 0
  %3297 = vmatpush2.bf16.msra.mxu0 0
  %3298 = vmatprep.subr.bf16.mxu0 0
  %3299 = vmatpush2.bf16.msra.mxu0 0
  %3300 = vmatprep.mubr.bf16.mxu0 0
  %3301 = vmatmul.mubr.bf16.gmra.mxu0 %v3266
  %v3302 = vpop.f32.mrf.mxu0
  %v3303 = vadd.f32 0.0, %v3302
  %v3304 = vpop.f32.mrf.mxu0
  %v3305 = vpop.f32.mrf.mxu0
  %v3306 = vadd.f32 0.0, %v3305
  %v3307 = vpop.f32.mrf.mxu0
  %3308 = vdwg.mxu0
  %v3309 = vadd.f32 %v3260, %v3303
  %v3310 = vadd.f32 %v3261, %v3306
  %v3311 = vadd.f32 %v2777, %v2778
  %v3312 = vadd.f32 %v3311, %v3309
  %v3313 = vadd.f32 %v3312, %v3310
  %v3314 = vrot.slane %v3313, 4
  %v3315 = vadd.f32 %v3313, %v3314
  %v3316 = vrot.slane %v3315, 2
  %v3317 = vadd.f32 %v3315, %v3316
  %v3318 = vrot.slane %v3317, 1
  %v3319 = vadd.f32 %v3317, %v3318
  %3320 = vmatprep.subr.mxu0 0.0
  %3321 = vmatpush1.msra.mxu0 %v57
  %3322 = vmatprep.subr.mxu0 0.0
  %3323 = vmatpush1.msra.mxu0 %v56
  %3324 = vmatprep.subr.mxu0 0.0
  %3325 = vmatpush1.msra.mxu0 %v55
  %3326 = vmatprep.subr.mxu0 0.0
  %3327 = vmatpush1.msra.mxu0 %v54
  %3328 = vmatprep.subr.mxu0 0.0
  %3329 = vmatpush1.msra.mxu0 %v53
  %3330 = vmatprep.subr.mxu0 0.0
  %3331 = vmatpush1.msra.mxu0 %v52
  %3332 = vmatprep.subr.mxu0 0.0
  %3333 = vmatpush1.msra.mxu0 %v51
  %3334 = vmatprep.subr.mxu0 0.0
  %3335 = vmatpush1.msra.mxu0 %v50
  %3336 = vmatprep.subr.mxu0 0.0
  %3337 = vmatpush1.msra.mxu0 %v49
  %3338 = vmatprep.subr.mxu0 0.0
  %3339 = vmatpush1.msra.mxu0 %v48
  %3340 = vmatprep.subr.mxu0 0.0
  %3341 = vmatpush1.msra.mxu0 %v47
  %3342 = vmatprep.subr.mxu0 0.0
  %3343 = vmatpush1.msra.mxu0 %v46
  %3344 = vmatprep.subr.mxu0 0.0
  %3345 = vmatpush1.msra.mxu0 %v45
  %3346 = vmatprep.subr.mxu0 0.0
  %3347 = vmatpush1.msra.mxu0 %v44
  %3348 = vmatprep.subr.mxu0 0.0
  %3349 = vmatpush1.msra.mxu0 %v43
  %3350 = vmatprep.subr.mxu0 0.0
  %3351 = vmatpush1.msra.mxu0 %v42
  %3352 = vmatprep.subr.mxu0 0.0
  %3353 = vmatpush2.msra.mxu0 0.0
  %3354 = vmatprep.subr.mxu0 0.0
  %3355 = vmatpush2.msra.mxu0 0.0
  %3356 = vmatprep.subr.mxu0 0.0
  %3357 = vmatpush2.msra.mxu0 0.0
  %3358 = vmatprep.subr.mxu0 0.0
  %3359 = vmatpush2.msra.mxu0 0.0
  %3360 = vmatprep.subr.mxu0 0.0
  %3361 = vmatpush2.msra.mxu0 0.0
  %3362 = vmatprep.subr.mxu0 0.0
  %3363 = vmatpush2.msra.mxu0 0.0
  %3364 = vmatprep.subr.mxu0 0.0
  %3365 = vmatpush2.msra.mxu0 0.0
  %3366 = vmatprep.subr.mxu0 0.0
  %3367 = vmatpush2.msra.mxu0 0.0
  %3368 = vmatprep.subr.mxu0 0.0
  %3369 = vmatpush2.msra.mxu0 0.0
  %3370 = vmatprep.subr.mxu0 0.0
  %3371 = vmatpush2.msra.mxu0 0.0
  %3372 = vmatprep.subr.mxu0 0.0
  %3373 = vmatpush2.msra.mxu0 0.0
  %3374 = vmatprep.subr.mxu0 0.0
  %3375 = vmatpush2.msra.mxu0 0.0
  %3376 = vmatprep.subr.mxu0 0.0
  %3377 = vmatpush2.msra.mxu0 0.0
  %3378 = vmatprep.subr.mxu0 0.0
  %3379 = vmatpush2.msra.mxu0 0.0
  %3380 = vmatprep.subr.mxu0 0.0
  %3381 = vmatpush2.msra.mxu0 0.0
  %3382 = vmatprep.subr.mxu0 0.0
  %3383 = vmatpush2.msra.mxu0 0.0
  %3384 = vmatprep.mubr.f32.mxu0 0.0
  %3385 = vmatmul.mubr.f32.gmra.mxu0 %v3319
  %v3386 = vpop.f32.mrf.mxu0
  %v3387 = vadd.f32 0.0, %v3386
  %v3388 = vpop.f32.mrf.mxu0
  %3389 = vdwg.mxu0
  %v3390 = vmul.f32 %v2777, %v2777
  %v3391 = vmul.f32 %v2778, %v2778
  %v3392 = vmul.f32 %v3309, %v3309
  %v3393 = vmul.f32 %v3310, %v3310
  %v3394 = vadd.f32 %v3390, %v3391
  %v3395 = vadd.f32 %v3394, %v3392
  %v3396 = vadd.f32 %v3395, %v3393
  %v3397 = vrot.slane %v3396, 4
  %v3398 = vadd.f32 %v3396, %v3397
  %v3399 = vrot.slane %v3398, 2
  %v3400 = vadd.f32 %v3398, %v3399
  %v3401 = vrot.slane %v3400, 1
  %v3402 = vadd.f32 %v3400, %v3401
  %3403 = vmatprep.subr.mxu0 0.0
  %3404 = vmatpush1.msra.mxu0 %v57
  %3405 = vmatprep.subr.mxu0 0.0
  %3406 = vmatpush1.msra.mxu0 %v56
  %3407 = vmatprep.subr.mxu0 0.0
  %3408 = vmatpush1.msra.mxu0 %v55
  %3409 = vmatprep.subr.mxu0 0.0
  %3410 = vmatpush1.msra.mxu0 %v54
  %3411 = vmatprep.subr.mxu0 0.0
  %3412 = vmatpush1.msra.mxu0 %v53
  %3413 = vmatprep.subr.mxu0 0.0
  %3414 = vmatpush1.msra.mxu0 %v52
  %3415 = vmatprep.subr.mxu0 0.0
  %3416 = vmatpush1.msra.mxu0 %v51
  %3417 = vmatprep.subr.mxu0 0.0
  %3418 = vmatpush1.msra.mxu0 %v50
  %3419 = vmatprep.subr.mxu0 0.0
  %3420 = vmatpush1.msra.mxu0 %v49
  %3421 = vmatprep.subr.mxu0 0.0
  %3422 = vmatpush1.msra.mxu0 %v48
  %3423 = vmatprep.subr.mxu0 0.0
  %3424 = vmatpush1.msra.mxu0 %v47
  %3425 = vmatprep.subr.mxu0 0.0
  %3426 = vmatpush1.msra.mxu0 %v46
  %3427 = vmatprep.subr.mxu0 0.0
  %3428 = vmatpush1.msra.mxu0 %v45
  %3429 = vmatprep.subr.mxu0 0.0
  %3430 = vmatpush1.msra.mxu0 %v44
  %3431 = vmatprep.subr.mxu0 0.0
  %3432 = vmatpush1.msra.mxu0 %v43
  %3433 = vmatprep.subr.mxu0 0.0
  %3434 = vmatpush1.msra.mxu0 %v42
  %3435 = vmatprep.subr.mxu0 0.0
  %3436 = vmatpush2.msra.mxu0 0.0
  %3437 = vmatprep.subr.mxu0 0.0
  %3438 = vmatpush2.msra.mxu0 0.0
  %3439 = vmatprep.subr.mxu0 0.0
  %3440 = vmatpush2.msra.mxu0 0.0
  %3441 = vmatprep.subr.mxu0 0.0
  %3442 = vmatpush2.msra.mxu0 0.0
  %3443 = vmatprep.subr.mxu0 0.0
  %3444 = vmatpush2.msra.mxu0 0.0
  %3445 = vmatprep.subr.mxu0 0.0
  %3446 = vmatpush2.msra.mxu0 0.0
  %3447 = vmatprep.subr.mxu0 0.0
  %3448 = vmatpush2.msra.mxu0 0.0
  %3449 = vmatprep.subr.mxu0 0.0
  %3450 = vmatpush2.msra.mxu0 0.0
  %3451 = vmatprep.subr.mxu0 0.0
  %3452 = vmatpush2.msra.mxu0 0.0
  %3453 = vmatprep.subr.mxu0 0.0
  %3454 = vmatpush2.msra.mxu0 0.0
  %3455 = vmatprep.subr.mxu0 0.0
  %3456 = vmatpush2.msra.mxu0 0.0
  %3457 = vmatprep.subr.mxu0 0.0
  %3458 = vmatpush2.msra.mxu0 0.0
  %3459 = vmatprep.subr.mxu0 0.0
  %3460 = vmatpush2.msra.mxu0 0.0
  %3461 = vmatprep.subr.mxu0 0.0
  %3462 = vmatpush2.msra.mxu0 0.0
  %3463 = vmatprep.subr.mxu0 0.0
  %3464 = vmatpush2.msra.mxu0 0.0
  %3465 = vmatprep.subr.mxu0 0.0
  %3466 = vmatpush2.msra.mxu0 0.0
  %3467 = vmatprep.mubr.f32.mxu0 0.0
  %3468 = vmatmul.mubr.f32.gmra.mxu0 %v3402
  %v3469 = vpop.f32.mrf.mxu0
  %v3470 = vadd.f32 0.0, %v3469
  %v3471 = vpop.f32.mrf.mxu0
  %3472 = vdwg.mxu0
  %v3473 = vmul.f32 %v3387, 0.001953125
  %v3474 = vmul.f32 %v3470, 0.001953125
  %v3475 = vmul.f32 %v3473, %v3473
  %v3476 = vsub.f32 %v3474, %v3475
  %v3477 = vld [vmem:[%s6] sm:$0x1]
  %v3478 = vadd.f32 %v3476, 1e-05
  %v3479 = vrsqrt.pop %v3478
  %v3480 = vmul.f32 %v3477, %v3479
  %v3481 = vld [vmem:[%s7] sm:$0x1]
  %v3482 = vmul.f32 %v3473, %v3480
  %v3483 = vsub.f32 %v3481, %v3482
  %v3485 = vsel %vm1468, %v3480, 0
  %3487 = vmatprep.subr.mxu0 0.0
  %3488 = vmatpush1.msra.mxu0 0.0
  %3489 = vmatprep.subr.mxu0 0.0
  %3490 = vmatpush1.msra.mxu0 0.0
  %3491 = vmatprep.subr.mxu0 0.0
  %3492 = vmatpush1.msra.mxu0 0.0
  %3493 = vmatprep.subr.mxu0 0.0
  %3494 = vmatpush1.msra.mxu0 0.0
  %3495 = vmatprep.subr.mxu0 0.0
  %3496 = vmatpush1.msra.mxu0 0.0
  %3497 = vmatprep.subr.mxu0 0.0
  %3498 = vmatpush1.msra.mxu0 0.0
  %3499 = vmatprep.subr.mxu0 0.0
  %3500 = vmatpush1.msra.mxu0 0.0
  %3501 = vmatprep.subr.mxu0 0.0
  %3502 = vmatpush1.msra.mxu0 0.0
  %3503 = vmatprep.subr.mxu0 0.0
  %3504 = vmatpush1.msra.mxu0 0.0
  %3505 = vmatprep.subr.mxu0 0.0
  %3506 = vmatpush1.msra.mxu0 0.0
  %3507 = vmatprep.subr.mxu0 0.0
  %3508 = vmatpush1.msra.mxu0 0.0
  %3509 = vmatprep.subr.mxu0 0.0
  %3510 = vmatpush1.msra.mxu0 0.0
  %3511 = vmatprep.subr.mxu0 0.0
  %3512 = vmatpush1.msra.mxu0 0.0
  %3513 = vmatprep.subr.mxu0 0.0
  %3514 = vmatpush1.msra.mxu0 0.0
  %3515 = vmatprep.subr.mxu0 0.0
  %3516 = vmatpush1.msra.mxu0 0.0
  %3517 = vmatprep.subr.mxu0 0.0
  %3518 = vmatpush1.msra.mxu0 %v58
  %3519 = vmatprep.subr.mxu0 0.0
  %3520 = vmatpush2.msra.mxu0 0.0
  %3521 = vmatprep.subr.mxu0 0.0
  %3522 = vmatpush2.msra.mxu0 0.0
  %3523 = vmatprep.subr.mxu0 0.0
  %3524 = vmatpush2.msra.mxu0 0.0
  %3525 = vmatprep.subr.mxu0 0.0
  %3526 = vmatpush2.msra.mxu0 0.0
  %3527 = vmatprep.subr.mxu0 0.0
  %3528 = vmatpush2.msra.mxu0 0.0
  %3529 = vmatprep.subr.mxu0 0.0
  %3530 = vmatpush2.msra.mxu0 0.0
  %3531 = vmatprep.subr.mxu0 0.0
  %3532 = vmatpush2.msra.mxu0 0.0
  %3533 = vmatprep.subr.mxu0 0.0
  %3534 = vmatpush2.msra.mxu0 0.0
  %3535 = vmatprep.subr.mxu0 0.0
  %3536 = vmatpush2.msra.mxu0 0.0
  %3537 = vmatprep.subr.mxu0 0.0
  %3538 = vmatpush2.msra.mxu0 0.0
  %3539 = vmatprep.subr.mxu0 0.0
  %3540 = vmatpush2.msra.mxu0 0.0
  %3541 = vmatprep.subr.mxu0 0.0
  %3542 = vmatpush2.msra.mxu0 0.0
  %3543 = vmatprep.subr.mxu0 0.0
  %3544 = vmatpush2.msra.mxu0 0.0
  %3545 = vmatprep.subr.mxu0 0.0
  %3546 = vmatpush2.msra.mxu0 0.0
  %3547 = vmatprep.subr.mxu0 0.0
  %3548 = vmatpush2.msra.mxu0 0.0
  %3549 = vmatprep.subr.mxu0 0.0
  %3550 = vmatpush2.msra.mxu0 0.0
  %3551 = vmatprep.mubr.f32.mxu0 0.0
  %3552 = vmatmul.mubr.f32.gmra.mxu0 %v3485
  %v3553 = vpop.f32.mrf.mxu0
  %v3554 = vadd.f32 0.0, %v3553
  %v3555 = vpop.f32.mrf.mxu0
  %3556 = vdwg.mxu0
  %v3558 = vsel %vm1468, %v3483, 0
  %3560 = vmatprep.subr.mxu0 0.0
  %3561 = vmatpush1.msra.mxu0 0.0
  %3562 = vmatprep.subr.mxu0 0.0
  %3563 = vmatpush1.msra.mxu0 0.0
  %3564 = vmatprep.subr.mxu0 0.0
  %3565 = vmatpush1.msra.mxu0 0.0
  %3566 = vmatprep.subr.mxu0 0.0
  %3567 = vmatpush1.msra.mxu0 0.0
  %3568 = vmatprep.subr.mxu0 0.0
  %3569 = vmatpush1.msra.mxu0 0.0
  %3570 = vmatprep.subr.mxu0 0.0
  %3571 = vmatpush1.msra.mxu0 0.0
  %3572 = vmatprep.subr.mxu0 0.0
  %3573 = vmatpush1.msra.mxu0 0.0
  %3574 = vmatprep.subr.mxu0 0.0
  %3575 = vmatpush1.msra.mxu0 0.0
  %3576 = vmatprep.subr.mxu0 0.0
  %3577 = vmatpush1.msra.mxu0 0.0
  %3578 = vmatprep.subr.mxu0 0.0
  %3579 = vmatpush1.msra.mxu0 0.0
  %3580 = vmatprep.subr.mxu0 0.0
  %3581 = vmatpush1.msra.mxu0 0.0
  %3582 = vmatprep.subr.mxu0 0.0
  %3583 = vmatpush1.msra.mxu0 0.0
  %3584 = vmatprep.subr.mxu0 0.0
  %3585 = vmatpush1.msra.mxu0 0.0
  %3586 = vmatprep.subr.mxu0 0.0
  %3587 = vmatpush1.msra.mxu0 0.0
  %3588 = vmatprep.subr.mxu0 0.0
  %3589 = vmatpush1.msra.mxu0 0.0
  %3590 = vmatprep.subr.mxu0 0.0
  %3591 = vmatpush1.msra.mxu0 %v58
  %3592 = vmatprep.subr.mxu0 0.0
  %3593 = vmatpush2.msra.mxu0 0.0
  %3594 = vmatprep.subr.mxu0 0.0
  %3595 = vmatpush2.msra.mxu0 0.0
  %3596 = vmatprep.subr.mxu0 0.0
  %3597 = vmatpush2.msra.mxu0 0.0
  %3598 = vmatprep.subr.mxu0 0.0
  %3599 = vmatpush2.msra.mxu0 0.0
  %3600 = vmatprep.subr.mxu0 0.0
  %3601 = vmatpush2.msra.mxu0 0.0
  %3602 = vmatprep.subr.mxu0 0.0
  %3603 = vmatpush2.msra.mxu0 0.0
  %3604 = vmatprep.subr.mxu0 0.0
  %3605 = vmatpush2.msra.mxu0 0.0
  %3606 = vmatprep.subr.mxu0 0.0
  %3607 = vmatpush2.msra.mxu0 0.0
  %3608 = vmatprep.subr.mxu0 0.0
  %3609 = vmatpush2.msra.mxu0 0.0
  %3610 = vmatprep.subr.mxu0 0.0
  %3611 = vmatpush2.msra.mxu0 0.0
  %3612 = vmatprep.subr.mxu0 0.0
  %3613 = vmatpush2.msra.mxu0 0.0
  %3614 = vmatprep.subr.mxu0 0.0
  %3615 = vmatpush2.msra.mxu0 0.0
  %3616 = vmatprep.subr.mxu0 0.0
  %3617 = vmatpush2.msra.mxu0 0.0
  %3618 = vmatprep.subr.mxu0 0.0
  %3619 = vmatpush2.msra.mxu0 0.0
  %3620 = vmatprep.subr.mxu0 0.0
  %3621 = vmatpush2.msra.mxu0 0.0
  %3622 = vmatprep.subr.mxu0 0.0
  %3623 = vmatpush2.msra.mxu0 0.0
  %3624 = vmatprep.mubr.f32.mxu0 0.0
  %3625 = vmatmul.mubr.f32.gmra.mxu0 %v3558
  %v3626 = vpop.f32.mrf.mxu0
  %v3627 = vadd.f32 0.0, %v3626
  %v3628 = vpop.f32.mrf.mxu0
  %3629 = vdwg.mxu0
  %v3630 = vlaneseq
  %v3631 = vshrl.u32 %v3630, 7
  %v3632 = vsub.s32 0, %v3631
  %v3633 = vrot.slane %v3554, %v3632
  %v3634 = vmul.f32 %v2777, %v3633
  %v3635 = vmul.f32 %v2778, %v3633
  %v3636 = vmul.f32 %v3309, %v3633
  %v3637 = vmul.f32 %v3310, %v3633
  %v3638 = vlaneseq
  %v3639 = vshrl.u32 %v3638, 7
  %v3640 = vsub.s32 0, %v3639
  %v3641 = vrot.slane %v3627, %v3640
  %v3642 = vadd.f32 %v3634, %v3641
  %v3643 = vadd.f32 %v3635, %v3641
  %v3644 = vadd.f32 %v3636, %v3641
  %v3645 = vadd.f32 %v3637, %v3641
  %v3646 = vmax.f32 %v3642, 0.0
  %v3647 = vmax.f32 %v3643, 0.0
  %v3648 = vmax.f32 %v3644, 0.0
  %v3649 = vmax.f32 %v3645, 0.0
  %v3652 = vrot.slane %v3646, 7
  %v3653 = vrot.slane %v3647, 7
  %v3654 = vsel %vm1637, %v3652, %v3653
  %3655 = vrot.lane.b32.xlu0 %v3652, 8
  %v3656 = vpop.permute.xlu0 %3655
  %3657 = vrot.lane.b32.xlu0 %v3654, 8
  %v3658 = vpop.permute.xlu0 %3657
  %3659 = vrot.lane.b32.xlu0 %v3653, 8
  %v3660 = vpop.permute.xlu0 %3659
  %3664 = vst.msk [vmem:[#allocation2] sm:$0xfe] %vm1650, %v3656
  %3665 = vst.msk [vmem:[#allocation2 + $0x8] sm:$0xfe] %vm1652, %v3656
  %3666 = vst.msk [vmem:[#allocation2 + $0x10] sm:$0xff] %vm1654, %v3658
  %3667 = vst.msk [vmem:[#allocation2 + $0x18] sm:$0xff] %vm1468, %v3658
  %3668 = vst.msk [vmem:[#allocation2 + $0x20] sm:$0x1] %vm1657, %v3660
  %3669 = vst.msk [vmem:[#allocation2 + $0x28] sm:$0x1] %vm1659, %v3660
  %v3672 = vrot.slane %v3648, 5
  %v3673 = vrot.slane %v3649, 5
  %v3674 = vsel %vm1663, %v3672, %v3673
  %3675 = vrot.lane.b32.xlu0 %v3672, 8
  %v3676 = vpop.permute.xlu0 %3675
  %3677 = vrot.lane.b32.xlu0 %v3674, 8
  %v3678 = vpop.permute.xlu0 %3677
  %3679 = vrot.lane.b32.xlu0 %v3673, 8
  %v3680 = vpop.permute.xlu0 %3679
  %3684 = vst.msk [vmem:[#allocation2 + $0x20] sm:$0xf8] %vm1676, %v3676
  %3685 = vst.msk [vmem:[#allocation2 + $0x28] sm:$0xf8] %vm1678, %v3676
  %3686 = vst.msk [vmem:[#allocation2 + $0x30] sm:$0xff] %vm1654, %v3678
  %3687 = vst.msk [vmem:[#allocation2 + $0x38] sm:$0xff] %vm1468, %v3678
  %3688 = vst.msk [vmem:[#allocation2 + $0x40] sm:$0x7] %vm1682, %v3680
  %3689 = vst.msk [vmem:[#allocation2 + $0x48] sm:$0x7] %vm1684, %v3680
  %v3690 = vld [vmem:[#allocation2] sm:$0xff]
  %v3691 = vld [vmem:[#allocation2 + $0x10] sm:$0xff]
  %v3692 = vpack.c.bf16 %v3691, %v3690
  %v3693 = vld [vmem:[%s3] sm:$0xf]
  %v3694 = vld [vmem:[%s3 + $0x4] sm:$0xf]
  %v3695 = vld [vmem:[%s3 + $0x8] sm:$0xf]
  %v3696 = vld [vmem:[%s3 + $0xc] sm:$0xf]
  %v3697 = vld [vmem:[%s3 + $0x10] sm:$0xf]
  %v3698 = vld [vmem:[%s3 + $0x14] sm:$0xf]
  %v3699 = vld [vmem:[%s3 + $0x18] sm:$0xf]
  %v3700 = vld [vmem:[%s3 + $0x1c] sm:$0xf]
  %v3701 = vld [vmem:[%s3 + $0x20] sm:$0xf]
  %v3702 = vld [vmem:[%s3 + $0x24] sm:$0xf]
  %v3703 = vld [vmem:[%s3 + $0x28] sm:$0xf]
  %v3704 = vld [vmem:[%s3 + $0x2c] sm:$0xf]
  %v3705 = vld [vmem:[%s3 + $0x30] sm:$0xf]
  %v3706 = vld [vmem:[%s3 + $0x34] sm:$0xf]
  %v3707 = vld [vmem:[%s3 + $0x38] sm:$0xf]
  %v3708 = vld [vmem:[%s3 + $0x3c] sm:$0xf]
  %v3709 = vld [vmem:[#allocation2 + $0x8] sm:$0xff]
  %v3710 = vld [vmem:[#allocation2 + $0x18] sm:$0xff]
  %v3711 = vpack.c.bf16 %v3710, %v3709
  %s3712 = scalar_lea.vmem %s3, 64
  %v3713 = vld [vmem:[%s3712] sm:$0xf]
  %v3714 = vld [vmem:[%s3712 + $0x4] sm:$0xf]
  %v3715 = vld [vmem:[%s3712 + $0x8] sm:$0xf]
  %v3716 = vld [vmem:[%s3712 + $0xc] sm:$0xf]
  %v3717 = vld [vmem:[%s3712 + $0x10] sm:$0xf]
  %v3718 = vld [vmem:[%s3712 + $0x14] sm:$0xf]
  %v3719 = vld [vmem:[%s3712 + $0x18] sm:$0xf]
  %v3720 = vld [vmem:[%s3712 + $0x1c] sm:$0xf]
  %v3721 = vld [vmem:[%s3712 + $0x20] sm:$0xf]
  %v3722 = vld [vmem:[%s3712 + $0x24] sm:$0xf]
  %v3723 = vld [vmem:[%s3712 + $0x28] sm:$0xf]
  %v3724 = vld [vmem:[%s3712 + $0x2c] sm:$0xf]
  %v3725 = vld [vmem:[%s3712 + $0x30] sm:$0xf]
  %v3726 = vld [vmem:[%s3712 + $0x34] sm:$0xf]
  %v3727 = vld [vmem:[%s3712 + $0x38] sm:$0xf]
  %v3728 = vld [vmem:[%s3712 + $0x3c] sm:$0xf]
  %3731 = vrot.lane.b32.xlu0 %v3692, 120
  %v3732 = vpop.permute.xlu0 %3731
  %3733 = vrot.lane.b32.xlu0 %v3711, 120
  %v3734 = vpop.permute.xlu0 %3733
  %v3735 = vsel %vm1731, %v3732, %v3734
  %v3753 = vunpack.c.l.b16 %v3713
  %v3754 = vunpack.c.l.b16 %v3714
  %v3755 = vunpack.c.l.b16 %v3715
  %v3756 = vunpack.c.l.b16 %v3716
  %v3757 = vunpack.c.l.b16 %v3717
  %v3758 = vunpack.c.l.b16 %v3718
  %v3759 = vunpack.c.l.b16 %v3719
  %v3760 = vunpack.c.l.b16 %v3720
  %v3761 = vunpack.c.l.b16 %v3721
  %v3762 = vunpack.c.l.b16 %v3722
  %v3763 = vunpack.c.l.b16 %v3723
  %v3764 = vunpack.c.l.b16 %v3724
  %v3765 = vunpack.c.l.b16 %v3725
  %v3766 = vunpack.c.l.b16 %v3726
  %v3767 = vunpack.c.l.b16 %v3727
  %v3768 = vunpack.c.l.b16 %v3728
  %v3769 = vpack.c.b16 %v3754, %v3753
  %v3770 = vpack.c.b16 %v3756, %v3755
  %v3771 = vpack.c.b16 %v3758, %v3757
  %v3772 = vpack.c.b16 %v3760, %v3759
  %v3773 = vpack.c.b16 %v3762, %v3761
  %v3774 = vpack.c.b16 %v3764, %v3763
  %v3775 = vpack.c.b16 %v3766, %v3765
  %v3776 = vpack.c.b16 %v3768, %v3767
  %3785 = vmatprep.subr.bf16.mxu0 0
  %3786 = vmatpush1.bf16.msra.mxu0 %v3776
  %3787 = vmatprep.subr.bf16.mxu0 0
  %3788 = vmatpush1.bf16.msra.mxu0 %v3775
  %3789 = vmatprep.subr.bf16.mxu0 0
  %3790 = vmatpush1.bf16.msra.mxu0 %v3774
  %3791 = vmatprep.subr.bf16.mxu0 0
  %3792 = vmatpush1.bf16.msra.mxu0 %v3773
  %3793 = vmatprep.subr.bf16.mxu0 0
  %3794 = vmatpush1.bf16.msra.mxu0 %v3772
  %3795 = vmatprep.subr.bf16.mxu0 0
  %3796 = vmatpush1.bf16.msra.mxu0 %v3771
  %3797 = vmatprep.subr.bf16.mxu0 0
  %3798 = vmatpush1.bf16.msra.mxu0 %v3770
  %3799 = vmatprep.subr.bf16.mxu0 0
  %3800 = vmatpush1.bf16.msra.mxu0 %v3769
  %3801 = vmatprep.subr.bf16.mxu0 0
  %3802 = vmatpush2.bf16.msra.mxu0 0
  %3803 = vmatprep.subr.bf16.mxu0 0
  %3804 = vmatpush2.bf16.msra.mxu0 0
  %3805 = vmatprep.subr.bf16.mxu0 0
  %3806 = vmatpush2.bf16.msra.mxu0 0
  %3807 = vmatprep.subr.bf16.mxu0 0
  %3808 = vmatpush2.bf16.msra.mxu0 0
  %3809 = vmatprep.subr.bf16.mxu0 0
  %3810 = vmatpush2.bf16.msra.mxu0 0
  %3811 = vmatprep.subr.bf16.mxu0 0
  %3812 = vmatpush2.bf16.msra.mxu0 0
  %3813 = vmatprep.subr.bf16.mxu0 0
  %3814 = vmatpush2.bf16.msra.mxu0 0
  %3815 = vmatprep.subr.bf16.mxu0 0
  %3816 = vmatpush2.bf16.msra.mxu0 0
  %3817 = vmatprep.mubr.bf16.mxu0 0
  %3818 = vmatmul.mubr.bf16.gmra.mxu0 %v3735
  %v3819 = vpop.f32.mrf.mxu0
  %v3820 = vadd.f32 0.0, %v3819
  %v3821 = vpop.f32.mrf.mxu0
  %v3822 = vpop.f32.mrf.mxu0
  %v3823 = vadd.f32 0.0, %v3822
  %v3824 = vpop.f32.mrf.mxu0
  %3825 = vdwg.mxu0
  %v3842 = vunpack.c.l.b16 %v3693
  %v3843 = vunpack.c.l.b16 %v3694
  %v3844 = vunpack.c.l.b16 %v3695
  %v3845 = vunpack.c.l.b16 %v3696
  %v3846 = vunpack.c.l.b16 %v3697
  %v3847 = vunpack.c.l.b16 %v3698
  %v3848 = vunpack.c.l.b16 %v3699
  %v3849 = vunpack.c.l.b16 %v3700
  %v3850 = vunpack.c.l.b16 %v3701
  %v3851 = vunpack.c.l.b16 %v3702
  %v3852 = vunpack.c.l.b16 %v3703
  %v3853 = vunpack.c.l.b16 %v3704
  %v3854 = vunpack.c.l.b16 %v3705
  %v3855 = vunpack.c.l.b16 %v3706
  %v3856 = vunpack.c.l.b16 %v3707
  %v3857 = vunpack.c.l.b16 %v3708
  %v3858 = vpack.c.b16 %v3843, %v3842
  %v3859 = vpack.c.b16 %v3845, %v3844
  %v3860 = vpack.c.b16 %v3847, %v3846
  %v3861 = vpack.c.b16 %v3849, %v3848
  %v3862 = vpack.c.b16 %v3851, %v3850
  %v3863 = vpack.c.b16 %v3853, %v3852
  %v3864 = vpack.c.b16 %v3855, %v3854
  %v3865 = vpack.c.b16 %v3857, %v3856
  %3874 = vmatprep.subr.bf16.mxu0 0
  %3875 = vmatpush1.bf16.msra.mxu0 %v3865
  %3876 = vmatprep.subr.bf16.mxu0 0
  %3877 = vmatpush1.bf16.msra.mxu0 %v3864
  %3878 = vmatprep.subr.bf16.mxu0 0
  %3879 = vmatpush1.bf16.msra.mxu0 %v3863
  %3880 = vmatprep.subr.bf16.mxu0 0
  %3881 = vmatpush1.bf16.msra.mxu0 %v3862
  %3882 = vmatprep.subr.bf16.mxu0 0
  %3883 = vmatpush1.bf16.msra.mxu0 %v3861
  %3884 = vmatprep.subr.bf16.mxu0 0
  %3885 = vmatpush1.bf16.msra.mxu0 %v3860
  %3886 = vmatprep.subr.bf16.mxu0 0
  %3887 = vmatpush1.bf16.msra.mxu0 %v3859
  %3888 = vmatprep.subr.bf16.mxu0 0
  %3889 = vmatpush1.bf16.msra.mxu0 %v3858
  %3890 = vmatprep.subr.bf16.mxu0 0
  %3891 = vmatpush2.bf16.msra.mxu0 0
  %3892 = vmatprep.subr.bf16.mxu0 0
  %3893 = vmatpush2.bf16.msra.mxu0 0
  %3894 = vmatprep.subr.bf16.mxu0 0
  %3895 = vmatpush2.bf16.msra.mxu0 0
  %3896 = vmatprep.subr.bf16.mxu0 0
  %3897 = vmatpush2.bf16.msra.mxu0 0
  %3898 = vmatprep.subr.bf16.mxu0 0
  %3899 = vmatpush2.bf16.msra.mxu0 0
  %3900 = vmatprep.subr.bf16.mxu0 0
  %3901 = vmatpush2.bf16.msra.mxu0 0
  %3902 = vmatprep.subr.bf16.mxu0 0
  %3903 = vmatpush2.bf16.msra.mxu0 0
  %3904 = vmatprep.subr.bf16.mxu0 0
  %3905 = vmatpush2.bf16.msra.mxu0 0
  %3906 = vmatprep.mubr.bf16.mxu0 0
  %3907 = vmatmul.mubr.bf16.gmra.mxu0 %v3692
  %v3908 = vpop.f32.mrf.mxu0
  %v3909 = vadd.f32 %v3820, %v3908
  %v3910 = vpop.f32.mrf.mxu0
  %v3911 = vpop.f32.mrf.mxu0
  %v3912 = vadd.f32 %v3823, %v3911
  %v3913 = vpop.f32.mrf.mxu0
  %3914 = vdwg.mxu0
  %s3915 = scalar_lea.vmem %s3, 128
  %v3916 = vld [vmem:[%s3915] sm:$0xf]
  %v3917 = vld [vmem:[%s3915 + $0x4] sm:$0xf]
  %v3918 = vld [vmem:[%s3915 + $0x8] sm:$0xf]
  %v3919 = vld [vmem:[%s3915 + $0xc] sm:$0xf]
  %v3920 = vld [vmem:[%s3915 + $0x10] sm:$0xf]
  %v3921 = vld [vmem:[%s3915 + $0x14] sm:$0xf]
  %v3922 = vld [vmem:[%s3915 + $0x18] sm:$0xf]
  %v3923 = vld [vmem:[%s3915 + $0x1c] sm:$0xf]
  %v3924 = vld [vmem:[%s3915 + $0x20] sm:$0xf]
  %v3925 = vld [vmem:[%s3915 + $0x24] sm:$0xf]
  %v3926 = vld [vmem:[%s3915 + $0x28] sm:$0xf]
  %v3927 = vld [vmem:[%s3915 + $0x2c] sm:$0xf]
  %v3928 = vld [vmem:[%s3915 + $0x30] sm:$0xf]
  %v3929 = vld [vmem:[%s3915 + $0x34] sm:$0xf]
  %v3930 = vld [vmem:[%s3915 + $0x38] sm:$0xf]
  %v3931 = vld [vmem:[%s3915 + $0x3c] sm:$0xf]
  %3932 = vrot.lane.b32.xlu0 %v3692, 112
  %v3933 = vpop.permute.xlu0 %3932
  %3934 = vrot.lane.b32.xlu0 %v3711, 112
  %v3935 = vpop.permute.xlu0 %3934
  %v3936 = vsel %vm1933, %v3933, %v3935
  %v3954 = vunpack.c.l.b16 %v3916
  %v3955 = vunpack.c.l.b16 %v3917
  %v3956 = vunpack.c.l.b16 %v3918
  %v3957 = vunpack.c.l.b16 %v3919
  %v3958 = vunpack.c.l.b16 %v3920
  %v3959 = vunpack.c.l.b16 %v3921
  %v3960 = vunpack.c.l.b16 %v3922
  %v3961 = vunpack.c.l.b16 %v3923
  %v3962 = vunpack.c.l.b16 %v3924
  %v3963 = vunpack.c.l.b16 %v3925
  %v3964 = vunpack.c.l.b16 %v3926
  %v3965 = vunpack.c.l.b16 %v3927
  %v3966 = vunpack.c.l.b16 %v3928
  %v3967 = vunpack.c.l.b16 %v3929
  %v3968 = vunpack.c.l.b16 %v3930
  %v3969 = vunpack.c.l.b16 %v3931
  %v3970 = vpack.c.b16 %v3955, %v3954
  %v3971 = vpack.c.b16 %v3957, %v3956
  %v3972 = vpack.c.b16 %v3959, %v3958
  %v3973 = vpack.c.b16 %v3961, %v3960
  %v3974 = vpack.c.b16 %v3963, %v3962
  %v3975 = vpack.c.b16 %v3965, %v3964
  %v3976 = vpack.c.b16 %v3967, %v3966
  %v3977 = vpack.c.b16 %v3969, %v3968
  %3986 = vmatprep.subr.bf16.mxu0 0
  %3987 = vmatpush1.bf16.msra.mxu0 %v3977
  %3988 = vmatprep.subr.bf16.mxu0 0
  %3989 = vmatpush1.bf16.msra.mxu0 %v3976
  %3990 = vmatprep.subr.bf16.mxu0 0
  %3991 = vmatpush1.bf16.msra.mxu0 %v3975
  %3992 = vmatprep.subr.bf16.mxu0 0
  %3993 = vmatpush1.bf16.msra.mxu0 %v3974
  %3994 = vmatprep.subr.bf16.mxu0 0
  %3995 = vmatpush1.bf16.msra.mxu0 %v3973
  %3996 = vmatprep.subr.bf16.mxu0 0
  %3997 = vmatpush1.bf16.msra.mxu0 %v3972
  %3998 = vmatprep.subr.bf16.mxu0 0
  %3999 = vmatpush1.bf16.msra.mxu0 %v3971
  %4000 = vmatprep.subr.bf16.mxu0 0
  %4001 = vmatpush1.bf16.msra.mxu0 %v3970
  %4002 = vmatprep.subr.bf16.mxu0 0
  %4003 = vmatpush2.bf16.msra.mxu0 0
  %4004 = vmatprep.subr.bf16.mxu0 0
  %4005 = vmatpush2.bf16.msra.mxu0 0
  %4006 = vmatprep.subr.bf16.mxu0 0
  %4007 = vmatpush2.bf16.msra.mxu0 0
  %4008 = vmatprep.subr.bf16.mxu0 0
  %4009 = vmatpush2.bf16.msra.mxu0 0
  %4010 = vmatprep.subr.bf16.mxu0 0
  %4011 = vmatpush2.bf16.msra.mxu0 0
  %4012 = vmatprep.subr.bf16.mxu0 0
  %4013 = vmatpush2.bf16.msra.mxu0 0
  %4014 = vmatprep.subr.bf16.mxu0 0
  %4015 = vmatpush2.bf16.msra.mxu0 0
  %4016 = vmatprep.subr.bf16.mxu0 0
  %4017 = vmatpush2.bf16.msra.mxu0 0
  %4018 = vmatprep.mubr.bf16.mxu0 0
  %4019 = vmatmul.mubr.bf16.gmra.mxu0 %v3936
  %v4020 = vpop.f32.mrf.mxu0
  %v4021 = vadd.f32 0.0, %v4020
  %v4022 = vpop.f32.mrf.mxu0
  %v4023 = vpop.f32.mrf.mxu0
  %v4024 = vadd.f32 0.0, %v4023
  %v4025 = vpop.f32.mrf.mxu0
  %4026 = vdwg.mxu0
  %v4027 = vadd.f32 %v3909, %v4021
  %v4028 = vadd.f32 %v3912, %v4024
  %v4029 = vld [vmem:[#allocation2] sm:$0xfe]
  %v4030 = vld [vmem:[#allocation2 + $0x10] sm:$0xff]
  %v4031 = vld [vmem:[#allocation2 + $0x20] sm:$0x1]
  %v4032 = vpack.c.bf16 %v4030, %v4029
  %v4033 = vpack.c.bf16 %v4031, %v4031
  %s4034 = scalar_lea.vmem %s3, 192
  %v4035 = vld [vmem:[%s4034] sm:$0xf]
  %v4036 = vld [vmem:[%s4034 + $0x4] sm:$0xf]
  %v4037 = vld [vmem:[%s4034 + $0x8] sm:$0xf]
  %v4038 = vld [vmem:[%s4034 + $0xc] sm:$0xf]
  %v4039 = vld [vmem:[%s4034 + $0x10] sm:$0xf]
  %v4040 = vld [vmem:[%s4034 + $0x14] sm:$0xf]
  %v4041 = vld [vmem:[%s4034 + $0x18] sm:$0xf]
  %v4042 = vld [vmem:[%s4034 + $0x1c] sm:$0xf]
  %v4043 = vld [vmem:[%s4034 + $0x20] sm:$0xf]
  %v4044 = vld [vmem:[%s4034 + $0x24] sm:$0xf]
  %v4045 = vld [vmem:[%s4034 + $0x28] sm:$0xf]
  %v4046 = vld [vmem:[%s4034 + $0x2c] sm:$0xf]
  %v4047 = vld [vmem:[%s4034 + $0x30] sm:$0xf]
  %v4048 = vld [vmem:[%s4034 + $0x34] sm:$0xf]
  %v4049 = vld [vmem:[%s4034 + $0x38] sm:$0xf]
  %v4050 = vld [vmem:[%s4034 + $0x3c] sm:$0xf]
  %v4052 = vshrl.u32 %v4032, 16
  %v4054 = vshll.u32 %v4032, 16
  %v4056 = vrot.slane %v4054, 1
  %v4057 = vor.u32 %v4052, %v4056
  %v4059 = vshll.u32 %v4033, 16
  %v4061 = vrot.slane %v4059, 1
  %v4062 = vsel %vm335, %v4057, %v4061
  %v4080 = vunpack.c.l.b16 %v4035
  %v4081 = vunpack.c.l.b16 %v4036
  %v4082 = vunpack.c.l.b16 %v4037
  %v4083 = vunpack.c.l.b16 %v4038
  %v4084 = vunpack.c.l.b16 %v4039
  %v4085 = vunpack.c.l.b16 %v4040
  %v4086 = vunpack.c.l.b16 %v4041
  %v4087 = vunpack.c.l.b16 %v4042
  %v4088 = vunpack.c.l.b16 %v4043
  %v4089 = vunpack.c.l.b16 %v4044
  %v4090 = vunpack.c.l.b16 %v4045
  %v4091 = vunpack.c.l.b16 %v4046
  %v4092 = vunpack.c.l.b16 %v4047
  %v4093 = vunpack.c.l.b16 %v4048
  %v4094 = vunpack.c.l.b16 %v4049
  %v4095 = vunpack.c.l.b16 %v4050
  %v4096 = vpack.c.b16 %v4081, %v4080
  %v4097 = vpack.c.b16 %v4083, %v4082
  %v4098 = vpack.c.b16 %v4085, %v4084
  %v4099 = vpack.c.b16 %v4087, %v4086
  %v4100 = vpack.c.b16 %v4089, %v4088
  %v4101 = vpack.c.b16 %v4091, %v4090
  %v4102 = vpack.c.b16 %v4093, %v4092
  %v4103 = vpack.c.b16 %v4095, %v4094
  %4112 = vmatprep.subr.bf16.mxu0 0
  %4113 = vmatpush1.bf16.msra.mxu0 %v4103
  %4114 = vmatprep.subr.bf16.mxu0 0
  %4115 = vmatpush1.bf16.msra.mxu0 %v4102
  %4116 = vmatprep.subr.bf16.mxu0 0
  %4117 = vmatpush1.bf16.msra.mxu0 %v4101
  %4118 = vmatprep.subr.bf16.mxu0 0
  %4119 = vmatpush1.bf16.msra.mxu0 %v4100
  %4120 = vmatprep.subr.bf16.mxu0 0
  %4121 = vmatpush1.bf16.msra.mxu0 %v4099
  %4122 = vmatprep.subr.bf16.mxu0 0
  %4123 = vmatpush1.bf16.msra.mxu0 %v4098
  %4124 = vmatprep.subr.bf16.mxu0 0
  %4125 = vmatpush1.bf16.msra.mxu0 %v4097
  %4126 = vmatprep.subr.bf16.mxu0 0
  %4127 = vmatpush1.bf16.msra.mxu0 %v4096
  %4128 = vmatprep.subr.bf16.mxu0 0
  %4129 = vmatpush2.bf16.msra.mxu0 0
  %4130 = vmatprep.subr.bf16.mxu0 0
  %4131 = vmatpush2.bf16.msra.mxu0 0
  %4132 = vmatprep.subr.bf16.mxu0 0
  %4133 = vmatpush2.bf16.msra.mxu0 0
  %4134 = vmatprep.subr.bf16.mxu0 0
  %4135 = vmatpush2.bf16.msra.mxu0 0
  %4136 = vmatprep.subr.bf16.mxu0 0
  %4137 = vmatpush2.bf16.msra.mxu0 0
  %4138 = vmatprep.subr.bf16.mxu0 0
  %4139 = vmatpush2.bf16.msra.mxu0 0
  %4140 = vmatprep.subr.bf16.mxu0 0
  %4141 = vmatpush2.bf16.msra.mxu0 0
  %4142 = vmatprep.subr.bf16.mxu0 0
  %4143 = vmatpush2.bf16.msra.mxu0 0
  %4144 = vmatprep.mubr.bf16.mxu0 0
  %4145 = vmatmul.mubr.bf16.gmra.mxu0 %v4062
  %v4146 = vpop.f32.mrf.mxu0
  %v4147 = vadd.f32 0.0, %v4146
  %v4148 = vpop.f32.mrf.mxu0
  %v4149 = vpop.f32.mrf.mxu0
  %v4150 = vadd.f32 0.0, %v4149
  %v4151 = vpop.f32.mrf.mxu0
  %4152 = vdwg.mxu0
  %v4153 = vadd.f32 %v4027, %v4147
  %v4154 = vadd.f32 %v4028, %v4150
  %v4155 = vld [vmem:[#allocation2] sm:$0xfe]
  %v4156 = vld [vmem:[#allocation2 + $0x8] sm:$0xfe]
  %v4157 = vld [vmem:[#allocation2 + $0x10] sm:$0xff]
  %v4158 = vld [vmem:[#allocation2 + $0x18] sm:$0xff]
  %v4159 = vld [vmem:[#allocation2 + $0x20] sm:$0x1]
  %v4160 = vld [vmem:[#allocation2 + $0x28] sm:$0x1]
  %v4161 = vpack.c.bf16 %v4157, %v4155
  %v4162 = vpack.c.bf16 %v4158, %v4156
  %v4163 = vpack.c.bf16 %v4159, %v4159
  %v4164 = vpack.c.bf16 %v4160, %v4160
  %s4165 = scalar_lea.vmem %s3, 256
  %v4166 = vld [vmem:[%s4165] sm:$0xf]
  %v4167 = vld [vmem:[%s4165 + $0x4] sm:$0xf]
  %v4168 = vld [vmem:[%s4165 + $0x8] sm:$0xf]
  %v4169 = vld [vmem:[%s4165 + $0xc] sm:$0xf]
  %v4170 = vld [vmem:[%s4165 + $0x10] sm:$0xf]
  %v4171 = vld [vmem:[%s4165 + $0x14] sm:$0xf]
  %v4172 = vld [vmem:[%s4165 + $0x18] sm:$0xf]
  %v4173 = vld [vmem:[%s4165 + $0x1c] sm:$0xf]
  %v4174 = vld [vmem:[%s4165 + $0x20] sm:$0xf]
  %v4175 = vld [vmem:[%s4165 + $0x24] sm:$0xf]
  %v4176 = vld [vmem:[%s4165 + $0x28] sm:$0xf]
  %v4177 = vld [vmem:[%s4165 + $0x2c] sm:$0xf]
  %v4178 = vld [vmem:[%s4165 + $0x30] sm:$0xf]
  %v4179 = vld [vmem:[%s4165 + $0x34] sm:$0xf]
  %v4180 = vld [vmem:[%s4165 + $0x38] sm:$0xf]
  %v4181 = vld [vmem:[%s4165 + $0x3c] sm:$0xf]
  %v4183 = vshrl.u32 %v4161, 16
  %v4185 = vshll.u32 %v4161, 16
  %v4187 = vrot.slane %v4185, 1
  %v4188 = vor.u32 %v4183, %v4187
  %v4190 = vshll.u32 %v4163, 16
  %v4192 = vrot.slane %v4190, 1
  %v4193 = vsel %vm335, %v4188, %v4192
  %v4195 = vshrl.u32 %v4162, 16
  %v4197 = vshll.u32 %v4162, 16
  %v4199 = vrot.slane %v4197, 1
  %v4200 = vor.u32 %v4195, %v4199
  %v4202 = vshll.u32 %v4164, 16
  %v4204 = vrot.slane %v4202, 1
  %v4205 = vsel %vm335, %v4200, %v4204
  %4206 = vrot.lane.b32.xlu0 %v4193, 120
  %v4207 = vpop.permute.xlu0 %4206
  %4208 = vrot.lane.b32.xlu0 %v4205, 120
  %v4209 = vpop.permute.xlu0 %4208
  %v4210 = vsel %vm1731, %v4207, %v4209
  %v4228 = vunpack.c.l.b16 %v4166
  %v4229 = vunpack.c.l.b16 %v4167
  %v4230 = vunpack.c.l.b16 %v4168
  %v4231 = vunpack.c.l.b16 %v4169
  %v4232 = vunpack.c.l.b16 %v4170
  %v4233 = vunpack.c.l.b16 %v4171
  %v4234 = vunpack.c.l.b16 %v4172
  %v4235 = vunpack.c.l.b16 %v4173
  %v4236 = vunpack.c.l.b16 %v4174
  %v4237 = vunpack.c.l.b16 %v4175
  %v4238 = vunpack.c.l.b16 %v4176
  %v4239 = vunpack.c.l.b16 %v4177
  %v4240 = vunpack.c.l.b16 %v4178
  %v4241 = vunpack.c.l.b16 %v4179
  %v4242 = vunpack.c.l.b16 %v4180
  %v4243 = vunpack.c.l.b16 %v4181
  %v4244 = vpack.c.b16 %v4229, %v4228
  %v4245 = vpack.c.b16 %v4231, %v4230
  %v4246 = vpack.c.b16 %v4233, %v4232
  %v4247 = vpack.c.b16 %v4235, %v4234
  %v4248 = vpack.c.b16 %v4237, %v4236
  %v4249 = vpack.c.b16 %v4239, %v4238
  %v4250 = vpack.c.b16 %v4241, %v4240
  %v4251 = vpack.c.b16 %v4243, %v4242
  %4260 = vmatprep.subr.bf16.mxu0 0
  %4261 = vmatpush1.bf16.msra.mxu0 %v4251
  %4262 = vmatprep.subr.bf16.mxu0 0
  %4263 = vmatpush1.bf16.msra.mxu0 %v4250
  %4264 = vmatprep.subr.bf16.mxu0 0
  %4265 = vmatpush1.bf16.msra.mxu0 %v4249
  %4266 = vmatprep.subr.bf16.mxu0 0
  %4267 = vmatpush1.bf16.msra.mxu0 %v4248
  %4268 = vmatprep.subr.bf16.mxu0 0
  %4269 = vmatpush1.bf16.msra.mxu0 %v4247
  %4270 = vmatprep.subr.bf16.mxu0 0
  %4271 = vmatpush1.bf16.msra.mxu0 %v4246
  %4272 = vmatprep.subr.bf16.mxu0 0
  %4273 = vmatpush1.bf16.msra.mxu0 %v4245
  %4274 = vmatprep.subr.bf16.mxu0 0
  %4275 = vmatpush1.bf16.msra.mxu0 %v4244
  %4276 = vmatprep.subr.bf16.mxu0 0
  %4277 = vmatpush2.bf16.msra.mxu0 0
  %4278 = vmatprep.subr.bf16.mxu0 0
  %4279 = vmatpush2.bf16.msra.mxu0 0
  %4280 = vmatprep.subr.bf16.mxu0 0
  %4281 = vmatpush2.bf16.msra.mxu0 0
  %4282 = vmatprep.subr.bf16.mxu0 0
  %4283 = vmatpush2.bf16.msra.mxu0 0
  %4284 = vmatprep.subr.bf16.mxu0 0
  %4285 = vmatpush2.bf16.msra.mxu0 0
  %4286 = vmatprep.subr.bf16.mxu0 0
  %4287 = vmatpush2.bf16.msra.mxu0 0
  %4288 = vmatprep.subr.bf16.mxu0 0
  %4289 = vmatpush2.bf16.msra.mxu0 0
  %4290 = vmatprep.subr.bf16.mxu0 0
  %4291 = vmatpush2.bf16.msra.mxu0 0
  %4292 = vmatprep.mubr.bf16.mxu0 0
  %4293 = vmatmul.mubr.bf16.gmra.mxu0 %v4210
  %v4294 = vpop.f32.mrf.mxu0
  %v4295 = vadd.f32 0.0, %v4294
  %v4296 = vpop.f32.mrf.mxu0
  %v4297 = vpop.f32.mrf.mxu0
  %v4298 = vadd.f32 0.0, %v4297
  %v4299 = vpop.f32.mrf.mxu0
  %4300 = vdwg.mxu0
  %v4301 = vadd.f32 %v4153, %v4295
  %v4302 = vadd.f32 %v4154, %v4298
  %s4303 = scalar_lea.vmem %s3, 320
  %v4304 = vld [vmem:[%s4303] sm:$0xf]
  %v4305 = vld [vmem:[%s4303 + $0x4] sm:$0xf]
  %v4306 = vld [vmem:[%s4303 + $0x8] sm:$0xf]
  %v4307 = vld [vmem:[%s4303 + $0xc] sm:$0xf]
  %v4308 = vld [vmem:[%s4303 + $0x10] sm:$0xf]
  %v4309 = vld [vmem:[%s4303 + $0x14] sm:$0xf]
  %v4310 = vld [vmem:[%s4303 + $0x18] sm:$0xf]
  %v4311 = vld [vmem:[%s4303 + $0x1c] sm:$0xf]
  %v4312 = vld [vmem:[%s4303 + $0x20] sm:$0xf]
  %v4313 = vld [vmem:[%s4303 + $0x24] sm:$0xf]
  %v4314 = vld [vmem:[%s4303 + $0x28] sm:$0xf]
  %v4315 = vld [vmem:[%s4303 + $0x2c] sm:$0xf]
  %v4316 = vld [vmem:[%s4303 + $0x30] sm:$0xf]
  %v4317 = vld [vmem:[%s4303 + $0x34] sm:$0xf]
  %v4318 = vld [vmem:[%s4303 + $0x38] sm:$0xf]
  %v4319 = vld [vmem:[%s4303 + $0x3c] sm:$0xf]
  %4320 = vrot.lane.b32.xlu0 %v4193, 112
  %v4321 = vpop.permute.xlu0 %4320
  %4322 = vrot.lane.b32.xlu0 %v4205, 112
  %v4323 = vpop.permute.xlu0 %4322
  %v4324 = vsel %vm1933, %v4321, %v4323
  %v4342 = vunpack.c.l.b16 %v4304
  %v4343 = vunpack.c.l.b16 %v4305
  %v4344 = vunpack.c.l.b16 %v4306
  %v4345 = vunpack.c.l.b16 %v4307
  %v4346 = vunpack.c.l.b16 %v4308
  %v4347 = vunpack.c.l.b16 %v4309
  %v4348 = vunpack.c.l.b16 %v4310
  %v4349 = vunpack.c.l.b16 %v4311
  %v4350 = vunpack.c.l.b16 %v4312
  %v4351 = vunpack.c.l.b16 %v4313
  %v4352 = vunpack.c.l.b16 %v4314
  %v4353 = vunpack.c.l.b16 %v4315
  %v4354 = vunpack.c.l.b16 %v4316
  %v4355 = vunpack.c.l.b16 %v4317
  %v4356 = vunpack.c.l.b16 %v4318
  %v4357 = vunpack.c.l.b16 %v4319
  %v4358 = vpack.c.b16 %v4343, %v4342
  %v4359 = vpack.c.b16 %v4345, %v4344
  %v4360 = vpack.c.b16 %v4347, %v4346
  %v4361 = vpack.c.b16 %v4349, %v4348
  %v4362 = vpack.c.b16 %v4351, %v4350
  %v4363 = vpack.c.b16 %v4353, %v4352
  %v4364 = vpack.c.b16 %v4355, %v4354
  %v4365 = vpack.c.b16 %v4357, %v4356
  %4374 = vmatprep.subr.bf16.mxu0 0
  %4375 = vmatpush1.bf16.msra.mxu0 %v4365
  %4376 = vmatprep.subr.bf16.mxu0 0
  %4377 = vmatpush1.bf16.msra.mxu0 %v4364
  %4378 = vmatprep.subr.bf16.mxu0 0
  %4379 = vmatpush1.bf16.msra.mxu0 %v4363
  %4380 = vmatprep.subr.bf16.mxu0 0
  %4381 = vmatpush1.bf16.msra.mxu0 %v4362
  %4382 = vmatprep.subr.bf16.mxu0 0
  %4383 = vmatpush1.bf16.msra.mxu0 %v4361
  %4384 = vmatprep.subr.bf16.mxu0 0
  %4385 = vmatpush1.bf16.msra.mxu0 %v4360
  %4386 = vmatprep.subr.bf16.mxu0 0
  %4387 = vmatpush1.bf16.msra.mxu0 %v4359
  %4388 = vmatprep.subr.bf16.mxu0 0
  %4389 = vmatpush1.bf16.msra.mxu0 %v4358
  %4390 = vmatprep.subr.bf16.mxu0 0
  %4391 = vmatpush2.bf16.msra.mxu0 0
  %4392 = vmatprep.subr.bf16.mxu0 0
  %4393 = vmatpush2.bf16.msra.mxu0 0
  %4394 = vmatprep.subr.bf16.mxu0 0
  %4395 = vmatpush2.bf16.msra.mxu0 0
  %4396 = vmatprep.subr.bf16.mxu0 0
  %4397 = vmatpush2.bf16.msra.mxu0 0
  %4398 = vmatprep.subr.bf16.mxu0 0
  %4399 = vmatpush2.bf16.msra.mxu0 0
  %4400 = vmatprep.subr.bf16.mxu0 0
  %4401 = vmatpush2.bf16.msra.mxu0 0
  %4402 = vmatprep.subr.bf16.mxu0 0
  %4403 = vmatpush2.bf16.msra.mxu0 0
  %4404 = vmatprep.subr.bf16.mxu0 0
  %4405 = vmatpush2.bf16.msra.mxu0 0
  %4406 = vmatprep.mubr.bf16.mxu0 0
  %4407 = vmatmul.mubr.bf16.gmra.mxu0 %v4324
  %v4408 = vpop.f32.mrf.mxu0
  %v4409 = vadd.f32 0.0, %v4408
  %v4410 = vpop.f32.mrf.mxu0
  %v4411 = vpop.f32.mrf.mxu0
  %v4412 = vadd.f32 0.0, %v4411
  %v4413 = vpop.f32.mrf.mxu0
  %4414 = vdwg.mxu0
  %v4415 = vadd.f32 %v4301, %v4409
  %v4416 = vadd.f32 %v4302, %v4412
  %v4417 = vld [vmem:[#allocation2] sm:$0xfc]
  %v4418 = vld [vmem:[#allocation2 + $0x20] sm:$0x3]
  %v4419 = vpack.c.bf16 %v4030, %v4417
  %v4420 = vpack.c.bf16 %v4418, %v4418
  %s4421 = scalar_lea.vmem %s3, 384
  %v4422 = vld [vmem:[%s4421] sm:$0xf]
  %v4423 = vld [vmem:[%s4421 + $0x4] sm:$0xf]
  %v4424 = vld [vmem:[%s4421 + $0x8] sm:$0xf]
  %v4425 = vld [vmem:[%s4421 + $0xc] sm:$0xf]
  %v4426 = vld [vmem:[%s4421 + $0x10] sm:$0xf]
  %v4427 = vld [vmem:[%s4421 + $0x14] sm:$0xf]
  %v4428 = vld [vmem:[%s4421 + $0x18] sm:$0xf]
  %v4429 = vld [vmem:[%s4421 + $0x1c] sm:$0xf]
  %v4430 = vld [vmem:[%s4421 + $0x20] sm:$0xf]
  %v4431 = vld [vmem:[%s4421 + $0x24] sm:$0xf]
  %v4432 = vld [vmem:[%s4421 + $0x28] sm:$0xf]
  %v4433 = vld [vmem:[%s4421 + $0x2c] sm:$0xf]
  %v4434 = vld [vmem:[%s4421 + $0x30] sm:$0xf]
  %v4435 = vld [vmem:[%s4421 + $0x34] sm:$0xf]
  %v4436 = vld [vmem:[%s4421 + $0x38] sm:$0xf]
  %v4437 = vld [vmem:[%s4421 + $0x3c] sm:$0xf]
  %v4440 = vrot.slane %v4419, 1
  %v4441 = vrot.slane %v4420, 1
  %v4442 = vsel %vm593, %v4440, %v4441
  %v4460 = vunpack.c.l.b16 %v4422
  %v4461 = vunpack.c.l.b16 %v4423
  %v4462 = vunpack.c.l.b16 %v4424
  %v4463 = vunpack.c.l.b16 %v4425
  %v4464 = vunpack.c.l.b16 %v4426
  %v4465 = vunpack.c.l.b16 %v4427
  %v4466 = vunpack.c.l.b16 %v4428
  %v4467 = vunpack.c.l.b16 %v4429
  %v4468 = vunpack.c.l.b16 %v4430
  %v4469 = vunpack.c.l.b16 %v4431
  %v4470 = vunpack.c.l.b16 %v4432
  %v4471 = vunpack.c.l.b16 %v4433
  %v4472 = vunpack.c.l.b16 %v4434
  %v4473 = vunpack.c.l.b16 %v4435
  %v4474 = vunpack.c.l.b16 %v4436
  %v4475 = vunpack.c.l.b16 %v4437
  %v4476 = vpack.c.b16 %v4461, %v4460
  %v4477 = vpack.c.b16 %v4463, %v4462
  %v4478 = vpack.c.b16 %v4465, %v4464
  %v4479 = vpack.c.b16 %v4467, %v4466
  %v4480 = vpack.c.b16 %v4469, %v4468
  %v4481 = vpack.c.b16 %v4471, %v4470
  %v4482 = vpack.c.b16 %v4473, %v4472
  %v4483 = vpack.c.b16 %v4475, %v4474
  %4492 = vmatprep.subr.bf16.mxu0 0
  %4493 = vmatpush1.bf16.msra.mxu0 %v4483
  %4494 = vmatprep.subr.bf16.mxu0 0
  %4495 = vmatpush1.bf16.msra.mxu0 %v4482
  %4496 = vmatprep.subr.bf16.mxu0 0
  %4497 = vmatpush1.bf16.msra.mxu0 %v4481
  %4498 = vmatprep.subr.bf16.mxu0 0
  %4499 = vmatpush1.bf16.msra.mxu0 %v4480
  %4500 = vmatprep.subr.bf16.mxu0 0
  %4501 = vmatpush1.bf16.msra.mxu0 %v4479
  %4502 = vmatprep.subr.bf16.mxu0 0
  %4503 = vmatpush1.bf16.msra.mxu0 %v4478
  %4504 = vmatprep.subr.bf16.mxu0 0
  %4505 = vmatpush1.bf16.msra.mxu0 %v4477
  %4506 = vmatprep.subr.bf16.mxu0 0
  %4507 = vmatpush1.bf16.msra.mxu0 %v4476
  %4508 = vmatprep.subr.bf16.mxu0 0
  %4509 = vmatpush2.bf16.msra.mxu0 0
  %4510 = vmatprep.subr.bf16.mxu0 0
  %4511 = vmatpush2.bf16.msra.mxu0 0
  %4512 = vmatprep.subr.bf16.mxu0 0
  %4513 = vmatpush2.bf16.msra.mxu0 0
  %4514 = vmatprep.subr.bf16.mxu0 0
  %4515 = vmatpush2.bf16.msra.mxu0 0
  %4516 = vmatprep.subr.bf16.mxu0 0
  %4517 = vmatpush2.bf16.msra.mxu0 0
  %4518 = vmatprep.subr.bf16.mxu0 0
  %4519 = vmatpush2.bf16.msra.mxu0 0
  %4520 = vmatprep.subr.bf16.mxu0 0
  %4521 = vmatpush2.bf16.msra.mxu0 0
  %4522 = vmatprep.subr.bf16.mxu0 0
  %4523 = vmatpush2.bf16.msra.mxu0 0
  %4524 = vmatprep.mubr.bf16.mxu0 0
  %4525 = vmatmul.mubr.bf16.gmra.mxu0 %v4442
  %v4526 = vpop.f32.mrf.mxu0
  %v4527 = vadd.f32 0.0, %v4526
  %v4528 = vpop.f32.mrf.mxu0
  %v4529 = vpop.f32.mrf.mxu0
  %v4530 = vadd.f32 0.0, %v4529
  %v4531 = vpop.f32.mrf.mxu0
  %4532 = vdwg.mxu0
  %v4533 = vadd.f32 %v4415, %v4527
  %v4534 = vadd.f32 %v4416, %v4530
  %v4535 = vld [vmem:[#allocation2] sm:$0xfc]
  %v4536 = vld [vmem:[#allocation2 + $0x8] sm:$0xfc]
  %v4537 = vld [vmem:[#allocation2 + $0x20] sm:$0x3]
  %v4538 = vld [vmem:[#allocation2 + $0x28] sm:$0x3]
  %v4539 = vpack.c.bf16 %v4157, %v4535
  %v4540 = vpack.c.bf16 %v4158, %v4536
  %v4541 = vpack.c.bf16 %v4537, %v4537
  %v4542 = vpack.c.bf16 %v4538, %v4538
  %s4543 = scalar_lea.vmem %s3, 448
  %v4544 = vld [vmem:[%s4543] sm:$0xf]
  %v4545 = vld [vmem:[%s4543 + $0x4] sm:$0xf]
  %v4546 = vld [vmem:[%s4543 + $0x8] sm:$0xf]
  %v4547 = vld [vmem:[%s4543 + $0xc] sm:$0xf]
  %v4548 = vld [vmem:[%s4543 + $0x10] sm:$0xf]
  %v4549 = vld [vmem:[%s4543 + $0x14] sm:$0xf]
  %v4550 = vld [vmem:[%s4543 + $0x18] sm:$0xf]
  %v4551 = vld [vmem:[%s4543 + $0x1c] sm:$0xf]
  %v4552 = vld [vmem:[%s4543 + $0x20] sm:$0xf]
  %v4553 = vld [vmem:[%s4543 + $0x24] sm:$0xf]
  %v4554 = vld [vmem:[%s4543 + $0x28] sm:$0xf]
  %v4555 = vld [vmem:[%s4543 + $0x2c] sm:$0xf]
  %v4556 = vld [vmem:[%s4543 + $0x30] sm:$0xf]
  %v4557 = vld [vmem:[%s4543 + $0x34] sm:$0xf]
  %v4558 = vld [vmem:[%s4543 + $0x38] sm:$0xf]
  %v4559 = vld [vmem:[%s4543 + $0x3c] sm:$0xf]
  %v4564 = vrot.slane %v4539, 1
  %v4565 = vrot.slane %v4541, 1
  %v4566 = vsel %vm593, %v4564, %v4565
  %v4567 = vrot.slane %v4540, 1
  %v4568 = vrot.slane %v4542, 1
  %v4569 = vsel %vm593, %v4567, %v4568
  %4570 = vrot.lane.b32.xlu0 %v4566, 120
  %v4571 = vpop.permute.xlu0 %4570
  %4572 = vrot.lane.b32.xlu0 %v4569, 120
  %v4573 = vpop.permute.xlu0 %4572
  %v4574 = vsel %vm1731, %v4571, %v4573
  %v4592 = vunpack.c.l.b16 %v4544
  %v4593 = vunpack.c.l.b16 %v4545
  %v4594 = vunpack.c.l.b16 %v4546
  %v4595 = vunpack.c.l.b16 %v4547
  %v4596 = vunpack.c.l.b16 %v4548
  %v4597 = vunpack.c.l.b16 %v4549
  %v4598 = vunpack.c.l.b16 %v4550
  %v4599 = vunpack.c.l.b16 %v4551
  %v4600 = vunpack.c.l.b16 %v4552
  %v4601 = vunpack.c.l.b16 %v4553
  %v4602 = vunpack.c.l.b16 %v4554
  %v4603 = vunpack.c.l.b16 %v4555
  %v4604 = vunpack.c.l.b16 %v4556
  %v4605 = vunpack.c.l.b16 %v4557
  %v4606 = vunpack.c.l.b16 %v4558
  %v4607 = vunpack.c.l.b16 %v4559
  %v4608 = vpack.c.b16 %v4593, %v4592
  %v4609 = vpack.c.b16 %v4595, %v4594
  %v4610 = vpack.c.b16 %v4597, %v4596
  %v4611 = vpack.c.b16 %v4599, %v4598
  %v4612 = vpack.c.b16 %v4601, %v4600
  %v4613 = vpack.c.b16 %v4603, %v4602
  %v4614 = vpack.c.b16 %v4605, %v4604
  %v4615 = vpack.c.b16 %v4607, %v4606
  %4624 = vmatprep.subr.bf16.mxu0 0
  %4625 = vmatpush1.bf16.msra.mxu0 %v4615
  %4626 = vmatprep.subr.bf16.mxu0 0
  %4627 = vmatpush1.bf16.msra.mxu0 %v4614
  %4628 = vmatprep.subr.bf16.mxu0 0
  %4629 = vmatpush1.bf16.msra.mxu0 %v4613
  %4630 = vmatprep.subr.bf16.mxu0 0
  %4631 = vmatpush1.bf16.msra.mxu0 %v4612
  %4632 = vmatprep.subr.bf16.mxu0 0
  %4633 = vmatpush1.bf16.msra.mxu0 %v4611
  %4634 = vmatprep.subr.bf16.mxu0 0
  %4635 = vmatpush1.bf16.msra.mxu0 %v4610
  %4636 = vmatprep.subr.bf16.mxu0 0
  %4637 = vmatpush1.bf16.msra.mxu0 %v4609
  %4638 = vmatprep.subr.bf16.mxu0 0
  %4639 = vmatpush1.bf16.msra.mxu0 %v4608
  %4640 = vmatprep.subr.bf16.mxu0 0
  %4641 = vmatpush2.bf16.msra.mxu0 0
  %4642 = vmatprep.subr.bf16.mxu0 0
  %4643 = vmatpush2.bf16.msra.mxu0 0
  %4644 = vmatprep.subr.bf16.mxu0 0
  %4645 = vmatpush2.bf16.msra.mxu0 0
  %4646 = vmatprep.subr.bf16.mxu0 0
  %4647 = vmatpush2.bf16.msra.mxu0 0
  %4648 = vmatprep.subr.bf16.mxu0 0
  %4649 = vmatpush2.bf16.msra.mxu0 0
  %4650 = vmatprep.subr.bf16.mxu0 0
  %4651 = vmatpush2.bf16.msra.mxu0 0
  %4652 = vmatprep.subr.bf16.mxu0 0
  %4653 = vmatpush2.bf16.msra.mxu0 0
  %4654 = vmatprep.subr.bf16.mxu0 0
  %4655 = vmatpush2.bf16.msra.mxu0 0
  %4656 = vmatprep.mubr.bf16.mxu0 0
  %4657 = vmatmul.mubr.bf16.gmra.mxu0 %v4574
  %v4658 = vpop.f32.mrf.mxu0
  %v4659 = vadd.f32 0.0, %v4658
  %v4660 = vpop.f32.mrf.mxu0
  %v4661 = vpop.f32.mrf.mxu0
  %v4662 = vadd.f32 0.0, %v4661
  %v4663 = vpop.f32.mrf.mxu0
  %4664 = vdwg.mxu0
  %v4665 = vadd.f32 %v4533, %v4659
  %v4666 = vadd.f32 %v4534, %v4662
  %s4667 = scalar_lea.vmem %s3, 512
  %v4668 = vld [vmem:[%s4667] sm:$0xf]
  %v4669 = vld [vmem:[%s4667 + $0x4] sm:$0xf]
  %v4670 = vld [vmem:[%s4667 + $0x8] sm:$0xf]
  %v4671 = vld [vmem:[%s4667 + $0xc] sm:$0xf]
  %v4672 = vld [vmem:[%s4667 + $0x10] sm:$0xf]
  %v4673 = vld [vmem:[%s4667 + $0x14] sm:$0xf]
  %v4674 = vld [vmem:[%s4667 + $0x18] sm:$0xf]
  %v4675 = vld [vmem:[%s4667 + $0x1c] sm:$0xf]
  %v4676 = vld [vmem:[%s4667 + $0x20] sm:$0xf]
  %v4677 = vld [vmem:[%s4667 + $0x24] sm:$0xf]
  %v4678 = vld [vmem:[%s4667 + $0x28] sm:$0xf]
  %v4679 = vld [vmem:[%s4667 + $0x2c] sm:$0xf]
  %v4680 = vld [vmem:[%s4667 + $0x30] sm:$0xf]
  %v4681 = vld [vmem:[%s4667 + $0x34] sm:$0xf]
  %v4682 = vld [vmem:[%s4667 + $0x38] sm:$0xf]
  %v4683 = vld [vmem:[%s4667 + $0x3c] sm:$0xf]
  %4684 = vrot.lane.b32.xlu0 %v4566, 112
  %v4685 = vpop.permute.xlu0 %4684
  %4686 = vrot.lane.b32.xlu0 %v4569, 112
  %v4687 = vpop.permute.xlu0 %4686
  %v4688 = vsel %vm1933, %v4685, %v4687
  %v4706 = vunpack.c.l.b16 %v4668
  %v4707 = vunpack.c.l.b16 %v4669
  %v4708 = vunpack.c.l.b16 %v4670
  %v4709 = vunpack.c.l.b16 %v4671
  %v4710 = vunpack.c.l.b16 %v4672
  %v4711 = vunpack.c.l.b16 %v4673
  %v4712 = vunpack.c.l.b16 %v4674
  %v4713 = vunpack.c.l.b16 %v4675
  %v4714 = vunpack.c.l.b16 %v4676
  %v4715 = vunpack.c.l.b16 %v4677
  %v4716 = vunpack.c.l.b16 %v4678
  %v4717 = vunpack.c.l.b16 %v4679
  %v4718 = vunpack.c.l.b16 %v4680
  %v4719 = vunpack.c.l.b16 %v4681
  %v4720 = vunpack.c.l.b16 %v4682
  %v4721 = vunpack.c.l.b16 %v4683
  %v4722 = vpack.c.b16 %v4707, %v4706
  %v4723 = vpack.c.b16 %v4709, %v4708
  %v4724 = vpack.c.b16 %v4711, %v4710
  %v4725 = vpack.c.b16 %v4713, %v4712
  %v4726 = vpack.c.b16 %v4715, %v4714
  %v4727 = vpack.c.b16 %v4717, %v4716
  %v4728 = vpack.c.b16 %v4719, %v4718
  %v4729 = vpack.c.b16 %v4721, %v4720
  %4738 = vmatprep.subr.bf16.mxu0 0
  %4739 = vmatpush1.bf16.msra.mxu0 %v4729
  %4740 = vmatprep.subr.bf16.mxu0 0
  %4741 = vmatpush1.bf16.msra.mxu0 %v4728
  %4742 = vmatprep.subr.bf16.mxu0 0
  %4743 = vmatpush1.bf16.msra.mxu0 %v4727
  %4744 = vmatprep.subr.bf16.mxu0 0
  %4745 = vmatpush1.bf16.msra.mxu0 %v4726
  %4746 = vmatprep.subr.bf16.mxu0 0
  %4747 = vmatpush1.bf16.msra.mxu0 %v4725
  %4748 = vmatprep.subr.bf16.mxu0 0
  %4749 = vmatpush1.bf16.msra.mxu0 %v4724
  %4750 = vmatprep.subr.bf16.mxu0 0
  %4751 = vmatpush1.bf16.msra.mxu0 %v4723
  %4752 = vmatprep.subr.bf16.mxu0 0
  %4753 = vmatpush1.bf16.msra.mxu0 %v4722
  %4754 = vmatprep.subr.bf16.mxu0 0
  %4755 = vmatpush2.bf16.msra.mxu0 0
  %4756 = vmatprep.subr.bf16.mxu0 0
  %4757 = vmatpush2.bf16.msra.mxu0 0
  %4758 = vmatprep.subr.bf16.mxu0 0
  %4759 = vmatpush2.bf16.msra.mxu0 0
  %4760 = vmatprep.subr.bf16.mxu0 0
  %4761 = vmatpush2.bf16.msra.mxu0 0
  %4762 = vmatprep.subr.bf16.mxu0 0
  %4763 = vmatpush2.bf16.msra.mxu0 0
  %4764 = vmatprep.subr.bf16.mxu0 0
  %4765 = vmatpush2.bf16.msra.mxu0 0
  %4766 = vmatprep.subr.bf16.mxu0 0
  %4767 = vmatpush2.bf16.msra.mxu0 0
  %4768 = vmatprep.subr.bf16.mxu0 0
  %4769 = vmatpush2.bf16.msra.mxu0 0
  %4770 = vmatprep.mubr.bf16.mxu0 0
  %4771 = vmatmul.mubr.bf16.gmra.mxu0 %v4688
  %v4772 = vpop.f32.mrf.mxu0
  %v4773 = vadd.f32 0.0, %v4772
  %v4774 = vpop.f32.mrf.mxu0
  %v4775 = vpop.f32.mrf.mxu0
  %v4776 = vadd.f32 0.0, %v4775
  %v4777 = vpop.f32.mrf.mxu0
  %4778 = vdwg.mxu0
  %v4779 = vadd.f32 %v4665, %v4773
  %v4780 = vadd.f32 %v4666, %v4776
  %v4781 = vld [vmem:[#allocation2 + $0x20] sm:$0xfc]
  %v4782 = vld [vmem:[#allocation2 + $0x30] sm:$0xff]
  %v4783 = vld [vmem:[#allocation2 + $0x40] sm:$0x3]
  %v4784 = vpack.c.bf16 %v4782, %v4781
  %v4785 = vpack.c.bf16 %v4783, %v4783
  %v4786 = vld [vmem:[#allocation2 + $0x28] sm:$0xfc]
  %v4787 = vld [vmem:[#allocation2 + $0x38] sm:$0xff]
  %v4788 = vld [vmem:[#allocation2 + $0x48] sm:$0x3]
  %v4789 = vpack.c.bf16 %v4787, %v4786
  %v4790 = vpack.c.bf16 %v4788, %v4788
  %v4795 = vrot.slane %v4784, 1
  %v4796 = vrot.slane %v4785, 1
  %v4797 = vsel %vm593, %v4795, %v4796
  %v4798 = vrot.slane %v4789, 1
  %v4799 = vrot.slane %v4790, 1
  %v4800 = vsel %vm593, %v4798, %v4799
  %4801 = vrot.lane.b32.xlu0 %v4797, 120
  %v4802 = vpop.permute.xlu0 %4801
  %4803 = vrot.lane.b32.xlu0 %v4800, 120
  %v4804 = vpop.permute.xlu0 %4803
  %v4805 = vsel %vm1731, %v4802, %v4804
  %4807 = vmatprep.subr.bf16.mxu0 0
  %4808 = vmatpush1.bf16.msra.mxu0 %v3776
  %4809 = vmatprep.subr.bf16.mxu0 0
  %4810 = vmatpush1.bf16.msra.mxu0 %v3775
  %4811 = vmatprep.subr.bf16.mxu0 0
  %4812 = vmatpush1.bf16.msra.mxu0 %v3774
  %4813 = vmatprep.subr.bf16.mxu0 0
  %4814 = vmatpush1.bf16.msra.mxu0 %v3773
  %4815 = vmatprep.subr.bf16.mxu0 0
  %4816 = vmatpush1.bf16.msra.mxu0 %v3772
  %4817 = vmatprep.subr.bf16.mxu0 0
  %4818 = vmatpush1.bf16.msra.mxu0 %v3771
  %4819 = vmatprep.subr.bf16.mxu0 0
  %4820 = vmatpush1.bf16.msra.mxu0 %v3770
  %4821 = vmatprep.subr.bf16.mxu0 0
  %4822 = vmatpush1.bf16.msra.mxu0 %v3769
  %4823 = vmatprep.subr.bf16.mxu0 0
  %4824 = vmatpush2.bf16.msra.mxu0 0
  %4825 = vmatprep.subr.bf16.mxu0 0
  %4826 = vmatpush2.bf16.msra.mxu0 0
  %4827 = vmatprep.subr.bf16.mxu0 0
  %4828 = vmatpush2.bf16.msra.mxu0 0
  %4829 = vmatprep.subr.bf16.mxu0 0
  %4830 = vmatpush2.bf16.msra.mxu0 0
  %4831 = vmatprep.subr.bf16.mxu0 0
  %4832 = vmatpush2.bf16.msra.mxu0 0
  %4833 = vmatprep.subr.bf16.mxu0 0
  %4834 = vmatpush2.bf16.msra.mxu0 0
  %4835 = vmatprep.subr.bf16.mxu0 0
  %4836 = vmatpush2.bf16.msra.mxu0 0
  %4837 = vmatprep.subr.bf16.mxu0 0
  %4838 = vmatpush2.bf16.msra.mxu0 0
  %4839 = vmatprep.mubr.bf16.mxu0 0
  %4840 = vmatmul.mubr.bf16.gmra.mxu0 %v4805
  %v4841 = vpop.f32.mrf.mxu0
  %v4842 = vadd.f32 0.0, %v4841
  %v4843 = vpop.f32.mrf.mxu0
  %v4844 = vpop.f32.mrf.mxu0
  %v4845 = vadd.f32 0.0, %v4844
  %v4846 = vpop.f32.mrf.mxu0
  %4847 = vdwg.mxu0
  %4849 = vmatprep.subr.bf16.mxu0 0
  %4850 = vmatpush1.bf16.msra.mxu0 %v3865
  %4851 = vmatprep.subr.bf16.mxu0 0
  %4852 = vmatpush1.bf16.msra.mxu0 %v3864
  %4853 = vmatprep.subr.bf16.mxu0 0
  %4854 = vmatpush1.bf16.msra.mxu0 %v3863
  %4855 = vmatprep.subr.bf16.mxu0 0
  %4856 = vmatpush1.bf16.msra.mxu0 %v3862
  %4857 = vmatprep.subr.bf16.mxu0 0
  %4858 = vmatpush1.bf16.msra.mxu0 %v3861
  %4859 = vmatprep.subr.bf16.mxu0 0
  %4860 = vmatpush1.bf16.msra.mxu0 %v3860
  %4861 = vmatprep.subr.bf16.mxu0 0
  %4862 = vmatpush1.bf16.msra.mxu0 %v3859
  %4863 = vmatprep.subr.bf16.mxu0 0
  %4864 = vmatpush1.bf16.msra.mxu0 %v3858
  %4865 = vmatprep.subr.bf16.mxu0 0
  %4866 = vmatpush2.bf16.msra.mxu0 0
  %4867 = vmatprep.subr.bf16.mxu0 0
  %4868 = vmatpush2.bf16.msra.mxu0 0
  %4869 = vmatprep.subr.bf16.mxu0 0
  %4870 = vmatpush2.bf16.msra.mxu0 0
  %4871 = vmatprep.subr.bf16.mxu0 0
  %4872 = vmatpush2.bf16.msra.mxu0 0
  %4873 = vmatprep.subr.bf16.mxu0 0
  %4874 = vmatpush2.bf16.msra.mxu0 0
  %4875 = vmatprep.subr.bf16.mxu0 0
  %4876 = vmatpush2.bf16.msra.mxu0 0
  %4877 = vmatprep.subr.bf16.mxu0 0
  %4878 = vmatpush2.bf16.msra.mxu0 0
  %4879 = vmatprep.subr.bf16.mxu0 0
  %4880 = vmatpush2.bf16.msra.mxu0 0
  %4881 = vmatprep.mubr.bf16.mxu0 0
  %4882 = vmatmul.mubr.bf16.gmra.mxu0 %v4797
  %v4883 = vpop.f32.mrf.mxu0
  %v4884 = vadd.f32 %v4842, %v4883
  %v4885 = vpop.f32.mrf.mxu0
  %v4886 = vpop.f32.mrf.mxu0
  %v4887 = vadd.f32 %v4845, %v4886
  %v4888 = vpop.f32.mrf.mxu0
  %4889 = vdwg.mxu0
  %4890 = vrot.lane.b32.xlu0 %v4797, 112
  %v4891 = vpop.permute.xlu0 %4890
  %4892 = vrot.lane.b32.xlu0 %v4800, 112
  %v4893 = vpop.permute.xlu0 %4892
  %v4894 = vsel %vm1933, %v4891, %v4893
  %4896 = vmatprep.subr.bf16.mxu0 0
  %4897 = vmatpush1.bf16.msra.mxu0 %v3977
  %4898 = vmatprep.subr.bf16.mxu0 0
  %4899 = vmatpush1.bf16.msra.mxu0 %v3976
  %4900 = vmatprep.subr.bf16.mxu0 0
  %4901 = vmatpush1.bf16.msra.mxu0 %v3975
  %4902 = vmatprep.subr.bf16.mxu0 0
  %4903 = vmatpush1.bf16.msra.mxu0 %v3974
  %4904 = vmatprep.subr.bf16.mxu0 0
  %4905 = vmatpush1.bf16.msra.mxu0 %v3973
  %4906 = vmatprep.subr.bf16.mxu0 0
  %4907 = vmatpush1.bf16.msra.mxu0 %v3972
  %4908 = vmatprep.subr.bf16.mxu0 0
  %4909 = vmatpush1.bf16.msra.mxu0 %v3971
  %4910 = vmatprep.subr.bf16.mxu0 0
  %4911 = vmatpush1.bf16.msra.mxu0 %v3970
  %4912 = vmatprep.subr.bf16.mxu0 0
  %4913 = vmatpush2.bf16.msra.mxu0 0
  %4914 = vmatprep.subr.bf16.mxu0 0
  %4915 = vmatpush2.bf16.msra.mxu0 0
  %4916 = vmatprep.subr.bf16.mxu0 0
  %4917 = vmatpush2.bf16.msra.mxu0 0
  %4918 = vmatprep.subr.bf16.mxu0 0
  %4919 = vmatpush2.bf16.msra.mxu0 0
  %4920 = vmatprep.subr.bf16.mxu0 0
  %4921 = vmatpush2.bf16.msra.mxu0 0
  %4922 = vmatprep.subr.bf16.mxu0 0
  %4923 = vmatpush2.bf16.msra.mxu0 0
  %4924 = vmatprep.subr.bf16.mxu0 0
  %4925 = vmatpush2.bf16.msra.mxu0 0
  %4926 = vmatprep.subr.bf16.mxu0 0
  %4927 = vmatpush2.bf16.msra.mxu0 0
  %4928 = vmatprep.mubr.bf16.mxu0 0
  %4929 = vmatmul.mubr.bf16.gmra.mxu0 %v4894
  %v4930 = vpop.f32.mrf.mxu0
  %v4931 = vadd.f32 0.0, %v4930
  %v4932 = vpop.f32.mrf.mxu0
  %v4933 = vpop.f32.mrf.mxu0
  %v4934 = vadd.f32 0.0, %v4933
  %v4935 = vpop.f32.mrf.mxu0
  %4936 = vdwg.mxu0
  %v4937 = vadd.f32 %v4884, %v4931
  %v4938 = vadd.f32 %v4887, %v4934
  %v4939 = vld [vmem:[#allocation2 + $0x20] sm:$0xf8]
  %v4940 = vld [vmem:[#allocation2 + $0x40] sm:$0x7]
  %v4941 = vpack.c.bf16 %v4782, %v4939
  %v4942 = vpack.c.bf16 %v4940, %v4940
  %v4944 = vshrl.u32 %v4941, 16
  %v4946 = vrot.slane %v4944, 1
  %v4947 = vshll.u32 %v4941, 16
  %v4949 = vrot.slane %v4947, 2
  %v4950 = vor.u32 %v4946, %v4949
  %v4952 = vshrl.u32 %v4942, 16
  %v4954 = vrot.slane %v4952, 1
  %v4955 = vshll.u32 %v4942, 16
  %v4957 = vrot.slane %v4955, 2
  %v4958 = vor.u32 %v4954, %v4957
  %v4959 = vsel %vm985, %v4950, %v4958
  %4961 = vmatprep.subr.bf16.mxu0 0
  %4962 = vmatpush1.bf16.msra.mxu0 %v4103
  %4963 = vmatprep.subr.bf16.mxu0 0
  %4964 = vmatpush1.bf16.msra.mxu0 %v4102
  %4965 = vmatprep.subr.bf16.mxu0 0
  %4966 = vmatpush1.bf16.msra.mxu0 %v4101
  %4967 = vmatprep.subr.bf16.mxu0 0
  %4968 = vmatpush1.bf16.msra.mxu0 %v4100
  %4969 = vmatprep.subr.bf16.mxu0 0
  %4970 = vmatpush1.bf16.msra.mxu0 %v4099
  %4971 = vmatprep.subr.bf16.mxu0 0
  %4972 = vmatpush1.bf16.msra.mxu0 %v4098
  %4973 = vmatprep.subr.bf16.mxu0 0
  %4974 = vmatpush1.bf16.msra.mxu0 %v4097
  %4975 = vmatprep.subr.bf16.mxu0 0
  %4976 = vmatpush1.bf16.msra.mxu0 %v4096
  %4977 = vmatprep.subr.bf16.mxu0 0
  %4978 = vmatpush2.bf16.msra.mxu0 0
  %4979 = vmatprep.subr.bf16.mxu0 0
  %4980 = vmatpush2.bf16.msra.mxu0 0
  %4981 = vmatprep.subr.bf16.mxu0 0
  %4982 = vmatpush2.bf16.msra.mxu0 0
  %4983 = vmatprep.subr.bf16.mxu0 0
  %4984 = vmatpush2.bf16.msra.mxu0 0
  %4985 = vmatprep.subr.bf16.mxu0 0
  %4986 = vmatpush2.bf16.msra.mxu0 0
  %4987 = vmatprep.subr.bf16.mxu0 0
  %4988 = vmatpush2.bf16.msra.mxu0 0
  %4989 = vmatprep.subr.bf16.mxu0 0
  %4990 = vmatpush2.bf16.msra.mxu0 0
  %4991 = vmatprep.subr.bf16.mxu0 0
  %4992 = vmatpush2.bf16.msra.mxu0 0
  %4993 = vmatprep.mubr.bf16.mxu0 0
  %4994 = vmatmul.mubr.bf16.gmra.mxu0 %v4959
  %v4995 = vpop.f32.mrf.mxu0
  %v4996 = vadd.f32 0.0, %v4995
  %v4997 = vpop.f32.mrf.mxu0
  %v4998 = vpop.f32.mrf.mxu0
  %v4999 = vadd.f32 0.0, %v4998
  %v5000 = vpop.f32.mrf.mxu0
  %5001 = vdwg.mxu0
  %v5002 = vadd.f32 %v4937, %v4996
  %v5003 = vadd.f32 %v4938, %v4999
  %v5004 = vld [vmem:[#allocation2 + $0x20] sm:$0xf8]
  %v5005 = vld [vmem:[#allocation2 + $0x28] sm:$0xf8]
  %v5006 = vld [vmem:[#allocation2 + $0x40] sm:$0x7]
  %v5007 = vld [vmem:[#allocation2 + $0x48] sm:$0x7]
  %v5008 = vpack.c.bf16 %v4782, %v5004
  %v5009 = vpack.c.bf16 %v4787, %v5005
  %v5010 = vpack.c.bf16 %v5006, %v5006
  %v5011 = vpack.c.bf16 %v5007, %v5007
  %v5013 = vshrl.u32 %v5008, 16
  %v5015 = vrot.slane %v5013, 1
  %v5016 = vshll.u32 %v5008, 16
  %v5018 = vrot.slane %v5016, 2
  %v5019 = vor.u32 %v5015, %v5018
  %v5021 = vshrl.u32 %v5010, 16
  %v5023 = vrot.slane %v5021, 1
  %v5024 = vshll.u32 %v5010, 16
  %v5026 = vrot.slane %v5024, 2
  %v5027 = vor.u32 %v5023, %v5026
  %v5028 = vsel %vm985, %v5019, %v5027
  %v5030 = vshrl.u32 %v5009, 16
  %v5032 = vrot.slane %v5030, 1
  %v5033 = vshll.u32 %v5009, 16
  %v5035 = vrot.slane %v5033, 2
  %v5036 = vor.u32 %v5032, %v5035
  %v5038 = vshrl.u32 %v5011, 16
  %v5040 = vrot.slane %v5038, 1
  %v5041 = vshll.u32 %v5011, 16
  %v5043 = vrot.slane %v5041, 2
  %v5044 = vor.u32 %v5040, %v5043
  %v5045 = vsel %vm985, %v5036, %v5044
  %5046 = vrot.lane.b32.xlu0 %v5028, 120
  %v5047 = vpop.permute.xlu0 %5046
  %5048 = vrot.lane.b32.xlu0 %v5045, 120
  %v5049 = vpop.permute.xlu0 %5048
  %v5050 = vsel %vm1731, %v5047, %v5049
  %5052 = vmatprep.subr.bf16.mxu0 0
  %5053 = vmatpush1.bf16.msra.mxu0 %v4251
  %5054 = vmatprep.subr.bf16.mxu0 0
  %5055 = vmatpush1.bf16.msra.mxu0 %v4250
  %5056 = vmatprep.subr.bf16.mxu0 0
  %5057 = vmatpush1.bf16.msra.mxu0 %v4249
  %5058 = vmatprep.subr.bf16.mxu0 0
  %5059 = vmatpush1.bf16.msra.mxu0 %v4248
  %5060 = vmatprep.subr.bf16.mxu0 0
  %5061 = vmatpush1.bf16.msra.mxu0 %v4247
  %5062 = vmatprep.subr.bf16.mxu0 0
  %5063 = vmatpush1.bf16.msra.mxu0 %v4246
  %5064 = vmatprep.subr.bf16.mxu0 0
  %5065 = vmatpush1.bf16.msra.mxu0 %v4245
  %5066 = vmatprep.subr.bf16.mxu0 0
  %5067 = vmatpush1.bf16.msra.mxu0 %v4244
  %5068 = vmatprep.subr.bf16.mxu0 0
  %5069 = vmatpush2.bf16.msra.mxu0 0
  %5070 = vmatprep.subr.bf16.mxu0 0
  %5071 = vmatpush2.bf16.msra.mxu0 0
  %5072 = vmatprep.subr.bf16.mxu0 0
  %5073 = vmatpush2.bf16.msra.mxu0 0
  %5074 = vmatprep.subr.bf16.mxu0 0
  %5075 = vmatpush2.bf16.msra.mxu0 0
  %5076 = vmatprep.subr.bf16.mxu0 0
  %5077 = vmatpush2.bf16.msra.mxu0 0
  %5078 = vmatprep.subr.bf16.mxu0 0
  %5079 = vmatpush2.bf16.msra.mxu0 0
  %5080 = vmatprep.subr.bf16.mxu0 0
  %5081 = vmatpush2.bf16.msra.mxu0 0
  %5082 = vmatprep.subr.bf16.mxu0 0
  %5083 = vmatpush2.bf16.msra.mxu0 0
  %5084 = vmatprep.mubr.bf16.mxu0 0
  %5085 = vmatmul.mubr.bf16.gmra.mxu0 %v5050
  %v5086 = vpop.f32.mrf.mxu0
  %v5087 = vadd.f32 0.0, %v5086
  %v5088 = vpop.f32.mrf.mxu0
  %v5089 = vpop.f32.mrf.mxu0
  %v5090 = vadd.f32 0.0, %v5089
  %v5091 = vpop.f32.mrf.mxu0
  %5092 = vdwg.mxu0
  %v5093 = vadd.f32 %v5002, %v5087
  %v5094 = vadd.f32 %v5003, %v5090
  %5095 = vrot.lane.b32.xlu0 %v5028, 112
  %v5096 = vpop.permute.xlu0 %5095
  %5097 = vrot.lane.b32.xlu0 %v5045, 112
  %v5098 = vpop.permute.xlu0 %5097
  %v5099 = vsel %vm1933, %v5096, %v5098
  %5101 = vmatprep.subr.bf16.mxu0 0
  %5102 = vmatpush1.bf16.msra.mxu0 %v4365
  %5103 = vmatprep.subr.bf16.mxu0 0
  %5104 = vmatpush1.bf16.msra.mxu0 %v4364
  %5105 = vmatprep.subr.bf16.mxu0 0
  %5106 = vmatpush1.bf16.msra.mxu0 %v4363
  %5107 = vmatprep.subr.bf16.mxu0 0
  %5108 = vmatpush1.bf16.msra.mxu0 %v4362
  %5109 = vmatprep.subr.bf16.mxu0 0
  %5110 = vmatpush1.bf16.msra.mxu0 %v4361
  %5111 = vmatprep.subr.bf16.mxu0 0
  %5112 = vmatpush1.bf16.msra.mxu0 %v4360
  %5113 = vmatprep.subr.bf16.mxu0 0
  %5114 = vmatpush1.bf16.msra.mxu0 %v4359
  %5115 = vmatprep.subr.bf16.mxu0 0
  %5116 = vmatpush1.bf16.msra.mxu0 %v4358
  %5117 = vmatprep.subr.bf16.mxu0 0
  %5118 = vmatpush2.bf16.msra.mxu0 0
  %5119 = vmatprep.subr.bf16.mxu0 0
  %5120 = vmatpush2.bf16.msra.mxu0 0
  %5121 = vmatprep.subr.bf16.mxu0 0
  %5122 = vmatpush2.bf16.msra.mxu0 0
  %5123 = vmatprep.subr.bf16.mxu0 0
  %5124 = vmatpush2.bf16.msra.mxu0 0
  %5125 = vmatprep.subr.bf16.mxu0 0
  %5126 = vmatpush2.bf16.msra.mxu0 0
  %5127 = vmatprep.subr.bf16.mxu0 0
  %5128 = vmatpush2.bf16.msra.mxu0 0
  %5129 = vmatprep.subr.bf16.mxu0 0
  %5130 = vmatpush2.bf16.msra.mxu0 0
  %5131 = vmatprep.subr.bf16.mxu0 0
  %5132 = vmatpush2.bf16.msra.mxu0 0
  %5133 = vmatprep.mubr.bf16.mxu0 0
  %5134 = vmatmul.mubr.bf16.gmra.mxu0 %v5099
  %v5135 = vpop.f32.mrf.mxu0
  %v5136 = vadd.f32 0.0, %v5135
  %v5137 = vpop.f32.mrf.mxu0
  %v5138 = vpop.f32.mrf.mxu0
  %v5139 = vadd.f32 0.0, %v5138
  %v5140 = vpop.f32.mrf.mxu0
  %5141 = vdwg.mxu0
  %v5142 = vadd.f32 %v5093, %v5136
  %v5143 = vadd.f32 %v5094, %v5139
  %v5144 = vld [vmem:[#allocation2 + $0x20] sm:$0xf0]
  %v5145 = vld [vmem:[#allocation2 + $0x40] sm:$0xf]
  %v5146 = vpack.c.bf16 %v4782, %v5144
  %v5147 = vpack.c.bf16 %v5145, %v5145
  %v5150 = vrot.slane %v5146, 2
  %v5151 = vrot.slane %v5147, 2
  %v5152 = vsel %vm1149, %v5150, %v5151
  %5154 = vmatprep.subr.bf16.mxu0 0
  %5155 = vmatpush1.bf16.msra.mxu0 %v4483
  %5156 = vmatprep.subr.bf16.mxu0 0
  %5157 = vmatpush1.bf16.msra.mxu0 %v4482
  %5158 = vmatprep.subr.bf16.mxu0 0
  %5159 = vmatpush1.bf16.msra.mxu0 %v4481
  %5160 = vmatprep.subr.bf16.mxu0 0
  %5161 = vmatpush1.bf16.msra.mxu0 %v4480
  %5162 = vmatprep.subr.bf16.mxu0 0
  %5163 = vmatpush1.bf16.msra.mxu0 %v4479
  %5164 = vmatprep.subr.bf16.mxu0 0
  %5165 = vmatpush1.bf16.msra.mxu0 %v4478
  %5166 = vmatprep.subr.bf16.mxu0 0
  %5167 = vmatpush1.bf16.msra.mxu0 %v4477
  %5168 = vmatprep.subr.bf16.mxu0 0
  %5169 = vmatpush1.bf16.msra.mxu0 %v4476
  %5170 = vmatprep.subr.bf16.mxu0 0
  %5171 = vmatpush2.bf16.msra.mxu0 0
  %5172 = vmatprep.subr.bf16.mxu0 0
  %5173 = vmatpush2.bf16.msra.mxu0 0
  %5174 = vmatprep.subr.bf16.mxu0 0
  %5175 = vmatpush2.bf16.msra.mxu0 0
  %5176 = vmatprep.subr.bf16.mxu0 0
  %5177 = vmatpush2.bf16.msra.mxu0 0
  %5178 = vmatprep.subr.bf16.mxu0 0
  %5179 = vmatpush2.bf16.msra.mxu0 0
  %5180 = vmatprep.subr.bf16.mxu0 0
  %5181 = vmatpush2.bf16.msra.mxu0 0
  %5182 = vmatprep.subr.bf16.mxu0 0
  %5183 = vmatpush2.bf16.msra.mxu0 0
  %5184 = vmatprep.subr.bf16.mxu0 0
  %5185 = vmatpush2.bf16.msra.mxu0 0
  %5186 = vmatprep.mubr.bf16.mxu0 0
  %5187 = vmatmul.mubr.bf16.gmra.mxu0 %v5152
  %v5188 = vpop.f32.mrf.mxu0
  %v5189 = vadd.f32 0.0, %v5188
  %v5190 = vpop.f32.mrf.mxu0
  %v5191 = vpop.f32.mrf.mxu0
  %v5192 = vadd.f32 0.0, %v5191
  %v5193 = vpop.f32.mrf.mxu0
  %5194 = vdwg.mxu0
  %v5195 = vadd.f32 %v5142, %v5189
  %v5196 = vadd.f32 %v5143, %v5192
  %v5197 = vld [vmem:[#allocation2 + $0x20] sm:$0xf0]
  %v5198 = vld [vmem:[#allocation2 + $0x28] sm:$0xf0]
  %v5199 = vld [vmem:[#allocation2 + $0x40] sm:$0xf]
  %v5200 = vld [vmem:[#allocation2 + $0x48] sm:$0xf]
  %v5201 = vpack.c.bf16 %v4782, %v5197
  %v5202 = vpack.c.bf16 %v4787, %v5198
  %v5203 = vpack.c.bf16 %v5199, %v5199
  %v5204 = vpack.c.bf16 %v5200, %v5200
  %v5209 = vrot.slane %v5201, 2
  %v5210 = vrot.slane %v5203, 2
  %v5211 = vsel %vm1149, %v5209, %v5210
  %v5212 = vrot.slane %v5202, 2
  %v5213 = vrot.slane %v5204, 2
  %v5214 = vsel %vm1149, %v5212, %v5213
  %5215 = vrot.lane.b32.xlu0 %v5211, 120
  %v5216 = vpop.permute.xlu0 %5215
  %5217 = vrot.lane.b32.xlu0 %v5214, 120
  %v5218 = vpop.permute.xlu0 %5217
  %v5219 = vsel %vm1731, %v5216, %v5218
  %5221 = vmatprep.subr.bf16.mxu0 0
  %5222 = vmatpush1.bf16.msra.mxu0 %v4615
  %5223 = vmatprep.subr.bf16.mxu0 0
  %5224 = vmatpush1.bf16.msra.mxu0 %v4614
  %5225 = vmatprep.subr.bf16.mxu0 0
  %5226 = vmatpush1.bf16.msra.mxu0 %v4613
  %5227 = vmatprep.subr.bf16.mxu0 0
  %5228 = vmatpush1.bf16.msra.mxu0 %v4612
  %5229 = vmatprep.subr.bf16.mxu0 0
  %5230 = vmatpush1.bf16.msra.mxu0 %v4611
  %5231 = vmatprep.subr.bf16.mxu0 0
  %5232 = vmatpush1.bf16.msra.mxu0 %v4610
  %5233 = vmatprep.subr.bf16.mxu0 0
  %5234 = vmatpush1.bf16.msra.mxu0 %v4609
  %5235 = vmatprep.subr.bf16.mxu0 0
  %5236 = vmatpush1.bf16.msra.mxu0 %v4608
  %5237 = vmatprep.subr.bf16.mxu0 0
  %5238 = vmatpush2.bf16.msra.mxu0 0
  %5239 = vmatprep.subr.bf16.mxu0 0
  %5240 = vmatpush2.bf16.msra.mxu0 0
  %5241 = vmatprep.subr.bf16.mxu0 0
  %5242 = vmatpush2.bf16.msra.mxu0 0
  %5243 = vmatprep.subr.bf16.mxu0 0
  %5244 = vmatpush2.bf16.msra.mxu0 0
  %5245 = vmatprep.subr.bf16.mxu0 0
  %5246 = vmatpush2.bf16.msra.mxu0 0
  %5247 = vmatprep.subr.bf16.mxu0 0
  %5248 = vmatpush2.bf16.msra.mxu0 0
  %5249 = vmatprep.subr.bf16.mxu0 0
  %5250 = vmatpush2.bf16.msra.mxu0 0
  %5251 = vmatprep.subr.bf16.mxu0 0
  %5252 = vmatpush2.bf16.msra.mxu0 0
  %5253 = vmatprep.mubr.bf16.mxu0 0
  %5254 = vmatmul.mubr.bf16.gmra.mxu0 %v5219
  %v5255 = vpop.f32.mrf.mxu0
  %v5256 = vadd.f32 0.0, %v5255
  %v5257 = vpop.f32.mrf.mxu0
  %v5258 = vpop.f32.mrf.mxu0
  %v5259 = vadd.f32 0.0, %v5258
  %v5260 = vpop.f32.mrf.mxu0
  %5261 = vdwg.mxu0
  %v5262 = vadd.f32 %v5195, %v5256
  %v5263 = vadd.f32 %v5196, %v5259
  %5264 = vrot.lane.b32.xlu0 %v5211, 112
  %v5265 = vpop.permute.xlu0 %5264
  %5266 = vrot.lane.b32.xlu0 %v5214, 112
  %v5267 = vpop.permute.xlu0 %5266
  %v5268 = vsel %vm1933, %v5265, %v5267
  %5270 = vmatprep.subr.bf16.mxu0 0
  %5271 = vmatpush1.bf16.msra.mxu0 %v4729
  %5272 = vmatprep.subr.bf16.mxu0 0
  %5273 = vmatpush1.bf16.msra.mxu0 %v4728
  %5274 = vmatprep.subr.bf16.mxu0 0
  %5275 = vmatpush1.bf16.msra.mxu0 %v4727
  %5276 = vmatprep.subr.bf16.mxu0 0
  %5277 = vmatpush1.bf16.msra.mxu0 %v4726
  %5278 = vmatprep.subr.bf16.mxu0 0
  %5279 = vmatpush1.bf16.msra.mxu0 %v4725
  %5280 = vmatprep.subr.bf16.mxu0 0
  %5281 = vmatpush1.bf16.msra.mxu0 %v4724
  %5282 = vmatprep.subr.bf16.mxu0 0
  %5283 = vmatpush1.bf16.msra.mxu0 %v4723
  %5284 = vmatprep.subr.bf16.mxu0 0
  %5285 = vmatpush1.bf16.msra.mxu0 %v4722
  %5286 = vmatprep.subr.bf16.mxu0 0
  %5287 = vmatpush2.bf16.msra.mxu0 0
  %5288 = vmatprep.subr.bf16.mxu0 0
  %5289 = vmatpush2.bf16.msra.mxu0 0
  %5290 = vmatprep.subr.bf16.mxu0 0
  %5291 = vmatpush2.bf16.msra.mxu0 0
  %5292 = vmatprep.subr.bf16.mxu0 0
  %5293 = vmatpush2.bf16.msra.mxu0 0
  %5294 = vmatprep.subr.bf16.mxu0 0
  %5295 = vmatpush2.bf16.msra.mxu0 0
  %5296 = vmatprep.subr.bf16.mxu0 0
  %5297 = vmatpush2.bf16.msra.mxu0 0
  %5298 = vmatprep.subr.bf16.mxu0 0
  %5299 = vmatpush2.bf16.msra.mxu0 0
  %5300 = vmatprep.subr.bf16.mxu0 0
  %5301 = vmatpush2.bf16.msra.mxu0 0
  %5302 = vmatprep.mubr.bf16.mxu0 0
  %5303 = vmatmul.mubr.bf16.gmra.mxu0 %v5268
  %v5304 = vpop.f32.mrf.mxu0
  %v5305 = vadd.f32 0.0, %v5304
  %v5306 = vpop.f32.mrf.mxu0
  %v5307 = vpop.f32.mrf.mxu0
  %v5308 = vadd.f32 0.0, %v5307
  %v5309 = vpop.f32.mrf.mxu0
  %5310 = vdwg.mxu0
  %v5311 = vadd.f32 %v5262, %v5305
  %v5312 = vadd.f32 %v5263, %v5308
  %v5313 = vadd.f32 %v4779, %v4780
  %v5314 = vadd.f32 %v5313, %v5311
  %v5315 = vadd.f32 %v5314, %v5312
  %v5316 = vrot.slane %v5315, 4
  %v5317 = vadd.f32 %v5315, %v5316
  %v5318 = vrot.slane %v5317, 2
  %v5319 = vadd.f32 %v5317, %v5318
  %v5320 = vrot.slane %v5319, 1
  %v5321 = vadd.f32 %v5319, %v5320
  %5322 = vmatprep.subr.mxu0 0.0
  %5323 = vmatpush1.msra.mxu0 %v57
  %5324 = vmatprep.subr.mxu0 0.0
  %5325 = vmatpush1.msra.mxu0 %v56
  %5326 = vmatprep.subr.mxu0 0.0
  %5327 = vmatpush1.msra.mxu0 %v55
  %5328 = vmatprep.subr.mxu0 0.0
  %5329 = vmatpush1.msra.mxu0 %v54
  %5330 = vmatprep.subr.mxu0 0.0
  %5331 = vmatpush1.msra.mxu0 %v53
  %5332 = vmatprep.subr.mxu0 0.0
  %5333 = vmatpush1.msra.mxu0 %v52
  %5334 = vmatprep.subr.mxu0 0.0
  %5335 = vmatpush1.msra.mxu0 %v51
  %5336 = vmatprep.subr.mxu0 0.0
  %5337 = vmatpush1.msra.mxu0 %v50
  %5338 = vmatprep.subr.mxu0 0.0
  %5339 = vmatpush1.msra.mxu0 %v49
  %5340 = vmatprep.subr.mxu0 0.0
  %5341 = vmatpush1.msra.mxu0 %v48
  %5342 = vmatprep.subr.mxu0 0.0
  %5343 = vmatpush1.msra.mxu0 %v47
  %5344 = vmatprep.subr.mxu0 0.0
  %5345 = vmatpush1.msra.mxu0 %v46
  %5346 = vmatprep.subr.mxu0 0.0
  %5347 = vmatpush1.msra.mxu0 %v45
  %5348 = vmatprep.subr.mxu0 0.0
  %5349 = vmatpush1.msra.mxu0 %v44
  %5350 = vmatprep.subr.mxu0 0.0
  %5351 = vmatpush1.msra.mxu0 %v43
  %5352 = vmatprep.subr.mxu0 0.0
  %5353 = vmatpush1.msra.mxu0 %v42
  %5354 = vmatprep.subr.mxu0 0.0
  %5355 = vmatpush2.msra.mxu0 0.0
  %5356 = vmatprep.subr.mxu0 0.0
  %5357 = vmatpush2.msra.mxu0 0.0
  %5358 = vmatprep.subr.mxu0 0.0
  %5359 = vmatpush2.msra.mxu0 0.0
  %5360 = vmatprep.subr.mxu0 0.0
  %5361 = vmatpush2.msra.mxu0 0.0
  %5362 = vmatprep.subr.mxu0 0.0
  %5363 = vmatpush2.msra.mxu0 0.0
  %5364 = vmatprep.subr.mxu0 0.0
  %5365 = vmatpush2.msra.mxu0 0.0
  %5366 = vmatprep.subr.mxu0 0.0
  %5367 = vmatpush2.msra.mxu0 0.0
  %5368 = vmatprep.subr.mxu0 0.0
  %5369 = vmatpush2.msra.mxu0 0.0
  %5370 = vmatprep.subr.mxu0 0.0
  %5371 = vmatpush2.msra.mxu0 0.0
  %5372 = vmatprep.subr.mxu0 0.0
  %5373 = vmatpush2.msra.mxu0 0.0
  %5374 = vmatprep.subr.mxu0 0.0
  %5375 = vmatpush2.msra.mxu0 0.0
  %5376 = vmatprep.subr.mxu0 0.0
  %5377 = vmatpush2.msra.mxu0 0.0
  %5378 = vmatprep.subr.mxu0 0.0
  %5379 = vmatpush2.msra.mxu0 0.0
  %5380 = vmatprep.subr.mxu0 0.0
  %5381 = vmatpush2.msra.mxu0 0.0
  %5382 = vmatprep.subr.mxu0 0.0
  %5383 = vmatpush2.msra.mxu0 0.0
  %5384 = vmatprep.subr.mxu0 0.0
  %5385 = vmatpush2.msra.mxu0 0.0
  %5386 = vmatprep.mubr.f32.mxu0 0.0
  %5387 = vmatmul.mubr.f32.gmra.mxu0 %v5321
  %v5388 = vpop.f32.mrf.mxu0
  %v5389 = vadd.f32 0.0, %v5388
  %v5390 = vpop.f32.mrf.mxu0
  %5391 = vdwg.mxu0
  %v5392 = vmul.f32 %v4779, %v4779
  %v5393 = vmul.f32 %v4780, %v4780
  %v5394 = vmul.f32 %v5311, %v5311
  %v5395 = vmul.f32 %v5312, %v5312
  %v5396 = vadd.f32 %v5392, %v5393
  %v5397 = vadd.f32 %v5396, %v5394
  %v5398 = vadd.f32 %v5397, %v5395
  %v5399 = vrot.slane %v5398, 4
  %v5400 = vadd.f32 %v5398, %v5399
  %v5401 = vrot.slane %v5400, 2
  %v5402 = vadd.f32 %v5400, %v5401
  %v5403 = vrot.slane %v5402, 1
  %v5404 = vadd.f32 %v5402, %v5403
  %5405 = vmatprep.subr.mxu0 0.0
  %5406 = vmatpush1.msra.mxu0 %v57
  %5407 = vmatprep.subr.mxu0 0.0
  %5408 = vmatpush1.msra.mxu0 %v56
  %5409 = vmatprep.subr.mxu0 0.0
  %5410 = vmatpush1.msra.mxu0 %v55
  %5411 = vmatprep.subr.mxu0 0.0
  %5412 = vmatpush1.msra.mxu0 %v54
  %5413 = vmatprep.subr.mxu0 0.0
  %5414 = vmatpush1.msra.mxu0 %v53
  %5415 = vmatprep.subr.mxu0 0.0
  %5416 = vmatpush1.msra.mxu0 %v52
  %5417 = vmatprep.subr.mxu0 0.0
  %5418 = vmatpush1.msra.mxu0 %v51
  %5419 = vmatprep.subr.mxu0 0.0
  %5420 = vmatpush1.msra.mxu0 %v50
  %5421 = vmatprep.subr.mxu0 0.0
  %5422 = vmatpush1.msra.mxu0 %v49
  %5423 = vmatprep.subr.mxu0 0.0
  %5424 = vmatpush1.msra.mxu0 %v48
  %5425 = vmatprep.subr.mxu0 0.0
  %5426 = vmatpush1.msra.mxu0 %v47
  %5427 = vmatprep.subr.mxu0 0.0
  %5428 = vmatpush1.msra.mxu0 %v46
  %5429 = vmatprep.subr.mxu0 0.0
  %5430 = vmatpush1.msra.mxu0 %v45
  %5431 = vmatprep.subr.mxu0 0.0
  %5432 = vmatpush1.msra.mxu0 %v44
  %5433 = vmatprep.subr.mxu0 0.0
  %5434 = vmatpush1.msra.mxu0 %v43
  %5435 = vmatprep.subr.mxu0 0.0
  %5436 = vmatpush1.msra.mxu0 %v42
  %5437 = vmatprep.subr.mxu0 0.0
  %5438 = vmatpush2.msra.mxu0 0.0
  %5439 = vmatprep.subr.mxu0 0.0
  %5440 = vmatpush2.msra.mxu0 0.0
  %5441 = vmatprep.subr.mxu0 0.0
  %5442 = vmatpush2.msra.mxu0 0.0
  %5443 = vmatprep.subr.mxu0 0.0
  %5444 = vmatpush2.msra.mxu0 0.0
  %5445 = vmatprep.subr.mxu0 0.0
  %5446 = vmatpush2.msra.mxu0 0.0
  %5447 = vmatprep.subr.mxu0 0.0
  %5448 = vmatpush2.msra.mxu0 0.0
  %5449 = vmatprep.subr.mxu0 0.0
  %5450 = vmatpush2.msra.mxu0 0.0
  %5451 = vmatprep.subr.mxu0 0.0
  %5452 = vmatpush2.msra.mxu0 0.0
  %5453 = vmatprep.subr.mxu0 0.0
  %5454 = vmatpush2.msra.mxu0 0.0
  %5455 = vmatprep.subr.mxu0 0.0
  %5456 = vmatpush2.msra.mxu0 0.0
  %5457 = vmatprep.subr.mxu0 0.0
  %5458 = vmatpush2.msra.mxu0 0.0
  %5459 = vmatprep.subr.mxu0 0.0
  %5460 = vmatpush2.msra.mxu0 0.0
  %5461 = vmatprep.subr.mxu0 0.0
  %5462 = vmatpush2.msra.mxu0 0.0
  %5463 = vmatprep.subr.mxu0 0.0
  %5464 = vmatpush2.msra.mxu0 0.0
  %5465 = vmatprep.subr.mxu0 0.0
  %5466 = vmatpush2.msra.mxu0 0.0
  %5467 = vmatprep.subr.mxu0 0.0
  %5468 = vmatpush2.msra.mxu0 0.0
  %5469 = vmatprep.mubr.f32.mxu0 0.0
  %5470 = vmatmul.mubr.f32.gmra.mxu0 %v5404
  %v5471 = vpop.f32.mrf.mxu0
  %v5472 = vadd.f32 0.0, %v5471
  %v5473 = vpop.f32.mrf.mxu0
  %5474 = vdwg.mxu0
  %v5475 = vmul.f32 %v5389, 0.001953125
  %v5476 = vmul.f32 %v5472, 0.001953125
  %v5477 = vmul.f32 %v5475, %v5475
  %v5478 = vsub.f32 %v5476, %v5477
  %v5479 = vld [vmem:[%s8] sm:$0x1]
  %v5480 = vadd.f32 %v5478, 1e-05
  %v5481 = vrsqrt.pop %v5480
  %v5482 = vmul.f32 %v5479, %v5481
  %v5483 = vld [vmem:[%s9] sm:$0x1]
  %v5484 = vmul.f32 %v5475, %v5482
  %v5485 = vsub.f32 %v5483, %v5484
  %v5487 = vsel %vm1468, %v5482, 0
  %5489 = vmatprep.subr.mxu0 0.0
  %5490 = vmatpush1.msra.mxu0 0.0
  %5491 = vmatprep.subr.mxu0 0.0
  %5492 = vmatpush1.msra.mxu0 0.0
  %5493 = vmatprep.subr.mxu0 0.0
  %5494 = vmatpush1.msra.mxu0 0.0
  %5495 = vmatprep.subr.mxu0 0.0
  %5496 = vmatpush1.msra.mxu0 0.0
  %5497 = vmatprep.subr.mxu0 0.0
  %5498 = vmatpush1.msra.mxu0 0.0
  %5499 = vmatprep.subr.mxu0 0.0
  %5500 = vmatpush1.msra.mxu0 0.0
  %5501 = vmatprep.subr.mxu0 0.0
  %5502 = vmatpush1.msra.mxu0 0.0
  %5503 = vmatprep.subr.mxu0 0.0
  %5504 = vmatpush1.msra.mxu0 0.0
  %5505 = vmatprep.subr.mxu0 0.0
  %5506 = vmatpush1.msra.mxu0 0.0
  %5507 = vmatprep.subr.mxu0 0.0
  %5508 = vmatpush1.msra.mxu0 0.0
  %5509 = vmatprep.subr.mxu0 0.0
  %5510 = vmatpush1.msra.mxu0 0.0
  %5511 = vmatprep.subr.mxu0 0.0
  %5512 = vmatpush1.msra.mxu0 0.0
  %5513 = vmatprep.subr.mxu0 0.0
  %5514 = vmatpush1.msra.mxu0 0.0
  %5515 = vmatprep.subr.mxu0 0.0
  %5516 = vmatpush1.msra.mxu0 0.0
  %5517 = vmatprep.subr.mxu0 0.0
  %5518 = vmatpush1.msra.mxu0 0.0
  %5519 = vmatprep.subr.mxu0 0.0
  %5520 = vmatpush1.msra.mxu0 %v58
  %5521 = vmatprep.subr.mxu0 0.0
  %5522 = vmatpush2.msra.mxu0 0.0
  %5523 = vmatprep.subr.mxu0 0.0
  %5524 = vmatpush2.msra.mxu0 0.0
  %5525 = vmatprep.subr.mxu0 0.0
  %5526 = vmatpush2.msra.mxu0 0.0
  %5527 = vmatprep.subr.mxu0 0.0
  %5528 = vmatpush2.msra.mxu0 0.0
  %5529 = vmatprep.subr.mxu0 0.0
  %5530 = vmatpush2.msra.mxu0 0.0
  %5531 = vmatprep.subr.mxu0 0.0
  %5532 = vmatpush2.msra.mxu0 0.0
  %5533 = vmatprep.subr.mxu0 0.0
  %5534 = vmatpush2.msra.mxu0 0.0
  %5535 = vmatprep.subr.mxu0 0.0
  %5536 = vmatpush2.msra.mxu0 0.0
  %5537 = vmatprep.subr.mxu0 0.0
  %5538 = vmatpush2.msra.mxu0 0.0
  %5539 = vmatprep.subr.mxu0 0.0
  %5540 = vmatpush2.msra.mxu0 0.0
  %5541 = vmatprep.subr.mxu0 0.0
  %5542 = vmatpush2.msra.mxu0 0.0
  %5543 = vmatprep.subr.mxu0 0.0
  %5544 = vmatpush2.msra.mxu0 0.0
  %5545 = vmatprep.subr.mxu0 0.0
  %5546 = vmatpush2.msra.mxu0 0.0
  %5547 = vmatprep.subr.mxu0 0.0
  %5548 = vmatpush2.msra.mxu0 0.0
  %5549 = vmatprep.subr.mxu0 0.0
  %5550 = vmatpush2.msra.mxu0 0.0
  %5551 = vmatprep.subr.mxu0 0.0
  %5552 = vmatpush2.msra.mxu0 0.0
  %5553 = vmatprep.mubr.f32.mxu0 0.0
  %5554 = vmatmul.mubr.f32.gmra.mxu0 %v5487
  %v5555 = vpop.f32.mrf.mxu0
  %v5556 = vadd.f32 0.0, %v5555
  %v5557 = vpop.f32.mrf.mxu0
  %5558 = vdwg.mxu0
  %v5560 = vsel %vm1468, %v5485, 0
  %5562 = vmatprep.subr.mxu0 0.0
  %5563 = vmatpush1.msra.mxu0 0.0
  %5564 = vmatprep.subr.mxu0 0.0
  %5565 = vmatpush1.msra.mxu0 0.0
  %5566 = vmatprep.subr.mxu0 0.0
  %5567 = vmatpush1.msra.mxu0 0.0
  %5568 = vmatprep.subr.mxu0 0.0
  %5569 = vmatpush1.msra.mxu0 0.0
  %5570 = vmatprep.subr.mxu0 0.0
  %5571 = vmatpush1.msra.mxu0 0.0
  %5572 = vmatprep.subr.mxu0 0.0
  %5573 = vmatpush1.msra.mxu0 0.0
  %5574 = vmatprep.subr.mxu0 0.0
  %5575 = vmatpush1.msra.mxu0 0.0
  %5576 = vmatprep.subr.mxu0 0.0
  %5577 = vmatpush1.msra.mxu0 0.0
  %5578 = vmatprep.subr.mxu0 0.0
  %5579 = vmatpush1.msra.mxu0 0.0
  %5580 = vmatprep.subr.mxu0 0.0
  %5581 = vmatpush1.msra.mxu0 0.0
  %5582 = vmatprep.subr.mxu0 0.0
  %5583 = vmatpush1.msra.mxu0 0.0
  %5584 = vmatprep.subr.mxu0 0.0
  %5585 = vmatpush1.msra.mxu0 0.0
  %5586 = vmatprep.subr.mxu0 0.0
  %5587 = vmatpush1.msra.mxu0 0.0
  %5588 = vmatprep.subr.mxu0 0.0
  %5589 = vmatpush1.msra.mxu0 0.0
  %5590 = vmatprep.subr.mxu0 0.0
  %5591 = vmatpush1.msra.mxu0 0.0
  %5592 = vmatprep.subr.mxu0 0.0
  %5593 = vmatpush1.msra.mxu0 %v58
  %5594 = vmatprep.subr.mxu0 0.0
  %5595 = vmatpush2.msra.mxu0 0.0
  %5596 = vmatprep.subr.mxu0 0.0
  %5597 = vmatpush2.msra.mxu0 0.0
  %5598 = vmatprep.subr.mxu0 0.0
  %5599 = vmatpush2.msra.mxu0 0.0
  %5600 = vmatprep.subr.mxu0 0.0
  %5601 = vmatpush2.msra.mxu0 0.0
  %5602 = vmatprep.subr.mxu0 0.0
  %5603 = vmatpush2.msra.mxu0 0.0
  %5604 = vmatprep.subr.mxu0 0.0
  %5605 = vmatpush2.msra.mxu0 0.0
  %5606 = vmatprep.subr.mxu0 0.0
  %5607 = vmatpush2.msra.mxu0 0.0
  %5608 = vmatprep.subr.mxu0 0.0
  %5609 = vmatpush2.msra.mxu0 0.0
  %5610 = vmatprep.subr.mxu0 0.0
  %5611 = vmatpush2.msra.mxu0 0.0
  %5612 = vmatprep.subr.mxu0 0.0
  %5613 = vmatpush2.msra.mxu0 0.0
  %5614 = vmatprep.subr.mxu0 0.0
  %5615 = vmatpush2.msra.mxu0 0.0
  %5616 = vmatprep.subr.mxu0 0.0
  %5617 = vmatpush2.msra.mxu0 0.0
  %5618 = vmatprep.subr.mxu0 0.0
  %5619 = vmatpush2.msra.mxu0 0.0
  %5620 = vmatprep.subr.mxu0 0.0
  %5621 = vmatpush2.msra.mxu0 0.0
  %5622 = vmatprep.subr.mxu0 0.0
  %5623 = vmatpush2.msra.mxu0 0.0
  %5624 = vmatprep.subr.mxu0 0.0
  %5625 = vmatpush2.msra.mxu0 0.0
  %5626 = vmatprep.mubr.f32.mxu0 0.0
  %5627 = vmatmul.mubr.f32.gmra.mxu0 %v5560
  %v5628 = vpop.f32.mrf.mxu0
  %v5629 = vadd.f32 0.0, %v5628
  %v5630 = vpop.f32.mrf.mxu0
  %5631 = vdwg.mxu0
  %v5632 = vlaneseq
  %v5633 = vshrl.u32 %v5632, 7
  %v5634 = vsub.s32 0, %v5633
  %v5635 = vrot.slane %v5556, %v5634
  %v5636 = vmul.f32 %v4779, %v5635
  %v5637 = vmul.f32 %v4780, %v5635
  %v5638 = vmul.f32 %v5311, %v5635
  %v5639 = vmul.f32 %v5312, %v5635
  %v5640 = vlaneseq
  %v5641 = vshrl.u32 %v5640, 7
  %v5642 = vsub.s32 0, %v5641
  %v5643 = vrot.slane %v5629, %v5642
  %v5644 = vadd.f32 %v5636, %v5643
  %v5645 = vadd.f32 %v5637, %v5643
  %v5646 = vadd.f32 %v5638, %v5643
  %v5647 = vadd.f32 %v5639, %v5643
  %v5648 = vmax.f32 %v5644, 0.0
  %v5649 = vmax.f32 %v5645, 0.0
  %v5650 = vmax.f32 %v5646, 0.0
  %v5651 = vmax.f32 %v5647, 0.0
  %5652 = vst [vmem:[%s12] sm:$0xff] %v5648
  %5653 = vst [vmem:[%s12 + $0x8] sm:$0xff] %v5649
  %5654 = vst [vmem:[%s12 + $0x10] sm:$0xff] %v5650
  %5655 = vst [vmem:[%s12 + $0x18] sm:$0xff] %v5651
  // Predicated region
  $region50: #{block_mid_2_forward.1} parent=0 // pred_check
    _
  $region51: #{block_mid_2_forward.1} parent=0 // pred_check_branch
    %5657 = sbr.rel (0) target = $region53
  $region52: #{block_mid_2_forward.1} parent=0 // pred_region
    _
  $region53: #{block_mid_2_forward.1} parent=0 // pred_fallthru
    _
  // Predicated region
  $region54: #{block_mid_2_forward.1} parent=0 // pred_check
    _
  $region55: #{block_mid_2_forward.1} parent=0 // pred_check_branch
    %5659 = sbr.rel (0) target = $region57
  $region56: #{block_mid_2_forward.1} parent=0 // pred_region
    _
  $region57: #{block_mid_2_forward.1} parent=0 // pred_fallthru
    _

</llo_original>
